<compile_context>
chip_gen: v6e
topology: v6e:2x2x1
jax: 0.10.0
libtpu: 0.0.40
codegen_flags: <defaults>
</compile_context>

<pallas_src>
import jax
import jax.numpy as jnp
import numpy as np
from jax import lax
from jax.experimental import pallas as pl
from jax.experimental.pallas import tpu as pltpu


def _round_up(v, m):
    return ((v + m - 1) // m) * m


# ----------------------------------------------------------------------------
# In-kernel helpers (only full-array slices, concats, broadcasts, VPU math)
# ----------------------------------------------------------------------------
def _shift_t(a, s):
    """b[q] = a[q + s] for q < L - s.  Tail rows wrap; they are only ever read
    at array positions that are already invalid ("garbage") in the dilated
    representation, so their values never reach a valid output."""
    if s == 0:
        return a
    return jnp.concatenate([a[s:], a[:s]], axis=0)


def _conv1x1(a, w, bias):
    """Pointwise conv over channels.
    a: (L, Ci, TM), w: (Ci, Co, 1), bias: (1, Co, 1)  ->  (L, Co, TM)."""
    ci = w.shape[0]
    acc = a[:, 0:1, :] * w[0]
    for c in range(1, ci):
        acc = acc + a[:, c:c + 1, :] * w[c]
    return acc + bias


def _conv1xk(a, w, bias, k, d):
    """1xk 'VALID' conv along time, evaluated at every array row with temporal
    step `d` (dilated frame).  a: (L, Ci, TM), w: (k*Ci, Co, 1)."""
    ci = w.shape[0] // k
    acc = None
    for j in range(k):
        aj = _shift_t(a, j * d)
        for c in range(ci):
            term = aj[:, c:c + 1, :] * w[j * ci + c]
            acc = term if acc is None else acc + term
    return acc + bias


# ----------------------------------------------------------------------------
# Fused kernel: start_conv + scale0 conv + all layer_blocks in one pass
# ----------------------------------------------------------------------------
def _make_fused_kernel(layer_num, kernel_set, t_valid_in):
    n_w = 4 + 4 * (layer_num - 1)

    def kernel(*refs):
        x_ref = refs[0]
        w = [refs[1 + i][...] for i in range(n_w)]
        out_refs = refs[1 + n_w:]

        # start_conv (1x1)
        h = _conv1x1(x_ref[...], w[0], w[1])
        d = 1                      # temporal dilation of h in the array frame
        tv = t_valid_in            # number of valid time samples in h

        # scale[0]: plain 1xk conv
        h = _conv1xk(h, w[2], w[3], kernel_set[0], d)
        tv = tv - kernel_set[0] + 1
        out_refs[0][...] = h

        wi = 4
        for i in range(1, layer_num):
            k = kernel_set[i]
            t2 = tv - k + 1                    # conv_output1 length
            tout = (t2 - 3) // 2 + 1           # maxpool output length
            t1 = (tv - 1) // 2 + 1             # stride-2 1x1 conv length
            start = 2 * (t1 - tout)            # first residual tap (input time)

            # conv_output1 (1xk), evaluated everywhere in the dilated frame
            y = _conv1xk(h, w[wi + 2], w[wi + 3], k, d)
            # MaxPool2d((1,3), stride (1,2)); out[r] lands at array row 2*d*r
            pooled = jnp.maximum(jnp.maximum(y, _shift_t(y, d)),
                                 _shift_t(y, 2 * d))
            # stride-2 1x1 residual, shifted so it aligns with the pooled frame
            res = _conv1x1(h, w[wi], w[wi + 1])
            h = jnp.maximum(pooled + _shift_t(res, d * start), 0.0)

            out_refs[i][...] = h
            d *= 2
            tv = tout
            wi += 4

    return kernel


# ----------------------------------------------------------------------------
# Host-side wrapper
# ----------------------------------------------------------------------------
def _static_schedule(t_in, layer_num, kernel_set):
    """(dilation, valid_len) of the dilated array each scale writes."""
    dil, tvs = [], []
    tv = t_in - kernel_set[0] + 1
    assert tv >= 1, "seq_length too short for scale-0 kernel"
    dil.append(1)
    tvs.append(tv)
    d = 1
    for i in range(1, layer_num):
        t2 = tv - kernel_set[i] + 1
        assert t2 >= 3, f"seq_length too short at layer {i} (maxpool window)"
        tv = (t2 - 3) // 2 + 1
        d *= 2
        dil.append(d)
        tvs.append(tv)
    return dil, tvs


def multi_scale_forward(x_nchw, wlist, layer_num, kernel_set, block_m=128):
    """x_nchw: (B, Cin, N, T) f32; wlist from prepare_params.
    Returns a list of (B, Cout, N, T_i), matching the PyTorch module."""
    assert block_m % 128 == 0
    b, cin, n, t = x_nchw.shape
    m = b * n
    c_out = wlist[0].shape[1]
    l0 = _round_up(t, 8)
    m_pad = _round_up(m, block_m)
    dil, tvs = _static_schedule(t, layer_num, kernel_set)

    # (B, Cin, N, T) -> (T, Cin, M); zero-pad time -> l0 and rows -> m_pad.
    xt = jnp.transpose(x_nchw, (3, 1, 0, 2)).reshape(t, cin, m)
    xt = jnp.pad(xt, ((0, l0 - t), (0, 0), (0, m_pad - m)))

    grid = (m_pad // block_m,)
    in_specs = [pl.BlockSpec((l0, cin, block_m), lambda i: (0, 0, i))]
    for warr in wlist:
        in_specs.append(
            pl.BlockSpec(warr.shape, lambda i, nd=warr.ndim: (0,) * nd))
    out_shape = [jax.ShapeDtypeStruct((l0, c_out, m_pad), jnp.float32)
                 for _ in range(layer_num)]
    out_specs = [pl.BlockSpec((l0, c_out, block_m), lambda i: (0, 0, i))
                 for _ in range(layer_num)]

    kernel = _make_fused_kernel(layer_num, tuple(kernel_set), t)
    outs = pl.pallas_call(
        kernel,
        grid=grid,
        in_specs=in_specs,
        out_specs=out_specs,
        out_shape=out_shape,
        compiler_params=pltpu.CompilerParams(
            dimension_semantics=("parallel",)),
    )(xt, *wlist)

    # Extract valid (strided) samples and restore NCHW — plain XLA, outside
    # the kernel.
    results = []
    for i in range(layer_num):
        d, ti = dil[i], tvs[i]
        o = outs[i][0:d * (ti - 1) + 1:d, :, :m]          # (ti, C, M)
        o = o.reshape(ti, c_out, b, n)
        results.append(jnp.transpose(o, (2, 1, 3, 0)))    # (B, C, N, ti)
    return results


# ----------------------------------------------------------------------------
# One-time weight packing (torch Conv2d layout: (out, in, kh, kw))
# ----------------------------------------------------------------------------
def prepare_params(p, layer_num):
    def pw(w):            # (Co, Ci, 1, 1) -> (Ci, Co, 1)
        return jnp.transpose(w[:, :, 0, 0], (1, 0))[:, :, None]

    def ck(w):            # (Co, Ci, 1, k) -> (k*Ci, Co, 1)
        co, ci, _, k = w.shape
        a = jnp.transpose(w[:, :, 0, :], (2, 1, 0))        # (k, Ci, Co)
        return a.reshape(k * ci, co)[:, :, None]

    def bias(v):          # (Co,) -> (1, Co, 1)
        return v[None, :, None]

    wl = [pw(p['start_w_t']), bias(p['start_b']),
          ck(p['scale0_w_t']), bias(p['scale0_b'])]
    for i in range(1, layer_num):
        wl += [pw(p[f'lb{i}_w0_t']), bias(p[f'lb{i}_b0']),
               ck(p[f'lb{i}_w1_t']), bias(p[f'lb{i}_b1'])]
    return wl


# ----------------------------------------------------------------------------
# Pure-JAX reference mirroring the PyTorch module exactly (for verification)
# ----------------------------------------------------------------------------
def reference_forward(x_nchw, p, layer_num):
    def conv(x, w, b, stride_w=1):
        y = lax.conv_general_dilated(x, w, (1, stride_w), 'VALID',
                                     dimension_numbers=('NCHW', 'OIHW', 'NCHW'))
        return y + b[None, :, None, None]

    def maxpool(x):
        return lax.reduce_window(x, jnp.array(-jnp.inf, jnp.float32), lax.max,
                                 (1, 1, 1, 3), (1, 1, 1, 2), 'VALID')

    h = conv(x_nchw, p['start_w_t'], p['start_b'])
    outs = []
    h = conv(h, p['scale0_w_t'], p['scale0_b'])
    outs.append(h)
    for i in range(1, layer_num):
        c0 = conv(h, p[f'lb{i}_w0_t'], p[f'lb{i}_b0'], stride_w=2)
        c1 = conv(h, p[f'lb{i}_w1_t'], p[f'lb{i}_b1'])
        pool = maxpool(c1)
        h = jax.nn.relu(pool + c0[..., -pool.shape[3]:])
        outs.append(h)
    return outs


# ----------------------------------------------------------------------------
# Deterministic parameter init (torch Conv2d weight layout: (out, in, kh, kw))
# ----------------------------------------------------------------------------
def init_params(key, c_in, c_out, layer_num, kernel_set):
    keys = jax.random.split(key, 4 + 4 * layer_num)
    idx = [0]

    def nrm(shape):
        k = keys[idx[0]]
        idx[0] += 1
        return jax.random.normal(k, shape, dtype=jnp.float32) * 0.3

    p = {}
    p['start_w_t'] = nrm((c_out, c_in, 1, 1))
    p['start_b'] = nrm((c_out,))
    p['scale0_w_t'] = nrm((c_out, c_out, 1, kernel_set[0]))
    p['scale0_b'] = nrm((c_out,))
    for i in range(1, layer_num):
        p[f'lb{i}_w0_t'] = nrm((c_out, c_out, 1, 1))
        p[f'lb{i}_b0'] = nrm((c_out,))
        p[f'lb{i}_w1_t'] = nrm((c_out, c_out, 1, kernel_set[i]))
        p[f'lb{i}_b1'] = nrm((c_out,))
    # TODO(synk): nn.BatchNorm2d layers in `self.norm` are constructed but never
    # used in the PyTorch forward, so they have no kernel counterpart here.
    return p


# ----------------------------------------------------------------------------
if __name__ == "__main__":
    B, C_IN, C_OUT, N, T = 2, 4, 8, 5, 16
    LAYER_NUM = 3
    KERNEL_SET = [3, 3, 3]

    root = jax.random.PRNGKey(0)
    kx, kp = jax.random.split(root)
    x = jax.random.normal(kx, (B, C_IN, N, T), dtype=jnp.float32)
    params = init_params(kp, C_IN, C_OUT, LAYER_NUM, KERNEL_SET)
    wlist = prepare_params(params, LAYER_NUM)          # packed once, reused

    outs = multi_scale_forward(x, wlist, LAYER_NUM, KERNEL_SET)
    outs = [jax.block_until_ready(o) for o in outs]

    refs = reference_forward(x, params, LAYER_NUM)
    for o, r in zip(outs, refs):
        np.testing.assert_allclose(np.asarray(o), np.asarray(r),
                                   rtol=1e-4, atol=1e-4)

    print("KERNEL_OK")
</pallas_src>

<mosaic_0001>
module attributes {stable_mosaic.version = 11 : i64} {
  func.func @kernel(%arg0: i32, %arg1: memref<16x4x128xf32, #tpu.memory_space<vmem>>, %arg2: memref<4x8x1xf32, #tpu.memory_space<vmem>>, %arg3: memref<1x8x1xf32, #tpu.memory_space<vmem>>, %arg4: memref<24x8x1xf32, #tpu.memory_space<vmem>>, %arg5: memref<1x8x1xf32, #tpu.memory_space<vmem>>, %arg6: memref<8x8x1xf32, #tpu.memory_space<vmem>>, %arg7: memref<1x8x1xf32, #tpu.memory_space<vmem>>, %arg8: memref<24x8x1xf32, #tpu.memory_space<vmem>>, %arg9: memref<1x8x1xf32, #tpu.memory_space<vmem>>, %arg10: memref<8x8x1xf32, #tpu.memory_space<vmem>>, %arg11: memref<1x8x1xf32, #tpu.memory_space<vmem>>, %arg12: memref<24x8x1xf32, #tpu.memory_space<vmem>>, %arg13: memref<1x8x1xf32, #tpu.memory_space<vmem>>, %arg14: memref<16x8x128xf32, #tpu.memory_space<vmem>>, %arg15: memref<16x8x128xf32, #tpu.memory_space<vmem>>, %arg16: memref<16x8x128xf32, #tpu.memory_space<vmem>>) attributes {dimension_semantics = [#tpu.dimension_semantics<parallel>], iteration_bounds = array<i64: 1>, scalar_prefetch = 0 : i64, scratch_operands = 0 : i64, tpu.core_type = #tpu.core_type<tc>, window_params = [{transform_indices = @transform_0, window_bounds = array<i64: 16, 4, 128>}, {pipeline_mode = #tpu.pipeline_mode<synchronous>, transform_indices = @transform_1, window_bounds = array<i64: 4, 8, 1>}, {pipeline_mode = #tpu.pipeline_mode<synchronous>, transform_indices = @transform_2, window_bounds = array<i64: 1, 8, 1>}, {pipeline_mode = #tpu.pipeline_mode<synchronous>, transform_indices = @transform_3, window_bounds = array<i64: 24, 8, 1>}, {pipeline_mode = #tpu.pipeline_mode<synchronous>, transform_indices = @transform_4, window_bounds = array<i64: 1, 8, 1>}, {pipeline_mode = #tpu.pipeline_mode<synchronous>, transform_indices = @transform_5, window_bounds = array<i64: 8, 8, 1>}, {pipeline_mode = #tpu.pipeline_mode<synchronous>, transform_indices = @transform_6, window_bounds = array<i64: 1, 8, 1>}, {pipeline_mode = #tpu.pipeline_mode<synchronous>, transform_indices = @transform_7, window_bounds = array<i64: 24, 8, 1>}, {pipeline_mode = #tpu.pipeline_mode<synchronous>, transform_indices = @transform_8, window_bounds = array<i64: 1, 8, 1>}, {pipeline_mode = #tpu.pipeline_mode<synchronous>, transform_indices = @transform_9, window_bounds = array<i64: 8, 8, 1>}, {pipeline_mode = #tpu.pipeline_mode<synchronous>, transform_indices = @transform_10, window_bounds = array<i64: 1, 8, 1>}, {pipeline_mode = #tpu.pipeline_mode<synchronous>, transform_indices = @transform_11, window_bounds = array<i64: 24, 8, 1>}, {pipeline_mode = #tpu.pipeline_mode<synchronous>, transform_indices = @transform_12, window_bounds = array<i64: 1, 8, 1>}, {transform_indices = @transform_13, window_bounds = array<i64: 16, 8, 128>}, {transform_indices = @transform_14, window_bounds = array<i64: 16, 8, 128>}, {transform_indices = @transform_15, window_bounds = array<i64: 16, 8, 128>}]} {
    %c0 = arith.constant 0 : index
    %c0_0 = arith.constant 0 : index
    %c0_1 = arith.constant 0 : index
    %0 = vector.load %arg2[%c0, %c0_0, %c0_1] : memref<4x8x1xf32, #tpu.memory_space<vmem>>, vector<4x8x1xf32>
    %c0_2 = arith.constant 0 : index
    %c0_3 = arith.constant 0 : index
    %c0_4 = arith.constant 0 : index
    %1 = vector.load %arg3[%c0_2, %c0_3, %c0_4] : memref<1x8x1xf32, #tpu.memory_space<vmem>>, vector<1x8x1xf32>
    %c0_5 = arith.constant 0 : index
    %c0_6 = arith.constant 0 : index
    %c0_7 = arith.constant 0 : index
    %2 = vector.load %arg4[%c0_5, %c0_6, %c0_7] : memref<24x8x1xf32, #tpu.memory_space<vmem>>, vector<24x8x1xf32>
    %c0_8 = arith.constant 0 : index
    %c0_9 = arith.constant 0 : index
    %c0_10 = arith.constant 0 : index
    %3 = vector.load %arg5[%c0_8, %c0_9, %c0_10] : memref<1x8x1xf32, #tpu.memory_space<vmem>>, vector<1x8x1xf32>
    %c0_11 = arith.constant 0 : index
    %c0_12 = arith.constant 0 : index
    %c0_13 = arith.constant 0 : index
    %4 = vector.load %arg6[%c0_11, %c0_12, %c0_13] : memref<8x8x1xf32, #tpu.memory_space<vmem>>, vector<8x8x1xf32>
    %c0_14 = arith.constant 0 : index
    %c0_15 = arith.constant 0 : index
    %c0_16 = arith.constant 0 : index
    %5 = vector.load %arg7[%c0_14, %c0_15, %c0_16] : memref<1x8x1xf32, #tpu.memory_space<vmem>>, vector<1x8x1xf32>
    %c0_17 = arith.constant 0 : index
    %c0_18 = arith.constant 0 : index
    %c0_19 = arith.constant 0 : index
    %6 = vector.load %arg8[%c0_17, %c0_18, %c0_19] : memref<24x8x1xf32, #tpu.memory_space<vmem>>, vector<24x8x1xf32>
    %c0_20 = arith.constant 0 : index
    %c0_21 = arith.constant 0 : index
    %c0_22 = arith.constant 0 : index
    %7 = vector.load %arg9[%c0_20, %c0_21, %c0_22] : memref<1x8x1xf32, #tpu.memory_space<vmem>>, vector<1x8x1xf32>
    %c0_23 = arith.constant 0 : index
    %c0_24 = arith.constant 0 : index
    %c0_25 = arith.constant 0 : index
    %8 = vector.load %arg10[%c0_23, %c0_24, %c0_25] : memref<8x8x1xf32, #tpu.memory_space<vmem>>, vector<8x8x1xf32>
    %c0_26 = arith.constant 0 : index
    %c0_27 = arith.constant 0 : index
    %c0_28 = arith.constant 0 : index
    %9 = vector.load %arg11[%c0_26, %c0_27, %c0_28] : memref<1x8x1xf32, #tpu.memory_space<vmem>>, vector<1x8x1xf32>
    %c0_29 = arith.constant 0 : index
    %c0_30 = arith.constant 0 : index
    %c0_31 = arith.constant 0 : index
    %10 = vector.load %arg12[%c0_29, %c0_30, %c0_31] : memref<24x8x1xf32, #tpu.memory_space<vmem>>, vector<24x8x1xf32>
    %c0_32 = arith.constant 0 : index
    %c0_33 = arith.constant 0 : index
    %c0_34 = arith.constant 0 : index
    %11 = vector.load %arg13[%c0_32, %c0_33, %c0_34] : memref<1x8x1xf32, #tpu.memory_space<vmem>>, vector<1x8x1xf32>
    %c0_35 = arith.constant 0 : index
    %c0_36 = arith.constant 0 : index
    %c0_37 = arith.constant 0 : index
    %12 = vector.load %arg1[%c0_35, %c0_36, %c0_37] : memref<16x4x128xf32, #tpu.memory_space<vmem>>, vector<16x4x128xf32>
    %13 = vector.extract_strided_slice %12 {offsets = [0, 0, 0], sizes = [16, 1, 128], strides = [1, 1, 1]} : vector<16x4x128xf32> to vector<16x1x128xf32>
    %14 = vector.extract_strided_slice %0 {offsets = [0, 0, 0], sizes = [1, 8, 1], strides = [1, 1, 1]} : vector<4x8x1xf32> to vector<1x8x1xf32>
    %15 = vector.shape_cast %14 : vector<1x8x1xf32> to vector<8x1xf32>
    %16 = vector.shape_cast %15 : vector<8x1xf32> to vector<1x8x1xf32>
    %17 = vector.broadcast %13 : vector<16x1x128xf32> to vector<16x8x128xf32>
    %18 = vector.broadcast %16 : vector<1x8x1xf32> to vector<16x8x128xf32>
    %19 = arith.mulf %17, %18 : vector<16x8x128xf32>
    %20 = vector.extract_strided_slice %12 {offsets = [0, 1, 0], sizes = [16, 1, 128], strides = [1, 1, 1]} : vector<16x4x128xf32> to vector<16x1x128xf32>
    %21 = vector.extract_strided_slice %0 {offsets = [1, 0, 0], sizes = [1, 8, 1], strides = [1, 1, 1]} : vector<4x8x1xf32> to vector<1x8x1xf32>
    %22 = vector.shape_cast %21 : vector<1x8x1xf32> to vector<8x1xf32>
    %23 = vector.shape_cast %22 : vector<8x1xf32> to vector<1x8x1xf32>
    %24 = vector.broadcast %20 : vector<16x1x128xf32> to vector<16x8x128xf32>
    %25 = vector.broadcast %23 : vector<1x8x1xf32> to vector<16x8x128xf32>
    %26 = arith.mulf %24, %25 : vector<16x8x128xf32>
    %27 = arith.addf %19, %26 : vector<16x8x128xf32>
    %28 = vector.extract_strided_slice %12 {offsets = [0, 2, 0], sizes = [16, 1, 128], strides = [1, 1, 1]} : vector<16x4x128xf32> to vector<16x1x128xf32>
    %29 = vector.extract_strided_slice %0 {offsets = [2, 0, 0], sizes = [1, 8, 1], strides = [1, 1, 1]} : vector<4x8x1xf32> to vector<1x8x1xf32>
    %30 = vector.shape_cast %29 : vector<1x8x1xf32> to vector<8x1xf32>
    %31 = vector.shape_cast %30 : vector<8x1xf32> to vector<1x8x1xf32>
    %32 = vector.broadcast %28 : vector<16x1x128xf32> to vector<16x8x128xf32>
    %33 = vector.broadcast %31 : vector<1x8x1xf32> to vector<16x8x128xf32>
    %34 = arith.mulf %32, %33 : vector<16x8x128xf32>
    %35 = arith.addf %27, %34 : vector<16x8x128xf32>
    %36 = vector.extract_strided_slice %12 {offsets = [0, 3, 0], sizes = [16, 1, 128], strides = [1, 1, 1]} : vector<16x4x128xf32> to vector<16x1x128xf32>
    %37 = vector.extract_strided_slice %0 {offsets = [3, 0, 0], sizes = [1, 8, 1], strides = [1, 1, 1]} : vector<4x8x1xf32> to vector<1x8x1xf32>
    %38 = vector.shape_cast %37 : vector<1x8x1xf32> to vector<8x1xf32>
    %39 = vector.shape_cast %38 : vector<8x1xf32> to vector<1x8x1xf32>
    %40 = vector.broadcast %36 : vector<16x1x128xf32> to vector<16x8x128xf32>
    %41 = vector.broadcast %39 : vector<1x8x1xf32> to vector<16x8x128xf32>
    %42 = arith.mulf %40, %41 : vector<16x8x128xf32>
    %43 = arith.addf %35, %42 : vector<16x8x128xf32>
    %44 = vector.broadcast %1 : vector<1x8x1xf32> to vector<16x8x128xf32>
    %45 = arith.addf %43, %44 : vector<16x8x128xf32>
    %46 = vector.extract_strided_slice %45 {offsets = [0, 0, 0], sizes = [16, 1, 128], strides = [1, 1, 1]} : vector<16x8x128xf32> to vector<16x1x128xf32>
    %47 = vector.extract_strided_slice %2 {offsets = [0, 0, 0], sizes = [1, 8, 1], strides = [1, 1, 1]} : vector<24x8x1xf32> to vector<1x8x1xf32>
    %48 = vector.shape_cast %47 : vector<1x8x1xf32> to vector<8x1xf32>
    %49 = vector.shape_cast %48 : vector<8x1xf32> to vector<1x8x1xf32>
    %50 = vector.broadcast %46 : vector<16x1x128xf32> to vector<16x8x128xf32>
    %51 = vector.broadcast %49 : vector<1x8x1xf32> to vector<16x8x128xf32>
    %52 = arith.mulf %50, %51 : vector<16x8x128xf32>
    %53 = vector.extract_strided_slice %45 {offsets = [0, 1, 0], sizes = [16, 1, 128], strides = [1, 1, 1]} : vector<16x8x128xf32> to vector<16x1x128xf32>
    %54 = vector.extract_strided_slice %2 {offsets = [1, 0, 0], sizes = [1, 8, 1], strides = [1, 1, 1]} : vector<24x8x1xf32> to vector<1x8x1xf32>
    %55 = vector.shape_cast %54 : vector<1x8x1xf32> to vector<8x1xf32>
    %56 = vector.shape_cast %55 : vector<8x1xf32> to vector<1x8x1xf32>
    %57 = vector.broadcast %53 : vector<16x1x128xf32> to vector<16x8x128xf32>
    %58 = vector.broadcast %56 : vector<1x8x1xf32> to vector<16x8x128xf32>
    %59 = arith.mulf %57, %58 : vector<16x8x128xf32>
    %60 = arith.addf %52, %59 : vector<16x8x128xf32>
    %61 = vector.extract_strided_slice %45 {offsets = [0, 2, 0], sizes = [16, 1, 128], strides = [1, 1, 1]} : vector<16x8x128xf32> to vector<16x1x128xf32>
    %62 = vector.extract_strided_slice %2 {offsets = [2, 0, 0], sizes = [1, 8, 1], strides = [1, 1, 1]} : vector<24x8x1xf32> to vector<1x8x1xf32>
    %63 = vector.shape_cast %62 : vector<1x8x1xf32> to vector<8x1xf32>
    %64 = vector.shape_cast %63 : vector<8x1xf32> to vector<1x8x1xf32>
    %65 = vector.broadcast %61 : vector<16x1x128xf32> to vector<16x8x128xf32>
    %66 = vector.broadcast %64 : vector<1x8x1xf32> to vector<16x8x128xf32>
    %67 = arith.mulf %65, %66 : vector<16x8x128xf32>
    %68 = arith.addf %60, %67 : vector<16x8x128xf32>
    %69 = vector.extract_strided_slice %45 {offsets = [0, 3, 0], sizes = [16, 1, 128], strides = [1, 1, 1]} : vector<16x8x128xf32> to vector<16x1x128xf32>
    %70 = vector.extract_strided_slice %2 {offsets = [3, 0, 0], sizes = [1, 8, 1], strides = [1, 1, 1]} : vector<24x8x1xf32> to vector<1x8x1xf32>
    %71 = vector.shape_cast %70 : vector<1x8x1xf32> to vector<8x1xf32>
    %72 = vector.shape_cast %71 : vector<8x1xf32> to vector<1x8x1xf32>
    %73 = vector.broadcast %69 : vector<16x1x128xf32> to vector<16x8x128xf32>
    %74 = vector.broadcast %72 : vector<1x8x1xf32> to vector<16x8x128xf32>
    %75 = arith.mulf %73, %74 : vector<16x8x128xf32>
    %76 = arith.addf %68, %75 : vector<16x8x128xf32>
    %77 = vector.extract_strided_slice %45 {offsets = [0, 4, 0], sizes = [16, 1, 128], strides = [1, 1, 1]} : vector<16x8x128xf32> to vector<16x1x128xf32>
    %78 = vector.extract_strided_slice %2 {offsets = [4, 0, 0], sizes = [1, 8, 1], strides = [1, 1, 1]} : vector<24x8x1xf32> to vector<1x8x1xf32>
    %79 = vector.shape_cast %78 : vector<1x8x1xf32> to vector<8x1xf32>
    %80 = vector.shape_cast %79 : vector<8x1xf32> to vector<1x8x1xf32>
    %81 = vector.broadcast %77 : vector<16x1x128xf32> to vector<16x8x128xf32>
    %82 = vector.broadcast %80 : vector<1x8x1xf32> to vector<16x8x128xf32>
    %83 = arith.mulf %81, %82 : vector<16x8x128xf32>
    %84 = arith.addf %76, %83 : vector<16x8x128xf32>
    %85 = vector.extract_strided_slice %45 {offsets = [0, 5, 0], sizes = [16, 1, 128], strides = [1, 1, 1]} : vector<16x8x128xf32> to vector<16x1x128xf32>
    %86 = vector.extract_strided_slice %2 {offsets = [5, 0, 0], sizes = [1, 8, 1], strides = [1, 1, 1]} : vector<24x8x1xf32> to vector<1x8x1xf32>
    %87 = vector.shape_cast %86 : vector<1x8x1xf32> to vector<8x1xf32>
    %88 = vector.shape_cast %87 : vector<8x1xf32> to vector<1x8x1xf32>
    %89 = vector.broadcast %85 : vector<16x1x128xf32> to vector<16x8x128xf32>
    %90 = vector.broadcast %88 : vector<1x8x1xf32> to vector<16x8x128xf32>
    %91 = arith.mulf %89, %90 : vector<16x8x128xf32>
    %92 = arith.addf %84, %91 : vector<16x8x128xf32>
    %93 = vector.extract_strided_slice %45 {offsets = [0, 6, 0], sizes = [16, 1, 128], strides = [1, 1, 1]} : vector<16x8x128xf32> to vector<16x1x128xf32>
    %94 = vector.extract_strided_slice %2 {offsets = [6, 0, 0], sizes = [1, 8, 1], strides = [1, 1, 1]} : vector<24x8x1xf32> to vector<1x8x1xf32>
    %95 = vector.shape_cast %94 : vector<1x8x1xf32> to vector<8x1xf32>
    %96 = vector.shape_cast %95 : vector<8x1xf32> to vector<1x8x1xf32>
    %97 = vector.broadcast %93 : vector<16x1x128xf32> to vector<16x8x128xf32>
    %98 = vector.broadcast %96 : vector<1x8x1xf32> to vector<16x8x128xf32>
    %99 = arith.mulf %97, %98 : vector<16x8x128xf32>
    %100 = arith.addf %92, %99 : vector<16x8x128xf32>
    %101 = vector.extract_strided_slice %45 {offsets = [0, 7, 0], sizes = [16, 1, 128], strides = [1, 1, 1]} : vector<16x8x128xf32> to vector<16x1x128xf32>
    %102 = vector.extract_strided_slice %2 {offsets = [7, 0, 0], sizes = [1, 8, 1], strides = [1, 1, 1]} : vector<24x8x1xf32> to vector<1x8x1xf32>
    %103 = vector.shape_cast %102 : vector<1x8x1xf32> to vector<8x1xf32>
    %104 = vector.shape_cast %103 : vector<8x1xf32> to vector<1x8x1xf32>
    %105 = vector.broadcast %101 : vector<16x1x128xf32> to vector<16x8x128xf32>
    %106 = vector.broadcast %104 : vector<1x8x1xf32> to vector<16x8x128xf32>
    %107 = arith.mulf %105, %106 : vector<16x8x128xf32>
    %108 = arith.addf %100, %107 : vector<16x8x128xf32>
    %109 = vector.extract_strided_slice %45 {offsets = [1, 0, 0], sizes = [15, 8, 128], strides = [1, 1, 1]} : vector<16x8x128xf32> to vector<15x8x128xf32>
    %110 = vector.extract_strided_slice %45 {offsets = [0, 0, 0], sizes = [1, 8, 128], strides = [1, 1, 1]} : vector<16x8x128xf32> to vector<1x8x128xf32>
    %111 = tpu.concatenate %109, %110 in 0 : vector<15x8x128xf32>, vector<1x8x128xf32> -> vector<16x8x128xf32>
    %112 = vector.extract_strided_slice %111 {offsets = [0, 0, 0], sizes = [16, 1, 128], strides = [1, 1, 1]} : vector<16x8x128xf32> to vector<16x1x128xf32>
    %113 = vector.extract_strided_slice %2 {offsets = [8, 0, 0], sizes = [1, 8, 1], strides = [1, 1, 1]} : vector<24x8x1xf32> to vector<1x8x1xf32>
    %114 = vector.shape_cast %113 : vector<1x8x1xf32> to vector<8x1xf32>
    %115 = vector.shape_cast %114 : vector<8x1xf32> to vector<1x8x1xf32>
    %116 = vector.broadcast %112 : vector<16x1x128xf32> to vector<16x8x128xf32>
    %117 = vector.broadcast %115 : vector<1x8x1xf32> to vector<16x8x128xf32>
    %118 = arith.mulf %116, %117 : vector<16x8x128xf32>
    %119 = arith.addf %108, %118 : vector<16x8x128xf32>
    %120 = vector.extract_strided_slice %111 {offsets = [0, 1, 0], sizes = [16, 1, 128], strides = [1, 1, 1]} : vector<16x8x128xf32> to vector<16x1x128xf32>
    %121 = vector.extract_strided_slice %2 {offsets = [9, 0, 0], sizes = [1, 8, 1], strides = [1, 1, 1]} : vector<24x8x1xf32> to vector<1x8x1xf32>
    %122 = vector.shape_cast %121 : vector<1x8x1xf32> to vector<8x1xf32>
    %123 = vector.shape_cast %122 : vector<8x1xf32> to vector<1x8x1xf32>
    %124 = vector.broadcast %120 : vector<16x1x128xf32> to vector<16x8x128xf32>
    %125 = vector.broadcast %123 : vector<1x8x1xf32> to vector<16x8x128xf32>
    %126 = arith.mulf %124, %125 : vector<16x8x128xf32>
    %127 = arith.addf %119, %126 : vector<16x8x128xf32>
    %128 = vector.extract_strided_slice %111 {offsets = [0, 2, 0], sizes = [16, 1, 128], strides = [1, 1, 1]} : vector<16x8x128xf32> to vector<16x1x128xf32>
    %129 = vector.extract_strided_slice %2 {offsets = [10, 0, 0], sizes = [1, 8, 1], strides = [1, 1, 1]} : vector<24x8x1xf32> to vector<1x8x1xf32>
    %130 = vector.shape_cast %129 : vector<1x8x1xf32> to vector<8x1xf32>
    %131 = vector.shape_cast %130 : vector<8x1xf32> to vector<1x8x1xf32>
    %132 = vector.broadcast %128 : vector<16x1x128xf32> to vector<16x8x128xf32>
    %133 = vector.broadcast %131 : vector<1x8x1xf32> to vector<16x8x128xf32>
    %134 = arith.mulf %132, %133 : vector<16x8x128xf32>
    %135 = arith.addf %127, %134 : vector<16x8x128xf32>
    %136 = vector.extract_strided_slice %111 {offsets = [0, 3, 0], sizes = [16, 1, 128], strides = [1, 1, 1]} : vector<16x8x128xf32> to vector<16x1x128xf32>
    %137 = vector.extract_strided_slice %2 {offsets = [11, 0, 0], sizes = [1, 8, 1], strides = [1, 1, 1]} : vector<24x8x1xf32> to vector<1x8x1xf32>
    %138 = vector.shape_cast %137 : vector<1x8x1xf32> to vector<8x1xf32>
    %139 = vector.shape_cast %138 : vector<8x1xf32> to vector<1x8x1xf32>
    %140 = vector.broadcast %136 : vector<16x1x128xf32> to vector<16x8x128xf32>
    %141 = vector.broadcast %139 : vector<1x8x1xf32> to vector<16x8x128xf32>
    %142 = arith.mulf %140, %141 : vector<16x8x128xf32>
    %143 = arith.addf %135, %142 : vector<16x8x128xf32>
    %144 = vector.extract_strided_slice %111 {offsets = [0, 4, 0], sizes = [16, 1, 128], strides = [1, 1, 1]} : vector<16x8x128xf32> to vector<16x1x128xf32>
    %145 = vector.extract_strided_slice %2 {offsets = [12, 0, 0], sizes = [1, 8, 1], strides = [1, 1, 1]} : vector<24x8x1xf32> to vector<1x8x1xf32>
    %146 = vector.shape_cast %145 : vector<1x8x1xf32> to vector<8x1xf32>
    %147 = vector.shape_cast %146 : vector<8x1xf32> to vector<1x8x1xf32>
    %148 = vector.broadcast %144 : vector<16x1x128xf32> to vector<16x8x128xf32>
    %149 = vector.broadcast %147 : vector<1x8x1xf32> to vector<16x8x128xf32>
    %150 = arith.mulf %148, %149 : vector<16x8x128xf32>
    %151 = arith.addf %143, %150 : vector<16x8x128xf32>
    %152 = vector.extract_strided_slice %111 {offsets = [0, 5, 0], sizes = [16, 1, 128], strides = [1, 1, 1]} : vector<16x8x128xf32> to vector<16x1x128xf32>
    %153 = vector.extract_strided_slice %2 {offsets = [13, 0, 0], sizes = [1, 8, 1], strides = [1, 1, 1]} : vector<24x8x1xf32> to vector<1x8x1xf32>
    %154 = vector.shape_cast %153 : vector<1x8x1xf32> to vector<8x1xf32>
    %155 = vector.shape_cast %154 : vector<8x1xf32> to vector<1x8x1xf32>
    %156 = vector.broadcast %152 : vector<16x1x128xf32> to vector<16x8x128xf32>
    %157 = vector.broadcast %155 : vector<1x8x1xf32> to vector<16x8x128xf32>
    %158 = arith.mulf %156, %157 : vector<16x8x128xf32>
    %159 = arith.addf %151, %158 : vector<16x8x128xf32>
    %160 = vector.extract_strided_slice %111 {offsets = [0, 6, 0], sizes = [16, 1, 128], strides = [1, 1, 1]} : vector<16x8x128xf32> to vector<16x1x128xf32>
    %161 = vector.extract_strided_slice %2 {offsets = [14, 0, 0], sizes = [1, 8, 1], strides = [1, 1, 1]} : vector<24x8x1xf32> to vector<1x8x1xf32>
    %162 = vector.shape_cast %161 : vector<1x8x1xf32> to vector<8x1xf32>
    %163 = vector.shape_cast %162 : vector<8x1xf32> to vector<1x8x1xf32>
    %164 = vector.broadcast %160 : vector<16x1x128xf32> to vector<16x8x128xf32>
    %165 = vector.broadcast %163 : vector<1x8x1xf32> to vector<16x8x128xf32>
    %166 = arith.mulf %164, %165 : vector<16x8x128xf32>
    %167 = arith.addf %159, %166 : vector<16x8x128xf32>
    %168 = vector.extract_strided_slice %111 {offsets = [0, 7, 0], sizes = [16, 1, 128], strides = [1, 1, 1]} : vector<16x8x128xf32> to vector<16x1x128xf32>
    %169 = vector.extract_strided_slice %2 {offsets = [15, 0, 0], sizes = [1, 8, 1], strides = [1, 1, 1]} : vector<24x8x1xf32> to vector<1x8x1xf32>
    %170 = vector.shape_cast %169 : vector<1x8x1xf32> to vector<8x1xf32>
    %171 = vector.shape_cast %170 : vector<8x1xf32> to vector<1x8x1xf32>
    %172 = vector.broadcast %168 : vector<16x1x128xf32> to vector<16x8x128xf32>
    %173 = vector.broadcast %171 : vector<1x8x1xf32> to vector<16x8x128xf32>
    %174 = arith.mulf %172, %173 : vector<16x8x128xf32>
    %175 = arith.addf %167, %174 : vector<16x8x128xf32>
    %176 = vector.extract_strided_slice %45 {offsets = [2, 0, 0], sizes = [14, 8, 128], strides = [1, 1, 1]} : vector<16x8x128xf32> to vector<14x8x128xf32>
    %177 = vector.extract_strided_slice %45 {offsets = [0, 0, 0], sizes = [2, 8, 128], strides = [1, 1, 1]} : vector<16x8x128xf32> to vector<2x8x128xf32>
    %178 = tpu.concatenate %176, %177 in 0 : vector<14x8x128xf32>, vector<2x8x128xf32> -> vector<16x8x128xf32>
    %179 = vector.extract_strided_slice %178 {offsets = [0, 0, 0], sizes = [16, 1, 128], strides = [1, 1, 1]} : vector<16x8x128xf32> to vector<16x1x128xf32>
    %180 = vector.extract_strided_slice %2 {offsets = [16, 0, 0], sizes = [1, 8, 1], strides = [1, 1, 1]} : vector<24x8x1xf32> to vector<1x8x1xf32>
    %181 = vector.shape_cast %180 : vector<1x8x1xf32> to vector<8x1xf32>
    %182 = vector.shape_cast %181 : vector<8x1xf32> to vector<1x8x1xf32>
    %183 = vector.broadcast %179 : vector<16x1x128xf32> to vector<16x8x128xf32>
    %184 = vector.broadcast %182 : vector<1x8x1xf32> to vector<16x8x128xf32>
    %185 = arith.mulf %183, %184 : vector<16x8x128xf32>
    %186 = arith.addf %175, %185 : vector<16x8x128xf32>
    %187 = vector.extract_strided_slice %178 {offsets = [0, 1, 0], sizes = [16, 1, 128], strides = [1, 1, 1]} : vector<16x8x128xf32> to vector<16x1x128xf32>
    %188 = vector.extract_strided_slice %2 {offsets = [17, 0, 0], sizes = [1, 8, 1], strides = [1, 1, 1]} : vector<24x8x1xf32> to vector<1x8x1xf32>
    %189 = vector.shape_cast %188 : vector<1x8x1xf32> to vector<8x1xf32>
    %190 = vector.shape_cast %189 : vector<8x1xf32> to vector<1x8x1xf32>
    %191 = vector.broadcast %187 : vector<16x1x128xf32> to vector<16x8x128xf32>
    %192 = vector.broadcast %190 : vector<1x8x1xf32> to vector<16x8x128xf32>
    %193 = arith.mulf %191, %192 : vector<16x8x128xf32>
    %194 = arith.addf %186, %193 : vector<16x8x128xf32>
    %195 = vector.extract_strided_slice %178 {offsets = [0, 2, 0], sizes = [16, 1, 128], strides = [1, 1, 1]} : vector<16x8x128xf32> to vector<16x1x128xf32>
    %196 = vector.extract_strided_slice %2 {offsets = [18, 0, 0], sizes = [1, 8, 1], strides = [1, 1, 1]} : vector<24x8x1xf32> to vector<1x8x1xf32>
    %197 = vector.shape_cast %196 : vector<1x8x1xf32> to vector<8x1xf32>
    %198 = vector.shape_cast %197 : vector<8x1xf32> to vector<1x8x1xf32>
    %199 = vector.broadcast %195 : vector<16x1x128xf32> to vector<16x8x128xf32>
    %200 = vector.broadcast %198 : vector<1x8x1xf32> to vector<16x8x128xf32>
    %201 = arith.mulf %199, %200 : vector<16x8x128xf32>
    %202 = arith.addf %194, %201 : vector<16x8x128xf32>
    %203 = vector.extract_strided_slice %178 {offsets = [0, 3, 0], sizes = [16, 1, 128], strides = [1, 1, 1]} : vector<16x8x128xf32> to vector<16x1x128xf32>
    %204 = vector.extract_strided_slice %2 {offsets = [19, 0, 0], sizes = [1, 8, 1], strides = [1, 1, 1]} : vector<24x8x1xf32> to vector<1x8x1xf32>
    %205 = vector.shape_cast %204 : vector<1x8x1xf32> to vector<8x1xf32>
    %206 = vector.shape_cast %205 : vector<8x1xf32> to vector<1x8x1xf32>
    %207 = vector.broadcast %203 : vector<16x1x128xf32> to vector<16x8x128xf32>
    %208 = vector.broadcast %206 : vector<1x8x1xf32> to vector<16x8x128xf32>
    %209 = arith.mulf %207, %208 : vector<16x8x128xf32>
    %210 = arith.addf %202, %209 : vector<16x8x128xf32>
    %211 = vector.extract_strided_slice %178 {offsets = [0, 4, 0], sizes = [16, 1, 128], strides = [1, 1, 1]} : vector<16x8x128xf32> to vector<16x1x128xf32>
    %212 = vector.extract_strided_slice %2 {offsets = [20, 0, 0], sizes = [1, 8, 1], strides = [1, 1, 1]} : vector<24x8x1xf32> to vector<1x8x1xf32>
    %213 = vector.shape_cast %212 : vector<1x8x1xf32> to vector<8x1xf32>
    %214 = vector.shape_cast %213 : vector<8x1xf32> to vector<1x8x1xf32>
    %215 = vector.broadcast %211 : vector<16x1x128xf32> to vector<16x8x128xf32>
    %216 = vector.broadcast %214 : vector<1x8x1xf32> to vector<16x8x128xf32>
    %217 = arith.mulf %215, %216 : vector<16x8x128xf32>
    %218 = arith.addf %210, %217 : vector<16x8x128xf32>
    %219 = vector.extract_strided_slice %178 {offsets = [0, 5, 0], sizes = [16, 1, 128], strides = [1, 1, 1]} : vector<16x8x128xf32> to vector<16x1x128xf32>
    %220 = vector.extract_strided_slice %2 {offsets = [21, 0, 0], sizes = [1, 8, 1], strides = [1, 1, 1]} : vector<24x8x1xf32> to vector<1x8x1xf32>
    %221 = vector.shape_cast %220 : vector<1x8x1xf32> to vector<8x1xf32>
    %222 = vector.shape_cast %221 : vector<8x1xf32> to vector<1x8x1xf32>
    %223 = vector.broadcast %219 : vector<16x1x128xf32> to vector<16x8x128xf32>
    %224 = vector.broadcast %222 : vector<1x8x1xf32> to vector<16x8x128xf32>
    %225 = arith.mulf %223, %224 : vector<16x8x128xf32>
    %226 = arith.addf %218, %225 : vector<16x8x128xf32>
    %227 = vector.extract_strided_slice %178 {offsets = [0, 6, 0], sizes = [16, 1, 128], strides = [1, 1, 1]} : vector<16x8x128xf32> to vector<16x1x128xf32>
    %228 = vector.extract_strided_slice %2 {offsets = [22, 0, 0], sizes = [1, 8, 1], strides = [1, 1, 1]} : vector<24x8x1xf32> to vector<1x8x1xf32>
    %229 = vector.shape_cast %228 : vector<1x8x1xf32> to vector<8x1xf32>
    %230 = vector.shape_cast %229 : vector<8x1xf32> to vector<1x8x1xf32>
    %231 = vector.broadcast %227 : vector<16x1x128xf32> to vector<16x8x128xf32>
    %232 = vector.broadcast %230 : vector<1x8x1xf32> to vector<16x8x128xf32>
    %233 = arith.mulf %231, %232 : vector<16x8x128xf32>
    %234 = arith.addf %226, %233 : vector<16x8x128xf32>
    %235 = vector.extract_strided_slice %178 {offsets = [0, 7, 0], sizes = [16, 1, 128], strides = [1, 1, 1]} : vector<16x8x128xf32> to vector<16x1x128xf32>
    %236 = vector.extract_strided_slice %2 {offsets = [23, 0, 0], sizes = [1, 8, 1], strides = [1, 1, 1]} : vector<24x8x1xf32> to vector<1x8x1xf32>
    %237 = vector.shape_cast %236 : vector<1x8x1xf32> to vector<8x1xf32>
    %238 = vector.shape_cast %237 : vector<8x1xf32> to vector<1x8x1xf32>
    %239 = vector.broadcast %235 : vector<16x1x128xf32> to vector<16x8x128xf32>
    %240 = vector.broadcast %238 : vector<1x8x1xf32> to vector<16x8x128xf32>
    %241 = arith.mulf %239, %240 : vector<16x8x128xf32>
    %242 = arith.addf %234, %241 : vector<16x8x128xf32>
    %243 = vector.broadcast %3 : vector<1x8x1xf32> to vector<16x8x128xf32>
    %244 = arith.addf %242, %243 : vector<16x8x128xf32>
    %c0_38 = arith.constant 0 : index
    %c0_39 = arith.constant 0 : index
    %c0_40 = arith.constant 0 : index
    %245 = vector.load %arg14[%c0_38, %c0_39, %c0_40] : memref<16x8x128xf32, #tpu.memory_space<vmem>>, vector<16x8x128xf32>
    tpu.vector_store %arg14[%c0_38, %c0_39, %c0_40], %244 {strides = array<i32>} : memref<16x8x128xf32, #tpu.memory_space<vmem>>, vector<16x8x128xf32>,
    %246 = vector.extract_strided_slice %244 {offsets = [0, 0, 0], sizes = [16, 1, 128], strides = [1, 1, 1]} : vector<16x8x128xf32> to vector<16x1x128xf32>
    %247 = vector.extract_strided_slice %6 {offsets = [0, 0, 0], sizes = [1, 8, 1], strides = [1, 1, 1]} : vector<24x8x1xf32> to vector<1x8x1xf32>
    %248 = vector.shape_cast %247 : vector<1x8x1xf32> to vector<8x1xf32>
    %249 = vector.shape_cast %248 : vector<8x1xf32> to vector<1x8x1xf32>
    %250 = vector.broadcast %246 : vector<16x1x128xf32> to vector<16x8x128xf32>
    %251 = vector.broadcast %249 : vector<1x8x1xf32> to vector<16x8x128xf32>
    %252 = arith.mulf %250, %251 : vector<16x8x128xf32>
    %253 = vector.extract_strided_slice %244 {offsets = [0, 1, 0], sizes = [16, 1, 128], strides = [1, 1, 1]} : vector<16x8x128xf32> to vector<16x1x128xf32>
    %254 = vector.extract_strided_slice %6 {offsets = [1, 0, 0], sizes = [1, 8, 1], strides = [1, 1, 1]} : vector<24x8x1xf32> to vector<1x8x1xf32>
    %255 = vector.shape_cast %254 : vector<1x8x1xf32> to vector<8x1xf32>
    %256 = vector.shape_cast %255 : vector<8x1xf32> to vector<1x8x1xf32>
    %257 = vector.broadcast %253 : vector<16x1x128xf32> to vector<16x8x128xf32>
    %258 = vector.broadcast %256 : vector<1x8x1xf32> to vector<16x8x128xf32>
    %259 = arith.mulf %257, %258 : vector<16x8x128xf32>
    %260 = arith.addf %252, %259 : vector<16x8x128xf32>
    %261 = vector.extract_strided_slice %244 {offsets = [0, 2, 0], sizes = [16, 1, 128], strides = [1, 1, 1]} : vector<16x8x128xf32> to vector<16x1x128xf32>
    %262 = vector.extract_strided_slice %6 {offsets = [2, 0, 0], sizes = [1, 8, 1], strides = [1, 1, 1]} : vector<24x8x1xf32> to vector<1x8x1xf32>
    %263 = vector.shape_cast %262 : vector<1x8x1xf32> to vector<8x1xf32>
    %264 = vector.shape_cast %263 : vector<8x1xf32> to vector<1x8x1xf32>
    %265 = vector.broadcast %261 : vector<16x1x128xf32> to vector<16x8x128xf32>
    %266 = vector.broadcast %264 : vector<1x8x1xf32> to vector<16x8x128xf32>
    %267 = arith.mulf %265, %266 : vector<16x8x128xf32>
    %268 = arith.addf %260, %267 : vector<16x8x128xf32>
    %269 = vector.extract_strided_slice %244 {offsets = [0, 3, 0], sizes = [16, 1, 128], strides = [1, 1, 1]} : vector<16x8x128xf32> to vector<16x1x128xf32>
    %270 = vector.extract_strided_slice %6 {offsets = [3, 0, 0], sizes = [1, 8, 1], strides = [1, 1, 1]} : vector<24x8x1xf32> to vector<1x8x1xf32>
    %271 = vector.shape_cast %270 : vector<1x8x1xf32> to vector<8x1xf32>
    %272 = vector.shape_cast %271 : vector<8x1xf32> to vector<1x8x1xf32>
    %273 = vector.broadcast %269 : vector<16x1x128xf32> to vector<16x8x128xf32>
    %274 = vector.broadcast %272 : vector<1x8x1xf32> to vector<16x8x128xf32>
    %275 = arith.mulf %273, %274 : vector<16x8x128xf32>
    %276 = arith.addf %268, %275 : vector<16x8x128xf32>
    %277 = vector.extract_strided_slice %244 {offsets = [0, 4, 0], sizes = [16, 1, 128], strides = [1, 1, 1]} : vector<16x8x128xf32> to vector<16x1x128xf32>
    %278 = vector.extract_strided_slice %6 {offsets = [4, 0, 0], sizes = [1, 8, 1], strides = [1, 1, 1]} : vector<24x8x1xf32> to vector<1x8x1xf32>
    %279 = vector.shape_cast %278 : vector<1x8x1xf32> to vector<8x1xf32>
    %280 = vector.shape_cast %279 : vector<8x1xf32> to vector<1x8x1xf32>
    %281 = vector.broadcast %277 : vector<16x1x128xf32> to vector<16x8x128xf32>
    %282 = vector.broadcast %280 : vector<1x8x1xf32> to vector<16x8x128xf32>
    %283 = arith.mulf %281, %282 : vector<16x8x128xf32>
    %284 = arith.addf %276, %283 : vector<16x8x128xf32>
    %285 = vector.extract_strided_slice %244 {offsets = [0, 5, 0], sizes = [16, 1, 128], strides = [1, 1, 1]} : vector<16x8x128xf32> to vector<16x1x128xf32>
    %286 = vector.extract_strided_slice %6 {offsets = [5, 0, 0], sizes = [1, 8, 1], strides = [1, 1, 1]} : vector<24x8x1xf32> to vector<1x8x1xf32>
    %287 = vector.shape_cast %286 : vector<1x8x1xf32> to vector<8x1xf32>
    %288 = vector.shape_cast %287 : vector<8x1xf32> to vector<1x8x1xf32>
    %289 = vector.broadcast %285 : vector<16x1x128xf32> to vector<16x8x128xf32>
    %290 = vector.broadcast %288 : vector<1x8x1xf32> to vector<16x8x128xf32>
    %291 = arith.mulf %289, %290 : vector<16x8x128xf32>
    %292 = arith.addf %284, %291 : vector<16x8x128xf32>
    %293 = vector.extract_strided_slice %244 {offsets = [0, 6, 0], sizes = [16, 1, 128], strides = [1, 1, 1]} : vector<16x8x128xf32> to vector<16x1x128xf32>
    %294 = vector.extract_strided_slice %6 {offsets = [6, 0, 0], sizes = [1, 8, 1], strides = [1, 1, 1]} : vector<24x8x1xf32> to vector<1x8x1xf32>
    %295 = vector.shape_cast %294 : vector<1x8x1xf32> to vector<8x1xf32>
    %296 = vector.shape_cast %295 : vector<8x1xf32> to vector<1x8x1xf32>
    %297 = vector.broadcast %293 : vector<16x1x128xf32> to vector<16x8x128xf32>
    %298 = vector.broadcast %296 : vector<1x8x1xf32> to vector<16x8x128xf32>
    %299 = arith.mulf %297, %298 : vector<16x8x128xf32>
    %300 = arith.addf %292, %299 : vector<16x8x128xf32>
    %301 = vector.extract_strided_slice %244 {offsets = [0, 7, 0], sizes = [16, 1, 128], strides = [1, 1, 1]} : vector<16x8x128xf32> to vector<16x1x128xf32>
    %302 = vector.extract_strided_slice %6 {offsets = [7, 0, 0], sizes = [1, 8, 1], strides = [1, 1, 1]} : vector<24x8x1xf32> to vector<1x8x1xf32>
    %303 = vector.shape_cast %302 : vector<1x8x1xf32> to vector<8x1xf32>
    %304 = vector.shape_cast %303 : vector<8x1xf32> to vector<1x8x1xf32>
    %305 = vector.broadcast %301 : vector<16x1x128xf32> to vector<16x8x128xf32>
    %306 = vector.broadcast %304 : vector<1x8x1xf32> to vector<16x8x128xf32>
    %307 = arith.mulf %305, %306 : vector<16x8x128xf32>
    %308 = arith.addf %300, %307 : vector<16x8x128xf32>
    %309 = vector.extract_strided_slice %244 {offsets = [1, 0, 0], sizes = [15, 8, 128], strides = [1, 1, 1]} : vector<16x8x128xf32> to vector<15x8x128xf32>
    %310 = vector.extract_strided_slice %244 {offsets = [0, 0, 0], sizes = [1, 8, 128], strides = [1, 1, 1]} : vector<16x8x128xf32> to vector<1x8x128xf32>
    %311 = tpu.concatenate %309, %310 in 0 : vector<15x8x128xf32>, vector<1x8x128xf32> -> vector<16x8x128xf32>
    %312 = vector.extract_strided_slice %311 {offsets = [0, 0, 0], sizes = [16, 1, 128], strides = [1, 1, 1]} : vector<16x8x128xf32> to vector<16x1x128xf32>
    %313 = vector.extract_strided_slice %6 {offsets = [8, 0, 0], sizes = [1, 8, 1], strides = [1, 1, 1]} : vector<24x8x1xf32> to vector<1x8x1xf32>
    %314 = vector.shape_cast %313 : vector<1x8x1xf32> to vector<8x1xf32>
    %315 = vector.shape_cast %314 : vector<8x1xf32> to vector<1x8x1xf32>
    %316 = vector.broadcast %312 : vector<16x1x128xf32> to vector<16x8x128xf32>
    %317 = vector.broadcast %315 : vector<1x8x1xf32> to vector<16x8x128xf32>
    %318 = arith.mulf %316, %317 : vector<16x8x128xf32>
    %319 = arith.addf %308, %318 : vector<16x8x128xf32>
    %320 = vector.extract_strided_slice %311 {offsets = [0, 1, 0], sizes = [16, 1, 128], strides = [1, 1, 1]} : vector<16x8x128xf32> to vector<16x1x128xf32>
    %321 = vector.extract_strided_slice %6 {offsets = [9, 0, 0], sizes = [1, 8, 1], strides = [1, 1, 1]} : vector<24x8x1xf32> to vector<1x8x1xf32>
    %322 = vector.shape_cast %321 : vector<1x8x1xf32> to vector<8x1xf32>
    %323 = vector.shape_cast %322 : vector<8x1xf32> to vector<1x8x1xf32>
    %324 = vector.broadcast %320 : vector<16x1x128xf32> to vector<16x8x128xf32>
    %325 = vector.broadcast %323 : vector<1x8x1xf32> to vector<16x8x128xf32>
    %326 = arith.mulf %324, %325 : vector<16x8x128xf32>
    %327 = arith.addf %319, %326 : vector<16x8x128xf32>
    %328 = vector.extract_strided_slice %311 {offsets = [0, 2, 0], sizes = [16, 1, 128], strides = [1, 1, 1]} : vector<16x8x128xf32> to vector<16x1x128xf32>
    %329 = vector.extract_strided_slice %6 {offsets = [10, 0, 0], sizes = [1, 8, 1], strides = [1, 1, 1]} : vector<24x8x1xf32> to vector<1x8x1xf32>
    %330 = vector.shape_cast %329 : vector<1x8x1xf32> to vector<8x1xf32>
    %331 = vector.shape_cast %330 : vector<8x1xf32> to vector<1x8x1xf32>
    %332 = vector.broadcast %328 : vector<16x1x128xf32> to vector<16x8x128xf32>
    %333 = vector.broadcast %331 : vector<1x8x1xf32> to vector<16x8x128xf32>
    %334 = arith.mulf %332, %333 : vector<16x8x128xf32>
    %335 = arith.addf %327, %334 : vector<16x8x128xf32>
    %336 = vector.extract_strided_slice %311 {offsets = [0, 3, 0], sizes = [16, 1, 128], strides = [1, 1, 1]} : vector<16x8x128xf32> to vector<16x1x128xf32>
    %337 = vector.extract_strided_slice %6 {offsets = [11, 0, 0], sizes = [1, 8, 1], strides = [1, 1, 1]} : vector<24x8x1xf32> to vector<1x8x1xf32>
    %338 = vector.shape_cast %337 : vector<1x8x1xf32> to vector<8x1xf32>
    %339 = vector.shape_cast %338 : vector<8x1xf32> to vector<1x8x1xf32>
    %340 = vector.broadcast %336 : vector<16x1x128xf32> to vector<16x8x128xf32>
    %341 = vector.broadcast %339 : vector<1x8x1xf32> to vector<16x8x128xf32>
    %342 = arith.mulf %340, %341 : vector<16x8x128xf32>
    %343 = arith.addf %335, %342 : vector<16x8x128xf32>
    %344 = vector.extract_strided_slice %311 {offsets = [0, 4, 0], sizes = [16, 1, 128], strides = [1, 1, 1]} : vector<16x8x128xf32> to vector<16x1x128xf32>
    %345 = vector.extract_strided_slice %6 {offsets = [12, 0, 0], sizes = [1, 8, 1], strides = [1, 1, 1]} : vector<24x8x1xf32> to vector<1x8x1xf32>
    %346 = vector.shape_cast %345 : vector<1x8x1xf32> to vector<8x1xf32>
    %347 = vector.shape_cast %346 : vector<8x1xf32> to vector<1x8x1xf32>
    %348 = vector.broadcast %344 : vector<16x1x128xf32> to vector<16x8x128xf32>
    %349 = vector.broadcast %347 : vector<1x8x1xf32> to vector<16x8x128xf32>
    %350 = arith.mulf %348, %349 : vector<16x8x128xf32>
    %351 = arith.addf %343, %350 : vector<16x8x128xf32>
    %352 = vector.extract_strided_slice %311 {offsets = [0, 5, 0], sizes = [16, 1, 128], strides = [1, 1, 1]} : vector<16x8x128xf32> to vector<16x1x128xf32>
    %353 = vector.extract_strided_slice %6 {offsets = [13, 0, 0], sizes = [1, 8, 1], strides = [1, 1, 1]} : vector<24x8x1xf32> to vector<1x8x1xf32>
    %354 = vector.shape_cast %353 : vector<1x8x1xf32> to vector<8x1xf32>
    %355 = vector.shape_cast %354 : vector<8x1xf32> to vector<1x8x1xf32>
    %356 = vector.broadcast %352 : vector<16x1x128xf32> to vector<16x8x128xf32>
    %357 = vector.broadcast %355 : vector<1x8x1xf32> to vector<16x8x128xf32>
    %358 = arith.mulf %356, %357 : vector<16x8x128xf32>
    %359 = arith.addf %351, %358 : vector<16x8x128xf32>
    %360 = vector.extract_strided_slice %311 {offsets = [0, 6, 0], sizes = [16, 1, 128], strides = [1, 1, 1]} : vector<16x8x128xf32> to vector<16x1x128xf32>
    %361 = vector.extract_strided_slice %6 {offsets = [14, 0, 0], sizes = [1, 8, 1], strides = [1, 1, 1]} : vector<24x8x1xf32> to vector<1x8x1xf32>
    %362 = vector.shape_cast %361 : vector<1x8x1xf32> to vector<8x1xf32>
    %363 = vector.shape_cast %362 : vector<8x1xf32> to vector<1x8x1xf32>
    %364 = vector.broadcast %360 : vector<16x1x128xf32> to vector<16x8x128xf32>
    %365 = vector.broadcast %363 : vector<1x8x1xf32> to vector<16x8x128xf32>
    %366 = arith.mulf %364, %365 : vector<16x8x128xf32>
    %367 = arith.addf %359, %366 : vector<16x8x128xf32>
    %368 = vector.extract_strided_slice %311 {offsets = [0, 7, 0], sizes = [16, 1, 128], strides = [1, 1, 1]} : vector<16x8x128xf32> to vector<16x1x128xf32>
    %369 = vector.extract_strided_slice %6 {offsets = [15, 0, 0], sizes = [1, 8, 1], strides = [1, 1, 1]} : vector<24x8x1xf32> to vector<1x8x1xf32>
    %370 = vector.shape_cast %369 : vector<1x8x1xf32> to vector<8x1xf32>
    %371 = vector.shape_cast %370 : vector<8x1xf32> to vector<1x8x1xf32>
    %372 = vector.broadcast %368 : vector<16x1x128xf32> to vector<16x8x128xf32>
    %373 = vector.broadcast %371 : vector<1x8x1xf32> to vector<16x8x128xf32>
    %374 = arith.mulf %372, %373 : vector<16x8x128xf32>
    %375 = arith.addf %367, %374 : vector<16x8x128xf32>
    %376 = vector.extract_strided_slice %244 {offsets = [2, 0, 0], sizes = [14, 8, 128], strides = [1, 1, 1]} : vector<16x8x128xf32> to vector<14x8x128xf32>
    %377 = vector.extract_strided_slice %244 {offsets = [0, 0, 0], sizes = [2, 8, 128], strides = [1, 1, 1]} : vector<16x8x128xf32> to vector<2x8x128xf32>
    %378 = tpu.concatenate %376, %377 in 0 : vector<14x8x128xf32>, vector<2x8x128xf32> -> vector<16x8x128xf32>
    %379 = vector.extract_strided_slice %378 {offsets = [0, 0, 0], sizes = [16, 1, 128], strides = [1, 1, 1]} : vector<16x8x128xf32> to vector<16x1x128xf32>
    %380 = vector.extract_strided_slice %6 {offsets = [16, 0, 0], sizes = [1, 8, 1], strides = [1, 1, 1]} : vector<24x8x1xf32> to vector<1x8x1xf32>
    %381 = vector.shape_cast %380 : vector<1x8x1xf32> to vector<8x1xf32>
    %382 = vector.shape_cast %381 : vector<8x1xf32> to vector<1x8x1xf32>
    %383 = vector.broadcast %379 : vector<16x1x128xf32> to vector<16x8x128xf32>
    %384 = vector.broadcast %382 : vector<1x8x1xf32> to vector<16x8x128xf32>
    %385 = arith.mulf %383, %384 : vector<16x8x128xf32>
    %386 = arith.addf %375, %385 : vector<16x8x128xf32>
    %387 = vector.extract_strided_slice %378 {offsets = [0, 1, 0], sizes = [16, 1, 128], strides = [1, 1, 1]} : vector<16x8x128xf32> to vector<16x1x128xf32>
    %388 = vector.extract_strided_slice %6 {offsets = [17, 0, 0], sizes = [1, 8, 1], strides = [1, 1, 1]} : vector<24x8x1xf32> to vector<1x8x1xf32>
    %389 = vector.shape_cast %388 : vector<1x8x1xf32> to vector<8x1xf32>
    %390 = vector.shape_cast %389 : vector<8x1xf32> to vector<1x8x1xf32>
    %391 = vector.broadcast %387 : vector<16x1x128xf32> to vector<16x8x128xf32>
    %392 = vector.broadcast %390 : vector<1x8x1xf32> to vector<16x8x128xf32>
    %393 = arith.mulf %391, %392 : vector<16x8x128xf32>
    %394 = arith.addf %386, %393 : vector<16x8x128xf32>
    %395 = vector.extract_strided_slice %378 {offsets = [0, 2, 0], sizes = [16, 1, 128], strides = [1, 1, 1]} : vector<16x8x128xf32> to vector<16x1x128xf32>
    %396 = vector.extract_strided_slice %6 {offsets = [18, 0, 0], sizes = [1, 8, 1], strides = [1, 1, 1]} : vector<24x8x1xf32> to vector<1x8x1xf32>
    %397 = vector.shape_cast %396 : vector<1x8x1xf32> to vector<8x1xf32>
    %398 = vector.shape_cast %397 : vector<8x1xf32> to vector<1x8x1xf32>
    %399 = vector.broadcast %395 : vector<16x1x128xf32> to vector<16x8x128xf32>
    %400 = vector.broadcast %398 : vector<1x8x1xf32> to vector<16x8x128xf32>
    %401 = arith.mulf %399, %400 : vector<16x8x128xf32>
    %402 = arith.addf %394, %401 : vector<16x8x128xf32>
    %403 = vector.extract_strided_slice %378 {offsets = [0, 3, 0], sizes = [16, 1, 128], strides = [1, 1, 1]} : vector<16x8x128xf32> to vector<16x1x128xf32>
    %404 = vector.extract_strided_slice %6 {offsets = [19, 0, 0], sizes = [1, 8, 1], strides = [1, 1, 1]} : vector<24x8x1xf32> to vector<1x8x1xf32>
    %405 = vector.shape_cast %404 : vector<1x8x1xf32> to vector<8x1xf32>
    %406 = vector.shape_cast %405 : vector<8x1xf32> to vector<1x8x1xf32>
    %407 = vector.broadcast %403 : vector<16x1x128xf32> to vector<16x8x128xf32>
    %408 = vector.broadcast %406 : vector<1x8x1xf32> to vector<16x8x128xf32>
    %409 = arith.mulf %407, %408 : vector<16x8x128xf32>
    %410 = arith.addf %402, %409 : vector<16x8x128xf32>
    %411 = vector.extract_strided_slice %378 {offsets = [0, 4, 0], sizes = [16, 1, 128], strides = [1, 1, 1]} : vector<16x8x128xf32> to vector<16x1x128xf32>
    %412 = vector.extract_strided_slice %6 {offsets = [20, 0, 0], sizes = [1, 8, 1], strides = [1, 1, 1]} : vector<24x8x1xf32> to vector<1x8x1xf32>
    %413 = vector.shape_cast %412 : vector<1x8x1xf32> to vector<8x1xf32>
    %414 = vector.shape_cast %413 : vector<8x1xf32> to vector<1x8x1xf32>
    %415 = vector.broadcast %411 : vector<16x1x128xf32> to vector<16x8x128xf32>
    %416 = vector.broadcast %414 : vector<1x8x1xf32> to vector<16x8x128xf32>
    %417 = arith.mulf %415, %416 : vector<16x8x128xf32>
    %418 = arith.addf %410, %417 : vector<16x8x128xf32>
    %419 = vector.extract_strided_slice %378 {offsets = [0, 5, 0], sizes = [16, 1, 128], strides = [1, 1, 1]} : vector<16x8x128xf32> to vector<16x1x128xf32>
    %420 = vector.extract_strided_slice %6 {offsets = [21, 0, 0], sizes = [1, 8, 1], strides = [1, 1, 1]} : vector<24x8x1xf32> to vector<1x8x1xf32>
    %421 = vector.shape_cast %420 : vector<1x8x1xf32> to vector<8x1xf32>
    %422 = vector.shape_cast %421 : vector<8x1xf32> to vector<1x8x1xf32>
    %423 = vector.broadcast %419 : vector<16x1x128xf32> to vector<16x8x128xf32>
    %424 = vector.broadcast %422 : vector<1x8x1xf32> to vector<16x8x128xf32>
    %425 = arith.mulf %423, %424 : vector<16x8x128xf32>
    %426 = arith.addf %418, %425 : vector<16x8x128xf32>
    %427 = vector.extract_strided_slice %378 {offsets = [0, 6, 0], sizes = [16, 1, 128], strides = [1, 1, 1]} : vector<16x8x128xf32> to vector<16x1x128xf32>
    %428 = vector.extract_strided_slice %6 {offsets = [22, 0, 0], sizes = [1, 8, 1], strides = [1, 1, 1]} : vector<24x8x1xf32> to vector<1x8x1xf32>
    %429 = vector.shape_cast %428 : vector<1x8x1xf32> to vector<8x1xf32>
    %430 = vector.shape_cast %429 : vector<8x1xf32> to vector<1x8x1xf32>
    %431 = vector.broadcast %427 : vector<16x1x128xf32> to vector<16x8x128xf32>
    %432 = vector.broadcast %430 : vector<1x8x1xf32> to vector<16x8x128xf32>
    %433 = arith.mulf %431, %432 : vector<16x8x128xf32>
    %434 = arith.addf %426, %433 : vector<16x8x128xf32>
    %435 = vector.extract_strided_slice %378 {offsets = [0, 7, 0], sizes = [16, 1, 128], strides = [1, 1, 1]} : vector<16x8x128xf32> to vector<16x1x128xf32>
    %436 = vector.extract_strided_slice %6 {offsets = [23, 0, 0], sizes = [1, 8, 1], strides = [1, 1, 1]} : vector<24x8x1xf32> to vector<1x8x1xf32>
    %437 = vector.shape_cast %436 : vector<1x8x1xf32> to vector<8x1xf32>
    %438 = vector.shape_cast %437 : vector<8x1xf32> to vector<1x8x1xf32>
    %439 = vector.broadcast %435 : vector<16x1x128xf32> to vector<16x8x128xf32>
    %440 = vector.broadcast %438 : vector<1x8x1xf32> to vector<16x8x128xf32>
    %441 = arith.mulf %439, %440 : vector<16x8x128xf32>
    %442 = arith.addf %434, %441 : vector<16x8x128xf32>
    %443 = vector.broadcast %7 : vector<1x8x1xf32> to vector<16x8x128xf32>
    %444 = arith.addf %442, %443 : vector<16x8x128xf32>
    %445 = vector.extract_strided_slice %444 {offsets = [1, 0, 0], sizes = [15, 8, 128], strides = [1, 1, 1]} : vector<16x8x128xf32> to vector<15x8x128xf32>
    %446 = vector.extract_strided_slice %444 {offsets = [0, 0, 0], sizes = [1, 8, 128], strides = [1, 1, 1]} : vector<16x8x128xf32> to vector<1x8x128xf32>
    %447 = tpu.concatenate %445, %446 in 0 : vector<15x8x128xf32>, vector<1x8x128xf32> -> vector<16x8x128xf32>
    %448 = arith.maximumf %444, %447 : vector<16x8x128xf32>
    %449 = vector.extract_strided_slice %444 {offsets = [2, 0, 0], sizes = [14, 8, 128], strides = [1, 1, 1]} : vector<16x8x128xf32> to vector<14x8x128xf32>
    %450 = vector.extract_strided_slice %444 {offsets = [0, 0, 0], sizes = [2, 8, 128], strides = [1, 1, 1]} : vector<16x8x128xf32> to vector<2x8x128xf32>
    %451 = tpu.concatenate %449, %450 in 0 : vector<14x8x128xf32>, vector<2x8x128xf32> -> vector<16x8x128xf32>
    %452 = arith.maximumf %448, %451 : vector<16x8x128xf32>
    %453 = vector.extract_strided_slice %244 {offsets = [0, 0, 0], sizes = [16, 1, 128], strides = [1, 1, 1]} : vector<16x8x128xf32> to vector<16x1x128xf32>
    %454 = vector.extract_strided_slice %4 {offsets = [0, 0, 0], sizes = [1, 8, 1], strides = [1, 1, 1]} : vector<8x8x1xf32> to vector<1x8x1xf32>
    %455 = vector.shape_cast %454 : vector<1x8x1xf32> to vector<8x1xf32>
    %456 = vector.shape_cast %455 : vector<8x1xf32> to vector<1x8x1xf32>
    %457 = vector.broadcast %453 : vector<16x1x128xf32> to vector<16x8x128xf32>
    %458 = vector.broadcast %456 : vector<1x8x1xf32> to vector<16x8x128xf32>
    %459 = arith.mulf %457, %458 : vector<16x8x128xf32>
    %460 = vector.extract_strided_slice %244 {offsets = [0, 1, 0], sizes = [16, 1, 128], strides = [1, 1, 1]} : vector<16x8x128xf32> to vector<16x1x128xf32>
    %461 = vector.extract_strided_slice %4 {offsets = [1, 0, 0], sizes = [1, 8, 1], strides = [1, 1, 1]} : vector<8x8x1xf32> to vector<1x8x1xf32>
    %462 = vector.shape_cast %461 : vector<1x8x1xf32> to vector<8x1xf32>
    %463 = vector.shape_cast %462 : vector<8x1xf32> to vector<1x8x1xf32>
    %464 = vector.broadcast %460 : vector<16x1x128xf32> to vector<16x8x128xf32>
    %465 = vector.broadcast %463 : vector<1x8x1xf32> to vector<16x8x128xf32>
    %466 = arith.mulf %464, %465 : vector<16x8x128xf32>
    %467 = arith.addf %459, %466 : vector<16x8x128xf32>
    %468 = vector.extract_strided_slice %244 {offsets = [0, 2, 0], sizes = [16, 1, 128], strides = [1, 1, 1]} : vector<16x8x128xf32> to vector<16x1x128xf32>
    %469 = vector.extract_strided_slice %4 {offsets = [2, 0, 0], sizes = [1, 8, 1], strides = [1, 1, 1]} : vector<8x8x1xf32> to vector<1x8x1xf32>
    %470 = vector.shape_cast %469 : vector<1x8x1xf32> to vector<8x1xf32>
    %471 = vector.shape_cast %470 : vector<8x1xf32> to vector<1x8x1xf32>
    %472 = vector.broadcast %468 : vector<16x1x128xf32> to vector<16x8x128xf32>
    %473 = vector.broadcast %471 : vector<1x8x1xf32> to vector<16x8x128xf32>
    %474 = arith.mulf %472, %473 : vector<16x8x128xf32>
    %475 = arith.addf %467, %474 : vector<16x8x128xf32>
    %476 = vector.extract_strided_slice %244 {offsets = [0, 3, 0], sizes = [16, 1, 128], strides = [1, 1, 1]} : vector<16x8x128xf32> to vector<16x1x128xf32>
    %477 = vector.extract_strided_slice %4 {offsets = [3, 0, 0], sizes = [1, 8, 1], strides = [1, 1, 1]} : vector<8x8x1xf32> to vector<1x8x1xf32>
    %478 = vector.shape_cast %477 : vector<1x8x1xf32> to vector<8x1xf32>
    %479 = vector.shape_cast %478 : vector<8x1xf32> to vector<1x8x1xf32>
    %480 = vector.broadcast %476 : vector<16x1x128xf32> to vector<16x8x128xf32>
    %481 = vector.broadcast %479 : vector<1x8x1xf32> to vector<16x8x128xf32>
    %482 = arith.mulf %480, %481 : vector<16x8x128xf32>
    %483 = arith.addf %475, %482 : vector<16x8x128xf32>
    %484 = vector.extract_strided_slice %244 {offsets = [0, 4, 0], sizes = [16, 1, 128], strides = [1, 1, 1]} : vector<16x8x128xf32> to vector<16x1x128xf32>
    %485 = vector.extract_strided_slice %4 {offsets = [4, 0, 0], sizes = [1, 8, 1], strides = [1, 1, 1]} : vector<8x8x1xf32> to vector<1x8x1xf32>
    %486 = vector.shape_cast %485 : vector<1x8x1xf32> to vector<8x1xf32>
    %487 = vector.shape_cast %486 : vector<8x1xf32> to vector<1x8x1xf32>
    %488 = vector.broadcast %484 : vector<16x1x128xf32> to vector<16x8x128xf32>
    %489 = vector.broadcast %487 : vector<1x8x1xf32> to vector<16x8x128xf32>
    %490 = arith.mulf %488, %489 : vector<16x8x128xf32>
    %491 = arith.addf %483, %490 : vector<16x8x128xf32>
    %492 = vector.extract_strided_slice %244 {offsets = [0, 5, 0], sizes = [16, 1, 128], strides = [1, 1, 1]} : vector<16x8x128xf32> to vector<16x1x128xf32>
    %493 = vector.extract_strided_slice %4 {offsets = [5, 0, 0], sizes = [1, 8, 1], strides = [1, 1, 1]} : vector<8x8x1xf32> to vector<1x8x1xf32>
    %494 = vector.shape_cast %493 : vector<1x8x1xf32> to vector<8x1xf32>
    %495 = vector.shape_cast %494 : vector<8x1xf32> to vector<1x8x1xf32>
    %496 = vector.broadcast %492 : vector<16x1x128xf32> to vector<16x8x128xf32>
    %497 = vector.broadcast %495 : vector<1x8x1xf32> to vector<16x8x128xf32>
    %498 = arith.mulf %496, %497 : vector<16x8x128xf32>
    %499 = arith.addf %491, %498 : vector<16x8x128xf32>
    %500 = vector.extract_strided_slice %244 {offsets = [0, 6, 0], sizes = [16, 1, 128], strides = [1, 1, 1]} : vector<16x8x128xf32> to vector<16x1x128xf32>
    %501 = vector.extract_strided_slice %4 {offsets = [6, 0, 0], sizes = [1, 8, 1], strides = [1, 1, 1]} : vector<8x8x1xf32> to vector<1x8x1xf32>
    %502 = vector.shape_cast %501 : vector<1x8x1xf32> to vector<8x1xf32>
    %503 = vector.shape_cast %502 : vector<8x1xf32> to vector<1x8x1xf32>
    %504 = vector.broadcast %500 : vector<16x1x128xf32> to vector<16x8x128xf32>
    %505 = vector.broadcast %503 : vector<1x8x1xf32> to vector<16x8x128xf32>
    %506 = arith.mulf %504, %505 : vector<16x8x128xf32>
    %507 = arith.addf %499, %506 : vector<16x8x128xf32>
    %508 = vector.extract_strided_slice %244 {offsets = [0, 7, 0], sizes = [16, 1, 128], strides = [1, 1, 1]} : vector<16x8x128xf32> to vector<16x1x128xf32>
    %509 = vector.extract_strided_slice %4 {offsets = [7, 0, 0], sizes = [1, 8, 1], strides = [1, 1, 1]} : vector<8x8x1xf32> to vector<1x8x1xf32>
    %510 = vector.shape_cast %509 : vector<1x8x1xf32> to vector<8x1xf32>
    %511 = vector.shape_cast %510 : vector<8x1xf32> to vector<1x8x1xf32>
    %512 = vector.broadcast %508 : vector<16x1x128xf32> to vector<16x8x128xf32>
    %513 = vector.broadcast %511 : vector<1x8x1xf32> to vector<16x8x128xf32>
    %514 = arith.mulf %512, %513 : vector<16x8x128xf32>
    %515 = arith.addf %507, %514 : vector<16x8x128xf32>
    %516 = vector.broadcast %5 : vector<1x8x1xf32> to vector<16x8x128xf32>
    %517 = arith.addf %515, %516 : vector<16x8x128xf32>
    %518 = vector.extract_strided_slice %517 {offsets = [4, 0, 0], sizes = [12, 8, 128], strides = [1, 1, 1]} : vector<16x8x128xf32> to vector<12x8x128xf32>
    %519 = vector.extract_strided_slice %517 {offsets = [0, 0, 0], sizes = [4, 8, 128], strides = [1, 1, 1]} : vector<16x8x128xf32> to vector<4x8x128xf32>
    %520 = tpu.concatenate %518, %519 in 0 : vector<12x8x128xf32>, vector<4x8x128xf32> -> vector<16x8x128xf32>
    %521 = arith.addf %452, %520 : vector<16x8x128xf32>
    %cst = arith.constant 0.000000e+00 : f32
    %522 = vector.broadcast %cst : f32 to vector<16x8x128xf32>
    %523 = arith.maximumf %521, %522 : vector<16x8x128xf32>
    %c0_41 = arith.constant 0 : index
    %c0_42 = arith.constant 0 : index
    %c0_43 = arith.constant 0 : index
    %524 = vector.load %arg15[%c0_41, %c0_42, %c0_43] : memref<16x8x128xf32, #tpu.memory_space<vmem>>, vector<16x8x128xf32>
    tpu.vector_store %arg15[%c0_41, %c0_42, %c0_43], %523 {strides = array<i32>} : memref<16x8x128xf32, #tpu.memory_space<vmem>>, vector<16x8x128xf32>,
    %525 = vector.extract_strided_slice %523 {offsets = [0, 0, 0], sizes = [16, 1, 128], strides = [1, 1, 1]} : vector<16x8x128xf32> to vector<16x1x128xf32>
    %526 = vector.extract_strided_slice %10 {offsets = [0, 0, 0], sizes = [1, 8, 1], strides = [1, 1, 1]} : vector<24x8x1xf32> to vector<1x8x1xf32>
    %527 = vector.shape_cast %526 : vector<1x8x1xf32> to vector<8x1xf32>
    %528 = vector.shape_cast %527 : vector<8x1xf32> to vector<1x8x1xf32>
    %529 = vector.broadcast %525 : vector<16x1x128xf32> to vector<16x8x128xf32>
    %530 = vector.broadcast %528 : vector<1x8x1xf32> to vector<16x8x128xf32>
    %531 = arith.mulf %529, %530 : vector<16x8x128xf32>
    %532 = vector.extract_strided_slice %523 {offsets = [0, 1, 0], sizes = [16, 1, 128], strides = [1, 1, 1]} : vector<16x8x128xf32> to vector<16x1x128xf32>
    %533 = vector.extract_strided_slice %10 {offsets = [1, 0, 0], sizes = [1, 8, 1], strides = [1, 1, 1]} : vector<24x8x1xf32> to vector<1x8x1xf32>
    %534 = vector.shape_cast %533 : vector<1x8x1xf32> to vector<8x1xf32>
    %535 = vector.shape_cast %534 : vector<8x1xf32> to vector<1x8x1xf32>
    %536 = vector.broadcast %532 : vector<16x1x128xf32> to vector<16x8x128xf32>
    %537 = vector.broadcast %535 : vector<1x8x1xf32> to vector<16x8x128xf32>
    %538 = arith.mulf %536, %537 : vector<16x8x128xf32>
    %539 = arith.addf %531, %538 : vector<16x8x128xf32>
    %540 = vector.extract_strided_slice %523 {offsets = [0, 2, 0], sizes = [16, 1, 128], strides = [1, 1, 1]} : vector<16x8x128xf32> to vector<16x1x128xf32>
    %541 = vector.extract_strided_slice %10 {offsets = [2, 0, 0], sizes = [1, 8, 1], strides = [1, 1, 1]} : vector<24x8x1xf32> to vector<1x8x1xf32>
    %542 = vector.shape_cast %541 : vector<1x8x1xf32> to vector<8x1xf32>
    %543 = vector.shape_cast %542 : vector<8x1xf32> to vector<1x8x1xf32>
    %544 = vector.broadcast %540 : vector<16x1x128xf32> to vector<16x8x128xf32>
    %545 = vector.broadcast %543 : vector<1x8x1xf32> to vector<16x8x128xf32>
    %546 = arith.mulf %544, %545 : vector<16x8x128xf32>
    %547 = arith.addf %539, %546 : vector<16x8x128xf32>
    %548 = vector.extract_strided_slice %523 {offsets = [0, 3, 0], sizes = [16, 1, 128], strides = [1, 1, 1]} : vector<16x8x128xf32> to vector<16x1x128xf32>
    %549 = vector.extract_strided_slice %10 {offsets = [3, 0, 0], sizes = [1, 8, 1], strides = [1, 1, 1]} : vector<24x8x1xf32> to vector<1x8x1xf32>
    %550 = vector.shape_cast %549 : vector<1x8x1xf32> to vector<8x1xf32>
    %551 = vector.shape_cast %550 : vector<8x1xf32> to vector<1x8x1xf32>
    %552 = vector.broadcast %548 : vector<16x1x128xf32> to vector<16x8x128xf32>
    %553 = vector.broadcast %551 : vector<1x8x1xf32> to vector<16x8x128xf32>
    %554 = arith.mulf %552, %553 : vector<16x8x128xf32>
    %555 = arith.addf %547, %554 : vector<16x8x128xf32>
    %556 = vector.extract_strided_slice %523 {offsets = [0, 4, 0], sizes = [16, 1, 128], strides = [1, 1, 1]} : vector<16x8x128xf32> to vector<16x1x128xf32>
    %557 = vector.extract_strided_slice %10 {offsets = [4, 0, 0], sizes = [1, 8, 1], strides = [1, 1, 1]} : vector<24x8x1xf32> to vector<1x8x1xf32>
    %558 = vector.shape_cast %557 : vector<1x8x1xf32> to vector<8x1xf32>
    %559 = vector.shape_cast %558 : vector<8x1xf32> to vector<1x8x1xf32>
    %560 = vector.broadcast %556 : vector<16x1x128xf32> to vector<16x8x128xf32>
    %561 = vector.broadcast %559 : vector<1x8x1xf32> to vector<16x8x128xf32>
    %562 = arith.mulf %560, %561 : vector<16x8x128xf32>
    %563 = arith.addf %555, %562 : vector<16x8x128xf32>
    %564 = vector.extract_strided_slice %523 {offsets = [0, 5, 0], sizes = [16, 1, 128], strides = [1, 1, 1]} : vector<16x8x128xf32> to vector<16x1x128xf32>
    %565 = vector.extract_strided_slice %10 {offsets = [5, 0, 0], sizes = [1, 8, 1], strides = [1, 1, 1]} : vector<24x8x1xf32> to vector<1x8x1xf32>
    %566 = vector.shape_cast %565 : vector<1x8x1xf32> to vector<8x1xf32>
    %567 = vector.shape_cast %566 : vector<8x1xf32> to vector<1x8x1xf32>
    %568 = vector.broadcast %564 : vector<16x1x128xf32> to vector<16x8x128xf32>
    %569 = vector.broadcast %567 : vector<1x8x1xf32> to vector<16x8x128xf32>
    %570 = arith.mulf %568, %569 : vector<16x8x128xf32>
    %571 = arith.addf %563, %570 : vector<16x8x128xf32>
    %572 = vector.extract_strided_slice %523 {offsets = [0, 6, 0], sizes = [16, 1, 128], strides = [1, 1, 1]} : vector<16x8x128xf32> to vector<16x1x128xf32>
    %573 = vector.extract_strided_slice %10 {offsets = [6, 0, 0], sizes = [1, 8, 1], strides = [1, 1, 1]} : vector<24x8x1xf32> to vector<1x8x1xf32>
    %574 = vector.shape_cast %573 : vector<1x8x1xf32> to vector<8x1xf32>
    %575 = vector.shape_cast %574 : vector<8x1xf32> to vector<1x8x1xf32>
    %576 = vector.broadcast %572 : vector<16x1x128xf32> to vector<16x8x128xf32>
    %577 = vector.broadcast %575 : vector<1x8x1xf32> to vector<16x8x128xf32>
    %578 = arith.mulf %576, %577 : vector<16x8x128xf32>
    %579 = arith.addf %571, %578 : vector<16x8x128xf32>
    %580 = vector.extract_strided_slice %523 {offsets = [0, 7, 0], sizes = [16, 1, 128], strides = [1, 1, 1]} : vector<16x8x128xf32> to vector<16x1x128xf32>
    %581 = vector.extract_strided_slice %10 {offsets = [7, 0, 0], sizes = [1, 8, 1], strides = [1, 1, 1]} : vector<24x8x1xf32> to vector<1x8x1xf32>
    %582 = vector.shape_cast %581 : vector<1x8x1xf32> to vector<8x1xf32>
    %583 = vector.shape_cast %582 : vector<8x1xf32> to vector<1x8x1xf32>
    %584 = vector.broadcast %580 : vector<16x1x128xf32> to vector<16x8x128xf32>
    %585 = vector.broadcast %583 : vector<1x8x1xf32> to vector<16x8x128xf32>
    %586 = arith.mulf %584, %585 : vector<16x8x128xf32>
    %587 = arith.addf %579, %586 : vector<16x8x128xf32>
    %588 = vector.extract_strided_slice %523 {offsets = [2, 0, 0], sizes = [14, 8, 128], strides = [1, 1, 1]} : vector<16x8x128xf32> to vector<14x8x128xf32>
    %589 = vector.extract_strided_slice %523 {offsets = [0, 0, 0], sizes = [2, 8, 128], strides = [1, 1, 1]} : vector<16x8x128xf32> to vector<2x8x128xf32>
    %590 = tpu.concatenate %588, %589 in 0 : vector<14x8x128xf32>, vector<2x8x128xf32> -> vector<16x8x128xf32>
    %591 = vector.extract_strided_slice %590 {offsets = [0, 0, 0], sizes = [16, 1, 128], strides = [1, 1, 1]} : vector<16x8x128xf32> to vector<16x1x128xf32>
    %592 = vector.extract_strided_slice %10 {offsets = [8, 0, 0], sizes = [1, 8, 1], strides = [1, 1, 1]} : vector<24x8x1xf32> to vector<1x8x1xf32>
    %593 = vector.shape_cast %592 : vector<1x8x1xf32> to vector<8x1xf32>
    %594 = vector.shape_cast %593 : vector<8x1xf32> to vector<1x8x1xf32>
    %595 = vector.broadcast %591 : vector<16x1x128xf32> to vector<16x8x128xf32>
    %596 = vector.broadcast %594 : vector<1x8x1xf32> to vector<16x8x128xf32>
    %597 = arith.mulf %595, %596 : vector<16x8x128xf32>
    %598 = arith.addf %587, %597 : vector<16x8x128xf32>
    %599 = vector.extract_strided_slice %590 {offsets = [0, 1, 0], sizes = [16, 1, 128], strides = [1, 1, 1]} : vector<16x8x128xf32> to vector<16x1x128xf32>
    %600 = vector.extract_strided_slice %10 {offsets = [9, 0, 0], sizes = [1, 8, 1], strides = [1, 1, 1]} : vector<24x8x1xf32> to vector<1x8x1xf32>
    %601 = vector.shape_cast %600 : vector<1x8x1xf32> to vector<8x1xf32>
    %602 = vector.shape_cast %601 : vector<8x1xf32> to vector<1x8x1xf32>
    %603 = vector.broadcast %599 : vector<16x1x128xf32> to vector<16x8x128xf32>
    %604 = vector.broadcast %602 : vector<1x8x1xf32> to vector<16x8x128xf32>
    %605 = arith.mulf %603, %604 : vector<16x8x128xf32>
    %606 = arith.addf %598, %605 : vector<16x8x128xf32>
    %607 = vector.extract_strided_slice %590 {offsets = [0, 2, 0], sizes = [16, 1, 128], strides = [1, 1, 1]} : vector<16x8x128xf32> to vector<16x1x128xf32>
    %608 = vector.extract_strided_slice %10 {offsets = [10, 0, 0], sizes = [1, 8, 1], strides = [1, 1, 1]} : vector<24x8x1xf32> to vector<1x8x1xf32>
    %609 = vector.shape_cast %608 : vector<1x8x1xf32> to vector<8x1xf32>
    %610 = vector.shape_cast %609 : vector<8x1xf32> to vector<1x8x1xf32>
    %611 = vector.broadcast %607 : vector<16x1x128xf32> to vector<16x8x128xf32>
    %612 = vector.broadcast %610 : vector<1x8x1xf32> to vector<16x8x128xf32>
    %613 = arith.mulf %611, %612 : vector<16x8x128xf32>
    %614 = arith.addf %606, %613 : vector<16x8x128xf32>
    %615 = vector.extract_strided_slice %590 {offsets = [0, 3, 0], sizes = [16, 1, 128], strides = [1, 1, 1]} : vector<16x8x128xf32> to vector<16x1x128xf32>
    %616 = vector.extract_strided_slice %10 {offsets = [11, 0, 0], sizes = [1, 8, 1], strides = [1, 1, 1]} : vector<24x8x1xf32> to vector<1x8x1xf32>
    %617 = vector.shape_cast %616 : vector<1x8x1xf32> to vector<8x1xf32>
    %618 = vector.shape_cast %617 : vector<8x1xf32> to vector<1x8x1xf32>
    %619 = vector.broadcast %615 : vector<16x1x128xf32> to vector<16x8x128xf32>
    %620 = vector.broadcast %618 : vector<1x8x1xf32> to vector<16x8x128xf32>
    %621 = arith.mulf %619, %620 : vector<16x8x128xf32>
    %622 = arith.addf %614, %621 : vector<16x8x128xf32>
    %623 = vector.extract_strided_slice %590 {offsets = [0, 4, 0], sizes = [16, 1, 128], strides = [1, 1, 1]} : vector<16x8x128xf32> to vector<16x1x128xf32>
    %624 = vector.extract_strided_slice %10 {offsets = [12, 0, 0], sizes = [1, 8, 1], strides = [1, 1, 1]} : vector<24x8x1xf32> to vector<1x8x1xf32>
    %625 = vector.shape_cast %624 : vector<1x8x1xf32> to vector<8x1xf32>
    %626 = vector.shape_cast %625 : vector<8x1xf32> to vector<1x8x1xf32>
    %627 = vector.broadcast %623 : vector<16x1x128xf32> to vector<16x8x128xf32>
    %628 = vector.broadcast %626 : vector<1x8x1xf32> to vector<16x8x128xf32>
    %629 = arith.mulf %627, %628 : vector<16x8x128xf32>
    %630 = arith.addf %622, %629 : vector<16x8x128xf32>
    %631 = vector.extract_strided_slice %590 {offsets = [0, 5, 0], sizes = [16, 1, 128], strides = [1, 1, 1]} : vector<16x8x128xf32> to vector<16x1x128xf32>
    %632 = vector.extract_strided_slice %10 {offsets = [13, 0, 0], sizes = [1, 8, 1], strides = [1, 1, 1]} : vector<24x8x1xf32> to vector<1x8x1xf32>
    %633 = vector.shape_cast %632 : vector<1x8x1xf32> to vector<8x1xf32>
    %634 = vector.shape_cast %633 : vector<8x1xf32> to vector<1x8x1xf32>
    %635 = vector.broadcast %631 : vector<16x1x128xf32> to vector<16x8x128xf32>
    %636 = vector.broadcast %634 : vector<1x8x1xf32> to vector<16x8x128xf32>
    %637 = arith.mulf %635, %636 : vector<16x8x128xf32>
    %638 = arith.addf %630, %637 : vector<16x8x128xf32>
    %639 = vector.extract_strided_slice %590 {offsets = [0, 6, 0], sizes = [16, 1, 128], strides = [1, 1, 1]} : vector<16x8x128xf32> to vector<16x1x128xf32>
    %640 = vector.extract_strided_slice %10 {offsets = [14, 0, 0], sizes = [1, 8, 1], strides = [1, 1, 1]} : vector<24x8x1xf32> to vector<1x8x1xf32>
    %641 = vector.shape_cast %640 : vector<1x8x1xf32> to vector<8x1xf32>
    %642 = vector.shape_cast %641 : vector<8x1xf32> to vector<1x8x1xf32>
    %643 = vector.broadcast %639 : vector<16x1x128xf32> to vector<16x8x128xf32>
    %644 = vector.broadcast %642 : vector<1x8x1xf32> to vector<16x8x128xf32>
    %645 = arith.mulf %643, %644 : vector<16x8x128xf32>
    %646 = arith.addf %638, %645 : vector<16x8x128xf32>
    %647 = vector.extract_strided_slice %590 {offsets = [0, 7, 0], sizes = [16, 1, 128], strides = [1, 1, 1]} : vector<16x8x128xf32> to vector<16x1x128xf32>
    %648 = vector.extract_strided_slice %10 {offsets = [15, 0, 0], sizes = [1, 8, 1], strides = [1, 1, 1]} : vector<24x8x1xf32> to vector<1x8x1xf32>
    %649 = vector.shape_cast %648 : vector<1x8x1xf32> to vector<8x1xf32>
    %650 = vector.shape_cast %649 : vector<8x1xf32> to vector<1x8x1xf32>
    %651 = vector.broadcast %647 : vector<16x1x128xf32> to vector<16x8x128xf32>
    %652 = vector.broadcast %650 : vector<1x8x1xf32> to vector<16x8x128xf32>
    %653 = arith.mulf %651, %652 : vector<16x8x128xf32>
    %654 = arith.addf %646, %653 : vector<16x8x128xf32>
    %655 = vector.extract_strided_slice %523 {offsets = [4, 0, 0], sizes = [12, 8, 128], strides = [1, 1, 1]} : vector<16x8x128xf32> to vector<12x8x128xf32>
    %656 = vector.extract_strided_slice %523 {offsets = [0, 0, 0], sizes = [4, 8, 128], strides = [1, 1, 1]} : vector<16x8x128xf32> to vector<4x8x128xf32>
    %657 = tpu.concatenate %655, %656 in 0 : vector<12x8x128xf32>, vector<4x8x128xf32> -> vector<16x8x128xf32>
    %658 = vector.extract_strided_slice %657 {offsets = [0, 0, 0], sizes = [16, 1, 128], strides = [1, 1, 1]} : vector<16x8x128xf32> to vector<16x1x128xf32>
    %659 = vector.extract_strided_slice %10 {offsets = [16, 0, 0], sizes = [1, 8, 1], strides = [1, 1, 1]} : vector<24x8x1xf32> to vector<1x8x1xf32>
    %660 = vector.shape_cast %659 : vector<1x8x1xf32> to vector<8x1xf32>
    %661 = vector.shape_cast %660 : vector<8x1xf32> to vector<1x8x1xf32>
    %662 = vector.broadcast %658 : vector<16x1x128xf32> to vector<16x8x128xf32>
    %663 = vector.broadcast %661 : vector<1x8x1xf32> to vector<16x8x128xf32>
    %664 = arith.mulf %662, %663 : vector<16x8x128xf32>
    %665 = arith.addf %654, %664 : vector<16x8x128xf32>
    %666 = vector.extract_strided_slice %657 {offsets = [0, 1, 0], sizes = [16, 1, 128], strides = [1, 1, 1]} : vector<16x8x128xf32> to vector<16x1x128xf32>
    %667 = vector.extract_strided_slice %10 {offsets = [17, 0, 0], sizes = [1, 8, 1], strides = [1, 1, 1]} : vector<24x8x1xf32> to vector<1x8x1xf32>
    %668 = vector.shape_cast %667 : vector<1x8x1xf32> to vector<8x1xf32>
    %669 = vector.shape_cast %668 : vector<8x1xf32> to vector<1x8x1xf32>
    %670 = vector.broadcast %666 : vector<16x1x128xf32> to vector<16x8x128xf32>
    %671 = vector.broadcast %669 : vector<1x8x1xf32> to vector<16x8x128xf32>
    %672 = arith.mulf %670, %671 : vector<16x8x128xf32>
    %673 = arith.addf %665, %672 : vector<16x8x128xf32>
    %674 = vector.extract_strided_slice %657 {offsets = [0, 2, 0], sizes = [16, 1, 128], strides = [1, 1, 1]} : vector<16x8x128xf32> to vector<16x1x128xf32>
    %675 = vector.extract_strided_slice %10 {offsets = [18, 0, 0], sizes = [1, 8, 1], strides = [1, 1, 1]} : vector<24x8x1xf32> to vector<1x8x1xf32>
    %676 = vector.shape_cast %675 : vector<1x8x1xf32> to vector<8x1xf32>
    %677 = vector.shape_cast %676 : vector<8x1xf32> to vector<1x8x1xf32>
    %678 = vector.broadcast %674 : vector<16x1x128xf32> to vector<16x8x128xf32>
    %679 = vector.broadcast %677 : vector<1x8x1xf32> to vector<16x8x128xf32>
    %680 = arith.mulf %678, %679 : vector<16x8x128xf32>
    %681 = arith.addf %673, %680 : vector<16x8x128xf32>
    %682 = vector.extract_strided_slice %657 {offsets = [0, 3, 0], sizes = [16, 1, 128], strides = [1, 1, 1]} : vector<16x8x128xf32> to vector<16x1x128xf32>
    %683 = vector.extract_strided_slice %10 {offsets = [19, 0, 0], sizes = [1, 8, 1], strides = [1, 1, 1]} : vector<24x8x1xf32> to vector<1x8x1xf32>
    %684 = vector.shape_cast %683 : vector<1x8x1xf32> to vector<8x1xf32>
    %685 = vector.shape_cast %684 : vector<8x1xf32> to vector<1x8x1xf32>
    %686 = vector.broadcast %682 : vector<16x1x128xf32> to vector<16x8x128xf32>
    %687 = vector.broadcast %685 : vector<1x8x1xf32> to vector<16x8x128xf32>
    %688 = arith.mulf %686, %687 : vector<16x8x128xf32>
    %689 = arith.addf %681, %688 : vector<16x8x128xf32>
    %690 = vector.extract_strided_slice %657 {offsets = [0, 4, 0], sizes = [16, 1, 128], strides = [1, 1, 1]} : vector<16x8x128xf32> to vector<16x1x128xf32>
    %691 = vector.extract_strided_slice %10 {offsets = [20, 0, 0], sizes = [1, 8, 1], strides = [1, 1, 1]} : vector<24x8x1xf32> to vector<1x8x1xf32>
    %692 = vector.shape_cast %691 : vector<1x8x1xf32> to vector<8x1xf32>
    %693 = vector.shape_cast %692 : vector<8x1xf32> to vector<1x8x1xf32>
    %694 = vector.broadcast %690 : vector<16x1x128xf32> to vector<16x8x128xf32>
    %695 = vector.broadcast %693 : vector<1x8x1xf32> to vector<16x8x128xf32>
    %696 = arith.mulf %694, %695 : vector<16x8x128xf32>
    %697 = arith.addf %689, %696 : vector<16x8x128xf32>
    %698 = vector.extract_strided_slice %657 {offsets = [0, 5, 0], sizes = [16, 1, 128], strides = [1, 1, 1]} : vector<16x8x128xf32> to vector<16x1x128xf32>
    %699 = vector.extract_strided_slice %10 {offsets = [21, 0, 0], sizes = [1, 8, 1], strides = [1, 1, 1]} : vector<24x8x1xf32> to vector<1x8x1xf32>
    %700 = vector.shape_cast %699 : vector<1x8x1xf32> to vector<8x1xf32>
    %701 = vector.shape_cast %700 : vector<8x1xf32> to vector<1x8x1xf32>
    %702 = vector.broadcast %698 : vector<16x1x128xf32> to vector<16x8x128xf32>
    %703 = vector.broadcast %701 : vector<1x8x1xf32> to vector<16x8x128xf32>
    %704 = arith.mulf %702, %703 : vector<16x8x128xf32>
    %705 = arith.addf %697, %704 : vector<16x8x128xf32>
    %706 = vector.extract_strided_slice %657 {offsets = [0, 6, 0], sizes = [16, 1, 128], strides = [1, 1, 1]} : vector<16x8x128xf32> to vector<16x1x128xf32>
    %707 = vector.extract_strided_slice %10 {offsets = [22, 0, 0], sizes = [1, 8, 1], strides = [1, 1, 1]} : vector<24x8x1xf32> to vector<1x8x1xf32>
    %708 = vector.shape_cast %707 : vector<1x8x1xf32> to vector<8x1xf32>
    %709 = vector.shape_cast %708 : vector<8x1xf32> to vector<1x8x1xf32>
    %710 = vector.broadcast %706 : vector<16x1x128xf32> to vector<16x8x128xf32>
    %711 = vector.broadcast %709 : vector<1x8x1xf32> to vector<16x8x128xf32>
    %712 = arith.mulf %710, %711 : vector<16x8x128xf32>
    %713 = arith.addf %705, %712 : vector<16x8x128xf32>
    %714 = vector.extract_strided_slice %657 {offsets = [0, 7, 0], sizes = [16, 1, 128], strides = [1, 1, 1]} : vector<16x8x128xf32> to vector<16x1x128xf32>
    %715 = vector.extract_strided_slice %10 {offsets = [23, 0, 0], sizes = [1, 8, 1], strides = [1, 1, 1]} : vector<24x8x1xf32> to vector<1x8x1xf32>
    %716 = vector.shape_cast %715 : vector<1x8x1xf32> to vector<8x1xf32>
    %717 = vector.shape_cast %716 : vector<8x1xf32> to vector<1x8x1xf32>
    %718 = vector.broadcast %714 : vector<16x1x128xf32> to vector<16x8x128xf32>
    %719 = vector.broadcast %717 : vector<1x8x1xf32> to vector<16x8x128xf32>
    %720 = arith.mulf %718, %719 : vector<16x8x128xf32>
    %721 = arith.addf %713, %720 : vector<16x8x128xf32>
    %722 = vector.broadcast %11 : vector<1x8x1xf32> to vector<16x8x128xf32>
    %723 = arith.addf %721, %722 : vector<16x8x128xf32>
    %724 = vector.extract_strided_slice %723 {offsets = [2, 0, 0], sizes = [14, 8, 128], strides = [1, 1, 1]} : vector<16x8x128xf32> to vector<14x8x128xf32>
    %725 = vector.extract_strided_slice %723 {offsets = [0, 0, 0], sizes = [2, 8, 128], strides = [1, 1, 1]} : vector<16x8x128xf32> to vector<2x8x128xf32>
    %726 = tpu.concatenate %724, %725 in 0 : vector<14x8x128xf32>, vector<2x8x128xf32> -> vector<16x8x128xf32>
    %727 = arith.maximumf %723, %726 : vector<16x8x128xf32>
    %728 = vector.extract_strided_slice %723 {offsets = [4, 0, 0], sizes = [12, 8, 128], strides = [1, 1, 1]} : vector<16x8x128xf32> to vector<12x8x128xf32>
    %729 = vector.extract_strided_slice %723 {offsets = [0, 0, 0], sizes = [4, 8, 128], strides = [1, 1, 1]} : vector<16x8x128xf32> to vector<4x8x128xf32>
    %730 = tpu.concatenate %728, %729 in 0 : vector<12x8x128xf32>, vector<4x8x128xf32> -> vector<16x8x128xf32>
    %731 = arith.maximumf %727, %730 : vector<16x8x128xf32>
    %732 = vector.extract_strided_slice %523 {offsets = [0, 0, 0], sizes = [16, 1, 128], strides = [1, 1, 1]} : vector<16x8x128xf32> to vector<16x1x128xf32>
    %733 = vector.extract_strided_slice %8 {offsets = [0, 0, 0], sizes = [1, 8, 1], strides = [1, 1, 1]} : vector<8x8x1xf32> to vector<1x8x1xf32>
    %734 = vector.shape_cast %733 : vector<1x8x1xf32> to vector<8x1xf32>
    %735 = vector.shape_cast %734 : vector<8x1xf32> to vector<1x8x1xf32>
    %736 = vector.broadcast %732 : vector<16x1x128xf32> to vector<16x8x128xf32>
    %737 = vector.broadcast %735 : vector<1x8x1xf32> to vector<16x8x128xf32>
    %738 = arith.mulf %736, %737 : vector<16x8x128xf32>
    %739 = vector.extract_strided_slice %523 {offsets = [0, 1, 0], sizes = [16, 1, 128], strides = [1, 1, 1]} : vector<16x8x128xf32> to vector<16x1x128xf32>
    %740 = vector.extract_strided_slice %8 {offsets = [1, 0, 0], sizes = [1, 8, 1], strides = [1, 1, 1]} : vector<8x8x1xf32> to vector<1x8x1xf32>
    %741 = vector.shape_cast %740 : vector<1x8x1xf32> to vector<8x1xf32>
    %742 = vector.shape_cast %741 : vector<8x1xf32> to vector<1x8x1xf32>
    %743 = vector.broadcast %739 : vector<16x1x128xf32> to vector<16x8x128xf32>
    %744 = vector.broadcast %742 : vector<1x8x1xf32> to vector<16x8x128xf32>
    %745 = arith.mulf %743, %744 : vector<16x8x128xf32>
    %746 = arith.addf %738, %745 : vector<16x8x128xf32>
    %747 = vector.extract_strided_slice %523 {offsets = [0, 2, 0], sizes = [16, 1, 128], strides = [1, 1, 1]} : vector<16x8x128xf32> to vector<16x1x128xf32>
    %748 = vector.extract_strided_slice %8 {offsets = [2, 0, 0], sizes = [1, 8, 1], strides = [1, 1, 1]} : vector<8x8x1xf32> to vector<1x8x1xf32>
    %749 = vector.shape_cast %748 : vector<1x8x1xf32> to vector<8x1xf32>
    %750 = vector.shape_cast %749 : vector<8x1xf32> to vector<1x8x1xf32>
    %751 = vector.broadcast %747 : vector<16x1x128xf32> to vector<16x8x128xf32>
    %752 = vector.broadcast %750 : vector<1x8x1xf32> to vector<16x8x128xf32>
    %753 = arith.mulf %751, %752 : vector<16x8x128xf32>
    %754 = arith.addf %746, %753 : vector<16x8x128xf32>
    %755 = vector.extract_strided_slice %523 {offsets = [0, 3, 0], sizes = [16, 1, 128], strides = [1, 1, 1]} : vector<16x8x128xf32> to vector<16x1x128xf32>
    %756 = vector.extract_strided_slice %8 {offsets = [3, 0, 0], sizes = [1, 8, 1], strides = [1, 1, 1]} : vector<8x8x1xf32> to vector<1x8x1xf32>
    %757 = vector.shape_cast %756 : vector<1x8x1xf32> to vector<8x1xf32>
    %758 = vector.shape_cast %757 : vector<8x1xf32> to vector<1x8x1xf32>
    %759 = vector.broadcast %755 : vector<16x1x128xf32> to vector<16x8x128xf32>
    %760 = vector.broadcast %758 : vector<1x8x1xf32> to vector<16x8x128xf32>
    %761 = arith.mulf %759, %760 : vector<16x8x128xf32>
    %762 = arith.addf %754, %761 : vector<16x8x128xf32>
    %763 = vector.extract_strided_slice %523 {offsets = [0, 4, 0], sizes = [16, 1, 128], strides = [1, 1, 1]} : vector<16x8x128xf32> to vector<16x1x128xf32>
    %764 = vector.extract_strided_slice %8 {offsets = [4, 0, 0], sizes = [1, 8, 1], strides = [1, 1, 1]} : vector<8x8x1xf32> to vector<1x8x1xf32>
    %765 = vector.shape_cast %764 : vector<1x8x1xf32> to vector<8x1xf32>
    %766 = vector.shape_cast %765 : vector<8x1xf32> to vector<1x8x1xf32>
    %767 = vector.broadcast %763 : vector<16x1x128xf32> to vector<16x8x128xf32>
    %768 = vector.broadcast %766 : vector<1x8x1xf32> to vector<16x8x128xf32>
    %769 = arith.mulf %767, %768 : vector<16x8x128xf32>
    %770 = arith.addf %762, %769 : vector<16x8x128xf32>
    %771 = vector.extract_strided_slice %523 {offsets = [0, 5, 0], sizes = [16, 1, 128], strides = [1, 1, 1]} : vector<16x8x128xf32> to vector<16x1x128xf32>
    %772 = vector.extract_strided_slice %8 {offsets = [5, 0, 0], sizes = [1, 8, 1], strides = [1, 1, 1]} : vector<8x8x1xf32> to vector<1x8x1xf32>
    %773 = vector.shape_cast %772 : vector<1x8x1xf32> to vector<8x1xf32>
    %774 = vector.shape_cast %773 : vector<8x1xf32> to vector<1x8x1xf32>
    %775 = vector.broadcast %771 : vector<16x1x128xf32> to vector<16x8x128xf32>
    %776 = vector.broadcast %774 : vector<1x8x1xf32> to vector<16x8x128xf32>
    %777 = arith.mulf %775, %776 : vector<16x8x128xf32>
    %778 = arith.addf %770, %777 : vector<16x8x128xf32>
    %779 = vector.extract_strided_slice %523 {offsets = [0, 6, 0], sizes = [16, 1, 128], strides = [1, 1, 1]} : vector<16x8x128xf32> to vector<16x1x128xf32>
    %780 = vector.extract_strided_slice %8 {offsets = [6, 0, 0], sizes = [1, 8, 1], strides = [1, 1, 1]} : vector<8x8x1xf32> to vector<1x8x1xf32>
    %781 = vector.shape_cast %780 : vector<1x8x1xf32> to vector<8x1xf32>
    %782 = vector.shape_cast %781 : vector<8x1xf32> to vector<1x8x1xf32>
    %783 = vector.broadcast %779 : vector<16x1x128xf32> to vector<16x8x128xf32>
    %784 = vector.broadcast %782 : vector<1x8x1xf32> to vector<16x8x128xf32>
    %785 = arith.mulf %783, %784 : vector<16x8x128xf32>
    %786 = arith.addf %778, %785 : vector<16x8x128xf32>
    %787 = vector.extract_strided_slice %523 {offsets = [0, 7, 0], sizes = [16, 1, 128], strides = [1, 1, 1]} : vector<16x8x128xf32> to vector<16x1x128xf32>
    %788 = vector.extract_strided_slice %8 {offsets = [7, 0, 0], sizes = [1, 8, 1], strides = [1, 1, 1]} : vector<8x8x1xf32> to vector<1x8x1xf32>
    %789 = vector.shape_cast %788 : vector<1x8x1xf32> to vector<8x1xf32>
    %790 = vector.shape_cast %789 : vector<8x1xf32> to vector<1x8x1xf32>
    %791 = vector.broadcast %787 : vector<16x1x128xf32> to vector<16x8x128xf32>
    %792 = vector.broadcast %790 : vector<1x8x1xf32> to vector<16x8x128xf32>
    %793 = arith.mulf %791, %792 : vector<16x8x128xf32>
    %794 = arith.addf %786, %793 : vector<16x8x128xf32>
    %795 = vector.broadcast %9 : vector<1x8x1xf32> to vector<16x8x128xf32>
    %796 = arith.addf %794, %795 : vector<16x8x128xf32>
    %797 = vector.extract_strided_slice %796 {offsets = [8, 0, 0], sizes = [8, 8, 128], strides = [1, 1, 1]} : vector<16x8x128xf32> to vector<8x8x128xf32>
    %798 = vector.extract_strided_slice %796 {offsets = [0, 0, 0], sizes = [8, 8, 128], strides = [1, 1, 1]} : vector<16x8x128xf32> to vector<8x8x128xf32>
    %799 = tpu.concatenate %797, %798 in 0 : vector<8x8x128xf32>, vector<8x8x128xf32> -> vector<16x8x128xf32>
    %800 = arith.addf %731, %799 : vector<16x8x128xf32>
    %cst_44 = arith.constant 0.000000e+00 : f32
    %801 = vector.broadcast %cst_44 : f32 to vector<16x8x128xf32>
    %802 = arith.maximumf %800, %801 : vector<16x8x128xf32>
    %c0_45 = arith.constant 0 : index
    %c0_46 = arith.constant 0 : index
    %c0_47 = arith.constant 0 : index
    %803 = vector.load %arg16[%c0_45, %c0_46, %c0_47] : memref<16x8x128xf32, #tpu.memory_space<vmem>>, vector<16x8x128xf32>
    tpu.vector_store %arg16[%c0_45, %c0_46, %c0_47], %802 {strides = array<i32>} : memref<16x8x128xf32, #tpu.memory_space<vmem>>, vector<16x8x128xf32>,
    return
  }
  func.func @transform_0(%arg0: i32) -> (i32, i32, i32) {
    %c0_i32 = arith.constant 0 : i32
    %c0_i32_0 = arith.constant 0 : i32
    %c0_i32_1 = arith.constant 0 : i32
    return %c0_i32, %c0_i32_0, %arg0 : i32, i32, i32
  }
  func.func @transform_1(%arg0: i32) -> (i32, i32, i32) {
    %c0_i32 = arith.constant 0 : i32
    %c0_i32_0 = arith.constant 0 : i32
    %c0_i32_1 = arith.constant 0 : i32
    %c0_i32_2 = arith.constant 0 : i32
    return %c0_i32, %c0_i32_0, %c0_i32_1 : i32, i32, i32
  }
  func.func @transform_2(%arg0: i32) -> (i32, i32, i32) {
    %c0_i32 = arith.constant 0 : i32
    %c0_i32_0 = arith.constant 0 : i32
    %c0_i32_1 = arith.constant 0 : i32
    %c0_i32_2 = arith.constant 0 : i32
    return %c0_i32, %c0_i32_0, %c0_i32_1 : i32, i32, i32
  }
  func.func @transform_3(%arg0: i32) -> (i32, i32, i32) {
    %c0_i32 = arith.constant 0 : i32
    %c0_i32_0 = arith.constant 0 : i32
    %c0_i32_1 = arith.constant 0 : i32
    %c0_i32_2 = arith.constant 0 : i32
    return %c0_i32, %c0_i32_0, %c0_i32_1 : i32, i32, i32
  }
  func.func @transform_4(%arg0: i32) -> (i32, i32, i32) {
    %c0_i32 = arith.constant 0 : i32
    %c0_i32_0 = arith.constant 0 : i32
    %c0_i32_1 = arith.constant 0 : i32
    %c0_i32_2 = arith.constant 0 : i32
    return %c0_i32, %c0_i32_0, %c0_i32_1 : i32, i32, i32
  }
  func.func @transform_5(%arg0: i32) -> (i32, i32, i32) {
    %c0_i32 = arith.constant 0 : i32
    %c0_i32_0 = arith.constant 0 : i32
    %c0_i32_1 = arith.constant 0 : i32
    %c0_i32_2 = arith.constant 0 : i32
    return %c0_i32, %c0_i32_0, %c0_i32_1 : i32, i32, i32
  }
  func.func @transform_6(%arg0: i32) -> (i32, i32, i32) {
    %c0_i32 = arith.constant 0 : i32
    %c0_i32_0 = arith.constant 0 : i32
    %c0_i32_1 = arith.constant 0 : i32
    %c0_i32_2 = arith.constant 0 : i32
    return %c0_i32, %c0_i32_0, %c0_i32_1 : i32, i32, i32
  }
  func.func @transform_7(%arg0: i32) -> (i32, i32, i32) {
    %c0_i32 = arith.constant 0 : i32
    %c0_i32_0 = arith.constant 0 : i32
    %c0_i32_1 = arith.constant 0 : i32
    %c0_i32_2 = arith.constant 0 : i32
    return %c0_i32, %c0_i32_0, %c0_i32_1 : i32, i32, i32
  }
  func.func @transform_8(%arg0: i32) -> (i32, i32, i32) {
    %c0_i32 = arith.constant 0 : i32
    %c0_i32_0 = arith.constant 0 : i32
    %c0_i32_1 = arith.constant 0 : i32
    %c0_i32_2 = arith.constant 0 : i32
    return %c0_i32, %c0_i32_0, %c0_i32_1 : i32, i32, i32
  }
  func.func @transform_9(%arg0: i32) -> (i32, i32, i32) {
    %c0_i32 = arith.constant 0 : i32
    %c0_i32_0 = arith.constant 0 : i32
    %c0_i32_1 = arith.constant 0 : i32
    %c0_i32_2 = arith.constant 0 : i32
    return %c0_i32, %c0_i32_0, %c0_i32_1 : i32, i32, i32
  }
  func.func @transform_10(%arg0: i32) -> (i32, i32, i32) {
    %c0_i32 = arith.constant 0 : i32
    %c0_i32_0 = arith.constant 0 : i32
    %c0_i32_1 = arith.constant 0 : i32
    %c0_i32_2 = arith.constant 0 : i32
    return %c0_i32, %c0_i32_0, %c0_i32_1 : i32, i32, i32
  }
  func.func @transform_11(%arg0: i32) -> (i32, i32, i32) {
    %c0_i32 = arith.constant 0 : i32
    %c0_i32_0 = arith.constant 0 : i32
    %c0_i32_1 = arith.constant 0 : i32
    %c0_i32_2 = arith.constant 0 : i32
    return %c0_i32, %c0_i32_0, %c0_i32_1 : i32, i32, i32
  }
  func.func @transform_12(%arg0: i32) -> (i32, i32, i32) {
    %c0_i32 = arith.constant 0 : i32
    %c0_i32_0 = arith.constant 0 : i32
    %c0_i32_1 = arith.constant 0 : i32
    %c0_i32_2 = arith.constant 0 : i32
    return %c0_i32, %c0_i32_0, %c0_i32_1 : i32, i32, i32
  }
  func.func @transform_13(%arg0: i32) -> (i32, i32, i32) {
    %c0_i32 = arith.constant 0 : i32
    %c0_i32_0 = arith.constant 0 : i32
    %c0_i32_1 = arith.constant 0 : i32
    return %c0_i32, %c0_i32_0, %arg0 : i32, i32, i32
  }
  func.func @transform_14(%arg0: i32) -> (i32, i32, i32) {
    %c0_i32 = arith.constant 0 : i32
    %c0_i32_0 = arith.constant 0 : i32
    %c0_i32_1 = arith.constant 0 : i32
    return %c0_i32, %c0_i32_0, %arg0 : i32, i32, i32
  }
  func.func @transform_15(%arg0: i32) -> (i32, i32, i32) {
    %c0_i32 = arith.constant 0 : i32
    %c0_i32_0 = arith.constant 0 : i32
    %c0_i32_1 = arith.constant 0 : i32
    return %c0_i32, %c0_i32_0, %arg0 : i32, i32, i32
  }
}

</mosaic_0001>

<llo_original>
// kernel: tpu_custom_call.1
$region0: #{tpu_custom_call.1}
  #allocation0 [shape = 'u32[]', space=smem, size = 0x4, offset = 0x4, fixed_abs, tag = 'smem constant byte address 0x4 - core index']
  #allocation1 [shape = 'u32[144,128]{1,0:T(1,128)}', space=vmem, size = 0x12000, scoped, tag = 'internal scratch']
  %s0 = inlined_call_operand.vmem [shape: f32[16,4,128], index: 0, kind: input, shape index: {}]
  %s1 = inlined_call_operand.vmem [shape: f32[4,8,1], index: 1, kind: input, shape index: {}]
  %s2 = inlined_call_operand.vmem [shape: f32[1,8,1], index: 2, kind: input, shape index: {}]
  %s3 = inlined_call_operand.vmem [shape: f32[24,8,1], index: 3, kind: input, shape index: {}]
  %s4 = inlined_call_operand.vmem [shape: f32[1,8,1], index: 4, kind: input, shape index: {}]
  %s5 = inlined_call_operand.vmem [shape: f32[8,8,1], index: 5, kind: input, shape index: {}]
  %s6 = inlined_call_operand.vmem [shape: f32[1,8,1], index: 6, kind: input, shape index: {}]
  %s7 = inlined_call_operand.vmem [shape: f32[24,8,1], index: 7, kind: input, shape index: {}]
  %s8 = inlined_call_operand.vmem [shape: f32[1,8,1], index: 8, kind: input, shape index: {}]
  %s9 = inlined_call_operand.vmem [shape: f32[8,8,1], index: 9, kind: input, shape index: {}]
  %s10 = inlined_call_operand.vmem [shape: f32[1,8,1], index: 10, kind: input, shape index: {}]
  %s11 = inlined_call_operand.vmem [shape: f32[24,8,1], index: 11, kind: input, shape index: {}]
  %s12 = inlined_call_operand.vmem [shape: f32[1,8,1], index: 12, kind: input, shape index: {}]
  %s13 = inlined_call_operand.hbm [shape: f32[16,8,128], index: 13, kind: output, shape index: {0}]
  %s14 = inlined_call_operand.hbm [shape: f32[16,8,128], index: 14, kind: output, shape index: {1}]
  %s15 = inlined_call_operand.hbm [shape: f32[16,8,128], index: 15, kind: output, shape index: {2}]
  %16 = xla_tuple %s13, %s14, %s15
  %s17 = sld [smem:[#allocation0]]
  $region78: #{tpu_custom_call.1} parent=0
    _
  %s19 = ssub.s32 1, %s17
  %s20 = scalar_select 0, %s19, %s17
  $region1: #{tpu_custom_call.1} parent=0
    #allocation2 [shape = 'u8[65536]{0}', space=vmem, size = 0x10000, scoped, tag = 'output window, operand 0, single buffered']
    #allocation3 [shape = 's32[1]{0}', space=sflag, size = 0x4, scoped, tag = 'scoped memory for tpu_custom_call.1']
    #allocation4 [shape = 'u8[65536]{0}', space=vmem, size = 0x10000, scoped, tag = 'output window, operand 1, single buffered']
    #allocation5 [shape = 's32[1]{0}', space=sflag, size = 0x4, scoped, tag = 'scoped memory for tpu_custom_call.1']
    #allocation6 [shape = 'u8[65536]{0}', space=vmem, size = 0x10000, scoped, tag = 'output window, operand 2, single buffered']
    %21 = vsyncpa [#allocation3], 0
    %22 = vsyncpa [#allocation5], 0
    // Predicated region
    $region2: #{tpu_custom_call.1} parent=1 // pred_check
      _
    $region3: #{tpu_custom_call.1} parent=1 // pred_check_branch
      %24 = sbr.rel (0) target = $region5
    $region4: #{tpu_custom_call.1} parent=1 // pred_region
      _
    $region5: #{tpu_custom_call.1} parent=1 // pred_fallthru
      _
    // Predicated region
    $region6: #{tpu_custom_call.1} parent=1 // pred_check
      _
    $region7: #{tpu_custom_call.1} parent=1 // pred_check_branch
      %26 = sbr.rel (0) target = $region9
    $region8: #{tpu_custom_call.1} parent=1 // pred_region
      _
    $region9: #{tpu_custom_call.1} parent=1 // pred_fallthru
      _
    // Predicated region
    $region10: #{tpu_custom_call.1} parent=1 // pred_check
      _
    $region11: #{tpu_custom_call.1} parent=1 // pred_check_branch
      %28 = sbr.rel (0) target = $region13
    $region12: #{tpu_custom_call.1} parent=1 // pred_region
      _
    $region13: #{tpu_custom_call.1} parent=1 // pred_fallthru
      _
    // Predicated region
    $region14: #{tpu_custom_call.1} parent=1 // pred_check
      _
    $region15: #{tpu_custom_call.1} parent=1 // pred_check_branch
      %30 = sbr.rel (0) target = $region17
    $region16: #{tpu_custom_call.1} parent=1 // pred_region
      _
    $region17: #{tpu_custom_call.1} parent=1 // pred_fallthru
      _
    // Predicated region
    $region18: #{tpu_custom_call.1} parent=1 // pred_check
      _
    $region19: #{tpu_custom_call.1} parent=1 // pred_check_branch
      %32 = sbr.rel (0) target = $region21
    $region20: #{tpu_custom_call.1} parent=1 // pred_region
      _
    $region21: #{tpu_custom_call.1} parent=1 // pred_fallthru
      _
    // Predicated region
    $region22: #{tpu_custom_call.1} parent=1 // pred_check
      _
    $region23: #{tpu_custom_call.1} parent=1 // pred_check_branch
      %34 = sbr.rel (0) target = $region25
    $region24: #{tpu_custom_call.1} parent=1 // pred_region
      _
    $region25: #{tpu_custom_call.1} parent=1 // pred_fallthru
      _
    // Predicated region
    $region26: #{tpu_custom_call.1} parent=1 // pred_check
      _
    $region27: #{tpu_custom_call.1} parent=1 // pred_check_branch
      %36 = sbr.rel (0) target = $region29
    $region28: #{tpu_custom_call.1} parent=1 // pred_region
      _
    $region29: #{tpu_custom_call.1} parent=1 // pred_fallthru
      _
    // Predicated region
    $region30: #{tpu_custom_call.1} parent=1 // pred_check
      _
    $region31: #{tpu_custom_call.1} parent=1 // pred_check_branch
      %38 = sbr.rel (0) target = $region33
    $region32: #{tpu_custom_call.1} parent=1 // pred_region
      _
    $region33: #{tpu_custom_call.1} parent=1 // pred_fallthru
      _
    // Predicated region
    $region34: #{tpu_custom_call.1} parent=1 // pred_check
      _
    $region35: #{tpu_custom_call.1} parent=1 // pred_check_branch
      %40 = sbr.rel (0) target = $region37
    $region36: #{tpu_custom_call.1} parent=1 // pred_region
      _
    $region37: #{tpu_custom_call.1} parent=1 // pred_fallthru
      _
    // Predicated region
    $region38: #{tpu_custom_call.1} parent=1 // pred_check
      _
    $region39: #{tpu_custom_call.1} parent=1 // pred_check_branch
      %42 = sbr.rel (0) target = $region41
    $region40: #{tpu_custom_call.1} parent=1 // pred_region
      _
    $region41: #{tpu_custom_call.1} parent=1 // pred_fallthru
      _
    // Predicated region
    $region42: #{tpu_custom_call.1} parent=1 // pred_check
      _
    $region43: #{tpu_custom_call.1} parent=1 // pred_check_branch
      %44 = sbr.rel (0) target = $region45
    $region44: #{tpu_custom_call.1} parent=1 // pred_region
      _
    $region45: #{tpu_custom_call.1} parent=1 // pred_fallthru
      _
    // Predicated region
    $region46: #{tpu_custom_call.1} parent=1 // pred_check
      _
    $region47: #{tpu_custom_call.1} parent=1 // pred_check_branch
      %46 = sbr.rel (0) target = $region49
    $region48: #{tpu_custom_call.1} parent=1 // pred_region
      _
    $region49: #{tpu_custom_call.1} parent=1 // pred_fallthru
      _
    // Predicated region
    $region50: #{tpu_custom_call.1} parent=1 // pred_check
      _
    $region51: #{tpu_custom_call.1} parent=1 // pred_check_branch
      %48 = sbr.rel (0) target = $region53
    $region52: #{tpu_custom_call.1} parent=1 // pred_region
      _
    $region53: #{tpu_custom_call.1} parent=1 // pred_fallthru
      _
    %v49 = vld [vmem:[%s1] sm:$0xff]
    %v50 = vld [vmem:[%s1 + $0x8] sm:$0xff]
    %v51 = vld [vmem:[%s1 + $0x10] sm:$0xff]
    %v52 = vld [vmem:[%s1 + $0x18] sm:$0xff]
    %v53 = vld [vmem:[%s2] sm:$0xff]
    %v54 = vld [vmem:[%s3] sm:$0xff]
    %v55 = vld [vmem:[%s3 + $0x8] sm:$0xff]
    %v56 = vld [vmem:[%s3 + $0x10] sm:$0xff]
    %v57 = vld [vmem:[%s3 + $0x18] sm:$0xff]
    %v58 = vld [vmem:[%s3 + $0x20] sm:$0xff]
    %v59 = vld [vmem:[%s3 + $0x28] sm:$0xff]
    %v60 = vld [vmem:[%s3 + $0x30] sm:$0xff]
    %v61 = vld [vmem:[%s3 + $0x38] sm:$0xff]
    %v62 = vld [vmem:[%s3 + $0x40] sm:$0xff]
    %v63 = vld [vmem:[%s3 + $0x48] sm:$0xff]
    %v64 = vld [vmem:[%s3 + $0x50] sm:$0xff]
    %v65 = vld [vmem:[%s3 + $0x58] sm:$0xff]
    %v66 = vld [vmem:[%s3 + $0x60] sm:$0xff]
    %v67 = vld [vmem:[%s3 + $0x68] sm:$0xff]
    %v68 = vld [vmem:[%s3 + $0x70] sm:$0xff]
    %v69 = vld [vmem:[%s3 + $0x78] sm:$0xff]
    %v70 = vld [vmem:[%s3 + $0x80] sm:$0xff]
    %v71 = vld [vmem:[%s3 + $0x88] sm:$0xff]
    %v72 = vld [vmem:[%s3 + $0x90] sm:$0xff]
    %v73 = vld [vmem:[%s3 + $0x98] sm:$0xff]
    %v74 = vld [vmem:[%s3 + $0xa0] sm:$0xff]
    %v75 = vld [vmem:[%s3 + $0xa8] sm:$0xff]
    %v76 = vld [vmem:[%s3 + $0xb0] sm:$0xff]
    %v77 = vld [vmem:[%s3 + $0xb8] sm:$0xff]
    %v78 = vld [vmem:[%s4] sm:$0xff]
    %v79 = vld [vmem:[%s5] sm:$0xff]
    %v80 = vld [vmem:[%s5 + $0x8] sm:$0xff]
    %v81 = vld [vmem:[%s5 + $0x10] sm:$0xff]
    %v82 = vld [vmem:[%s5 + $0x18] sm:$0xff]
    %v83 = vld [vmem:[%s5 + $0x20] sm:$0xff]
    %v84 = vld [vmem:[%s5 + $0x28] sm:$0xff]
    %v85 = vld [vmem:[%s5 + $0x30] sm:$0xff]
    %v86 = vld [vmem:[%s5 + $0x38] sm:$0xff]
    %v87 = vld [vmem:[%s6] sm:$0xff]
    %v88 = vld [vmem:[%s7] sm:$0xff]
    %v89 = vld [vmem:[%s7 + $0x8] sm:$0xff]
    %v90 = vld [vmem:[%s7 + $0x10] sm:$0xff]
    %v91 = vld [vmem:[%s7 + $0x18] sm:$0xff]
    %v92 = vld [vmem:[%s7 + $0x20] sm:$0xff]
    %v93 = vld [vmem:[%s7 + $0x28] sm:$0xff]
    %v94 = vld [vmem:[%s7 + $0x30] sm:$0xff]
    %v95 = vld [vmem:[%s7 + $0x38] sm:$0xff]
    %v96 = vld [vmem:[%s7 + $0x40] sm:$0xff]
    %v97 = vld [vmem:[%s7 + $0x48] sm:$0xff]
    %v98 = vld [vmem:[%s7 + $0x50] sm:$0xff]
    %v99 = vld [vmem:[%s7 + $0x58] sm:$0xff]
    %v100 = vld [vmem:[%s7 + $0x60] sm:$0xff]
    %v101 = vld [vmem:[%s7 + $0x68] sm:$0xff]
    %v102 = vld [vmem:[%s7 + $0x70] sm:$0xff]
    %v103 = vld [vmem:[%s7 + $0x78] sm:$0xff]
    %v104 = vld [vmem:[%s7 + $0x80] sm:$0xff]
    %v105 = vld [vmem:[%s7 + $0x88] sm:$0xff]
    %v106 = vld [vmem:[%s7 + $0x90] sm:$0xff]
    %v107 = vld [vmem:[%s7 + $0x98] sm:$0xff]
    %v108 = vld [vmem:[%s7 + $0xa0] sm:$0xff]
    %v109 = vld [vmem:[%s7 + $0xa8] sm:$0xff]
    %v110 = vld [vmem:[%s7 + $0xb0] sm:$0xff]
    %v111 = vld [vmem:[%s7 + $0xb8] sm:$0xff]
    %v112 = vld [vmem:[%s8] sm:$0xff]
    %v113 = vld [vmem:[%s9] sm:$0xff]
    %v114 = vld [vmem:[%s9 + $0x8] sm:$0xff]
    %v115 = vld [vmem:[%s9 + $0x10] sm:$0xff]
    %v116 = vld [vmem:[%s9 + $0x18] sm:$0xff]
    %v117 = vld [vmem:[%s9 + $0x20] sm:$0xff]
    %v118 = vld [vmem:[%s9 + $0x28] sm:$0xff]
    %v119 = vld [vmem:[%s9 + $0x30] sm:$0xff]
    %v120 = vld [vmem:[%s9 + $0x38] sm:$0xff]
    %v121 = vld [vmem:[%s10] sm:$0xff]
    %v122 = vld [vmem:[%s11] sm:$0xff]
    %v123 = vld [vmem:[%s11 + $0x8] sm:$0xff]
    %v124 = vld [vmem:[%s11 + $0x10] sm:$0xff]
    %v125 = vld [vmem:[%s11 + $0x18] sm:$0xff]
    %v126 = vld [vmem:[%s11 + $0x20] sm:$0xff]
    %v127 = vld [vmem:[%s11 + $0x28] sm:$0xff]
    %v128 = vld [vmem:[%s11 + $0x30] sm:$0xff]
    %v129 = vld [vmem:[%s11 + $0x38] sm:$0xff]
    %v130 = vld [vmem:[%s11 + $0x40] sm:$0xff]
    %v131 = vld [vmem:[%s11 + $0x48] sm:$0xff]
    %v132 = vld [vmem:[%s11 + $0x50] sm:$0xff]
    %v133 = vld [vmem:[%s11 + $0x58] sm:$0xff]
    %v134 = vld [vmem:[%s11 + $0x60] sm:$0xff]
    %v135 = vld [vmem:[%s11 + $0x68] sm:$0xff]
    %v136 = vld [vmem:[%s11 + $0x70] sm:$0xff]
    %v137 = vld [vmem:[%s11 + $0x78] sm:$0xff]
    %v138 = vld [vmem:[%s11 + $0x80] sm:$0xff]
    %v139 = vld [vmem:[%s11 + $0x88] sm:$0xff]
    %v140 = vld [vmem:[%s11 + $0x90] sm:$0xff]
    %v141 = vld [vmem:[%s11 + $0x98] sm:$0xff]
    %v142 = vld [vmem:[%s11 + $0xa0] sm:$0xff]
    %v143 = vld [vmem:[%s11 + $0xa8] sm:$0xff]
    %v144 = vld [vmem:[%s11 + $0xb0] sm:$0xff]
    %v145 = vld [vmem:[%s11 + $0xb8] sm:$0xff]
    %v146 = vld [vmem:[%s12] sm:$0xff]
    %v147 = vld [vmem:[%s0] sm:$0xf]
    %v148 = vld [vmem:[%s0 + $0x4] sm:$0xf]
    %v149 = vld [vmem:[%s0 + $0x8] sm:$0xf]
    %v150 = vld [vmem:[%s0 + $0xc] sm:$0xf]
    %v151 = vld [vmem:[%s0 + $0x10] sm:$0xf]
    %v152 = vld [vmem:[%s0 + $0x14] sm:$0xf]
    %v153 = vld [vmem:[%s0 + $0x18] sm:$0xf]
    %v154 = vld [vmem:[%s0 + $0x1c] sm:$0xf]
    %v155 = vld [vmem:[%s0 + $0x20] sm:$0xf]
    %v156 = vld [vmem:[%s0 + $0x24] sm:$0xf]
    %v157 = vld [vmem:[%s0 + $0x28] sm:$0xf]
    %v158 = vld [vmem:[%s0 + $0x2c] sm:$0xf]
    %v159 = vld [vmem:[%s0 + $0x30] sm:$0xf]
    %v160 = vld [vmem:[%s0 + $0x34] sm:$0xf]
    %v161 = vld [vmem:[%s0 + $0x38] sm:$0xf]
    %v162 = vld [vmem:[%s0 + $0x3c] sm:$0xf]
    %v163 = vlaneseq
    %v164 = vshrl.u32 %v163, 7
    %v165 = vsub.s32 0, %v164
    %v166 = vrot.slane %v147, %v165
    %v167 = vlaneseq
    %v168 = vshrl.u32 %v167, 7
    %v169 = vsub.s32 0, %v168
    %v170 = vrot.slane %v148, %v169
    %v171 = vlaneseq
    %v172 = vshrl.u32 %v171, 7
    %v173 = vsub.s32 0, %v172
    %v174 = vrot.slane %v149, %v173
    %v175 = vlaneseq
    %v176 = vshrl.u32 %v175, 7
    %v177 = vsub.s32 0, %v176
    %v178 = vrot.slane %v150, %v177
    %v179 = vlaneseq
    %v180 = vshrl.u32 %v179, 7
    %v181 = vsub.s32 0, %v180
    %v182 = vrot.slane %v151, %v181
    %v183 = vlaneseq
    %v184 = vshrl.u32 %v183, 7
    %v185 = vsub.s32 0, %v184
    %v186 = vrot.slane %v152, %v185
    %v187 = vlaneseq
    %v188 = vshrl.u32 %v187, 7
    %v189 = vsub.s32 0, %v188
    %v190 = vrot.slane %v153, %v189
    %v191 = vlaneseq
    %v192 = vshrl.u32 %v191, 7
    %v193 = vsub.s32 0, %v192
    %v194 = vrot.slane %v154, %v193
    %v195 = vlaneseq
    %v196 = vshrl.u32 %v195, 7
    %v197 = vsub.s32 0, %v196
    %v198 = vrot.slane %v155, %v197
    %v199 = vlaneseq
    %v200 = vshrl.u32 %v199, 7
    %v201 = vsub.s32 0, %v200
    %v202 = vrot.slane %v156, %v201
    %v203 = vlaneseq
    %v204 = vshrl.u32 %v203, 7
    %v205 = vsub.s32 0, %v204
    %v206 = vrot.slane %v157, %v205
    %v207 = vlaneseq
    %v208 = vshrl.u32 %v207, 7
    %v209 = vsub.s32 0, %v208
    %v210 = vrot.slane %v158, %v209
    %v211 = vlaneseq
    %v212 = vshrl.u32 %v211, 7
    %v213 = vsub.s32 0, %v212
    %v214 = vrot.slane %v159, %v213
    %v215 = vlaneseq
    %v216 = vshrl.u32 %v215, 7
    %v217 = vsub.s32 0, %v216
    %v218 = vrot.slane %v160, %v217
    %v219 = vlaneseq
    %v220 = vshrl.u32 %v219, 7
    %v221 = vsub.s32 0, %v220
    %v222 = vrot.slane %v161, %v221
    %v223 = vlaneseq
    %v224 = vshrl.u32 %v223, 7
    %v225 = vsub.s32 0, %v224
    %v226 = vrot.slane %v162, %v225
    %228 = vset.pattern.permute.xlu0 0
    %229 = vperm.xlu0 %228, %v49
    %v230 = vpop.permute.xlu0 %229
    %v232 = vmul.f32 %v166, %v230
    %v233 = vmul.f32 %v170, %v230
    %v234 = vmul.f32 %v174, %v230
    %v235 = vmul.f32 %v178, %v230
    %v236 = vmul.f32 %v182, %v230
    %v237 = vmul.f32 %v186, %v230
    %v238 = vmul.f32 %v190, %v230
    %v239 = vmul.f32 %v194, %v230
    %v240 = vmul.f32 %v198, %v230
    %v241 = vmul.f32 %v202, %v230
    %v242 = vmul.f32 %v206, %v230
    %v243 = vmul.f32 %v210, %v230
    %v244 = vmul.f32 %v214, %v230
    %v245 = vmul.f32 %v218, %v230
    %v246 = vmul.f32 %v222, %v230
    %v247 = vmul.f32 %v226, %v230
    %v248 = vlaneseq
    %v249 = vshrl.u32 %v248, 7
    %v250 = vsub.s32 1, %v249
    %v251 = vrot.slane %v147, %v250
    %v252 = vlaneseq
    %v253 = vshrl.u32 %v252, 7
    %v254 = vsub.s32 1, %v253
    %v255 = vrot.slane %v148, %v254
    %v256 = vlaneseq
    %v257 = vshrl.u32 %v256, 7
    %v258 = vsub.s32 1, %v257
    %v259 = vrot.slane %v149, %v258
    %v260 = vlaneseq
    %v261 = vshrl.u32 %v260, 7
    %v262 = vsub.s32 1, %v261
    %v263 = vrot.slane %v150, %v262
    %v264 = vlaneseq
    %v265 = vshrl.u32 %v264, 7
    %v266 = vsub.s32 1, %v265
    %v267 = vrot.slane %v151, %v266
    %v268 = vlaneseq
    %v269 = vshrl.u32 %v268, 7
    %v270 = vsub.s32 1, %v269
    %v271 = vrot.slane %v152, %v270
    %v272 = vlaneseq
    %v273 = vshrl.u32 %v272, 7
    %v274 = vsub.s32 1, %v273
    %v275 = vrot.slane %v153, %v274
    %v276 = vlaneseq
    %v277 = vshrl.u32 %v276, 7
    %v278 = vsub.s32 1, %v277
    %v279 = vrot.slane %v154, %v278
    %v280 = vlaneseq
    %v281 = vshrl.u32 %v280, 7
    %v282 = vsub.s32 1, %v281
    %v283 = vrot.slane %v155, %v282
    %v284 = vlaneseq
    %v285 = vshrl.u32 %v284, 7
    %v286 = vsub.s32 1, %v285
    %v287 = vrot.slane %v156, %v286
    %v288 = vlaneseq
    %v289 = vshrl.u32 %v288, 7
    %v290 = vsub.s32 1, %v289
    %v291 = vrot.slane %v157, %v290
    %v292 = vlaneseq
    %v293 = vshrl.u32 %v292, 7
    %v294 = vsub.s32 1, %v293
    %v295 = vrot.slane %v158, %v294
    %v296 = vlaneseq
    %v297 = vshrl.u32 %v296, 7
    %v298 = vsub.s32 1, %v297
    %v299 = vrot.slane %v159, %v298
    %v300 = vlaneseq
    %v301 = vshrl.u32 %v300, 7
    %v302 = vsub.s32 1, %v301
    %v303 = vrot.slane %v160, %v302
    %v304 = vlaneseq
    %v305 = vshrl.u32 %v304, 7
    %v306 = vsub.s32 1, %v305
    %v307 = vrot.slane %v161, %v306
    %v308 = vlaneseq
    %v309 = vshrl.u32 %v308, 7
    %v310 = vsub.s32 1, %v309
    %v311 = vrot.slane %v162, %v310
    %313 = vset.pattern.permute.xlu0 0
    %314 = vperm.xlu0 %313, %v50
    %v315 = vpop.permute.xlu0 %314
    %v317 = vmul.f32 %v251, %v315
    %v318 = vmul.f32 %v255, %v315
    %v319 = vmul.f32 %v259, %v315
    %v320 = vmul.f32 %v263, %v315
    %v321 = vmul.f32 %v267, %v315
    %v322 = vmul.f32 %v271, %v315
    %v323 = vmul.f32 %v275, %v315
    %v324 = vmul.f32 %v279, %v315
    %v325 = vmul.f32 %v283, %v315
    %v326 = vmul.f32 %v287, %v315
    %v327 = vmul.f32 %v291, %v315
    %v328 = vmul.f32 %v295, %v315
    %v329 = vmul.f32 %v299, %v315
    %v330 = vmul.f32 %v303, %v315
    %v331 = vmul.f32 %v307, %v315
    %v332 = vmul.f32 %v311, %v315
    %v333 = vadd.f32 %v232, %v317
    %v334 = vadd.f32 %v233, %v318
    %v335 = vadd.f32 %v234, %v319
    %v336 = vadd.f32 %v235, %v320
    %v337 = vadd.f32 %v236, %v321
    %v338 = vadd.f32 %v237, %v322
    %v339 = vadd.f32 %v238, %v323
    %v340 = vadd.f32 %v239, %v324
    %v341 = vadd.f32 %v240, %v325
    %v342 = vadd.f32 %v241, %v326
    %v343 = vadd.f32 %v242, %v327
    %v344 = vadd.f32 %v243, %v328
    %v345 = vadd.f32 %v244, %v329
    %v346 = vadd.f32 %v245, %v330
    %v347 = vadd.f32 %v246, %v331
    %v348 = vadd.f32 %v247, %v332
    %v349 = vlaneseq
    %v350 = vshrl.u32 %v349, 7
    %v351 = vsub.s32 2, %v350
    %v352 = vrot.slane %v147, %v351
    %v353 = vlaneseq
    %v354 = vshrl.u32 %v353, 7
    %v355 = vsub.s32 2, %v354
    %v356 = vrot.slane %v148, %v355
    %v357 = vlaneseq
    %v358 = vshrl.u32 %v357, 7
    %v359 = vsub.s32 2, %v358
    %v360 = vrot.slane %v149, %v359
    %v361 = vlaneseq
    %v362 = vshrl.u32 %v361, 7
    %v363 = vsub.s32 2, %v362
    %v364 = vrot.slane %v150, %v363
    %v365 = vlaneseq
    %v366 = vshrl.u32 %v365, 7
    %v367 = vsub.s32 2, %v366
    %v368 = vrot.slane %v151, %v367
    %v369 = vlaneseq
    %v370 = vshrl.u32 %v369, 7
    %v371 = vsub.s32 2, %v370
    %v372 = vrot.slane %v152, %v371
    %v373 = vlaneseq
    %v374 = vshrl.u32 %v373, 7
    %v375 = vsub.s32 2, %v374
    %v376 = vrot.slane %v153, %v375
    %v377 = vlaneseq
    %v378 = vshrl.u32 %v377, 7
    %v379 = vsub.s32 2, %v378
    %v380 = vrot.slane %v154, %v379
    %v381 = vlaneseq
    %v382 = vshrl.u32 %v381, 7
    %v383 = vsub.s32 2, %v382
    %v384 = vrot.slane %v155, %v383
    %v385 = vlaneseq
    %v386 = vshrl.u32 %v385, 7
    %v387 = vsub.s32 2, %v386
    %v388 = vrot.slane %v156, %v387
    %v389 = vlaneseq
    %v390 = vshrl.u32 %v389, 7
    %v391 = vsub.s32 2, %v390
    %v392 = vrot.slane %v157, %v391
    %v393 = vlaneseq
    %v394 = vshrl.u32 %v393, 7
    %v395 = vsub.s32 2, %v394
    %v396 = vrot.slane %v158, %v395
    %v397 = vlaneseq
    %v398 = vshrl.u32 %v397, 7
    %v399 = vsub.s32 2, %v398
    %v400 = vrot.slane %v159, %v399
    %v401 = vlaneseq
    %v402 = vshrl.u32 %v401, 7
    %v403 = vsub.s32 2, %v402
    %v404 = vrot.slane %v160, %v403
    %v405 = vlaneseq
    %v406 = vshrl.u32 %v405, 7
    %v407 = vsub.s32 2, %v406
    %v408 = vrot.slane %v161, %v407
    %v409 = vlaneseq
    %v410 = vshrl.u32 %v409, 7
    %v411 = vsub.s32 2, %v410
    %v412 = vrot.slane %v162, %v411
    %414 = vset.pattern.permute.xlu0 0
    %415 = vperm.xlu0 %414, %v51
    %v416 = vpop.permute.xlu0 %415
    %v418 = vmul.f32 %v352, %v416
    %v419 = vmul.f32 %v356, %v416
    %v420 = vmul.f32 %v360, %v416
    %v421 = vmul.f32 %v364, %v416
    %v422 = vmul.f32 %v368, %v416
    %v423 = vmul.f32 %v372, %v416
    %v424 = vmul.f32 %v376, %v416
    %v425 = vmul.f32 %v380, %v416
    %v426 = vmul.f32 %v384, %v416
    %v427 = vmul.f32 %v388, %v416
    %v428 = vmul.f32 %v392, %v416
    %v429 = vmul.f32 %v396, %v416
    %v430 = vmul.f32 %v400, %v416
    %v431 = vmul.f32 %v404, %v416
    %v432 = vmul.f32 %v408, %v416
    %v433 = vmul.f32 %v412, %v416
    %v434 = vadd.f32 %v333, %v418
    %v435 = vadd.f32 %v334, %v419
    %v436 = vadd.f32 %v335, %v420
    %v437 = vadd.f32 %v336, %v421
    %v438 = vadd.f32 %v337, %v422
    %v439 = vadd.f32 %v338, %v423
    %v440 = vadd.f32 %v339, %v424
    %v441 = vadd.f32 %v340, %v425
    %v442 = vadd.f32 %v341, %v426
    %v443 = vadd.f32 %v342, %v427
    %v444 = vadd.f32 %v343, %v428
    %v445 = vadd.f32 %v344, %v429
    %v446 = vadd.f32 %v345, %v430
    %v447 = vadd.f32 %v346, %v431
    %v448 = vadd.f32 %v347, %v432
    %v449 = vadd.f32 %v348, %v433
    %v450 = vlaneseq
    %v451 = vshrl.u32 %v450, 7
    %v452 = vsub.s32 3, %v451
    %v453 = vrot.slane %v147, %v452
    %v454 = vlaneseq
    %v455 = vshrl.u32 %v454, 7
    %v456 = vsub.s32 3, %v455
    %v457 = vrot.slane %v148, %v456
    %v458 = vlaneseq
    %v459 = vshrl.u32 %v458, 7
    %v460 = vsub.s32 3, %v459
    %v461 = vrot.slane %v149, %v460
    %v462 = vlaneseq
    %v463 = vshrl.u32 %v462, 7
    %v464 = vsub.s32 3, %v463
    %v465 = vrot.slane %v150, %v464
    %v466 = vlaneseq
    %v467 = vshrl.u32 %v466, 7
    %v468 = vsub.s32 3, %v467
    %v469 = vrot.slane %v151, %v468
    %v470 = vlaneseq
    %v471 = vshrl.u32 %v470, 7
    %v472 = vsub.s32 3, %v471
    %v473 = vrot.slane %v152, %v472
    %v474 = vlaneseq
    %v475 = vshrl.u32 %v474, 7
    %v476 = vsub.s32 3, %v475
    %v477 = vrot.slane %v153, %v476
    %v478 = vlaneseq
    %v479 = vshrl.u32 %v478, 7
    %v480 = vsub.s32 3, %v479
    %v481 = vrot.slane %v154, %v480
    %v482 = vlaneseq
    %v483 = vshrl.u32 %v482, 7
    %v484 = vsub.s32 3, %v483
    %v485 = vrot.slane %v155, %v484
    %v486 = vlaneseq
    %v487 = vshrl.u32 %v486, 7
    %v488 = vsub.s32 3, %v487
    %v489 = vrot.slane %v156, %v488
    %v490 = vlaneseq
    %v491 = vshrl.u32 %v490, 7
    %v492 = vsub.s32 3, %v491
    %v493 = vrot.slane %v157, %v492
    %v494 = vlaneseq
    %v495 = vshrl.u32 %v494, 7
    %v496 = vsub.s32 3, %v495
    %v497 = vrot.slane %v158, %v496
    %v498 = vlaneseq
    %v499 = vshrl.u32 %v498, 7
    %v500 = vsub.s32 3, %v499
    %v501 = vrot.slane %v159, %v500
    %v502 = vlaneseq
    %v503 = vshrl.u32 %v502, 7
    %v504 = vsub.s32 3, %v503
    %v505 = vrot.slane %v160, %v504
    %v506 = vlaneseq
    %v507 = vshrl.u32 %v506, 7
    %v508 = vsub.s32 3, %v507
    %v509 = vrot.slane %v161, %v508
    %v510 = vlaneseq
    %v511 = vshrl.u32 %v510, 7
    %v512 = vsub.s32 3, %v511
    %v513 = vrot.slane %v162, %v512
    %515 = vset.pattern.permute.xlu0 0
    %516 = vperm.xlu0 %515, %v52
    %v517 = vpop.permute.xlu0 %516
    %v519 = vmul.f32 %v453, %v517
    %v520 = vmul.f32 %v457, %v517
    %v521 = vmul.f32 %v461, %v517
    %v522 = vmul.f32 %v465, %v517
    %v523 = vmul.f32 %v469, %v517
    %v524 = vmul.f32 %v473, %v517
    %v525 = vmul.f32 %v477, %v517
    %v526 = vmul.f32 %v481, %v517
    %v527 = vmul.f32 %v485, %v517
    %v528 = vmul.f32 %v489, %v517
    %v529 = vmul.f32 %v493, %v517
    %v530 = vmul.f32 %v497, %v517
    %v531 = vmul.f32 %v501, %v517
    %v532 = vmul.f32 %v505, %v517
    %v533 = vmul.f32 %v509, %v517
    %v534 = vmul.f32 %v513, %v517
    %v535 = vadd.f32 %v434, %v519
    %v536 = vadd.f32 %v435, %v520
    %v537 = vadd.f32 %v436, %v521
    %v538 = vadd.f32 %v437, %v522
    %v539 = vadd.f32 %v438, %v523
    %v540 = vadd.f32 %v439, %v524
    %v541 = vadd.f32 %v440, %v525
    %v542 = vadd.f32 %v441, %v526
    %v543 = vadd.f32 %v442, %v527
    %v544 = vadd.f32 %v443, %v528
    %v545 = vadd.f32 %v444, %v529
    %v546 = vadd.f32 %v445, %v530
    %v547 = vadd.f32 %v446, %v531
    %v548 = vadd.f32 %v447, %v532
    %v549 = vadd.f32 %v448, %v533
    %v550 = vadd.f32 %v449, %v534
    %552 = vset.pattern.permute.xlu0 0
    %553 = vperm.xlu0 %552, %v53
    %v554 = vpop.permute.xlu0 %553
    %v556 = vadd.f32 %v535, %v554
    %v557 = vadd.f32 %v536, %v554
    %v558 = vadd.f32 %v537, %v554
    %v559 = vadd.f32 %v538, %v554
    %v560 = vadd.f32 %v539, %v554
    %v561 = vadd.f32 %v540, %v554
    %v562 = vadd.f32 %v541, %v554
    %v563 = vadd.f32 %v542, %v554
    %v564 = vadd.f32 %v543, %v554
    %v565 = vadd.f32 %v544, %v554
    %v566 = vadd.f32 %v545, %v554
    %v567 = vadd.f32 %v546, %v554
    %v568 = vadd.f32 %v547, %v554
    %v569 = vadd.f32 %v548, %v554
    %v570 = vadd.f32 %v549, %v554
    %v571 = vadd.f32 %v550, %v554
    %v572 = vlaneseq
    %v573 = vshrl.u32 %v572, 7
    %v574 = vsub.s32 0, %v573
    %v575 = vrot.slane %v556, %v574
    %v576 = vlaneseq
    %v577 = vshrl.u32 %v576, 7
    %v578 = vsub.s32 0, %v577
    %v579 = vrot.slane %v557, %v578
    %v580 = vlaneseq
    %v581 = vshrl.u32 %v580, 7
    %v582 = vsub.s32 0, %v581
    %v583 = vrot.slane %v558, %v582
    %v584 = vlaneseq
    %v585 = vshrl.u32 %v584, 7
    %v586 = vsub.s32 0, %v585
    %v587 = vrot.slane %v559, %v586
    %v588 = vlaneseq
    %v589 = vshrl.u32 %v588, 7
    %v590 = vsub.s32 0, %v589
    %v591 = vrot.slane %v560, %v590
    %v592 = vlaneseq
    %v593 = vshrl.u32 %v592, 7
    %v594 = vsub.s32 0, %v593
    %v595 = vrot.slane %v561, %v594
    %v596 = vlaneseq
    %v597 = vshrl.u32 %v596, 7
    %v598 = vsub.s32 0, %v597
    %v599 = vrot.slane %v562, %v598
    %v600 = vlaneseq
    %v601 = vshrl.u32 %v600, 7
    %v602 = vsub.s32 0, %v601
    %v603 = vrot.slane %v563, %v602
    %v604 = vlaneseq
    %v605 = vshrl.u32 %v604, 7
    %v606 = vsub.s32 0, %v605
    %v607 = vrot.slane %v564, %v606
    %v608 = vlaneseq
    %v609 = vshrl.u32 %v608, 7
    %v610 = vsub.s32 0, %v609
    %v611 = vrot.slane %v565, %v610
    %v612 = vlaneseq
    %v613 = vshrl.u32 %v612, 7
    %v614 = vsub.s32 0, %v613
    %v615 = vrot.slane %v566, %v614
    %v616 = vlaneseq
    %v617 = vshrl.u32 %v616, 7
    %v618 = vsub.s32 0, %v617
    %v619 = vrot.slane %v567, %v618
    %v620 = vlaneseq
    %v621 = vshrl.u32 %v620, 7
    %v622 = vsub.s32 0, %v621
    %v623 = vrot.slane %v568, %v622
    %v624 = vlaneseq
    %v625 = vshrl.u32 %v624, 7
    %v626 = vsub.s32 0, %v625
    %v627 = vrot.slane %v569, %v626
    %v628 = vlaneseq
    %v629 = vshrl.u32 %v628, 7
    %v630 = vsub.s32 0, %v629
    %v631 = vrot.slane %v570, %v630
    %v632 = vlaneseq
    %v633 = vshrl.u32 %v632, 7
    %v634 = vsub.s32 0, %v633
    %v635 = vrot.slane %v571, %v634
    %637 = vset.pattern.permute.xlu0 0
    %638 = vperm.xlu0 %637, %v54
    %v639 = vpop.permute.xlu0 %638
    %v641 = vmul.f32 %v575, %v639
    %v642 = vmul.f32 %v579, %v639
    %v643 = vmul.f32 %v583, %v639
    %v644 = vmul.f32 %v587, %v639
    %v645 = vmul.f32 %v591, %v639
    %v646 = vmul.f32 %v595, %v639
    %v647 = vmul.f32 %v599, %v639
    %v648 = vmul.f32 %v603, %v639
    %v649 = vmul.f32 %v607, %v639
    %v650 = vmul.f32 %v611, %v639
    %v651 = vmul.f32 %v615, %v639
    %v652 = vmul.f32 %v619, %v639
    %v653 = vmul.f32 %v623, %v639
    %v654 = vmul.f32 %v627, %v639
    %v655 = vmul.f32 %v631, %v639
    %v656 = vmul.f32 %v635, %v639
    %v657 = vlaneseq
    %v658 = vshrl.u32 %v657, 7
    %v659 = vsub.s32 1, %v658
    %v660 = vrot.slane %v556, %v659
    %v661 = vlaneseq
    %v662 = vshrl.u32 %v661, 7
    %v663 = vsub.s32 1, %v662
    %v664 = vrot.slane %v557, %v663
    %v665 = vlaneseq
    %v666 = vshrl.u32 %v665, 7
    %v667 = vsub.s32 1, %v666
    %v668 = vrot.slane %v558, %v667
    %v669 = vlaneseq
    %v670 = vshrl.u32 %v669, 7
    %v671 = vsub.s32 1, %v670
    %v672 = vrot.slane %v559, %v671
    %v673 = vlaneseq
    %v674 = vshrl.u32 %v673, 7
    %v675 = vsub.s32 1, %v674
    %v676 = vrot.slane %v560, %v675
    %v677 = vlaneseq
    %v678 = vshrl.u32 %v677, 7
    %v679 = vsub.s32 1, %v678
    %v680 = vrot.slane %v561, %v679
    %v681 = vlaneseq
    %v682 = vshrl.u32 %v681, 7
    %v683 = vsub.s32 1, %v682
    %v684 = vrot.slane %v562, %v683
    %v685 = vlaneseq
    %v686 = vshrl.u32 %v685, 7
    %v687 = vsub.s32 1, %v686
    %v688 = vrot.slane %v563, %v687
    %v689 = vlaneseq
    %v690 = vshrl.u32 %v689, 7
    %v691 = vsub.s32 1, %v690
    %v692 = vrot.slane %v564, %v691
    %v693 = vlaneseq
    %v694 = vshrl.u32 %v693, 7
    %v695 = vsub.s32 1, %v694
    %v696 = vrot.slane %v565, %v695
    %v697 = vlaneseq
    %v698 = vshrl.u32 %v697, 7
    %v699 = vsub.s32 1, %v698
    %v700 = vrot.slane %v566, %v699
    %v701 = vlaneseq
    %v702 = vshrl.u32 %v701, 7
    %v703 = vsub.s32 1, %v702
    %v704 = vrot.slane %v567, %v703
    %v705 = vlaneseq
    %v706 = vshrl.u32 %v705, 7
    %v707 = vsub.s32 1, %v706
    %v708 = vrot.slane %v568, %v707
    %v709 = vlaneseq
    %v710 = vshrl.u32 %v709, 7
    %v711 = vsub.s32 1, %v710
    %v712 = vrot.slane %v569, %v711
    %v713 = vlaneseq
    %v714 = vshrl.u32 %v713, 7
    %v715 = vsub.s32 1, %v714
    %v716 = vrot.slane %v570, %v715
    %v717 = vlaneseq
    %v718 = vshrl.u32 %v717, 7
    %v719 = vsub.s32 1, %v718
    %v720 = vrot.slane %v571, %v719
    %722 = vset.pattern.permute.xlu0 0
    %723 = vperm.xlu0 %722, %v55
    %v724 = vpop.permute.xlu0 %723
    %v726 = vmul.f32 %v660, %v724
    %v727 = vmul.f32 %v664, %v724
    %v728 = vmul.f32 %v668, %v724
    %v729 = vmul.f32 %v672, %v724
    %v730 = vmul.f32 %v676, %v724
    %v731 = vmul.f32 %v680, %v724
    %v732 = vmul.f32 %v684, %v724
    %v733 = vmul.f32 %v688, %v724
    %v734 = vmul.f32 %v692, %v724
    %v735 = vmul.f32 %v696, %v724
    %v736 = vmul.f32 %v700, %v724
    %v737 = vmul.f32 %v704, %v724
    %v738 = vmul.f32 %v708, %v724
    %v739 = vmul.f32 %v712, %v724
    %v740 = vmul.f32 %v716, %v724
    %v741 = vmul.f32 %v720, %v724
    %v742 = vadd.f32 %v641, %v726
    %v743 = vadd.f32 %v642, %v727
    %v744 = vadd.f32 %v643, %v728
    %v745 = vadd.f32 %v644, %v729
    %v746 = vadd.f32 %v645, %v730
    %v747 = vadd.f32 %v646, %v731
    %v748 = vadd.f32 %v647, %v732
    %v749 = vadd.f32 %v648, %v733
    %v750 = vadd.f32 %v649, %v734
    %v751 = vadd.f32 %v650, %v735
    %v752 = vadd.f32 %v651, %v736
    %v753 = vadd.f32 %v652, %v737
    %v754 = vadd.f32 %v653, %v738
    %v755 = vadd.f32 %v654, %v739
    %v756 = vadd.f32 %v655, %v740
    %v757 = vadd.f32 %v656, %v741
    %v758 = vlaneseq
    %v759 = vshrl.u32 %v758, 7
    %v760 = vsub.s32 2, %v759
    %v761 = vrot.slane %v556, %v760
    %v762 = vlaneseq
    %v763 = vshrl.u32 %v762, 7
    %v764 = vsub.s32 2, %v763
    %v765 = vrot.slane %v557, %v764
    %v766 = vlaneseq
    %v767 = vshrl.u32 %v766, 7
    %v768 = vsub.s32 2, %v767
    %v769 = vrot.slane %v558, %v768
    %v770 = vlaneseq
    %v771 = vshrl.u32 %v770, 7
    %v772 = vsub.s32 2, %v771
    %v773 = vrot.slane %v559, %v772
    %v774 = vlaneseq
    %v775 = vshrl.u32 %v774, 7
    %v776 = vsub.s32 2, %v775
    %v777 = vrot.slane %v560, %v776
    %v778 = vlaneseq
    %v779 = vshrl.u32 %v778, 7
    %v780 = vsub.s32 2, %v779
    %v781 = vrot.slane %v561, %v780
    %v782 = vlaneseq
    %v783 = vshrl.u32 %v782, 7
    %v784 = vsub.s32 2, %v783
    %v785 = vrot.slane %v562, %v784
    %v786 = vlaneseq
    %v787 = vshrl.u32 %v786, 7
    %v788 = vsub.s32 2, %v787
    %v789 = vrot.slane %v563, %v788
    %v790 = vlaneseq
    %v791 = vshrl.u32 %v790, 7
    %v792 = vsub.s32 2, %v791
    %v793 = vrot.slane %v564, %v792
    %v794 = vlaneseq
    %v795 = vshrl.u32 %v794, 7
    %v796 = vsub.s32 2, %v795
    %v797 = vrot.slane %v565, %v796
    %v798 = vlaneseq
    %v799 = vshrl.u32 %v798, 7
    %v800 = vsub.s32 2, %v799
    %v801 = vrot.slane %v566, %v800
    %v802 = vlaneseq
    %v803 = vshrl.u32 %v802, 7
    %v804 = vsub.s32 2, %v803
    %v805 = vrot.slane %v567, %v804
    %v806 = vlaneseq
    %v807 = vshrl.u32 %v806, 7
    %v808 = vsub.s32 2, %v807
    %v809 = vrot.slane %v568, %v808
    %v810 = vlaneseq
    %v811 = vshrl.u32 %v810, 7
    %v812 = vsub.s32 2, %v811
    %v813 = vrot.slane %v569, %v812
    %v814 = vlaneseq
    %v815 = vshrl.u32 %v814, 7
    %v816 = vsub.s32 2, %v815
    %v817 = vrot.slane %v570, %v816
    %v818 = vlaneseq
    %v819 = vshrl.u32 %v818, 7
    %v820 = vsub.s32 2, %v819
    %v821 = vrot.slane %v571, %v820
    %823 = vset.pattern.permute.xlu0 0
    %824 = vperm.xlu0 %823, %v56
    %v825 = vpop.permute.xlu0 %824
    %v827 = vmul.f32 %v761, %v825
    %v828 = vmul.f32 %v765, %v825
    %v829 = vmul.f32 %v769, %v825
    %v830 = vmul.f32 %v773, %v825
    %v831 = vmul.f32 %v777, %v825
    %v832 = vmul.f32 %v781, %v825
    %v833 = vmul.f32 %v785, %v825
    %v834 = vmul.f32 %v789, %v825
    %v835 = vmul.f32 %v793, %v825
    %v836 = vmul.f32 %v797, %v825
    %v837 = vmul.f32 %v801, %v825
    %v838 = vmul.f32 %v805, %v825
    %v839 = vmul.f32 %v809, %v825
    %v840 = vmul.f32 %v813, %v825
    %v841 = vmul.f32 %v817, %v825
    %v842 = vmul.f32 %v821, %v825
    %v843 = vadd.f32 %v742, %v827
    %v844 = vadd.f32 %v743, %v828
    %v845 = vadd.f32 %v744, %v829
    %v846 = vadd.f32 %v745, %v830
    %v847 = vadd.f32 %v746, %v831
    %v848 = vadd.f32 %v747, %v832
    %v849 = vadd.f32 %v748, %v833
    %v850 = vadd.f32 %v749, %v834
    %v851 = vadd.f32 %v750, %v835
    %v852 = vadd.f32 %v751, %v836
    %v853 = vadd.f32 %v752, %v837
    %v854 = vadd.f32 %v753, %v838
    %v855 = vadd.f32 %v754, %v839
    %v856 = vadd.f32 %v755, %v840
    %v857 = vadd.f32 %v756, %v841
    %v858 = vadd.f32 %v757, %v842
    %v859 = vlaneseq
    %v860 = vshrl.u32 %v859, 7
    %v861 = vsub.s32 3, %v860
    %v862 = vrot.slane %v556, %v861
    %v863 = vlaneseq
    %v864 = vshrl.u32 %v863, 7
    %v865 = vsub.s32 3, %v864
    %v866 = vrot.slane %v557, %v865
    %v867 = vlaneseq
    %v868 = vshrl.u32 %v867, 7
    %v869 = vsub.s32 3, %v868
    %v870 = vrot.slane %v558, %v869
    %v871 = vlaneseq
    %v872 = vshrl.u32 %v871, 7
    %v873 = vsub.s32 3, %v872
    %v874 = vrot.slane %v559, %v873
    %v875 = vlaneseq
    %v876 = vshrl.u32 %v875, 7
    %v877 = vsub.s32 3, %v876
    %v878 = vrot.slane %v560, %v877
    %v879 = vlaneseq
    %v880 = vshrl.u32 %v879, 7
    %v881 = vsub.s32 3, %v880
    %v882 = vrot.slane %v561, %v881
    %v883 = vlaneseq
    %v884 = vshrl.u32 %v883, 7
    %v885 = vsub.s32 3, %v884
    %v886 = vrot.slane %v562, %v885
    %v887 = vlaneseq
    %v888 = vshrl.u32 %v887, 7
    %v889 = vsub.s32 3, %v888
    %v890 = vrot.slane %v563, %v889
    %v891 = vlaneseq
    %v892 = vshrl.u32 %v891, 7
    %v893 = vsub.s32 3, %v892
    %v894 = vrot.slane %v564, %v893
    %v895 = vlaneseq
    %v896 = vshrl.u32 %v895, 7
    %v897 = vsub.s32 3, %v896
    %v898 = vrot.slane %v565, %v897
    %v899 = vlaneseq
    %v900 = vshrl.u32 %v899, 7
    %v901 = vsub.s32 3, %v900
    %v902 = vrot.slane %v566, %v901
    %v903 = vlaneseq
    %v904 = vshrl.u32 %v903, 7
    %v905 = vsub.s32 3, %v904
    %v906 = vrot.slane %v567, %v905
    %v907 = vlaneseq
    %v908 = vshrl.u32 %v907, 7
    %v909 = vsub.s32 3, %v908
    %v910 = vrot.slane %v568, %v909
    %v911 = vlaneseq
    %v912 = vshrl.u32 %v911, 7
    %v913 = vsub.s32 3, %v912
    %v914 = vrot.slane %v569, %v913
    %v915 = vlaneseq
    %v916 = vshrl.u32 %v915, 7
    %v917 = vsub.s32 3, %v916
    %v918 = vrot.slane %v570, %v917
    %v919 = vlaneseq
    %v920 = vshrl.u32 %v919, 7
    %v921 = vsub.s32 3, %v920
    %v922 = vrot.slane %v571, %v921
    %924 = vset.pattern.permute.xlu0 0
    %925 = vperm.xlu0 %924, %v57
    %v926 = vpop.permute.xlu0 %925
    %v928 = vmul.f32 %v862, %v926
    %v929 = vmul.f32 %v866, %v926
    %v930 = vmul.f32 %v870, %v926
    %v931 = vmul.f32 %v874, %v926
    %v932 = vmul.f32 %v878, %v926
    %v933 = vmul.f32 %v882, %v926
    %v934 = vmul.f32 %v886, %v926
    %v935 = vmul.f32 %v890, %v926
    %v936 = vmul.f32 %v894, %v926
    %v937 = vmul.f32 %v898, %v926
    %v938 = vmul.f32 %v902, %v926
    %v939 = vmul.f32 %v906, %v926
    %v940 = vmul.f32 %v910, %v926
    %v941 = vmul.f32 %v914, %v926
    %v942 = vmul.f32 %v918, %v926
    %v943 = vmul.f32 %v922, %v926
    %v944 = vadd.f32 %v843, %v928
    %v945 = vadd.f32 %v844, %v929
    %v946 = vadd.f32 %v845, %v930
    %v947 = vadd.f32 %v846, %v931
    %v948 = vadd.f32 %v847, %v932
    %v949 = vadd.f32 %v848, %v933
    %v950 = vadd.f32 %v849, %v934
    %v951 = vadd.f32 %v850, %v935
    %v952 = vadd.f32 %v851, %v936
    %v953 = vadd.f32 %v852, %v937
    %v954 = vadd.f32 %v853, %v938
    %v955 = vadd.f32 %v854, %v939
    %v956 = vadd.f32 %v855, %v940
    %v957 = vadd.f32 %v856, %v941
    %v958 = vadd.f32 %v857, %v942
    %v959 = vadd.f32 %v858, %v943
    %v960 = vlaneseq
    %v961 = vshrl.u32 %v960, 7
    %v962 = vsub.s32 4, %v961
    %v963 = vrot.slane %v556, %v962
    %v964 = vlaneseq
    %v965 = vshrl.u32 %v964, 7
    %v966 = vsub.s32 4, %v965
    %v967 = vrot.slane %v557, %v966
    %v968 = vlaneseq
    %v969 = vshrl.u32 %v968, 7
    %v970 = vsub.s32 4, %v969
    %v971 = vrot.slane %v558, %v970
    %v972 = vlaneseq
    %v973 = vshrl.u32 %v972, 7
    %v974 = vsub.s32 4, %v973
    %v975 = vrot.slane %v559, %v974
    %v976 = vlaneseq
    %v977 = vshrl.u32 %v976, 7
    %v978 = vsub.s32 4, %v977
    %v979 = vrot.slane %v560, %v978
    %v980 = vlaneseq
    %v981 = vshrl.u32 %v980, 7
    %v982 = vsub.s32 4, %v981
    %v983 = vrot.slane %v561, %v982
    %v984 = vlaneseq
    %v985 = vshrl.u32 %v984, 7
    %v986 = vsub.s32 4, %v985
    %v987 = vrot.slane %v562, %v986
    %v988 = vlaneseq
    %v989 = vshrl.u32 %v988, 7
    %v990 = vsub.s32 4, %v989
    %v991 = vrot.slane %v563, %v990
    %v992 = vlaneseq
    %v993 = vshrl.u32 %v992, 7
    %v994 = vsub.s32 4, %v993
    %v995 = vrot.slane %v564, %v994
    %v996 = vlaneseq
    %v997 = vshrl.u32 %v996, 7
    %v998 = vsub.s32 4, %v997
    %v999 = vrot.slane %v565, %v998
    %v1000 = vlaneseq
    %v1001 = vshrl.u32 %v1000, 7
    %v1002 = vsub.s32 4, %v1001
    %v1003 = vrot.slane %v566, %v1002
    %v1004 = vlaneseq
    %v1005 = vshrl.u32 %v1004, 7
    %v1006 = vsub.s32 4, %v1005
    %v1007 = vrot.slane %v567, %v1006
    %v1008 = vlaneseq
    %v1009 = vshrl.u32 %v1008, 7
    %v1010 = vsub.s32 4, %v1009
    %v1011 = vrot.slane %v568, %v1010
    %v1012 = vlaneseq
    %v1013 = vshrl.u32 %v1012, 7
    %v1014 = vsub.s32 4, %v1013
    %v1015 = vrot.slane %v569, %v1014
    %v1016 = vlaneseq
    %v1017 = vshrl.u32 %v1016, 7
    %v1018 = vsub.s32 4, %v1017
    %v1019 = vrot.slane %v570, %v1018
    %v1020 = vlaneseq
    %v1021 = vshrl.u32 %v1020, 7
    %v1022 = vsub.s32 4, %v1021
    %v1023 = vrot.slane %v571, %v1022
    %1025 = vset.pattern.permute.xlu0 0
    %1026 = vperm.xlu0 %1025, %v58
    %v1027 = vpop.permute.xlu0 %1026
    %v1029 = vmul.f32 %v963, %v1027
    %v1030 = vmul.f32 %v967, %v1027
    %v1031 = vmul.f32 %v971, %v1027
    %v1032 = vmul.f32 %v975, %v1027
    %v1033 = vmul.f32 %v979, %v1027
    %v1034 = vmul.f32 %v983, %v1027
    %v1035 = vmul.f32 %v987, %v1027
    %v1036 = vmul.f32 %v991, %v1027
    %v1037 = vmul.f32 %v995, %v1027
    %v1038 = vmul.f32 %v999, %v1027
    %v1039 = vmul.f32 %v1003, %v1027
    %v1040 = vmul.f32 %v1007, %v1027
    %v1041 = vmul.f32 %v1011, %v1027
    %v1042 = vmul.f32 %v1015, %v1027
    %v1043 = vmul.f32 %v1019, %v1027
    %v1044 = vmul.f32 %v1023, %v1027
    %v1045 = vadd.f32 %v944, %v1029
    %v1046 = vadd.f32 %v945, %v1030
    %v1047 = vadd.f32 %v946, %v1031
    %v1048 = vadd.f32 %v947, %v1032
    %v1049 = vadd.f32 %v948, %v1033
    %v1050 = vadd.f32 %v949, %v1034
    %v1051 = vadd.f32 %v950, %v1035
    %v1052 = vadd.f32 %v951, %v1036
    %v1053 = vadd.f32 %v952, %v1037
    %v1054 = vadd.f32 %v953, %v1038
    %v1055 = vadd.f32 %v954, %v1039
    %v1056 = vadd.f32 %v955, %v1040
    %v1057 = vadd.f32 %v956, %v1041
    %v1058 = vadd.f32 %v957, %v1042
    %v1059 = vadd.f32 %v958, %v1043
    %v1060 = vadd.f32 %v959, %v1044
    %v1061 = vlaneseq
    %v1062 = vshrl.u32 %v1061, 7
    %v1063 = vsub.s32 5, %v1062
    %v1064 = vrot.slane %v556, %v1063
    %v1065 = vlaneseq
    %v1066 = vshrl.u32 %v1065, 7
    %v1067 = vsub.s32 5, %v1066
    %v1068 = vrot.slane %v557, %v1067
    %v1069 = vlaneseq
    %v1070 = vshrl.u32 %v1069, 7
    %v1071 = vsub.s32 5, %v1070
    %v1072 = vrot.slane %v558, %v1071
    %v1073 = vlaneseq
    %v1074 = vshrl.u32 %v1073, 7
    %v1075 = vsub.s32 5, %v1074
    %v1076 = vrot.slane %v559, %v1075
    %v1077 = vlaneseq
    %v1078 = vshrl.u32 %v1077, 7
    %v1079 = vsub.s32 5, %v1078
    %v1080 = vrot.slane %v560, %v1079
    %v1081 = vlaneseq
    %v1082 = vshrl.u32 %v1081, 7
    %v1083 = vsub.s32 5, %v1082
    %v1084 = vrot.slane %v561, %v1083
    %v1085 = vlaneseq
    %v1086 = vshrl.u32 %v1085, 7
    %v1087 = vsub.s32 5, %v1086
    %v1088 = vrot.slane %v562, %v1087
    %v1089 = vlaneseq
    %v1090 = vshrl.u32 %v1089, 7
    %v1091 = vsub.s32 5, %v1090
    %v1092 = vrot.slane %v563, %v1091
    %v1093 = vlaneseq
    %v1094 = vshrl.u32 %v1093, 7
    %v1095 = vsub.s32 5, %v1094
    %v1096 = vrot.slane %v564, %v1095
    %v1097 = vlaneseq
    %v1098 = vshrl.u32 %v1097, 7
    %v1099 = vsub.s32 5, %v1098
    %v1100 = vrot.slane %v565, %v1099
    %v1101 = vlaneseq
    %v1102 = vshrl.u32 %v1101, 7
    %v1103 = vsub.s32 5, %v1102
    %v1104 = vrot.slane %v566, %v1103
    %v1105 = vlaneseq
    %v1106 = vshrl.u32 %v1105, 7
    %v1107 = vsub.s32 5, %v1106
    %v1108 = vrot.slane %v567, %v1107
    %v1109 = vlaneseq
    %v1110 = vshrl.u32 %v1109, 7
    %v1111 = vsub.s32 5, %v1110
    %v1112 = vrot.slane %v568, %v1111
    %v1113 = vlaneseq
    %v1114 = vshrl.u32 %v1113, 7
    %v1115 = vsub.s32 5, %v1114
    %v1116 = vrot.slane %v569, %v1115
    %v1117 = vlaneseq
    %v1118 = vshrl.u32 %v1117, 7
    %v1119 = vsub.s32 5, %v1118
    %v1120 = vrot.slane %v570, %v1119
    %v1121 = vlaneseq
    %v1122 = vshrl.u32 %v1121, 7
    %v1123 = vsub.s32 5, %v1122
    %v1124 = vrot.slane %v571, %v1123
    %1126 = vset.pattern.permute.xlu0 0
    %1127 = vperm.xlu0 %1126, %v59
    %v1128 = vpop.permute.xlu0 %1127
    %v1130 = vmul.f32 %v1064, %v1128
    %v1131 = vmul.f32 %v1068, %v1128
    %v1132 = vmul.f32 %v1072, %v1128
    %v1133 = vmul.f32 %v1076, %v1128
    %v1134 = vmul.f32 %v1080, %v1128
    %v1135 = vmul.f32 %v1084, %v1128
    %v1136 = vmul.f32 %v1088, %v1128
    %v1137 = vmul.f32 %v1092, %v1128
    %v1138 = vmul.f32 %v1096, %v1128
    %v1139 = vmul.f32 %v1100, %v1128
    %v1140 = vmul.f32 %v1104, %v1128
    %v1141 = vmul.f32 %v1108, %v1128
    %v1142 = vmul.f32 %v1112, %v1128
    %v1143 = vmul.f32 %v1116, %v1128
    %v1144 = vmul.f32 %v1120, %v1128
    %v1145 = vmul.f32 %v1124, %v1128
    %v1146 = vadd.f32 %v1045, %v1130
    %v1147 = vadd.f32 %v1046, %v1131
    %v1148 = vadd.f32 %v1047, %v1132
    %v1149 = vadd.f32 %v1048, %v1133
    %v1150 = vadd.f32 %v1049, %v1134
    %v1151 = vadd.f32 %v1050, %v1135
    %v1152 = vadd.f32 %v1051, %v1136
    %v1153 = vadd.f32 %v1052, %v1137
    %v1154 = vadd.f32 %v1053, %v1138
    %v1155 = vadd.f32 %v1054, %v1139
    %v1156 = vadd.f32 %v1055, %v1140
    %v1157 = vadd.f32 %v1056, %v1141
    %v1158 = vadd.f32 %v1057, %v1142
    %v1159 = vadd.f32 %v1058, %v1143
    %v1160 = vadd.f32 %v1059, %v1144
    %v1161 = vadd.f32 %v1060, %v1145
    %v1162 = vlaneseq
    %v1163 = vshrl.u32 %v1162, 7
    %v1164 = vsub.s32 6, %v1163
    %v1165 = vrot.slane %v556, %v1164
    %v1166 = vlaneseq
    %v1167 = vshrl.u32 %v1166, 7
    %v1168 = vsub.s32 6, %v1167
    %v1169 = vrot.slane %v557, %v1168
    %v1170 = vlaneseq
    %v1171 = vshrl.u32 %v1170, 7
    %v1172 = vsub.s32 6, %v1171
    %v1173 = vrot.slane %v558, %v1172
    %v1174 = vlaneseq
    %v1175 = vshrl.u32 %v1174, 7
    %v1176 = vsub.s32 6, %v1175
    %v1177 = vrot.slane %v559, %v1176
    %v1178 = vlaneseq
    %v1179 = vshrl.u32 %v1178, 7
    %v1180 = vsub.s32 6, %v1179
    %v1181 = vrot.slane %v560, %v1180
    %v1182 = vlaneseq
    %v1183 = vshrl.u32 %v1182, 7
    %v1184 = vsub.s32 6, %v1183
    %v1185 = vrot.slane %v561, %v1184
    %v1186 = vlaneseq
    %v1187 = vshrl.u32 %v1186, 7
    %v1188 = vsub.s32 6, %v1187
    %v1189 = vrot.slane %v562, %v1188
    %v1190 = vlaneseq
    %v1191 = vshrl.u32 %v1190, 7
    %v1192 = vsub.s32 6, %v1191
    %v1193 = vrot.slane %v563, %v1192
    %v1194 = vlaneseq
    %v1195 = vshrl.u32 %v1194, 7
    %v1196 = vsub.s32 6, %v1195
    %v1197 = vrot.slane %v564, %v1196
    %v1198 = vlaneseq
    %v1199 = vshrl.u32 %v1198, 7
    %v1200 = vsub.s32 6, %v1199
    %v1201 = vrot.slane %v565, %v1200
    %v1202 = vlaneseq
    %v1203 = vshrl.u32 %v1202, 7
    %v1204 = vsub.s32 6, %v1203
    %v1205 = vrot.slane %v566, %v1204
    %v1206 = vlaneseq
    %v1207 = vshrl.u32 %v1206, 7
    %v1208 = vsub.s32 6, %v1207
    %v1209 = vrot.slane %v567, %v1208
    %v1210 = vlaneseq
    %v1211 = vshrl.u32 %v1210, 7
    %v1212 = vsub.s32 6, %v1211
    %v1213 = vrot.slane %v568, %v1212
    %v1214 = vlaneseq
    %v1215 = vshrl.u32 %v1214, 7
    %v1216 = vsub.s32 6, %v1215
    %v1217 = vrot.slane %v569, %v1216
    %v1218 = vlaneseq
    %v1219 = vshrl.u32 %v1218, 7
    %v1220 = vsub.s32 6, %v1219
    %v1221 = vrot.slane %v570, %v1220
    %v1222 = vlaneseq
    %v1223 = vshrl.u32 %v1222, 7
    %v1224 = vsub.s32 6, %v1223
    %v1225 = vrot.slane %v571, %v1224
    %1227 = vset.pattern.permute.xlu0 0
    %1228 = vperm.xlu0 %1227, %v60
    %v1229 = vpop.permute.xlu0 %1228
    %v1231 = vmul.f32 %v1165, %v1229
    %v1232 = vmul.f32 %v1169, %v1229
    %v1233 = vmul.f32 %v1173, %v1229
    %v1234 = vmul.f32 %v1177, %v1229
    %v1235 = vmul.f32 %v1181, %v1229
    %v1236 = vmul.f32 %v1185, %v1229
    %v1237 = vmul.f32 %v1189, %v1229
    %v1238 = vmul.f32 %v1193, %v1229
    %v1239 = vmul.f32 %v1197, %v1229
    %v1240 = vmul.f32 %v1201, %v1229
    %v1241 = vmul.f32 %v1205, %v1229
    %v1242 = vmul.f32 %v1209, %v1229
    %v1243 = vmul.f32 %v1213, %v1229
    %v1244 = vmul.f32 %v1217, %v1229
    %v1245 = vmul.f32 %v1221, %v1229
    %v1246 = vmul.f32 %v1225, %v1229
    %v1247 = vadd.f32 %v1146, %v1231
    %v1248 = vadd.f32 %v1147, %v1232
    %v1249 = vadd.f32 %v1148, %v1233
    %v1250 = vadd.f32 %v1149, %v1234
    %v1251 = vadd.f32 %v1150, %v1235
    %v1252 = vadd.f32 %v1151, %v1236
    %v1253 = vadd.f32 %v1152, %v1237
    %v1254 = vadd.f32 %v1153, %v1238
    %v1255 = vadd.f32 %v1154, %v1239
    %v1256 = vadd.f32 %v1155, %v1240
    %v1257 = vadd.f32 %v1156, %v1241
    %v1258 = vadd.f32 %v1157, %v1242
    %v1259 = vadd.f32 %v1158, %v1243
    %v1260 = vadd.f32 %v1159, %v1244
    %v1261 = vadd.f32 %v1160, %v1245
    %v1262 = vadd.f32 %v1161, %v1246
    %v1263 = vlaneseq
    %v1264 = vshrl.u32 %v1263, 7
    %v1265 = vsub.s32 7, %v1264
    %v1266 = vrot.slane %v556, %v1265
    %v1267 = vlaneseq
    %v1268 = vshrl.u32 %v1267, 7
    %v1269 = vsub.s32 7, %v1268
    %v1270 = vrot.slane %v557, %v1269
    %v1271 = vlaneseq
    %v1272 = vshrl.u32 %v1271, 7
    %v1273 = vsub.s32 7, %v1272
    %v1274 = vrot.slane %v558, %v1273
    %v1275 = vlaneseq
    %v1276 = vshrl.u32 %v1275, 7
    %v1277 = vsub.s32 7, %v1276
    %v1278 = vrot.slane %v559, %v1277
    %v1279 = vlaneseq
    %v1280 = vshrl.u32 %v1279, 7
    %v1281 = vsub.s32 7, %v1280
    %v1282 = vrot.slane %v560, %v1281
    %v1283 = vlaneseq
    %v1284 = vshrl.u32 %v1283, 7
    %v1285 = vsub.s32 7, %v1284
    %v1286 = vrot.slane %v561, %v1285
    %v1287 = vlaneseq
    %v1288 = vshrl.u32 %v1287, 7
    %v1289 = vsub.s32 7, %v1288
    %v1290 = vrot.slane %v562, %v1289
    %v1291 = vlaneseq
    %v1292 = vshrl.u32 %v1291, 7
    %v1293 = vsub.s32 7, %v1292
    %v1294 = vrot.slane %v563, %v1293
    %v1295 = vlaneseq
    %v1296 = vshrl.u32 %v1295, 7
    %v1297 = vsub.s32 7, %v1296
    %v1298 = vrot.slane %v564, %v1297
    %v1299 = vlaneseq
    %v1300 = vshrl.u32 %v1299, 7
    %v1301 = vsub.s32 7, %v1300
    %v1302 = vrot.slane %v565, %v1301
    %v1303 = vlaneseq
    %v1304 = vshrl.u32 %v1303, 7
    %v1305 = vsub.s32 7, %v1304
    %v1306 = vrot.slane %v566, %v1305
    %v1307 = vlaneseq
    %v1308 = vshrl.u32 %v1307, 7
    %v1309 = vsub.s32 7, %v1308
    %v1310 = vrot.slane %v567, %v1309
    %v1311 = vlaneseq
    %v1312 = vshrl.u32 %v1311, 7
    %v1313 = vsub.s32 7, %v1312
    %v1314 = vrot.slane %v568, %v1313
    %v1315 = vlaneseq
    %v1316 = vshrl.u32 %v1315, 7
    %v1317 = vsub.s32 7, %v1316
    %v1318 = vrot.slane %v569, %v1317
    %v1319 = vlaneseq
    %v1320 = vshrl.u32 %v1319, 7
    %v1321 = vsub.s32 7, %v1320
    %v1322 = vrot.slane %v570, %v1321
    %v1323 = vlaneseq
    %v1324 = vshrl.u32 %v1323, 7
    %v1325 = vsub.s32 7, %v1324
    %v1326 = vrot.slane %v571, %v1325
    %1328 = vset.pattern.permute.xlu0 0
    %1329 = vperm.xlu0 %1328, %v61
    %v1330 = vpop.permute.xlu0 %1329
    %v1332 = vmul.f32 %v1266, %v1330
    %v1333 = vmul.f32 %v1270, %v1330
    %v1334 = vmul.f32 %v1274, %v1330
    %v1335 = vmul.f32 %v1278, %v1330
    %v1336 = vmul.f32 %v1282, %v1330
    %v1337 = vmul.f32 %v1286, %v1330
    %v1338 = vmul.f32 %v1290, %v1330
    %v1339 = vmul.f32 %v1294, %v1330
    %v1340 = vmul.f32 %v1298, %v1330
    %v1341 = vmul.f32 %v1302, %v1330
    %v1342 = vmul.f32 %v1306, %v1330
    %v1343 = vmul.f32 %v1310, %v1330
    %v1344 = vmul.f32 %v1314, %v1330
    %v1345 = vmul.f32 %v1318, %v1330
    %v1346 = vmul.f32 %v1322, %v1330
    %v1347 = vmul.f32 %v1326, %v1330
    %v1348 = vadd.f32 %v1247, %v1332
    %v1349 = vadd.f32 %v1248, %v1333
    %v1350 = vadd.f32 %v1249, %v1334
    %v1351 = vadd.f32 %v1250, %v1335
    %v1352 = vadd.f32 %v1251, %v1336
    %v1353 = vadd.f32 %v1252, %v1337
    %v1354 = vadd.f32 %v1253, %v1338
    %v1355 = vadd.f32 %v1254, %v1339
    %v1356 = vadd.f32 %v1255, %v1340
    %v1357 = vadd.f32 %v1256, %v1341
    %v1358 = vadd.f32 %v1257, %v1342
    %v1359 = vadd.f32 %v1258, %v1343
    %v1360 = vadd.f32 %v1259, %v1344
    %v1361 = vadd.f32 %v1260, %v1345
    %v1362 = vadd.f32 %v1261, %v1346
    %v1363 = vadd.f32 %v1262, %v1347
    %1365 = vset.pattern.permute.xlu0 0
    %1366 = vperm.xlu0 %1365, %v62
    %v1367 = vpop.permute.xlu0 %1366
    %v1369 = vmul.f32 %v579, %v1367
    %v1370 = vmul.f32 %v583, %v1367
    %v1371 = vmul.f32 %v587, %v1367
    %v1372 = vmul.f32 %v591, %v1367
    %v1373 = vmul.f32 %v595, %v1367
    %v1374 = vmul.f32 %v599, %v1367
    %v1375 = vmul.f32 %v603, %v1367
    %v1376 = vmul.f32 %v607, %v1367
    %v1377 = vmul.f32 %v611, %v1367
    %v1378 = vmul.f32 %v615, %v1367
    %v1379 = vmul.f32 %v619, %v1367
    %v1380 = vmul.f32 %v623, %v1367
    %v1381 = vmul.f32 %v627, %v1367
    %v1382 = vmul.f32 %v631, %v1367
    %v1383 = vmul.f32 %v635, %v1367
    %v1384 = vmul.f32 %v575, %v1367
    %v1385 = vadd.f32 %v1348, %v1369
    %v1386 = vadd.f32 %v1349, %v1370
    %v1387 = vadd.f32 %v1350, %v1371
    %v1388 = vadd.f32 %v1351, %v1372
    %v1389 = vadd.f32 %v1352, %v1373
    %v1390 = vadd.f32 %v1353, %v1374
    %v1391 = vadd.f32 %v1354, %v1375
    %v1392 = vadd.f32 %v1355, %v1376
    %v1393 = vadd.f32 %v1356, %v1377
    %v1394 = vadd.f32 %v1357, %v1378
    %v1395 = vadd.f32 %v1358, %v1379
    %v1396 = vadd.f32 %v1359, %v1380
    %v1397 = vadd.f32 %v1360, %v1381
    %v1398 = vadd.f32 %v1361, %v1382
    %v1399 = vadd.f32 %v1362, %v1383
    %v1400 = vadd.f32 %v1363, %v1384
    %1402 = vset.pattern.permute.xlu0 0
    %1403 = vperm.xlu0 %1402, %v63
    %v1404 = vpop.permute.xlu0 %1403
    %v1406 = vmul.f32 %v664, %v1404
    %v1407 = vmul.f32 %v668, %v1404
    %v1408 = vmul.f32 %v672, %v1404
    %v1409 = vmul.f32 %v676, %v1404
    %v1410 = vmul.f32 %v680, %v1404
    %v1411 = vmul.f32 %v684, %v1404
    %v1412 = vmul.f32 %v688, %v1404
    %v1413 = vmul.f32 %v692, %v1404
    %v1414 = vmul.f32 %v696, %v1404
    %v1415 = vmul.f32 %v700, %v1404
    %v1416 = vmul.f32 %v704, %v1404
    %v1417 = vmul.f32 %v708, %v1404
    %v1418 = vmul.f32 %v712, %v1404
    %v1419 = vmul.f32 %v716, %v1404
    %v1420 = vmul.f32 %v720, %v1404
    %v1421 = vmul.f32 %v660, %v1404
    %v1422 = vadd.f32 %v1385, %v1406
    %v1423 = vadd.f32 %v1386, %v1407
    %v1424 = vadd.f32 %v1387, %v1408
    %v1425 = vadd.f32 %v1388, %v1409
    %v1426 = vadd.f32 %v1389, %v1410
    %v1427 = vadd.f32 %v1390, %v1411
    %v1428 = vadd.f32 %v1391, %v1412
    %v1429 = vadd.f32 %v1392, %v1413
    %v1430 = vadd.f32 %v1393, %v1414
    %v1431 = vadd.f32 %v1394, %v1415
    %v1432 = vadd.f32 %v1395, %v1416
    %v1433 = vadd.f32 %v1396, %v1417
    %v1434 = vadd.f32 %v1397, %v1418
    %v1435 = vadd.f32 %v1398, %v1419
    %v1436 = vadd.f32 %v1399, %v1420
    %v1437 = vadd.f32 %v1400, %v1421
    %1439 = vset.pattern.permute.xlu0 0
    %1440 = vperm.xlu0 %1439, %v64
    %v1441 = vpop.permute.xlu0 %1440
    %v1443 = vmul.f32 %v765, %v1441
    %v1444 = vmul.f32 %v769, %v1441
    %v1445 = vmul.f32 %v773, %v1441
    %v1446 = vmul.f32 %v777, %v1441
    %v1447 = vmul.f32 %v781, %v1441
    %v1448 = vmul.f32 %v785, %v1441
    %v1449 = vmul.f32 %v789, %v1441
    %v1450 = vmul.f32 %v793, %v1441
    %v1451 = vmul.f32 %v797, %v1441
    %v1452 = vmul.f32 %v801, %v1441
    %v1453 = vmul.f32 %v805, %v1441
    %v1454 = vmul.f32 %v809, %v1441
    %v1455 = vmul.f32 %v813, %v1441
    %v1456 = vmul.f32 %v817, %v1441
    %v1457 = vmul.f32 %v821, %v1441
    %v1458 = vmul.f32 %v761, %v1441
    %v1459 = vadd.f32 %v1422, %v1443
    %v1460 = vadd.f32 %v1423, %v1444
    %v1461 = vadd.f32 %v1424, %v1445
    %v1462 = vadd.f32 %v1425, %v1446
    %v1463 = vadd.f32 %v1426, %v1447
    %v1464 = vadd.f32 %v1427, %v1448
    %v1465 = vadd.f32 %v1428, %v1449
    %v1466 = vadd.f32 %v1429, %v1450
    %v1467 = vadd.f32 %v1430, %v1451
    %v1468 = vadd.f32 %v1431, %v1452
    %v1469 = vadd.f32 %v1432, %v1453
    %v1470 = vadd.f32 %v1433, %v1454
    %v1471 = vadd.f32 %v1434, %v1455
    %v1472 = vadd.f32 %v1435, %v1456
    %v1473 = vadd.f32 %v1436, %v1457
    %v1474 = vadd.f32 %v1437, %v1458
    %1476 = vset.pattern.permute.xlu0 0
    %1477 = vperm.xlu0 %1476, %v65
    %v1478 = vpop.permute.xlu0 %1477
    %v1480 = vmul.f32 %v866, %v1478
    %v1481 = vmul.f32 %v870, %v1478
    %v1482 = vmul.f32 %v874, %v1478
    %v1483 = vmul.f32 %v878, %v1478
    %v1484 = vmul.f32 %v882, %v1478
    %v1485 = vmul.f32 %v886, %v1478
    %v1486 = vmul.f32 %v890, %v1478
    %v1487 = vmul.f32 %v894, %v1478
    %v1488 = vmul.f32 %v898, %v1478
    %v1489 = vmul.f32 %v902, %v1478
    %v1490 = vmul.f32 %v906, %v1478
    %v1491 = vmul.f32 %v910, %v1478
    %v1492 = vmul.f32 %v914, %v1478
    %v1493 = vmul.f32 %v918, %v1478
    %v1494 = vmul.f32 %v922, %v1478
    %v1495 = vmul.f32 %v862, %v1478
    %v1496 = vadd.f32 %v1459, %v1480
    %v1497 = vadd.f32 %v1460, %v1481
    %v1498 = vadd.f32 %v1461, %v1482
    %v1499 = vadd.f32 %v1462, %v1483
    %v1500 = vadd.f32 %v1463, %v1484
    %v1501 = vadd.f32 %v1464, %v1485
    %v1502 = vadd.f32 %v1465, %v1486
    %v1503 = vadd.f32 %v1466, %v1487
    %v1504 = vadd.f32 %v1467, %v1488
    %v1505 = vadd.f32 %v1468, %v1489
    %v1506 = vadd.f32 %v1469, %v1490
    %v1507 = vadd.f32 %v1470, %v1491
    %v1508 = vadd.f32 %v1471, %v1492
    %v1509 = vadd.f32 %v1472, %v1493
    %v1510 = vadd.f32 %v1473, %v1494
    %v1511 = vadd.f32 %v1474, %v1495
    %1513 = vset.pattern.permute.xlu0 0
    %1514 = vperm.xlu0 %1513, %v66
    %v1515 = vpop.permute.xlu0 %1514
    %v1517 = vmul.f32 %v967, %v1515
    %v1518 = vmul.f32 %v971, %v1515
    %v1519 = vmul.f32 %v975, %v1515
    %v1520 = vmul.f32 %v979, %v1515
    %v1521 = vmul.f32 %v983, %v1515
    %v1522 = vmul.f32 %v987, %v1515
    %v1523 = vmul.f32 %v991, %v1515
    %v1524 = vmul.f32 %v995, %v1515
    %v1525 = vmul.f32 %v999, %v1515
    %v1526 = vmul.f32 %v1003, %v1515
    %v1527 = vmul.f32 %v1007, %v1515
    %v1528 = vmul.f32 %v1011, %v1515
    %v1529 = vmul.f32 %v1015, %v1515
    %v1530 = vmul.f32 %v1019, %v1515
    %v1531 = vmul.f32 %v1023, %v1515
    %v1532 = vmul.f32 %v963, %v1515
    %v1533 = vadd.f32 %v1496, %v1517
    %v1534 = vadd.f32 %v1497, %v1518
    %v1535 = vadd.f32 %v1498, %v1519
    %v1536 = vadd.f32 %v1499, %v1520
    %v1537 = vadd.f32 %v1500, %v1521
    %v1538 = vadd.f32 %v1501, %v1522
    %v1539 = vadd.f32 %v1502, %v1523
    %v1540 = vadd.f32 %v1503, %v1524
    %v1541 = vadd.f32 %v1504, %v1525
    %v1542 = vadd.f32 %v1505, %v1526
    %v1543 = vadd.f32 %v1506, %v1527
    %v1544 = vadd.f32 %v1507, %v1528
    %v1545 = vadd.f32 %v1508, %v1529
    %v1546 = vadd.f32 %v1509, %v1530
    %v1547 = vadd.f32 %v1510, %v1531
    %v1548 = vadd.f32 %v1511, %v1532
    %1550 = vset.pattern.permute.xlu0 0
    %1551 = vperm.xlu0 %1550, %v67
    %v1552 = vpop.permute.xlu0 %1551
    %v1554 = vmul.f32 %v1068, %v1552
    %v1555 = vmul.f32 %v1072, %v1552
    %v1556 = vmul.f32 %v1076, %v1552
    %v1557 = vmul.f32 %v1080, %v1552
    %v1558 = vmul.f32 %v1084, %v1552
    %v1559 = vmul.f32 %v1088, %v1552
    %v1560 = vmul.f32 %v1092, %v1552
    %v1561 = vmul.f32 %v1096, %v1552
    %v1562 = vmul.f32 %v1100, %v1552
    %v1563 = vmul.f32 %v1104, %v1552
    %v1564 = vmul.f32 %v1108, %v1552
    %v1565 = vmul.f32 %v1112, %v1552
    %v1566 = vmul.f32 %v1116, %v1552
    %v1567 = vmul.f32 %v1120, %v1552
    %v1568 = vmul.f32 %v1124, %v1552
    %v1569 = vmul.f32 %v1064, %v1552
    %v1570 = vadd.f32 %v1533, %v1554
    %v1571 = vadd.f32 %v1534, %v1555
    %v1572 = vadd.f32 %v1535, %v1556
    %v1573 = vadd.f32 %v1536, %v1557
    %v1574 = vadd.f32 %v1537, %v1558
    %v1575 = vadd.f32 %v1538, %v1559
    %v1576 = vadd.f32 %v1539, %v1560
    %v1577 = vadd.f32 %v1540, %v1561
    %v1578 = vadd.f32 %v1541, %v1562
    %v1579 = vadd.f32 %v1542, %v1563
    %v1580 = vadd.f32 %v1543, %v1564
    %v1581 = vadd.f32 %v1544, %v1565
    %v1582 = vadd.f32 %v1545, %v1566
    %v1583 = vadd.f32 %v1546, %v1567
    %v1584 = vadd.f32 %v1547, %v1568
    %v1585 = vadd.f32 %v1548, %v1569
    %1587 = vset.pattern.permute.xlu0 0
    %1588 = vperm.xlu0 %1587, %v68
    %v1589 = vpop.permute.xlu0 %1588
    %v1591 = vmul.f32 %v1169, %v1589
    %v1592 = vmul.f32 %v1173, %v1589
    %v1593 = vmul.f32 %v1177, %v1589
    %v1594 = vmul.f32 %v1181, %v1589
    %v1595 = vmul.f32 %v1185, %v1589
    %v1596 = vmul.f32 %v1189, %v1589
    %v1597 = vmul.f32 %v1193, %v1589
    %v1598 = vmul.f32 %v1197, %v1589
    %v1599 = vmul.f32 %v1201, %v1589
    %v1600 = vmul.f32 %v1205, %v1589
    %v1601 = vmul.f32 %v1209, %v1589
    %v1602 = vmul.f32 %v1213, %v1589
    %v1603 = vmul.f32 %v1217, %v1589
    %v1604 = vmul.f32 %v1221, %v1589
    %v1605 = vmul.f32 %v1225, %v1589
    %v1606 = vmul.f32 %v1165, %v1589
    %v1607 = vadd.f32 %v1570, %v1591
    %v1608 = vadd.f32 %v1571, %v1592
    %v1609 = vadd.f32 %v1572, %v1593
    %v1610 = vadd.f32 %v1573, %v1594
    %v1611 = vadd.f32 %v1574, %v1595
    %v1612 = vadd.f32 %v1575, %v1596
    %v1613 = vadd.f32 %v1576, %v1597
    %v1614 = vadd.f32 %v1577, %v1598
    %v1615 = vadd.f32 %v1578, %v1599
    %v1616 = vadd.f32 %v1579, %v1600
    %v1617 = vadd.f32 %v1580, %v1601
    %v1618 = vadd.f32 %v1581, %v1602
    %v1619 = vadd.f32 %v1582, %v1603
    %v1620 = vadd.f32 %v1583, %v1604
    %v1621 = vadd.f32 %v1584, %v1605
    %v1622 = vadd.f32 %v1585, %v1606
    %1624 = vset.pattern.permute.xlu0 0
    %1625 = vperm.xlu0 %1624, %v69
    %v1626 = vpop.permute.xlu0 %1625
    %v1628 = vmul.f32 %v1270, %v1626
    %v1629 = vmul.f32 %v1274, %v1626
    %v1630 = vmul.f32 %v1278, %v1626
    %v1631 = vmul.f32 %v1282, %v1626
    %v1632 = vmul.f32 %v1286, %v1626
    %v1633 = vmul.f32 %v1290, %v1626
    %v1634 = vmul.f32 %v1294, %v1626
    %v1635 = vmul.f32 %v1298, %v1626
    %v1636 = vmul.f32 %v1302, %v1626
    %v1637 = vmul.f32 %v1306, %v1626
    %v1638 = vmul.f32 %v1310, %v1626
    %v1639 = vmul.f32 %v1314, %v1626
    %v1640 = vmul.f32 %v1318, %v1626
    %v1641 = vmul.f32 %v1322, %v1626
    %v1642 = vmul.f32 %v1326, %v1626
    %v1643 = vmul.f32 %v1266, %v1626
    %v1644 = vadd.f32 %v1607, %v1628
    %v1645 = vadd.f32 %v1608, %v1629
    %v1646 = vadd.f32 %v1609, %v1630
    %v1647 = vadd.f32 %v1610, %v1631
    %v1648 = vadd.f32 %v1611, %v1632
    %v1649 = vadd.f32 %v1612, %v1633
    %v1650 = vadd.f32 %v1613, %v1634
    %v1651 = vadd.f32 %v1614, %v1635
    %v1652 = vadd.f32 %v1615, %v1636
    %v1653 = vadd.f32 %v1616, %v1637
    %v1654 = vadd.f32 %v1617, %v1638
    %v1655 = vadd.f32 %v1618, %v1639
    %v1656 = vadd.f32 %v1619, %v1640
    %v1657 = vadd.f32 %v1620, %v1641
    %v1658 = vadd.f32 %v1621, %v1642
    %v1659 = vadd.f32 %v1622, %v1643
    %1661 = vset.pattern.permute.xlu0 0
    %1662 = vperm.xlu0 %1661, %v70
    %v1663 = vpop.permute.xlu0 %1662
    %v1665 = vmul.f32 %v583, %v1663
    %v1666 = vmul.f32 %v587, %v1663
    %v1667 = vmul.f32 %v591, %v1663
    %v1668 = vmul.f32 %v595, %v1663
    %v1669 = vmul.f32 %v599, %v1663
    %v1670 = vmul.f32 %v603, %v1663
    %v1671 = vmul.f32 %v607, %v1663
    %v1672 = vmul.f32 %v611, %v1663
    %v1673 = vmul.f32 %v615, %v1663
    %v1674 = vmul.f32 %v619, %v1663
    %v1675 = vmul.f32 %v623, %v1663
    %v1676 = vmul.f32 %v627, %v1663
    %v1677 = vmul.f32 %v631, %v1663
    %v1678 = vmul.f32 %v635, %v1663
    %v1679 = vmul.f32 %v575, %v1663
    %v1680 = vmul.f32 %v579, %v1663
    %v1681 = vadd.f32 %v1644, %v1665
    %v1682 = vadd.f32 %v1645, %v1666
    %v1683 = vadd.f32 %v1646, %v1667
    %v1684 = vadd.f32 %v1647, %v1668
    %v1685 = vadd.f32 %v1648, %v1669
    %v1686 = vadd.f32 %v1649, %v1670
    %v1687 = vadd.f32 %v1650, %v1671
    %v1688 = vadd.f32 %v1651, %v1672
    %v1689 = vadd.f32 %v1652, %v1673
    %v1690 = vadd.f32 %v1653, %v1674
    %v1691 = vadd.f32 %v1654, %v1675
    %v1692 = vadd.f32 %v1655, %v1676
    %v1693 = vadd.f32 %v1656, %v1677
    %v1694 = vadd.f32 %v1657, %v1678
    %v1695 = vadd.f32 %v1658, %v1679
    %v1696 = vadd.f32 %v1659, %v1680
    %1698 = vset.pattern.permute.xlu0 0
    %1699 = vperm.xlu0 %1698, %v71
    %v1700 = vpop.permute.xlu0 %1699
    %v1702 = vmul.f32 %v668, %v1700
    %v1703 = vmul.f32 %v672, %v1700
    %v1704 = vmul.f32 %v676, %v1700
    %v1705 = vmul.f32 %v680, %v1700
    %v1706 = vmul.f32 %v684, %v1700
    %v1707 = vmul.f32 %v688, %v1700
    %v1708 = vmul.f32 %v692, %v1700
    %v1709 = vmul.f32 %v696, %v1700
    %v1710 = vmul.f32 %v700, %v1700
    %v1711 = vmul.f32 %v704, %v1700
    %v1712 = vmul.f32 %v708, %v1700
    %v1713 = vmul.f32 %v712, %v1700
    %v1714 = vmul.f32 %v716, %v1700
    %v1715 = vmul.f32 %v720, %v1700
    %v1716 = vmul.f32 %v660, %v1700
    %v1717 = vmul.f32 %v664, %v1700
    %v1718 = vadd.f32 %v1681, %v1702
    %v1719 = vadd.f32 %v1682, %v1703
    %v1720 = vadd.f32 %v1683, %v1704
    %v1721 = vadd.f32 %v1684, %v1705
    %v1722 = vadd.f32 %v1685, %v1706
    %v1723 = vadd.f32 %v1686, %v1707
    %v1724 = vadd.f32 %v1687, %v1708
    %v1725 = vadd.f32 %v1688, %v1709
    %v1726 = vadd.f32 %v1689, %v1710
    %v1727 = vadd.f32 %v1690, %v1711
    %v1728 = vadd.f32 %v1691, %v1712
    %v1729 = vadd.f32 %v1692, %v1713
    %v1730 = vadd.f32 %v1693, %v1714
    %v1731 = vadd.f32 %v1694, %v1715
    %v1732 = vadd.f32 %v1695, %v1716
    %v1733 = vadd.f32 %v1696, %v1717
    %1735 = vset.pattern.permute.xlu0 0
    %1736 = vperm.xlu0 %1735, %v72
    %v1737 = vpop.permute.xlu0 %1736
    %v1739 = vmul.f32 %v769, %v1737
    %v1740 = vmul.f32 %v773, %v1737
    %v1741 = vmul.f32 %v777, %v1737
    %v1742 = vmul.f32 %v781, %v1737
    %v1743 = vmul.f32 %v785, %v1737
    %v1744 = vmul.f32 %v789, %v1737
    %v1745 = vmul.f32 %v793, %v1737
    %v1746 = vmul.f32 %v797, %v1737
    %v1747 = vmul.f32 %v801, %v1737
    %v1748 = vmul.f32 %v805, %v1737
    %v1749 = vmul.f32 %v809, %v1737
    %v1750 = vmul.f32 %v813, %v1737
    %v1751 = vmul.f32 %v817, %v1737
    %v1752 = vmul.f32 %v821, %v1737
    %v1753 = vmul.f32 %v761, %v1737
    %v1754 = vmul.f32 %v765, %v1737
    %v1755 = vadd.f32 %v1718, %v1739
    %v1756 = vadd.f32 %v1719, %v1740
    %v1757 = vadd.f32 %v1720, %v1741
    %v1758 = vadd.f32 %v1721, %v1742
    %v1759 = vadd.f32 %v1722, %v1743
    %v1760 = vadd.f32 %v1723, %v1744
    %v1761 = vadd.f32 %v1724, %v1745
    %v1762 = vadd.f32 %v1725, %v1746
    %v1763 = vadd.f32 %v1726, %v1747
    %v1764 = vadd.f32 %v1727, %v1748
    %v1765 = vadd.f32 %v1728, %v1749
    %v1766 = vadd.f32 %v1729, %v1750
    %v1767 = vadd.f32 %v1730, %v1751
    %v1768 = vadd.f32 %v1731, %v1752
    %v1769 = vadd.f32 %v1732, %v1753
    %v1770 = vadd.f32 %v1733, %v1754
    %1772 = vset.pattern.permute.xlu0 0
    %1773 = vperm.xlu0 %1772, %v73
    %v1774 = vpop.permute.xlu0 %1773
    %v1776 = vmul.f32 %v870, %v1774
    %v1777 = vmul.f32 %v874, %v1774
    %v1778 = vmul.f32 %v878, %v1774
    %v1779 = vmul.f32 %v882, %v1774
    %v1780 = vmul.f32 %v886, %v1774
    %v1781 = vmul.f32 %v890, %v1774
    %v1782 = vmul.f32 %v894, %v1774
    %v1783 = vmul.f32 %v898, %v1774
    %v1784 = vmul.f32 %v902, %v1774
    %v1785 = vmul.f32 %v906, %v1774
    %v1786 = vmul.f32 %v910, %v1774
    %v1787 = vmul.f32 %v914, %v1774
    %v1788 = vmul.f32 %v918, %v1774
    %v1789 = vmul.f32 %v922, %v1774
    %v1790 = vmul.f32 %v862, %v1774
    %v1791 = vmul.f32 %v866, %v1774
    %v1792 = vadd.f32 %v1755, %v1776
    %v1793 = vadd.f32 %v1756, %v1777
    %v1794 = vadd.f32 %v1757, %v1778
    %v1795 = vadd.f32 %v1758, %v1779
    %v1796 = vadd.f32 %v1759, %v1780
    %v1797 = vadd.f32 %v1760, %v1781
    %v1798 = vadd.f32 %v1761, %v1782
    %v1799 = vadd.f32 %v1762, %v1783
    %v1800 = vadd.f32 %v1763, %v1784
    %v1801 = vadd.f32 %v1764, %v1785
    %v1802 = vadd.f32 %v1765, %v1786
    %v1803 = vadd.f32 %v1766, %v1787
    %v1804 = vadd.f32 %v1767, %v1788
    %v1805 = vadd.f32 %v1768, %v1789
    %v1806 = vadd.f32 %v1769, %v1790
    %v1807 = vadd.f32 %v1770, %v1791
    %1809 = vset.pattern.permute.xlu0 0
    %1810 = vperm.xlu0 %1809, %v74
    %v1811 = vpop.permute.xlu0 %1810
    %v1813 = vmul.f32 %v971, %v1811
    %v1814 = vmul.f32 %v975, %v1811
    %v1815 = vmul.f32 %v979, %v1811
    %v1816 = vmul.f32 %v983, %v1811
    %v1817 = vmul.f32 %v987, %v1811
    %v1818 = vmul.f32 %v991, %v1811
    %v1819 = vmul.f32 %v995, %v1811
    %v1820 = vmul.f32 %v999, %v1811
    %v1821 = vmul.f32 %v1003, %v1811
    %v1822 = vmul.f32 %v1007, %v1811
    %v1823 = vmul.f32 %v1011, %v1811
    %v1824 = vmul.f32 %v1015, %v1811
    %v1825 = vmul.f32 %v1019, %v1811
    %v1826 = vmul.f32 %v1023, %v1811
    %v1827 = vmul.f32 %v963, %v1811
    %v1828 = vmul.f32 %v967, %v1811
    %v1829 = vadd.f32 %v1792, %v1813
    %v1830 = vadd.f32 %v1793, %v1814
    %v1831 = vadd.f32 %v1794, %v1815
    %v1832 = vadd.f32 %v1795, %v1816
    %v1833 = vadd.f32 %v1796, %v1817
    %v1834 = vadd.f32 %v1797, %v1818
    %v1835 = vadd.f32 %v1798, %v1819
    %v1836 = vadd.f32 %v1799, %v1820
    %v1837 = vadd.f32 %v1800, %v1821
    %v1838 = vadd.f32 %v1801, %v1822
    %v1839 = vadd.f32 %v1802, %v1823
    %v1840 = vadd.f32 %v1803, %v1824
    %v1841 = vadd.f32 %v1804, %v1825
    %v1842 = vadd.f32 %v1805, %v1826
    %v1843 = vadd.f32 %v1806, %v1827
    %v1844 = vadd.f32 %v1807, %v1828
    %1846 = vset.pattern.permute.xlu0 0
    %1847 = vperm.xlu0 %1846, %v75
    %v1848 = vpop.permute.xlu0 %1847
    %v1850 = vmul.f32 %v1072, %v1848
    %v1851 = vmul.f32 %v1076, %v1848
    %v1852 = vmul.f32 %v1080, %v1848
    %v1853 = vmul.f32 %v1084, %v1848
    %v1854 = vmul.f32 %v1088, %v1848
    %v1855 = vmul.f32 %v1092, %v1848
    %v1856 = vmul.f32 %v1096, %v1848
    %v1857 = vmul.f32 %v1100, %v1848
    %v1858 = vmul.f32 %v1104, %v1848
    %v1859 = vmul.f32 %v1108, %v1848
    %v1860 = vmul.f32 %v1112, %v1848
    %v1861 = vmul.f32 %v1116, %v1848
    %v1862 = vmul.f32 %v1120, %v1848
    %v1863 = vmul.f32 %v1124, %v1848
    %v1864 = vmul.f32 %v1064, %v1848
    %v1865 = vmul.f32 %v1068, %v1848
    %v1866 = vadd.f32 %v1829, %v1850
    %v1867 = vadd.f32 %v1830, %v1851
    %v1868 = vadd.f32 %v1831, %v1852
    %v1869 = vadd.f32 %v1832, %v1853
    %v1870 = vadd.f32 %v1833, %v1854
    %v1871 = vadd.f32 %v1834, %v1855
    %v1872 = vadd.f32 %v1835, %v1856
    %v1873 = vadd.f32 %v1836, %v1857
    %v1874 = vadd.f32 %v1837, %v1858
    %v1875 = vadd.f32 %v1838, %v1859
    %v1876 = vadd.f32 %v1839, %v1860
    %v1877 = vadd.f32 %v1840, %v1861
    %v1878 = vadd.f32 %v1841, %v1862
    %v1879 = vadd.f32 %v1842, %v1863
    %v1880 = vadd.f32 %v1843, %v1864
    %v1881 = vadd.f32 %v1844, %v1865
    %1883 = vset.pattern.permute.xlu0 0
    %1884 = vperm.xlu0 %1883, %v76
    %v1885 = vpop.permute.xlu0 %1884
    %v1887 = vmul.f32 %v1173, %v1885
    %v1888 = vmul.f32 %v1177, %v1885
    %v1889 = vmul.f32 %v1181, %v1885
    %v1890 = vmul.f32 %v1185, %v1885
    %v1891 = vmul.f32 %v1189, %v1885
    %v1892 = vmul.f32 %v1193, %v1885
    %v1893 = vmul.f32 %v1197, %v1885
    %v1894 = vmul.f32 %v1201, %v1885
    %v1895 = vmul.f32 %v1205, %v1885
    %v1896 = vmul.f32 %v1209, %v1885
    %v1897 = vmul.f32 %v1213, %v1885
    %v1898 = vmul.f32 %v1217, %v1885
    %v1899 = vmul.f32 %v1221, %v1885
    %v1900 = vmul.f32 %v1225, %v1885
    %v1901 = vmul.f32 %v1165, %v1885
    %v1902 = vmul.f32 %v1169, %v1885
    %v1903 = vadd.f32 %v1866, %v1887
    %v1904 = vadd.f32 %v1867, %v1888
    %v1905 = vadd.f32 %v1868, %v1889
    %v1906 = vadd.f32 %v1869, %v1890
    %v1907 = vadd.f32 %v1870, %v1891
    %v1908 = vadd.f32 %v1871, %v1892
    %v1909 = vadd.f32 %v1872, %v1893
    %v1910 = vadd.f32 %v1873, %v1894
    %v1911 = vadd.f32 %v1874, %v1895
    %v1912 = vadd.f32 %v1875, %v1896
    %v1913 = vadd.f32 %v1876, %v1897
    %v1914 = vadd.f32 %v1877, %v1898
    %v1915 = vadd.f32 %v1878, %v1899
    %v1916 = vadd.f32 %v1879, %v1900
    %v1917 = vadd.f32 %v1880, %v1901
    %v1918 = vadd.f32 %v1881, %v1902
    %1920 = vset.pattern.permute.xlu0 0
    %1921 = vperm.xlu0 %1920, %v77
    %v1922 = vpop.permute.xlu0 %1921
    %v1924 = vmul.f32 %v1274, %v1922
    %v1925 = vmul.f32 %v1278, %v1922
    %v1926 = vmul.f32 %v1282, %v1922
    %v1927 = vmul.f32 %v1286, %v1922
    %v1928 = vmul.f32 %v1290, %v1922
    %v1929 = vmul.f32 %v1294, %v1922
    %v1930 = vmul.f32 %v1298, %v1922
    %v1931 = vmul.f32 %v1302, %v1922
    %v1932 = vmul.f32 %v1306, %v1922
    %v1933 = vmul.f32 %v1310, %v1922
    %v1934 = vmul.f32 %v1314, %v1922
    %v1935 = vmul.f32 %v1318, %v1922
    %v1936 = vmul.f32 %v1322, %v1922
    %v1937 = vmul.f32 %v1326, %v1922
    %v1938 = vmul.f32 %v1266, %v1922
    %v1939 = vmul.f32 %v1270, %v1922
    %v1940 = vadd.f32 %v1903, %v1924
    %v1941 = vadd.f32 %v1904, %v1925
    %v1942 = vadd.f32 %v1905, %v1926
    %v1943 = vadd.f32 %v1906, %v1927
    %v1944 = vadd.f32 %v1907, %v1928
    %v1945 = vadd.f32 %v1908, %v1929
    %v1946 = vadd.f32 %v1909, %v1930
    %v1947 = vadd.f32 %v1910, %v1931
    %v1948 = vadd.f32 %v1911, %v1932
    %v1949 = vadd.f32 %v1912, %v1933
    %v1950 = vadd.f32 %v1913, %v1934
    %v1951 = vadd.f32 %v1914, %v1935
    %v1952 = vadd.f32 %v1915, %v1936
    %v1953 = vadd.f32 %v1916, %v1937
    %v1954 = vadd.f32 %v1917, %v1938
    %v1955 = vadd.f32 %v1918, %v1939
    %1957 = vset.pattern.permute.xlu0 0
    %1958 = vperm.xlu0 %1957, %v78
    %v1959 = vpop.permute.xlu0 %1958
    %v1961 = vadd.f32 %v1940, %v1959
    %v1962 = vadd.f32 %v1941, %v1959
    %v1963 = vadd.f32 %v1942, %v1959
    %v1964 = vadd.f32 %v1943, %v1959
    %v1965 = vadd.f32 %v1944, %v1959
    %v1966 = vadd.f32 %v1945, %v1959
    %v1967 = vadd.f32 %v1946, %v1959
    %v1968 = vadd.f32 %v1947, %v1959
    %v1969 = vadd.f32 %v1948, %v1959
    %v1970 = vadd.f32 %v1949, %v1959
    %v1971 = vadd.f32 %v1950, %v1959
    %v1972 = vadd.f32 %v1951, %v1959
    %v1973 = vadd.f32 %v1952, %v1959
    %v1974 = vadd.f32 %v1953, %v1959
    %v1975 = vadd.f32 %v1954, %v1959
    %v1976 = vadd.f32 %v1955, %v1959
    %1977 = vst [vmem:[#allocation2] sm:$0xff] %v1961
    %1978 = vst [vmem:[#allocation2 + $0x8] sm:$0xff] %v1962
    %1979 = vst [vmem:[#allocation2 + $0x10] sm:$0xff] %v1963
    %1980 = vst [vmem:[#allocation2 + $0x18] sm:$0xff] %v1964
    %1981 = vst [vmem:[#allocation2 + $0x20] sm:$0xff] %v1965
    %1982 = vst [vmem:[#allocation2 + $0x28] sm:$0xff] %v1966
    %1983 = vst [vmem:[#allocation2 + $0x30] sm:$0xff] %v1967
    %1984 = vst [vmem:[#allocation2 + $0x38] sm:$0xff] %v1968
    %1985 = vst [vmem:[#allocation2 + $0x40] sm:$0xff] %v1969
    %1986 = vst [vmem:[#allocation2 + $0x48] sm:$0xff] %v1970
    %1987 = vst [vmem:[#allocation2 + $0x50] sm:$0xff] %v1971
    %1988 = vst [vmem:[#allocation2 + $0x58] sm:$0xff] %v1972
    %1989 = vst [vmem:[#allocation2 + $0x60] sm:$0xff] %v1973
    %1990 = vst [vmem:[#allocation2 + $0x68] sm:$0xff] %v1974
    %1991 = vst [vmem:[#allocation2 + $0x70] sm:$0xff] %v1975
    %1992 = vst [vmem:[#allocation2 + $0x78] sm:$0xff] %v1976
    %v1993 = vlaneseq
    %v1994 = vshrl.u32 %v1993, 7
    %v1995 = vsub.s32 0, %v1994
    %v1996 = vrot.slane %v1961, %v1995
    %v1997 = vlaneseq
    %v1998 = vshrl.u32 %v1997, 7
    %v1999 = vsub.s32 0, %v1998
    %v2000 = vrot.slane %v1962, %v1999
    %v2001 = vlaneseq
    %v2002 = vshrl.u32 %v2001, 7
    %v2003 = vsub.s32 0, %v2002
    %v2004 = vrot.slane %v1963, %v2003
    %v2005 = vlaneseq
    %v2006 = vshrl.u32 %v2005, 7
    %v2007 = vsub.s32 0, %v2006
    %v2008 = vrot.slane %v1964, %v2007
    %v2009 = vlaneseq
    %v2010 = vshrl.u32 %v2009, 7
    %v2011 = vsub.s32 0, %v2010
    %v2012 = vrot.slane %v1965, %v2011
    %v2013 = vlaneseq
    %v2014 = vshrl.u32 %v2013, 7
    %v2015 = vsub.s32 0, %v2014
    %v2016 = vrot.slane %v1966, %v2015
    %v2017 = vlaneseq
    %v2018 = vshrl.u32 %v2017, 7
    %v2019 = vsub.s32 0, %v2018
    %v2020 = vrot.slane %v1967, %v2019
    %v2021 = vlaneseq
    %v2022 = vshrl.u32 %v2021, 7
    %v2023 = vsub.s32 0, %v2022
    %v2024 = vrot.slane %v1968, %v2023
    %v2025 = vlaneseq
    %v2026 = vshrl.u32 %v2025, 7
    %v2027 = vsub.s32 0, %v2026
    %v2028 = vrot.slane %v1969, %v2027
    %v2029 = vlaneseq
    %v2030 = vshrl.u32 %v2029, 7
    %v2031 = vsub.s32 0, %v2030
    %v2032 = vrot.slane %v1970, %v2031
    %v2033 = vlaneseq
    %v2034 = vshrl.u32 %v2033, 7
    %v2035 = vsub.s32 0, %v2034
    %v2036 = vrot.slane %v1971, %v2035
    %v2037 = vlaneseq
    %v2038 = vshrl.u32 %v2037, 7
    %v2039 = vsub.s32 0, %v2038
    %v2040 = vrot.slane %v1972, %v2039
    %v2041 = vlaneseq
    %v2042 = vshrl.u32 %v2041, 7
    %v2043 = vsub.s32 0, %v2042
    %v2044 = vrot.slane %v1973, %v2043
    %v2045 = vlaneseq
    %v2046 = vshrl.u32 %v2045, 7
    %v2047 = vsub.s32 0, %v2046
    %v2048 = vrot.slane %v1974, %v2047
    %v2049 = vlaneseq
    %v2050 = vshrl.u32 %v2049, 7
    %v2051 = vsub.s32 0, %v2050
    %v2052 = vrot.slane %v1975, %v2051
    %v2053 = vlaneseq
    %v2054 = vshrl.u32 %v2053, 7
    %v2055 = vsub.s32 0, %v2054
    %v2056 = vrot.slane %v1976, %v2055
    %2058 = vset.pattern.permute.xlu0 0
    %2059 = vperm.xlu0 %2058, %v88
    %v2060 = vpop.permute.xlu0 %2059
    %v2062 = vmul.f32 %v1996, %v2060
    %v2063 = vmul.f32 %v2000, %v2060
    %v2064 = vmul.f32 %v2004, %v2060
    %v2065 = vmul.f32 %v2008, %v2060
    %v2066 = vmul.f32 %v2012, %v2060
    %v2067 = vmul.f32 %v2016, %v2060
    %v2068 = vmul.f32 %v2020, %v2060
    %v2069 = vmul.f32 %v2024, %v2060
    %v2070 = vmul.f32 %v2028, %v2060
    %v2071 = vmul.f32 %v2032, %v2060
    %v2072 = vmul.f32 %v2036, %v2060
    %v2073 = vmul.f32 %v2040, %v2060
    %v2074 = vmul.f32 %v2044, %v2060
    %v2075 = vmul.f32 %v2048, %v2060
    %v2076 = vmul.f32 %v2052, %v2060
    %v2077 = vmul.f32 %v2056, %v2060
    %v2078 = vlaneseq
    %v2079 = vshrl.u32 %v2078, 7
    %v2080 = vsub.s32 1, %v2079
    %v2081 = vrot.slane %v1961, %v2080
    %v2082 = vlaneseq
    %v2083 = vshrl.u32 %v2082, 7
    %v2084 = vsub.s32 1, %v2083
    %v2085 = vrot.slane %v1962, %v2084
    %v2086 = vlaneseq
    %v2087 = vshrl.u32 %v2086, 7
    %v2088 = vsub.s32 1, %v2087
    %v2089 = vrot.slane %v1963, %v2088
    %v2090 = vlaneseq
    %v2091 = vshrl.u32 %v2090, 7
    %v2092 = vsub.s32 1, %v2091
    %v2093 = vrot.slane %v1964, %v2092
    %v2094 = vlaneseq
    %v2095 = vshrl.u32 %v2094, 7
    %v2096 = vsub.s32 1, %v2095
    %v2097 = vrot.slane %v1965, %v2096
    %v2098 = vlaneseq
    %v2099 = vshrl.u32 %v2098, 7
    %v2100 = vsub.s32 1, %v2099
    %v2101 = vrot.slane %v1966, %v2100
    %v2102 = vlaneseq
    %v2103 = vshrl.u32 %v2102, 7
    %v2104 = vsub.s32 1, %v2103
    %v2105 = vrot.slane %v1967, %v2104
    %v2106 = vlaneseq
    %v2107 = vshrl.u32 %v2106, 7
    %v2108 = vsub.s32 1, %v2107
    %v2109 = vrot.slane %v1968, %v2108
    %v2110 = vlaneseq
    %v2111 = vshrl.u32 %v2110, 7
    %v2112 = vsub.s32 1, %v2111
    %v2113 = vrot.slane %v1969, %v2112
    %v2114 = vlaneseq
    %v2115 = vshrl.u32 %v2114, 7
    %v2116 = vsub.s32 1, %v2115
    %v2117 = vrot.slane %v1970, %v2116
    %v2118 = vlaneseq
    %v2119 = vshrl.u32 %v2118, 7
    %v2120 = vsub.s32 1, %v2119
    %v2121 = vrot.slane %v1971, %v2120
    %v2122 = vlaneseq
    %v2123 = vshrl.u32 %v2122, 7
    %v2124 = vsub.s32 1, %v2123
    %v2125 = vrot.slane %v1972, %v2124
    %v2126 = vlaneseq
    %v2127 = vshrl.u32 %v2126, 7
    %v2128 = vsub.s32 1, %v2127
    %v2129 = vrot.slane %v1973, %v2128
    %v2130 = vlaneseq
    %v2131 = vshrl.u32 %v2130, 7
    %v2132 = vsub.s32 1, %v2131
    %v2133 = vrot.slane %v1974, %v2132
    %v2134 = vlaneseq
    %v2135 = vshrl.u32 %v2134, 7
    %v2136 = vsub.s32 1, %v2135
    %v2137 = vrot.slane %v1975, %v2136
    %v2138 = vlaneseq
    %v2139 = vshrl.u32 %v2138, 7
    %v2140 = vsub.s32 1, %v2139
    %v2141 = vrot.slane %v1976, %v2140
    %2143 = vset.pattern.permute.xlu0 0
    %2144 = vperm.xlu0 %2143, %v89
    %v2145 = vpop.permute.xlu0 %2144
    %v2147 = vmul.f32 %v2081, %v2145
    %v2148 = vmul.f32 %v2085, %v2145
    %v2149 = vmul.f32 %v2089, %v2145
    %v2150 = vmul.f32 %v2093, %v2145
    %v2151 = vmul.f32 %v2097, %v2145
    %v2152 = vmul.f32 %v2101, %v2145
    %v2153 = vmul.f32 %v2105, %v2145
    %v2154 = vmul.f32 %v2109, %v2145
    %v2155 = vmul.f32 %v2113, %v2145
    %v2156 = vmul.f32 %v2117, %v2145
    %v2157 = vmul.f32 %v2121, %v2145
    %v2158 = vmul.f32 %v2125, %v2145
    %v2159 = vmul.f32 %v2129, %v2145
    %v2160 = vmul.f32 %v2133, %v2145
    %v2161 = vmul.f32 %v2137, %v2145
    %v2162 = vmul.f32 %v2141, %v2145
    %v2163 = vadd.f32 %v2062, %v2147
    %v2164 = vadd.f32 %v2063, %v2148
    %v2165 = vadd.f32 %v2064, %v2149
    %v2166 = vadd.f32 %v2065, %v2150
    %v2167 = vadd.f32 %v2066, %v2151
    %v2168 = vadd.f32 %v2067, %v2152
    %v2169 = vadd.f32 %v2068, %v2153
    %v2170 = vadd.f32 %v2069, %v2154
    %v2171 = vadd.f32 %v2070, %v2155
    %v2172 = vadd.f32 %v2071, %v2156
    %v2173 = vadd.f32 %v2072, %v2157
    %v2174 = vadd.f32 %v2073, %v2158
    %v2175 = vadd.f32 %v2074, %v2159
    %v2176 = vadd.f32 %v2075, %v2160
    %v2177 = vadd.f32 %v2076, %v2161
    %v2178 = vadd.f32 %v2077, %v2162
    %v2179 = vlaneseq
    %v2180 = vshrl.u32 %v2179, 7
    %v2181 = vsub.s32 2, %v2180
    %v2182 = vrot.slane %v1961, %v2181
    %v2183 = vlaneseq
    %v2184 = vshrl.u32 %v2183, 7
    %v2185 = vsub.s32 2, %v2184
    %v2186 = vrot.slane %v1962, %v2185
    %v2187 = vlaneseq
    %v2188 = vshrl.u32 %v2187, 7
    %v2189 = vsub.s32 2, %v2188
    %v2190 = vrot.slane %v1963, %v2189
    %v2191 = vlaneseq
    %v2192 = vshrl.u32 %v2191, 7
    %v2193 = vsub.s32 2, %v2192
    %v2194 = vrot.slane %v1964, %v2193
    %v2195 = vlaneseq
    %v2196 = vshrl.u32 %v2195, 7
    %v2197 = vsub.s32 2, %v2196
    %v2198 = vrot.slane %v1965, %v2197
    %v2199 = vlaneseq
    %v2200 = vshrl.u32 %v2199, 7
    %v2201 = vsub.s32 2, %v2200
    %v2202 = vrot.slane %v1966, %v2201
    %v2203 = vlaneseq
    %v2204 = vshrl.u32 %v2203, 7
    %v2205 = vsub.s32 2, %v2204
    %v2206 = vrot.slane %v1967, %v2205
    %v2207 = vlaneseq
    %v2208 = vshrl.u32 %v2207, 7
    %v2209 = vsub.s32 2, %v2208
    %v2210 = vrot.slane %v1968, %v2209
    %v2211 = vlaneseq
    %v2212 = vshrl.u32 %v2211, 7
    %v2213 = vsub.s32 2, %v2212
    %v2214 = vrot.slane %v1969, %v2213
    %v2215 = vlaneseq
    %v2216 = vshrl.u32 %v2215, 7
    %v2217 = vsub.s32 2, %v2216
    %v2218 = vrot.slane %v1970, %v2217
    %v2219 = vlaneseq
    %v2220 = vshrl.u32 %v2219, 7
    %v2221 = vsub.s32 2, %v2220
    %v2222 = vrot.slane %v1971, %v2221
    %v2223 = vlaneseq
    %v2224 = vshrl.u32 %v2223, 7
    %v2225 = vsub.s32 2, %v2224
    %v2226 = vrot.slane %v1972, %v2225
    %v2227 = vlaneseq
    %v2228 = vshrl.u32 %v2227, 7
    %v2229 = vsub.s32 2, %v2228
    %v2230 = vrot.slane %v1973, %v2229
    %v2231 = vlaneseq
    %v2232 = vshrl.u32 %v2231, 7
    %v2233 = vsub.s32 2, %v2232
    %v2234 = vrot.slane %v1974, %v2233
    %v2235 = vlaneseq
    %v2236 = vshrl.u32 %v2235, 7
    %v2237 = vsub.s32 2, %v2236
    %v2238 = vrot.slane %v1975, %v2237
    %v2239 = vlaneseq
    %v2240 = vshrl.u32 %v2239, 7
    %v2241 = vsub.s32 2, %v2240
    %v2242 = vrot.slane %v1976, %v2241
    %2244 = vset.pattern.permute.xlu0 0
    %2245 = vperm.xlu0 %2244, %v90
    %v2246 = vpop.permute.xlu0 %2245
    %v2248 = vmul.f32 %v2182, %v2246
    %v2249 = vmul.f32 %v2186, %v2246
    %v2250 = vmul.f32 %v2190, %v2246
    %v2251 = vmul.f32 %v2194, %v2246
    %v2252 = vmul.f32 %v2198, %v2246
    %v2253 = vmul.f32 %v2202, %v2246
    %v2254 = vmul.f32 %v2206, %v2246
    %v2255 = vmul.f32 %v2210, %v2246
    %v2256 = vmul.f32 %v2214, %v2246
    %v2257 = vmul.f32 %v2218, %v2246
    %v2258 = vmul.f32 %v2222, %v2246
    %v2259 = vmul.f32 %v2226, %v2246
    %v2260 = vmul.f32 %v2230, %v2246
    %v2261 = vmul.f32 %v2234, %v2246
    %v2262 = vmul.f32 %v2238, %v2246
    %v2263 = vmul.f32 %v2242, %v2246
    %v2264 = vadd.f32 %v2163, %v2248
    %v2265 = vadd.f32 %v2164, %v2249
    %v2266 = vadd.f32 %v2165, %v2250
    %v2267 = vadd.f32 %v2166, %v2251
    %v2268 = vadd.f32 %v2167, %v2252
    %v2269 = vadd.f32 %v2168, %v2253
    %v2270 = vadd.f32 %v2169, %v2254
    %v2271 = vadd.f32 %v2170, %v2255
    %v2272 = vadd.f32 %v2171, %v2256
    %v2273 = vadd.f32 %v2172, %v2257
    %v2274 = vadd.f32 %v2173, %v2258
    %v2275 = vadd.f32 %v2174, %v2259
    %v2276 = vadd.f32 %v2175, %v2260
    %v2277 = vadd.f32 %v2176, %v2261
    %v2278 = vadd.f32 %v2177, %v2262
    %v2279 = vadd.f32 %v2178, %v2263
    %v2280 = vlaneseq
    %v2281 = vshrl.u32 %v2280, 7
    %v2282 = vsub.s32 3, %v2281
    %v2283 = vrot.slane %v1961, %v2282
    %v2284 = vlaneseq
    %v2285 = vshrl.u32 %v2284, 7
    %v2286 = vsub.s32 3, %v2285
    %v2287 = vrot.slane %v1962, %v2286
    %v2288 = vlaneseq
    %v2289 = vshrl.u32 %v2288, 7
    %v2290 = vsub.s32 3, %v2289
    %v2291 = vrot.slane %v1963, %v2290
    %v2292 = vlaneseq
    %v2293 = vshrl.u32 %v2292, 7
    %v2294 = vsub.s32 3, %v2293
    %v2295 = vrot.slane %v1964, %v2294
    %v2296 = vlaneseq
    %v2297 = vshrl.u32 %v2296, 7
    %v2298 = vsub.s32 3, %v2297
    %v2299 = vrot.slane %v1965, %v2298
    %v2300 = vlaneseq
    %v2301 = vshrl.u32 %v2300, 7
    %v2302 = vsub.s32 3, %v2301
    %v2303 = vrot.slane %v1966, %v2302
    %v2304 = vlaneseq
    %v2305 = vshrl.u32 %v2304, 7
    %v2306 = vsub.s32 3, %v2305
    %v2307 = vrot.slane %v1967, %v2306
    %v2308 = vlaneseq
    %v2309 = vshrl.u32 %v2308, 7
    %v2310 = vsub.s32 3, %v2309
    %v2311 = vrot.slane %v1968, %v2310
    %v2312 = vlaneseq
    %v2313 = vshrl.u32 %v2312, 7
    %v2314 = vsub.s32 3, %v2313
    %v2315 = vrot.slane %v1969, %v2314
    %v2316 = vlaneseq
    %v2317 = vshrl.u32 %v2316, 7
    %v2318 = vsub.s32 3, %v2317
    %v2319 = vrot.slane %v1970, %v2318
    %v2320 = vlaneseq
    %v2321 = vshrl.u32 %v2320, 7
    %v2322 = vsub.s32 3, %v2321
    %v2323 = vrot.slane %v1971, %v2322
    %v2324 = vlaneseq
    %v2325 = vshrl.u32 %v2324, 7
    %v2326 = vsub.s32 3, %v2325
    %v2327 = vrot.slane %v1972, %v2326
    %v2328 = vlaneseq
    %v2329 = vshrl.u32 %v2328, 7
    %v2330 = vsub.s32 3, %v2329
    %v2331 = vrot.slane %v1973, %v2330
    %v2332 = vlaneseq
    %v2333 = vshrl.u32 %v2332, 7
    %v2334 = vsub.s32 3, %v2333
    %v2335 = vrot.slane %v1974, %v2334
    %v2336 = vlaneseq
    %v2337 = vshrl.u32 %v2336, 7
    %v2338 = vsub.s32 3, %v2337
    %v2339 = vrot.slane %v1975, %v2338
    %v2340 = vlaneseq
    %v2341 = vshrl.u32 %v2340, 7
    %v2342 = vsub.s32 3, %v2341
    %v2343 = vrot.slane %v1976, %v2342
    %2345 = vset.pattern.permute.xlu0 0
    %2346 = vperm.xlu0 %2345, %v91
    %v2347 = vpop.permute.xlu0 %2346
    %v2349 = vmul.f32 %v2283, %v2347
    %v2350 = vmul.f32 %v2287, %v2347
    %v2351 = vmul.f32 %v2291, %v2347
    %v2352 = vmul.f32 %v2295, %v2347
    %v2353 = vmul.f32 %v2299, %v2347
    %v2354 = vmul.f32 %v2303, %v2347
    %v2355 = vmul.f32 %v2307, %v2347
    %v2356 = vmul.f32 %v2311, %v2347
    %v2357 = vmul.f32 %v2315, %v2347
    %v2358 = vmul.f32 %v2319, %v2347
    %v2359 = vmul.f32 %v2323, %v2347
    %v2360 = vmul.f32 %v2327, %v2347
    %v2361 = vmul.f32 %v2331, %v2347
    %v2362 = vmul.f32 %v2335, %v2347
    %v2363 = vmul.f32 %v2339, %v2347
    %v2364 = vmul.f32 %v2343, %v2347
    %v2365 = vadd.f32 %v2264, %v2349
    %v2366 = vadd.f32 %v2265, %v2350
    %v2367 = vadd.f32 %v2266, %v2351
    %v2368 = vadd.f32 %v2267, %v2352
    %v2369 = vadd.f32 %v2268, %v2353
    %v2370 = vadd.f32 %v2269, %v2354
    %v2371 = vadd.f32 %v2270, %v2355
    %v2372 = vadd.f32 %v2271, %v2356
    %v2373 = vadd.f32 %v2272, %v2357
    %v2374 = vadd.f32 %v2273, %v2358
    %v2375 = vadd.f32 %v2274, %v2359
    %v2376 = vadd.f32 %v2275, %v2360
    %v2377 = vadd.f32 %v2276, %v2361
    %v2378 = vadd.f32 %v2277, %v2362
    %v2379 = vadd.f32 %v2278, %v2363
    %v2380 = vadd.f32 %v2279, %v2364
    %v2381 = vlaneseq
    %v2382 = vshrl.u32 %v2381, 7
    %v2383 = vsub.s32 4, %v2382
    %v2384 = vrot.slane %v1961, %v2383
    %v2385 = vlaneseq
    %v2386 = vshrl.u32 %v2385, 7
    %v2387 = vsub.s32 4, %v2386
    %v2388 = vrot.slane %v1962, %v2387
    %v2389 = vlaneseq
    %v2390 = vshrl.u32 %v2389, 7
    %v2391 = vsub.s32 4, %v2390
    %v2392 = vrot.slane %v1963, %v2391
    %v2393 = vlaneseq
    %v2394 = vshrl.u32 %v2393, 7
    %v2395 = vsub.s32 4, %v2394
    %v2396 = vrot.slane %v1964, %v2395
    %v2397 = vlaneseq
    %v2398 = vshrl.u32 %v2397, 7
    %v2399 = vsub.s32 4, %v2398
    %v2400 = vrot.slane %v1965, %v2399
    %v2401 = vlaneseq
    %v2402 = vshrl.u32 %v2401, 7
    %v2403 = vsub.s32 4, %v2402
    %v2404 = vrot.slane %v1966, %v2403
    %v2405 = vlaneseq
    %v2406 = vshrl.u32 %v2405, 7
    %v2407 = vsub.s32 4, %v2406
    %v2408 = vrot.slane %v1967, %v2407
    %v2409 = vlaneseq
    %v2410 = vshrl.u32 %v2409, 7
    %v2411 = vsub.s32 4, %v2410
    %v2412 = vrot.slane %v1968, %v2411
    %v2413 = vlaneseq
    %v2414 = vshrl.u32 %v2413, 7
    %v2415 = vsub.s32 4, %v2414
    %v2416 = vrot.slane %v1969, %v2415
    %v2417 = vlaneseq
    %v2418 = vshrl.u32 %v2417, 7
    %v2419 = vsub.s32 4, %v2418
    %v2420 = vrot.slane %v1970, %v2419
    %v2421 = vlaneseq
    %v2422 = vshrl.u32 %v2421, 7
    %v2423 = vsub.s32 4, %v2422
    %v2424 = vrot.slane %v1971, %v2423
    %v2425 = vlaneseq
    %v2426 = vshrl.u32 %v2425, 7
    %v2427 = vsub.s32 4, %v2426
    %v2428 = vrot.slane %v1972, %v2427
    %v2429 = vlaneseq
    %v2430 = vshrl.u32 %v2429, 7
    %v2431 = vsub.s32 4, %v2430
    %v2432 = vrot.slane %v1973, %v2431
    %v2433 = vlaneseq
    %v2434 = vshrl.u32 %v2433, 7
    %v2435 = vsub.s32 4, %v2434
    %v2436 = vrot.slane %v1974, %v2435
    %v2437 = vlaneseq
    %v2438 = vshrl.u32 %v2437, 7
    %v2439 = vsub.s32 4, %v2438
    %v2440 = vrot.slane %v1975, %v2439
    %v2441 = vlaneseq
    %v2442 = vshrl.u32 %v2441, 7
    %v2443 = vsub.s32 4, %v2442
    %v2444 = vrot.slane %v1976, %v2443
    %2446 = vset.pattern.permute.xlu0 0
    %2447 = vperm.xlu0 %2446, %v92
    %v2448 = vpop.permute.xlu0 %2447
    %v2450 = vmul.f32 %v2384, %v2448
    %v2451 = vmul.f32 %v2388, %v2448
    %v2452 = vmul.f32 %v2392, %v2448
    %v2453 = vmul.f32 %v2396, %v2448
    %v2454 = vmul.f32 %v2400, %v2448
    %v2455 = vmul.f32 %v2404, %v2448
    %v2456 = vmul.f32 %v2408, %v2448
    %v2457 = vmul.f32 %v2412, %v2448
    %v2458 = vmul.f32 %v2416, %v2448
    %v2459 = vmul.f32 %v2420, %v2448
    %v2460 = vmul.f32 %v2424, %v2448
    %v2461 = vmul.f32 %v2428, %v2448
    %v2462 = vmul.f32 %v2432, %v2448
    %v2463 = vmul.f32 %v2436, %v2448
    %v2464 = vmul.f32 %v2440, %v2448
    %v2465 = vmul.f32 %v2444, %v2448
    %v2466 = vadd.f32 %v2365, %v2450
    %v2467 = vadd.f32 %v2366, %v2451
    %v2468 = vadd.f32 %v2367, %v2452
    %v2469 = vadd.f32 %v2368, %v2453
    %v2470 = vadd.f32 %v2369, %v2454
    %v2471 = vadd.f32 %v2370, %v2455
    %v2472 = vadd.f32 %v2371, %v2456
    %v2473 = vadd.f32 %v2372, %v2457
    %v2474 = vadd.f32 %v2373, %v2458
    %v2475 = vadd.f32 %v2374, %v2459
    %v2476 = vadd.f32 %v2375, %v2460
    %v2477 = vadd.f32 %v2376, %v2461
    %v2478 = vadd.f32 %v2377, %v2462
    %v2479 = vadd.f32 %v2378, %v2463
    %v2480 = vadd.f32 %v2379, %v2464
    %v2481 = vadd.f32 %v2380, %v2465
    %v2482 = vlaneseq
    %v2483 = vshrl.u32 %v2482, 7
    %v2484 = vsub.s32 5, %v2483
    %v2485 = vrot.slane %v1961, %v2484
    %v2486 = vlaneseq
    %v2487 = vshrl.u32 %v2486, 7
    %v2488 = vsub.s32 5, %v2487
    %v2489 = vrot.slane %v1962, %v2488
    %v2490 = vlaneseq
    %v2491 = vshrl.u32 %v2490, 7
    %v2492 = vsub.s32 5, %v2491
    %v2493 = vrot.slane %v1963, %v2492
    %v2494 = vlaneseq
    %v2495 = vshrl.u32 %v2494, 7
    %v2496 = vsub.s32 5, %v2495
    %v2497 = vrot.slane %v1964, %v2496
    %v2498 = vlaneseq
    %v2499 = vshrl.u32 %v2498, 7
    %v2500 = vsub.s32 5, %v2499
    %v2501 = vrot.slane %v1965, %v2500
    %v2502 = vlaneseq
    %v2503 = vshrl.u32 %v2502, 7
    %v2504 = vsub.s32 5, %v2503
    %v2505 = vrot.slane %v1966, %v2504
    %v2506 = vlaneseq
    %v2507 = vshrl.u32 %v2506, 7
    %v2508 = vsub.s32 5, %v2507
    %v2509 = vrot.slane %v1967, %v2508
    %v2510 = vlaneseq
    %v2511 = vshrl.u32 %v2510, 7
    %v2512 = vsub.s32 5, %v2511
    %v2513 = vrot.slane %v1968, %v2512
    %v2514 = vlaneseq
    %v2515 = vshrl.u32 %v2514, 7
    %v2516 = vsub.s32 5, %v2515
    %v2517 = vrot.slane %v1969, %v2516
    %v2518 = vlaneseq
    %v2519 = vshrl.u32 %v2518, 7
    %v2520 = vsub.s32 5, %v2519
    %v2521 = vrot.slane %v1970, %v2520
    %v2522 = vlaneseq
    %v2523 = vshrl.u32 %v2522, 7
    %v2524 = vsub.s32 5, %v2523
    %v2525 = vrot.slane %v1971, %v2524
    %v2526 = vlaneseq
    %v2527 = vshrl.u32 %v2526, 7
    %v2528 = vsub.s32 5, %v2527
    %v2529 = vrot.slane %v1972, %v2528
    %v2530 = vlaneseq
    %v2531 = vshrl.u32 %v2530, 7
    %v2532 = vsub.s32 5, %v2531
    %v2533 = vrot.slane %v1973, %v2532
    %v2534 = vlaneseq
    %v2535 = vshrl.u32 %v2534, 7
    %v2536 = vsub.s32 5, %v2535
    %v2537 = vrot.slane %v1974, %v2536
    %v2538 = vlaneseq
    %v2539 = vshrl.u32 %v2538, 7
    %v2540 = vsub.s32 5, %v2539
    %v2541 = vrot.slane %v1975, %v2540
    %v2542 = vlaneseq
    %v2543 = vshrl.u32 %v2542, 7
    %v2544 = vsub.s32 5, %v2543
    %v2545 = vrot.slane %v1976, %v2544
    %2547 = vset.pattern.permute.xlu0 0
    %2548 = vperm.xlu0 %2547, %v93
    %v2549 = vpop.permute.xlu0 %2548
    %v2551 = vmul.f32 %v2485, %v2549
    %v2552 = vmul.f32 %v2489, %v2549
    %v2553 = vmul.f32 %v2493, %v2549
    %v2554 = vmul.f32 %v2497, %v2549
    %v2555 = vmul.f32 %v2501, %v2549
    %v2556 = vmul.f32 %v2505, %v2549
    %v2557 = vmul.f32 %v2509, %v2549
    %v2558 = vmul.f32 %v2513, %v2549
    %v2559 = vmul.f32 %v2517, %v2549
    %v2560 = vmul.f32 %v2521, %v2549
    %v2561 = vmul.f32 %v2525, %v2549
    %v2562 = vmul.f32 %v2529, %v2549
    %v2563 = vmul.f32 %v2533, %v2549
    %v2564 = vmul.f32 %v2537, %v2549
    %v2565 = vmul.f32 %v2541, %v2549
    %v2566 = vmul.f32 %v2545, %v2549
    %v2567 = vadd.f32 %v2466, %v2551
    %v2568 = vadd.f32 %v2467, %v2552
    %v2569 = vadd.f32 %v2468, %v2553
    %v2570 = vadd.f32 %v2469, %v2554
    %v2571 = vadd.f32 %v2470, %v2555
    %v2572 = vadd.f32 %v2471, %v2556
    %v2573 = vadd.f32 %v2472, %v2557
    %v2574 = vadd.f32 %v2473, %v2558
    %v2575 = vadd.f32 %v2474, %v2559
    %v2576 = vadd.f32 %v2475, %v2560
    %v2577 = vadd.f32 %v2476, %v2561
    %v2578 = vadd.f32 %v2477, %v2562
    %v2579 = vadd.f32 %v2478, %v2563
    %v2580 = vadd.f32 %v2479, %v2564
    %v2581 = vadd.f32 %v2480, %v2565
    %v2582 = vadd.f32 %v2481, %v2566
    %v2583 = vlaneseq
    %v2584 = vshrl.u32 %v2583, 7
    %v2585 = vsub.s32 6, %v2584
    %v2586 = vrot.slane %v1961, %v2585
    %v2587 = vlaneseq
    %v2588 = vshrl.u32 %v2587, 7
    %v2589 = vsub.s32 6, %v2588
    %v2590 = vrot.slane %v1962, %v2589
    %v2591 = vlaneseq
    %v2592 = vshrl.u32 %v2591, 7
    %v2593 = vsub.s32 6, %v2592
    %v2594 = vrot.slane %v1963, %v2593
    %v2595 = vlaneseq
    %v2596 = vshrl.u32 %v2595, 7
    %v2597 = vsub.s32 6, %v2596
    %v2598 = vrot.slane %v1964, %v2597
    %v2599 = vlaneseq
    %v2600 = vshrl.u32 %v2599, 7
    %v2601 = vsub.s32 6, %v2600
    %v2602 = vrot.slane %v1965, %v2601
    %v2603 = vlaneseq
    %v2604 = vshrl.u32 %v2603, 7
    %v2605 = vsub.s32 6, %v2604
    %v2606 = vrot.slane %v1966, %v2605
    %v2607 = vlaneseq
    %v2608 = vshrl.u32 %v2607, 7
    %v2609 = vsub.s32 6, %v2608
    %v2610 = vrot.slane %v1967, %v2609
    %v2611 = vlaneseq
    %v2612 = vshrl.u32 %v2611, 7
    %v2613 = vsub.s32 6, %v2612
    %v2614 = vrot.slane %v1968, %v2613
    %v2615 = vlaneseq
    %v2616 = vshrl.u32 %v2615, 7
    %v2617 = vsub.s32 6, %v2616
    %v2618 = vrot.slane %v1969, %v2617
    %v2619 = vlaneseq
    %v2620 = vshrl.u32 %v2619, 7
    %v2621 = vsub.s32 6, %v2620
    %v2622 = vrot.slane %v1970, %v2621
    %v2623 = vlaneseq
    %v2624 = vshrl.u32 %v2623, 7
    %v2625 = vsub.s32 6, %v2624
    %v2626 = vrot.slane %v1971, %v2625
    %v2627 = vlaneseq
    %v2628 = vshrl.u32 %v2627, 7
    %v2629 = vsub.s32 6, %v2628
    %v2630 = vrot.slane %v1972, %v2629
    %v2631 = vlaneseq
    %v2632 = vshrl.u32 %v2631, 7
    %v2633 = vsub.s32 6, %v2632
    %v2634 = vrot.slane %v1973, %v2633
    %v2635 = vlaneseq
    %v2636 = vshrl.u32 %v2635, 7
    %v2637 = vsub.s32 6, %v2636
    %v2638 = vrot.slane %v1974, %v2637
    %v2639 = vlaneseq
    %v2640 = vshrl.u32 %v2639, 7
    %v2641 = vsub.s32 6, %v2640
    %v2642 = vrot.slane %v1975, %v2641
    %v2643 = vlaneseq
    %v2644 = vshrl.u32 %v2643, 7
    %v2645 = vsub.s32 6, %v2644
    %v2646 = vrot.slane %v1976, %v2645
    %2648 = vset.pattern.permute.xlu0 0
    %2649 = vperm.xlu0 %2648, %v94
    %v2650 = vpop.permute.xlu0 %2649
    %v2652 = vmul.f32 %v2586, %v2650
    %v2653 = vmul.f32 %v2590, %v2650
    %v2654 = vmul.f32 %v2594, %v2650
    %v2655 = vmul.f32 %v2598, %v2650
    %v2656 = vmul.f32 %v2602, %v2650
    %v2657 = vmul.f32 %v2606, %v2650
    %v2658 = vmul.f32 %v2610, %v2650
    %v2659 = vmul.f32 %v2614, %v2650
    %v2660 = vmul.f32 %v2618, %v2650
    %v2661 = vmul.f32 %v2622, %v2650
    %v2662 = vmul.f32 %v2626, %v2650
    %v2663 = vmul.f32 %v2630, %v2650
    %v2664 = vmul.f32 %v2634, %v2650
    %v2665 = vmul.f32 %v2638, %v2650
    %v2666 = vmul.f32 %v2642, %v2650
    %v2667 = vmul.f32 %v2646, %v2650
    %v2668 = vadd.f32 %v2567, %v2652
    %v2669 = vadd.f32 %v2568, %v2653
    %v2670 = vadd.f32 %v2569, %v2654
    %v2671 = vadd.f32 %v2570, %v2655
    %v2672 = vadd.f32 %v2571, %v2656
    %v2673 = vadd.f32 %v2572, %v2657
    %v2674 = vadd.f32 %v2573, %v2658
    %v2675 = vadd.f32 %v2574, %v2659
    %v2676 = vadd.f32 %v2575, %v2660
    %v2677 = vadd.f32 %v2576, %v2661
    %v2678 = vadd.f32 %v2577, %v2662
    %v2679 = vadd.f32 %v2578, %v2663
    %v2680 = vadd.f32 %v2579, %v2664
    %v2681 = vadd.f32 %v2580, %v2665
    %v2682 = vadd.f32 %v2581, %v2666
    %v2683 = vadd.f32 %v2582, %v2667
    %v2684 = vlaneseq
    %v2685 = vshrl.u32 %v2684, 7
    %v2686 = vsub.s32 7, %v2685
    %v2687 = vrot.slane %v1961, %v2686
    %v2688 = vlaneseq
    %v2689 = vshrl.u32 %v2688, 7
    %v2690 = vsub.s32 7, %v2689
    %v2691 = vrot.slane %v1962, %v2690
    %v2692 = vlaneseq
    %v2693 = vshrl.u32 %v2692, 7
    %v2694 = vsub.s32 7, %v2693
    %v2695 = vrot.slane %v1963, %v2694
    %v2696 = vlaneseq
    %v2697 = vshrl.u32 %v2696, 7
    %v2698 = vsub.s32 7, %v2697
    %v2699 = vrot.slane %v1964, %v2698
    %v2700 = vlaneseq
    %v2701 = vshrl.u32 %v2700, 7
    %v2702 = vsub.s32 7, %v2701
    %v2703 = vrot.slane %v1965, %v2702
    %v2704 = vlaneseq
    %v2705 = vshrl.u32 %v2704, 7
    %v2706 = vsub.s32 7, %v2705
    %v2707 = vrot.slane %v1966, %v2706
    %v2708 = vlaneseq
    %v2709 = vshrl.u32 %v2708, 7
    %v2710 = vsub.s32 7, %v2709
    %v2711 = vrot.slane %v1967, %v2710
    %v2712 = vlaneseq
    %v2713 = vshrl.u32 %v2712, 7
    %v2714 = vsub.s32 7, %v2713
    %v2715 = vrot.slane %v1968, %v2714
    %v2716 = vlaneseq
    %v2717 = vshrl.u32 %v2716, 7
    %v2718 = vsub.s32 7, %v2717
    %v2719 = vrot.slane %v1969, %v2718
    %v2720 = vlaneseq
    %v2721 = vshrl.u32 %v2720, 7
    %v2722 = vsub.s32 7, %v2721
    %v2723 = vrot.slane %v1970, %v2722
    %v2724 = vlaneseq
    %v2725 = vshrl.u32 %v2724, 7
    %v2726 = vsub.s32 7, %v2725
    %v2727 = vrot.slane %v1971, %v2726
    %v2728 = vlaneseq
    %v2729 = vshrl.u32 %v2728, 7
    %v2730 = vsub.s32 7, %v2729
    %v2731 = vrot.slane %v1972, %v2730
    %v2732 = vlaneseq
    %v2733 = vshrl.u32 %v2732, 7
    %v2734 = vsub.s32 7, %v2733
    %v2735 = vrot.slane %v1973, %v2734
    %v2736 = vlaneseq
    %v2737 = vshrl.u32 %v2736, 7
    %v2738 = vsub.s32 7, %v2737
    %v2739 = vrot.slane %v1974, %v2738
    %v2740 = vlaneseq
    %v2741 = vshrl.u32 %v2740, 7
    %v2742 = vsub.s32 7, %v2741
    %v2743 = vrot.slane %v1975, %v2742
    %v2744 = vlaneseq
    %v2745 = vshrl.u32 %v2744, 7
    %v2746 = vsub.s32 7, %v2745
    %v2747 = vrot.slane %v1976, %v2746
    %2749 = vset.pattern.permute.xlu0 0
    %2750 = vperm.xlu0 %2749, %v95
    %v2751 = vpop.permute.xlu0 %2750
    %v2753 = vmul.f32 %v2687, %v2751
    %v2754 = vmul.f32 %v2691, %v2751
    %v2755 = vmul.f32 %v2695, %v2751
    %v2756 = vmul.f32 %v2699, %v2751
    %v2757 = vmul.f32 %v2703, %v2751
    %v2758 = vmul.f32 %v2707, %v2751
    %v2759 = vmul.f32 %v2711, %v2751
    %v2760 = vmul.f32 %v2715, %v2751
    %v2761 = vmul.f32 %v2719, %v2751
    %v2762 = vmul.f32 %v2723, %v2751
    %v2763 = vmul.f32 %v2727, %v2751
    %v2764 = vmul.f32 %v2731, %v2751
    %v2765 = vmul.f32 %v2735, %v2751
    %v2766 = vmul.f32 %v2739, %v2751
    %v2767 = vmul.f32 %v2743, %v2751
    %v2768 = vmul.f32 %v2747, %v2751
    %v2769 = vadd.f32 %v2668, %v2753
    %v2770 = vadd.f32 %v2669, %v2754
    %v2771 = vadd.f32 %v2670, %v2755
    %v2772 = vadd.f32 %v2671, %v2756
    %v2773 = vadd.f32 %v2672, %v2757
    %v2774 = vadd.f32 %v2673, %v2758
    %v2775 = vadd.f32 %v2674, %v2759
    %v2776 = vadd.f32 %v2675, %v2760
    %v2777 = vadd.f32 %v2676, %v2761
    %v2778 = vadd.f32 %v2677, %v2762
    %v2779 = vadd.f32 %v2678, %v2763
    %v2780 = vadd.f32 %v2679, %v2764
    %v2781 = vadd.f32 %v2680, %v2765
    %v2782 = vadd.f32 %v2681, %v2766
    %v2783 = vadd.f32 %v2682, %v2767
    %v2784 = vadd.f32 %v2683, %v2768
    %2786 = vset.pattern.permute.xlu0 0
    %2787 = vperm.xlu0 %2786, %v96
    %v2788 = vpop.permute.xlu0 %2787
    %v2790 = vmul.f32 %v2000, %v2788
    %v2791 = vmul.f32 %v2004, %v2788
    %v2792 = vmul.f32 %v2008, %v2788
    %v2793 = vmul.f32 %v2012, %v2788
    %v2794 = vmul.f32 %v2016, %v2788
    %v2795 = vmul.f32 %v2020, %v2788
    %v2796 = vmul.f32 %v2024, %v2788
    %v2797 = vmul.f32 %v2028, %v2788
    %v2798 = vmul.f32 %v2032, %v2788
    %v2799 = vmul.f32 %v2036, %v2788
    %v2800 = vmul.f32 %v2040, %v2788
    %v2801 = vmul.f32 %v2044, %v2788
    %v2802 = vmul.f32 %v2048, %v2788
    %v2803 = vmul.f32 %v2052, %v2788
    %v2804 = vmul.f32 %v2056, %v2788
    %v2805 = vmul.f32 %v1996, %v2788
    %v2806 = vadd.f32 %v2769, %v2790
    %v2807 = vadd.f32 %v2770, %v2791
    %v2808 = vadd.f32 %v2771, %v2792
    %v2809 = vadd.f32 %v2772, %v2793
    %v2810 = vadd.f32 %v2773, %v2794
    %v2811 = vadd.f32 %v2774, %v2795
    %v2812 = vadd.f32 %v2775, %v2796
    %v2813 = vadd.f32 %v2776, %v2797
    %v2814 = vadd.f32 %v2777, %v2798
    %v2815 = vadd.f32 %v2778, %v2799
    %v2816 = vadd.f32 %v2779, %v2800
    %v2817 = vadd.f32 %v2780, %v2801
    %v2818 = vadd.f32 %v2781, %v2802
    %v2819 = vadd.f32 %v2782, %v2803
    %v2820 = vadd.f32 %v2783, %v2804
    %v2821 = vadd.f32 %v2784, %v2805
    %2823 = vset.pattern.permute.xlu0 0
    %2824 = vperm.xlu0 %2823, %v97
    %v2825 = vpop.permute.xlu0 %2824
    %v2827 = vmul.f32 %v2085, %v2825
    %v2828 = vmul.f32 %v2089, %v2825
    %v2829 = vmul.f32 %v2093, %v2825
    %v2830 = vmul.f32 %v2097, %v2825
    %v2831 = vmul.f32 %v2101, %v2825
    %v2832 = vmul.f32 %v2105, %v2825
    %v2833 = vmul.f32 %v2109, %v2825
    %v2834 = vmul.f32 %v2113, %v2825
    %v2835 = vmul.f32 %v2117, %v2825
    %v2836 = vmul.f32 %v2121, %v2825
    %v2837 = vmul.f32 %v2125, %v2825
    %v2838 = vmul.f32 %v2129, %v2825
    %v2839 = vmul.f32 %v2133, %v2825
    %v2840 = vmul.f32 %v2137, %v2825
    %v2841 = vmul.f32 %v2141, %v2825
    %v2842 = vmul.f32 %v2081, %v2825
    %v2843 = vadd.f32 %v2806, %v2827
    %v2844 = vadd.f32 %v2807, %v2828
    %v2845 = vadd.f32 %v2808, %v2829
    %v2846 = vadd.f32 %v2809, %v2830
    %v2847 = vadd.f32 %v2810, %v2831
    %v2848 = vadd.f32 %v2811, %v2832
    %v2849 = vadd.f32 %v2812, %v2833
    %v2850 = vadd.f32 %v2813, %v2834
    %v2851 = vadd.f32 %v2814, %v2835
    %v2852 = vadd.f32 %v2815, %v2836
    %v2853 = vadd.f32 %v2816, %v2837
    %v2854 = vadd.f32 %v2817, %v2838
    %v2855 = vadd.f32 %v2818, %v2839
    %v2856 = vadd.f32 %v2819, %v2840
    %v2857 = vadd.f32 %v2820, %v2841
    %v2858 = vadd.f32 %v2821, %v2842
    %2860 = vset.pattern.permute.xlu0 0
    %2861 = vperm.xlu0 %2860, %v98
    %v2862 = vpop.permute.xlu0 %2861
    %v2864 = vmul.f32 %v2186, %v2862
    %v2865 = vmul.f32 %v2190, %v2862
    %v2866 = vmul.f32 %v2194, %v2862
    %v2867 = vmul.f32 %v2198, %v2862
    %v2868 = vmul.f32 %v2202, %v2862
    %v2869 = vmul.f32 %v2206, %v2862
    %v2870 = vmul.f32 %v2210, %v2862
    %v2871 = vmul.f32 %v2214, %v2862
    %v2872 = vmul.f32 %v2218, %v2862
    %v2873 = vmul.f32 %v2222, %v2862
    %v2874 = vmul.f32 %v2226, %v2862
    %v2875 = vmul.f32 %v2230, %v2862
    %v2876 = vmul.f32 %v2234, %v2862
    %v2877 = vmul.f32 %v2238, %v2862
    %v2878 = vmul.f32 %v2242, %v2862
    %v2879 = vmul.f32 %v2182, %v2862
    %v2880 = vadd.f32 %v2843, %v2864
    %v2881 = vadd.f32 %v2844, %v2865
    %v2882 = vadd.f32 %v2845, %v2866
    %v2883 = vadd.f32 %v2846, %v2867
    %v2884 = vadd.f32 %v2847, %v2868
    %v2885 = vadd.f32 %v2848, %v2869
    %v2886 = vadd.f32 %v2849, %v2870
    %v2887 = vadd.f32 %v2850, %v2871
    %v2888 = vadd.f32 %v2851, %v2872
    %v2889 = vadd.f32 %v2852, %v2873
    %v2890 = vadd.f32 %v2853, %v2874
    %v2891 = vadd.f32 %v2854, %v2875
    %v2892 = vadd.f32 %v2855, %v2876
    %v2893 = vadd.f32 %v2856, %v2877
    %v2894 = vadd.f32 %v2857, %v2878
    %v2895 = vadd.f32 %v2858, %v2879
    %2897 = vset.pattern.permute.xlu0 0
    %2898 = vperm.xlu0 %2897, %v99
    %v2899 = vpop.permute.xlu0 %2898
    %v2901 = vmul.f32 %v2287, %v2899
    %v2902 = vmul.f32 %v2291, %v2899
    %v2903 = vmul.f32 %v2295, %v2899
    %v2904 = vmul.f32 %v2299, %v2899
    %v2905 = vmul.f32 %v2303, %v2899
    %v2906 = vmul.f32 %v2307, %v2899
    %v2907 = vmul.f32 %v2311, %v2899
    %v2908 = vmul.f32 %v2315, %v2899
    %v2909 = vmul.f32 %v2319, %v2899
    %v2910 = vmul.f32 %v2323, %v2899
    %v2911 = vmul.f32 %v2327, %v2899
    %v2912 = vmul.f32 %v2331, %v2899
    %v2913 = vmul.f32 %v2335, %v2899
    %v2914 = vmul.f32 %v2339, %v2899
    %v2915 = vmul.f32 %v2343, %v2899
    %v2916 = vmul.f32 %v2283, %v2899
    %v2917 = vadd.f32 %v2880, %v2901
    %v2918 = vadd.f32 %v2881, %v2902
    %v2919 = vadd.f32 %v2882, %v2903
    %v2920 = vadd.f32 %v2883, %v2904
    %v2921 = vadd.f32 %v2884, %v2905
    %v2922 = vadd.f32 %v2885, %v2906
    %v2923 = vadd.f32 %v2886, %v2907
    %v2924 = vadd.f32 %v2887, %v2908
    %v2925 = vadd.f32 %v2888, %v2909
    %v2926 = vadd.f32 %v2889, %v2910
    %v2927 = vadd.f32 %v2890, %v2911
    %v2928 = vadd.f32 %v2891, %v2912
    %v2929 = vadd.f32 %v2892, %v2913
    %v2930 = vadd.f32 %v2893, %v2914
    %v2931 = vadd.f32 %v2894, %v2915
    %v2932 = vadd.f32 %v2895, %v2916
    %2934 = vset.pattern.permute.xlu0 0
    %2935 = vperm.xlu0 %2934, %v100
    %v2936 = vpop.permute.xlu0 %2935
    %v2938 = vmul.f32 %v2388, %v2936
    %v2939 = vmul.f32 %v2392, %v2936
    %v2940 = vmul.f32 %v2396, %v2936
    %v2941 = vmul.f32 %v2400, %v2936
    %v2942 = vmul.f32 %v2404, %v2936
    %v2943 = vmul.f32 %v2408, %v2936
    %v2944 = vmul.f32 %v2412, %v2936
    %v2945 = vmul.f32 %v2416, %v2936
    %v2946 = vmul.f32 %v2420, %v2936
    %v2947 = vmul.f32 %v2424, %v2936
    %v2948 = vmul.f32 %v2428, %v2936
    %v2949 = vmul.f32 %v2432, %v2936
    %v2950 = vmul.f32 %v2436, %v2936
    %v2951 = vmul.f32 %v2440, %v2936
    %v2952 = vmul.f32 %v2444, %v2936
    %v2953 = vmul.f32 %v2384, %v2936
    %v2954 = vadd.f32 %v2917, %v2938
    %v2955 = vadd.f32 %v2918, %v2939
    %v2956 = vadd.f32 %v2919, %v2940
    %v2957 = vadd.f32 %v2920, %v2941
    %v2958 = vadd.f32 %v2921, %v2942
    %v2959 = vadd.f32 %v2922, %v2943
    %v2960 = vadd.f32 %v2923, %v2944
    %v2961 = vadd.f32 %v2924, %v2945
    %v2962 = vadd.f32 %v2925, %v2946
    %v2963 = vadd.f32 %v2926, %v2947
    %v2964 = vadd.f32 %v2927, %v2948
    %v2965 = vadd.f32 %v2928, %v2949
    %v2966 = vadd.f32 %v2929, %v2950
    %v2967 = vadd.f32 %v2930, %v2951
    %v2968 = vadd.f32 %v2931, %v2952
    %v2969 = vadd.f32 %v2932, %v2953
    %2971 = vset.pattern.permute.xlu0 0
    %2972 = vperm.xlu0 %2971, %v101
    %v2973 = vpop.permute.xlu0 %2972
    %v2975 = vmul.f32 %v2489, %v2973
    %v2976 = vmul.f32 %v2493, %v2973
    %v2977 = vmul.f32 %v2497, %v2973
    %v2978 = vmul.f32 %v2501, %v2973
    %v2979 = vmul.f32 %v2505, %v2973
    %v2980 = vmul.f32 %v2509, %v2973
    %v2981 = vmul.f32 %v2513, %v2973
    %v2982 = vmul.f32 %v2517, %v2973
    %v2983 = vmul.f32 %v2521, %v2973
    %v2984 = vmul.f32 %v2525, %v2973
    %v2985 = vmul.f32 %v2529, %v2973
    %v2986 = vmul.f32 %v2533, %v2973
    %v2987 = vmul.f32 %v2537, %v2973
    %v2988 = vmul.f32 %v2541, %v2973
    %v2989 = vmul.f32 %v2545, %v2973
    %v2990 = vmul.f32 %v2485, %v2973
    %v2991 = vadd.f32 %v2954, %v2975
    %v2992 = vadd.f32 %v2955, %v2976
    %v2993 = vadd.f32 %v2956, %v2977
    %v2994 = vadd.f32 %v2957, %v2978
    %v2995 = vadd.f32 %v2958, %v2979
    %v2996 = vadd.f32 %v2959, %v2980
    %v2997 = vadd.f32 %v2960, %v2981
    %v2998 = vadd.f32 %v2961, %v2982
    %v2999 = vadd.f32 %v2962, %v2983
    %v3000 = vadd.f32 %v2963, %v2984
    %v3001 = vadd.f32 %v2964, %v2985
    %v3002 = vadd.f32 %v2965, %v2986
    %v3003 = vadd.f32 %v2966, %v2987
    %v3004 = vadd.f32 %v2967, %v2988
    %v3005 = vadd.f32 %v2968, %v2989
    %v3006 = vadd.f32 %v2969, %v2990
    %3008 = vset.pattern.permute.xlu0 0
    %3009 = vperm.xlu0 %3008, %v102
    %v3010 = vpop.permute.xlu0 %3009
    %v3012 = vmul.f32 %v2590, %v3010
    %v3013 = vmul.f32 %v2594, %v3010
    %v3014 = vmul.f32 %v2598, %v3010
    %v3015 = vmul.f32 %v2602, %v3010
    %v3016 = vmul.f32 %v2606, %v3010
    %v3017 = vmul.f32 %v2610, %v3010
    %v3018 = vmul.f32 %v2614, %v3010
    %v3019 = vmul.f32 %v2618, %v3010
    %v3020 = vmul.f32 %v2622, %v3010
    %v3021 = vmul.f32 %v2626, %v3010
    %v3022 = vmul.f32 %v2630, %v3010
    %v3023 = vmul.f32 %v2634, %v3010
    %v3024 = vmul.f32 %v2638, %v3010
    %v3025 = vmul.f32 %v2642, %v3010
    %v3026 = vmul.f32 %v2646, %v3010
    %v3027 = vmul.f32 %v2586, %v3010
    %v3028 = vadd.f32 %v2991, %v3012
    %v3029 = vadd.f32 %v2992, %v3013
    %v3030 = vadd.f32 %v2993, %v3014
    %v3031 = vadd.f32 %v2994, %v3015
    %v3032 = vadd.f32 %v2995, %v3016
    %v3033 = vadd.f32 %v2996, %v3017
    %v3034 = vadd.f32 %v2997, %v3018
    %v3035 = vadd.f32 %v2998, %v3019
    %v3036 = vadd.f32 %v2999, %v3020
    %v3037 = vadd.f32 %v3000, %v3021
    %v3038 = vadd.f32 %v3001, %v3022
    %v3039 = vadd.f32 %v3002, %v3023
    %v3040 = vadd.f32 %v3003, %v3024
    %v3041 = vadd.f32 %v3004, %v3025
    %v3042 = vadd.f32 %v3005, %v3026
    %v3043 = vadd.f32 %v3006, %v3027
    %3045 = vset.pattern.permute.xlu0 0
    %3046 = vperm.xlu0 %3045, %v103
    %v3047 = vpop.permute.xlu0 %3046
    %v3049 = vmul.f32 %v2691, %v3047
    %v3050 = vmul.f32 %v2695, %v3047
    %v3051 = vmul.f32 %v2699, %v3047
    %v3052 = vmul.f32 %v2703, %v3047
    %v3053 = vmul.f32 %v2707, %v3047
    %v3054 = vmul.f32 %v2711, %v3047
    %v3055 = vmul.f32 %v2715, %v3047
    %v3056 = vmul.f32 %v2719, %v3047
    %v3057 = vmul.f32 %v2723, %v3047
    %v3058 = vmul.f32 %v2727, %v3047
    %v3059 = vmul.f32 %v2731, %v3047
    %v3060 = vmul.f32 %v2735, %v3047
    %v3061 = vmul.f32 %v2739, %v3047
    %v3062 = vmul.f32 %v2743, %v3047
    %v3063 = vmul.f32 %v2747, %v3047
    %v3064 = vmul.f32 %v2687, %v3047
    %v3065 = vadd.f32 %v3028, %v3049
    %v3066 = vadd.f32 %v3029, %v3050
    %v3067 = vadd.f32 %v3030, %v3051
    %v3068 = vadd.f32 %v3031, %v3052
    %v3069 = vadd.f32 %v3032, %v3053
    %v3070 = vadd.f32 %v3033, %v3054
    %v3071 = vadd.f32 %v3034, %v3055
    %v3072 = vadd.f32 %v3035, %v3056
    %v3073 = vadd.f32 %v3036, %v3057
    %v3074 = vadd.f32 %v3037, %v3058
    %v3075 = vadd.f32 %v3038, %v3059
    %v3076 = vadd.f32 %v3039, %v3060
    %v3077 = vadd.f32 %v3040, %v3061
    %v3078 = vadd.f32 %v3041, %v3062
    %v3079 = vadd.f32 %v3042, %v3063
    %v3080 = vadd.f32 %v3043, %v3064
    %3082 = vset.pattern.permute.xlu0 0
    %3083 = vperm.xlu0 %3082, %v104
    %v3084 = vpop.permute.xlu0 %3083
    %v3086 = vmul.f32 %v2004, %v3084
    %v3087 = vmul.f32 %v2008, %v3084
    %v3088 = vmul.f32 %v2012, %v3084
    %v3089 = vmul.f32 %v2016, %v3084
    %v3090 = vmul.f32 %v2020, %v3084
    %v3091 = vmul.f32 %v2024, %v3084
    %v3092 = vmul.f32 %v2028, %v3084
    %v3093 = vmul.f32 %v2032, %v3084
    %v3094 = vmul.f32 %v2036, %v3084
    %v3095 = vmul.f32 %v2040, %v3084
    %v3096 = vmul.f32 %v2044, %v3084
    %v3097 = vmul.f32 %v2048, %v3084
    %v3098 = vmul.f32 %v2052, %v3084
    %v3099 = vmul.f32 %v2056, %v3084
    %v3100 = vmul.f32 %v1996, %v3084
    %v3101 = vmul.f32 %v2000, %v3084
    %v3102 = vadd.f32 %v3065, %v3086
    %v3103 = vadd.f32 %v3066, %v3087
    %v3104 = vadd.f32 %v3067, %v3088
    %v3105 = vadd.f32 %v3068, %v3089
    %v3106 = vadd.f32 %v3069, %v3090
    %v3107 = vadd.f32 %v3070, %v3091
    %v3108 = vadd.f32 %v3071, %v3092
    %v3109 = vadd.f32 %v3072, %v3093
    %v3110 = vadd.f32 %v3073, %v3094
    %v3111 = vadd.f32 %v3074, %v3095
    %v3112 = vadd.f32 %v3075, %v3096
    %v3113 = vadd.f32 %v3076, %v3097
    %v3114 = vadd.f32 %v3077, %v3098
    %v3115 = vadd.f32 %v3078, %v3099
    %v3116 = vadd.f32 %v3079, %v3100
    %v3117 = vadd.f32 %v3080, %v3101
    %3119 = vset.pattern.permute.xlu0 0
    %3120 = vperm.xlu0 %3119, %v105
    %v3121 = vpop.permute.xlu0 %3120
    %v3123 = vmul.f32 %v2089, %v3121
    %v3124 = vmul.f32 %v2093, %v3121
    %v3125 = vmul.f32 %v2097, %v3121
    %v3126 = vmul.f32 %v2101, %v3121
    %v3127 = vmul.f32 %v2105, %v3121
    %v3128 = vmul.f32 %v2109, %v3121
    %v3129 = vmul.f32 %v2113, %v3121
    %v3130 = vmul.f32 %v2117, %v3121
    %v3131 = vmul.f32 %v2121, %v3121
    %v3132 = vmul.f32 %v2125, %v3121
    %v3133 = vmul.f32 %v2129, %v3121
    %v3134 = vmul.f32 %v2133, %v3121
    %v3135 = vmul.f32 %v2137, %v3121
    %v3136 = vmul.f32 %v2141, %v3121
    %v3137 = vmul.f32 %v2081, %v3121
    %v3138 = vmul.f32 %v2085, %v3121
    %v3139 = vadd.f32 %v3102, %v3123
    %v3140 = vadd.f32 %v3103, %v3124
    %v3141 = vadd.f32 %v3104, %v3125
    %v3142 = vadd.f32 %v3105, %v3126
    %v3143 = vadd.f32 %v3106, %v3127
    %v3144 = vadd.f32 %v3107, %v3128
    %v3145 = vadd.f32 %v3108, %v3129
    %v3146 = vadd.f32 %v3109, %v3130
    %v3147 = vadd.f32 %v3110, %v3131
    %v3148 = vadd.f32 %v3111, %v3132
    %v3149 = vadd.f32 %v3112, %v3133
    %v3150 = vadd.f32 %v3113, %v3134
    %v3151 = vadd.f32 %v3114, %v3135
    %v3152 = vadd.f32 %v3115, %v3136
    %v3153 = vadd.f32 %v3116, %v3137
    %v3154 = vadd.f32 %v3117, %v3138
    %3156 = vset.pattern.permute.xlu0 0
    %3157 = vperm.xlu0 %3156, %v106
    %v3158 = vpop.permute.xlu0 %3157
    %v3160 = vmul.f32 %v2190, %v3158
    %v3161 = vmul.f32 %v2194, %v3158
    %v3162 = vmul.f32 %v2198, %v3158
    %v3163 = vmul.f32 %v2202, %v3158
    %v3164 = vmul.f32 %v2206, %v3158
    %v3165 = vmul.f32 %v2210, %v3158
    %v3166 = vmul.f32 %v2214, %v3158
    %v3167 = vmul.f32 %v2218, %v3158
    %v3168 = vmul.f32 %v2222, %v3158
    %v3169 = vmul.f32 %v2226, %v3158
    %v3170 = vmul.f32 %v2230, %v3158
    %v3171 = vmul.f32 %v2234, %v3158
    %v3172 = vmul.f32 %v2238, %v3158
    %v3173 = vmul.f32 %v2242, %v3158
    %v3174 = vmul.f32 %v2182, %v3158
    %v3175 = vmul.f32 %v2186, %v3158
    %v3176 = vadd.f32 %v3139, %v3160
    %v3177 = vadd.f32 %v3140, %v3161
    %v3178 = vadd.f32 %v3141, %v3162
    %v3179 = vadd.f32 %v3142, %v3163
    %v3180 = vadd.f32 %v3143, %v3164
    %v3181 = vadd.f32 %v3144, %v3165
    %v3182 = vadd.f32 %v3145, %v3166
    %v3183 = vadd.f32 %v3146, %v3167
    %v3184 = vadd.f32 %v3147, %v3168
    %v3185 = vadd.f32 %v3148, %v3169
    %v3186 = vadd.f32 %v3149, %v3170
    %v3187 = vadd.f32 %v3150, %v3171
    %v3188 = vadd.f32 %v3151, %v3172
    %v3189 = vadd.f32 %v3152, %v3173
    %v3190 = vadd.f32 %v3153, %v3174
    %v3191 = vadd.f32 %v3154, %v3175
    %3193 = vset.pattern.permute.xlu0 0
    %3194 = vperm.xlu0 %3193, %v107
    %v3195 = vpop.permute.xlu0 %3194
    %v3197 = vmul.f32 %v2291, %v3195
    %v3198 = vmul.f32 %v2295, %v3195
    %v3199 = vmul.f32 %v2299, %v3195
    %v3200 = vmul.f32 %v2303, %v3195
    %v3201 = vmul.f32 %v2307, %v3195
    %v3202 = vmul.f32 %v2311, %v3195
    %v3203 = vmul.f32 %v2315, %v3195
    %v3204 = vmul.f32 %v2319, %v3195
    %v3205 = vmul.f32 %v2323, %v3195
    %v3206 = vmul.f32 %v2327, %v3195
    %v3207 = vmul.f32 %v2331, %v3195
    %v3208 = vmul.f32 %v2335, %v3195
    %v3209 = vmul.f32 %v2339, %v3195
    %v3210 = vmul.f32 %v2343, %v3195
    %v3211 = vmul.f32 %v2283, %v3195
    %v3212 = vmul.f32 %v2287, %v3195
    %v3213 = vadd.f32 %v3176, %v3197
    %v3214 = vadd.f32 %v3177, %v3198
    %v3215 = vadd.f32 %v3178, %v3199
    %v3216 = vadd.f32 %v3179, %v3200
    %v3217 = vadd.f32 %v3180, %v3201
    %v3218 = vadd.f32 %v3181, %v3202
    %v3219 = vadd.f32 %v3182, %v3203
    %v3220 = vadd.f32 %v3183, %v3204
    %v3221 = vadd.f32 %v3184, %v3205
    %v3222 = vadd.f32 %v3185, %v3206
    %v3223 = vadd.f32 %v3186, %v3207
    %v3224 = vadd.f32 %v3187, %v3208
    %v3225 = vadd.f32 %v3188, %v3209
    %v3226 = vadd.f32 %v3189, %v3210
    %v3227 = vadd.f32 %v3190, %v3211
    %v3228 = vadd.f32 %v3191, %v3212
    %3230 = vset.pattern.permute.xlu0 0
    %3231 = vperm.xlu0 %3230, %v108
    %v3232 = vpop.permute.xlu0 %3231
    %v3234 = vmul.f32 %v2392, %v3232
    %v3235 = vmul.f32 %v2396, %v3232
    %v3236 = vmul.f32 %v2400, %v3232
    %v3237 = vmul.f32 %v2404, %v3232
    %v3238 = vmul.f32 %v2408, %v3232
    %v3239 = vmul.f32 %v2412, %v3232
    %v3240 = vmul.f32 %v2416, %v3232
    %v3241 = vmul.f32 %v2420, %v3232
    %v3242 = vmul.f32 %v2424, %v3232
    %v3243 = vmul.f32 %v2428, %v3232
    %v3244 = vmul.f32 %v2432, %v3232
    %v3245 = vmul.f32 %v2436, %v3232
    %v3246 = vmul.f32 %v2440, %v3232
    %v3247 = vmul.f32 %v2444, %v3232
    %v3248 = vmul.f32 %v2384, %v3232
    %v3249 = vmul.f32 %v2388, %v3232
    %v3250 = vadd.f32 %v3213, %v3234
    %v3251 = vadd.f32 %v3214, %v3235
    %v3252 = vadd.f32 %v3215, %v3236
    %v3253 = vadd.f32 %v3216, %v3237
    %v3254 = vadd.f32 %v3217, %v3238
    %v3255 = vadd.f32 %v3218, %v3239
    %v3256 = vadd.f32 %v3219, %v3240
    %v3257 = vadd.f32 %v3220, %v3241
    %v3258 = vadd.f32 %v3221, %v3242
    %v3259 = vadd.f32 %v3222, %v3243
    %v3260 = vadd.f32 %v3223, %v3244
    %v3261 = vadd.f32 %v3224, %v3245
    %v3262 = vadd.f32 %v3225, %v3246
    %v3263 = vadd.f32 %v3226, %v3247
    %v3264 = vadd.f32 %v3227, %v3248
    %v3265 = vadd.f32 %v3228, %v3249
    %3267 = vset.pattern.permute.xlu0 0
    %3268 = vperm.xlu0 %3267, %v109
    %v3269 = vpop.permute.xlu0 %3268
    %v3271 = vmul.f32 %v2493, %v3269
    %v3272 = vmul.f32 %v2497, %v3269
    %v3273 = vmul.f32 %v2501, %v3269
    %v3274 = vmul.f32 %v2505, %v3269
    %v3275 = vmul.f32 %v2509, %v3269
    %v3276 = vmul.f32 %v2513, %v3269
    %v3277 = vmul.f32 %v2517, %v3269
    %v3278 = vmul.f32 %v2521, %v3269
    %v3279 = vmul.f32 %v2525, %v3269
    %v3280 = vmul.f32 %v2529, %v3269
    %v3281 = vmul.f32 %v2533, %v3269
    %v3282 = vmul.f32 %v2537, %v3269
    %v3283 = vmul.f32 %v2541, %v3269
    %v3284 = vmul.f32 %v2545, %v3269
    %v3285 = vmul.f32 %v2485, %v3269
    %v3286 = vmul.f32 %v2489, %v3269
    %v3287 = vadd.f32 %v3250, %v3271
    %v3288 = vadd.f32 %v3251, %v3272
    %v3289 = vadd.f32 %v3252, %v3273
    %v3290 = vadd.f32 %v3253, %v3274
    %v3291 = vadd.f32 %v3254, %v3275
    %v3292 = vadd.f32 %v3255, %v3276
    %v3293 = vadd.f32 %v3256, %v3277
    %v3294 = vadd.f32 %v3257, %v3278
    %v3295 = vadd.f32 %v3258, %v3279
    %v3296 = vadd.f32 %v3259, %v3280
    %v3297 = vadd.f32 %v3260, %v3281
    %v3298 = vadd.f32 %v3261, %v3282
    %v3299 = vadd.f32 %v3262, %v3283
    %v3300 = vadd.f32 %v3263, %v3284
    %v3301 = vadd.f32 %v3264, %v3285
    %v3302 = vadd.f32 %v3265, %v3286
    %3304 = vset.pattern.permute.xlu0 0
    %3305 = vperm.xlu0 %3304, %v110
    %v3306 = vpop.permute.xlu0 %3305
    %v3308 = vmul.f32 %v2594, %v3306
    %v3309 = vmul.f32 %v2598, %v3306
    %v3310 = vmul.f32 %v2602, %v3306
    %v3311 = vmul.f32 %v2606, %v3306
    %v3312 = vmul.f32 %v2610, %v3306
    %v3313 = vmul.f32 %v2614, %v3306
    %v3314 = vmul.f32 %v2618, %v3306
    %v3315 = vmul.f32 %v2622, %v3306
    %v3316 = vmul.f32 %v2626, %v3306
    %v3317 = vmul.f32 %v2630, %v3306
    %v3318 = vmul.f32 %v2634, %v3306
    %v3319 = vmul.f32 %v2638, %v3306
    %v3320 = vmul.f32 %v2642, %v3306
    %v3321 = vmul.f32 %v2646, %v3306
    %v3322 = vmul.f32 %v2586, %v3306
    %v3323 = vmul.f32 %v2590, %v3306
    %v3324 = vadd.f32 %v3287, %v3308
    %v3325 = vadd.f32 %v3288, %v3309
    %v3326 = vadd.f32 %v3289, %v3310
    %v3327 = vadd.f32 %v3290, %v3311
    %v3328 = vadd.f32 %v3291, %v3312
    %v3329 = vadd.f32 %v3292, %v3313
    %v3330 = vadd.f32 %v3293, %v3314
    %v3331 = vadd.f32 %v3294, %v3315
    %v3332 = vadd.f32 %v3295, %v3316
    %v3333 = vadd.f32 %v3296, %v3317
    %v3334 = vadd.f32 %v3297, %v3318
    %v3335 = vadd.f32 %v3298, %v3319
    %v3336 = vadd.f32 %v3299, %v3320
    %v3337 = vadd.f32 %v3300, %v3321
    %v3338 = vadd.f32 %v3301, %v3322
    %v3339 = vadd.f32 %v3302, %v3323
    %3341 = vset.pattern.permute.xlu0 0
    %3342 = vperm.xlu0 %3341, %v111
    %v3343 = vpop.permute.xlu0 %3342
    %v3345 = vmul.f32 %v2695, %v3343
    %v3346 = vmul.f32 %v2699, %v3343
    %v3347 = vmul.f32 %v2703, %v3343
    %v3348 = vmul.f32 %v2707, %v3343
    %v3349 = vmul.f32 %v2711, %v3343
    %v3350 = vmul.f32 %v2715, %v3343
    %v3351 = vmul.f32 %v2719, %v3343
    %v3352 = vmul.f32 %v2723, %v3343
    %v3353 = vmul.f32 %v2727, %v3343
    %v3354 = vmul.f32 %v2731, %v3343
    %v3355 = vmul.f32 %v2735, %v3343
    %v3356 = vmul.f32 %v2739, %v3343
    %v3357 = vmul.f32 %v2743, %v3343
    %v3358 = vmul.f32 %v2747, %v3343
    %v3359 = vmul.f32 %v2687, %v3343
    %v3360 = vmul.f32 %v2691, %v3343
    %v3361 = vadd.f32 %v3324, %v3345
    %v3362 = vadd.f32 %v3325, %v3346
    %v3363 = vadd.f32 %v3326, %v3347
    %v3364 = vadd.f32 %v3327, %v3348
    %v3365 = vadd.f32 %v3328, %v3349
    %v3366 = vadd.f32 %v3329, %v3350
    %v3367 = vadd.f32 %v3330, %v3351
    %v3368 = vadd.f32 %v3331, %v3352
    %v3369 = vadd.f32 %v3332, %v3353
    %v3370 = vadd.f32 %v3333, %v3354
    %v3371 = vadd.f32 %v3334, %v3355
    %v3372 = vadd.f32 %v3335, %v3356
    %v3373 = vadd.f32 %v3336, %v3357
    %v3374 = vadd.f32 %v3337, %v3358
    %v3375 = vadd.f32 %v3338, %v3359
    %v3376 = vadd.f32 %v3339, %v3360
    %3378 = vset.pattern.permute.xlu0 0
    %3379 = vperm.xlu0 %3378, %v112
    %v3380 = vpop.permute.xlu0 %3379
    %v3382 = vadd.f32 %v3361, %v3380
    %v3383 = vadd.f32 %v3362, %v3380
    %v3384 = vadd.f32 %v3363, %v3380
    %v3385 = vadd.f32 %v3364, %v3380
    %v3386 = vadd.f32 %v3365, %v3380
    %v3387 = vadd.f32 %v3366, %v3380
    %v3388 = vadd.f32 %v3367, %v3380
    %v3389 = vadd.f32 %v3368, %v3380
    %v3390 = vadd.f32 %v3369, %v3380
    %v3391 = vadd.f32 %v3370, %v3380
    %v3392 = vadd.f32 %v3371, %v3380
    %v3393 = vadd.f32 %v3372, %v3380
    %v3394 = vadd.f32 %v3373, %v3380
    %v3395 = vadd.f32 %v3374, %v3380
    %v3396 = vadd.f32 %v3375, %v3380
    %v3397 = vadd.f32 %v3376, %v3380
    %v3398 = vmax.f32 %v3382, %v3383
    %v3399 = vmax.f32 %v3383, %v3384
    %v3400 = vmax.f32 %v3384, %v3385
    %v3401 = vmax.f32 %v3385, %v3386
    %v3402 = vmax.f32 %v3386, %v3387
    %v3403 = vmax.f32 %v3387, %v3388
    %v3404 = vmax.f32 %v3388, %v3389
    %v3405 = vmax.f32 %v3389, %v3390
    %v3406 = vmax.f32 %v3390, %v3391
    %v3407 = vmax.f32 %v3391, %v3392
    %v3408 = vmax.f32 %v3392, %v3393
    %v3409 = vmax.f32 %v3393, %v3394
    %v3410 = vmax.f32 %v3394, %v3395
    %v3411 = vmax.f32 %v3395, %v3396
    %v3412 = vmax.f32 %v3396, %v3397
    %v3413 = vmax.f32 %v3397, %v3382
    %v3414 = vmax.f32 %v3398, %v3384
    %v3415 = vmax.f32 %v3399, %v3385
    %v3416 = vmax.f32 %v3400, %v3386
    %v3417 = vmax.f32 %v3401, %v3387
    %v3418 = vmax.f32 %v3402, %v3388
    %v3419 = vmax.f32 %v3403, %v3389
    %v3420 = vmax.f32 %v3404, %v3390
    %v3421 = vmax.f32 %v3405, %v3391
    %v3422 = vmax.f32 %v3406, %v3392
    %v3423 = vmax.f32 %v3407, %v3393
    %v3424 = vmax.f32 %v3408, %v3394
    %v3425 = vmax.f32 %v3409, %v3395
    %v3426 = vmax.f32 %v3410, %v3396
    %v3427 = vmax.f32 %v3411, %v3397
    %v3428 = vmax.f32 %v3412, %v3382
    %v3429 = vmax.f32 %v3413, %v3383
    %3431 = vset.pattern.permute.xlu0 0
    %3432 = vperm.xlu0 %3431, %v79
    %v3433 = vpop.permute.xlu0 %3432
    %v3435 = vmul.f32 %v1996, %v3433
    %v3436 = vmul.f32 %v2000, %v3433
    %v3437 = vmul.f32 %v2004, %v3433
    %v3438 = vmul.f32 %v2008, %v3433
    %v3439 = vmul.f32 %v2012, %v3433
    %v3440 = vmul.f32 %v2016, %v3433
    %v3441 = vmul.f32 %v2020, %v3433
    %v3442 = vmul.f32 %v2024, %v3433
    %v3443 = vmul.f32 %v2028, %v3433
    %v3444 = vmul.f32 %v2032, %v3433
    %v3445 = vmul.f32 %v2036, %v3433
    %v3446 = vmul.f32 %v2040, %v3433
    %v3447 = vmul.f32 %v2044, %v3433
    %v3448 = vmul.f32 %v2048, %v3433
    %v3449 = vmul.f32 %v2052, %v3433
    %v3450 = vmul.f32 %v2056, %v3433
    %3452 = vset.pattern.permute.xlu0 0
    %3453 = vperm.xlu0 %3452, %v80
    %v3454 = vpop.permute.xlu0 %3453
    %v3456 = vmul.f32 %v2081, %v3454
    %v3457 = vmul.f32 %v2085, %v3454
    %v3458 = vmul.f32 %v2089, %v3454
    %v3459 = vmul.f32 %v2093, %v3454
    %v3460 = vmul.f32 %v2097, %v3454
    %v3461 = vmul.f32 %v2101, %v3454
    %v3462 = vmul.f32 %v2105, %v3454
    %v3463 = vmul.f32 %v2109, %v3454
    %v3464 = vmul.f32 %v2113, %v3454
    %v3465 = vmul.f32 %v2117, %v3454
    %v3466 = vmul.f32 %v2121, %v3454
    %v3467 = vmul.f32 %v2125, %v3454
    %v3468 = vmul.f32 %v2129, %v3454
    %v3469 = vmul.f32 %v2133, %v3454
    %v3470 = vmul.f32 %v2137, %v3454
    %v3471 = vmul.f32 %v2141, %v3454
    %v3472 = vadd.f32 %v3435, %v3456
    %v3473 = vadd.f32 %v3436, %v3457
    %v3474 = vadd.f32 %v3437, %v3458
    %v3475 = vadd.f32 %v3438, %v3459
    %v3476 = vadd.f32 %v3439, %v3460
    %v3477 = vadd.f32 %v3440, %v3461
    %v3478 = vadd.f32 %v3441, %v3462
    %v3479 = vadd.f32 %v3442, %v3463
    %v3480 = vadd.f32 %v3443, %v3464
    %v3481 = vadd.f32 %v3444, %v3465
    %v3482 = vadd.f32 %v3445, %v3466
    %v3483 = vadd.f32 %v3446, %v3467
    %v3484 = vadd.f32 %v3447, %v3468
    %v3485 = vadd.f32 %v3448, %v3469
    %v3486 = vadd.f32 %v3449, %v3470
    %v3487 = vadd.f32 %v3450, %v3471
    %3489 = vset.pattern.permute.xlu0 0
    %3490 = vperm.xlu0 %3489, %v81
    %v3491 = vpop.permute.xlu0 %3490
    %v3493 = vmul.f32 %v2182, %v3491
    %v3494 = vmul.f32 %v2186, %v3491
    %v3495 = vmul.f32 %v2190, %v3491
    %v3496 = vmul.f32 %v2194, %v3491
    %v3497 = vmul.f32 %v2198, %v3491
    %v3498 = vmul.f32 %v2202, %v3491
    %v3499 = vmul.f32 %v2206, %v3491
    %v3500 = vmul.f32 %v2210, %v3491
    %v3501 = vmul.f32 %v2214, %v3491
    %v3502 = vmul.f32 %v2218, %v3491
    %v3503 = vmul.f32 %v2222, %v3491
    %v3504 = vmul.f32 %v2226, %v3491
    %v3505 = vmul.f32 %v2230, %v3491
    %v3506 = vmul.f32 %v2234, %v3491
    %v3507 = vmul.f32 %v2238, %v3491
    %v3508 = vmul.f32 %v2242, %v3491
    %v3509 = vadd.f32 %v3472, %v3493
    %v3510 = vadd.f32 %v3473, %v3494
    %v3511 = vadd.f32 %v3474, %v3495
    %v3512 = vadd.f32 %v3475, %v3496
    %v3513 = vadd.f32 %v3476, %v3497
    %v3514 = vadd.f32 %v3477, %v3498
    %v3515 = vadd.f32 %v3478, %v3499
    %v3516 = vadd.f32 %v3479, %v3500
    %v3517 = vadd.f32 %v3480, %v3501
    %v3518 = vadd.f32 %v3481, %v3502
    %v3519 = vadd.f32 %v3482, %v3503
    %v3520 = vadd.f32 %v3483, %v3504
    %v3521 = vadd.f32 %v3484, %v3505
    %v3522 = vadd.f32 %v3485, %v3506
    %v3523 = vadd.f32 %v3486, %v3507
    %v3524 = vadd.f32 %v3487, %v3508
    %3526 = vset.pattern.permute.xlu0 0
    %3527 = vperm.xlu0 %3526, %v82
    %v3528 = vpop.permute.xlu0 %3527
    %v3530 = vmul.f32 %v2283, %v3528
    %v3531 = vmul.f32 %v2287, %v3528
    %v3532 = vmul.f32 %v2291, %v3528
    %v3533 = vmul.f32 %v2295, %v3528
    %v3534 = vmul.f32 %v2299, %v3528
    %v3535 = vmul.f32 %v2303, %v3528
    %v3536 = vmul.f32 %v2307, %v3528
    %v3537 = vmul.f32 %v2311, %v3528
    %v3538 = vmul.f32 %v2315, %v3528
    %v3539 = vmul.f32 %v2319, %v3528
    %v3540 = vmul.f32 %v2323, %v3528
    %v3541 = vmul.f32 %v2327, %v3528
    %v3542 = vmul.f32 %v2331, %v3528
    %v3543 = vmul.f32 %v2335, %v3528
    %v3544 = vmul.f32 %v2339, %v3528
    %v3545 = vmul.f32 %v2343, %v3528
    %v3546 = vadd.f32 %v3509, %v3530
    %v3547 = vadd.f32 %v3510, %v3531
    %v3548 = vadd.f32 %v3511, %v3532
    %v3549 = vadd.f32 %v3512, %v3533
    %v3550 = vadd.f32 %v3513, %v3534
    %v3551 = vadd.f32 %v3514, %v3535
    %v3552 = vadd.f32 %v3515, %v3536
    %v3553 = vadd.f32 %v3516, %v3537
    %v3554 = vadd.f32 %v3517, %v3538
    %v3555 = vadd.f32 %v3518, %v3539
    %v3556 = vadd.f32 %v3519, %v3540
    %v3557 = vadd.f32 %v3520, %v3541
    %v3558 = vadd.f32 %v3521, %v3542
    %v3559 = vadd.f32 %v3522, %v3543
    %v3560 = vadd.f32 %v3523, %v3544
    %v3561 = vadd.f32 %v3524, %v3545
    %3563 = vset.pattern.permute.xlu0 0
    %3564 = vperm.xlu0 %3563, %v83
    %v3565 = vpop.permute.xlu0 %3564
    %v3567 = vmul.f32 %v2384, %v3565
    %v3568 = vmul.f32 %v2388, %v3565
    %v3569 = vmul.f32 %v2392, %v3565
    %v3570 = vmul.f32 %v2396, %v3565
    %v3571 = vmul.f32 %v2400, %v3565
    %v3572 = vmul.f32 %v2404, %v3565
    %v3573 = vmul.f32 %v2408, %v3565
    %v3574 = vmul.f32 %v2412, %v3565
    %v3575 = vmul.f32 %v2416, %v3565
    %v3576 = vmul.f32 %v2420, %v3565
    %v3577 = vmul.f32 %v2424, %v3565
    %v3578 = vmul.f32 %v2428, %v3565
    %v3579 = vmul.f32 %v2432, %v3565
    %v3580 = vmul.f32 %v2436, %v3565
    %v3581 = vmul.f32 %v2440, %v3565
    %v3582 = vmul.f32 %v2444, %v3565
    %v3583 = vadd.f32 %v3546, %v3567
    %v3584 = vadd.f32 %v3547, %v3568
    %v3585 = vadd.f32 %v3548, %v3569
    %v3586 = vadd.f32 %v3549, %v3570
    %v3587 = vadd.f32 %v3550, %v3571
    %v3588 = vadd.f32 %v3551, %v3572
    %v3589 = vadd.f32 %v3552, %v3573
    %v3590 = vadd.f32 %v3553, %v3574
    %v3591 = vadd.f32 %v3554, %v3575
    %v3592 = vadd.f32 %v3555, %v3576
    %v3593 = vadd.f32 %v3556, %v3577
    %v3594 = vadd.f32 %v3557, %v3578
    %v3595 = vadd.f32 %v3558, %v3579
    %v3596 = vadd.f32 %v3559, %v3580
    %v3597 = vadd.f32 %v3560, %v3581
    %v3598 = vadd.f32 %v3561, %v3582
    %3600 = vset.pattern.permute.xlu0 0
    %3601 = vperm.xlu0 %3600, %v84
    %v3602 = vpop.permute.xlu0 %3601
    %v3604 = vmul.f32 %v2485, %v3602
    %v3605 = vmul.f32 %v2489, %v3602
    %v3606 = vmul.f32 %v2493, %v3602
    %v3607 = vmul.f32 %v2497, %v3602
    %v3608 = vmul.f32 %v2501, %v3602
    %v3609 = vmul.f32 %v2505, %v3602
    %v3610 = vmul.f32 %v2509, %v3602
    %v3611 = vmul.f32 %v2513, %v3602
    %v3612 = vmul.f32 %v2517, %v3602
    %v3613 = vmul.f32 %v2521, %v3602
    %v3614 = vmul.f32 %v2525, %v3602
    %v3615 = vmul.f32 %v2529, %v3602
    %v3616 = vmul.f32 %v2533, %v3602
    %v3617 = vmul.f32 %v2537, %v3602
    %v3618 = vmul.f32 %v2541, %v3602
    %v3619 = vmul.f32 %v2545, %v3602
    %v3620 = vadd.f32 %v3583, %v3604
    %v3621 = vadd.f32 %v3584, %v3605
    %v3622 = vadd.f32 %v3585, %v3606
    %v3623 = vadd.f32 %v3586, %v3607
    %v3624 = vadd.f32 %v3587, %v3608
    %v3625 = vadd.f32 %v3588, %v3609
    %v3626 = vadd.f32 %v3589, %v3610
    %v3627 = vadd.f32 %v3590, %v3611
    %v3628 = vadd.f32 %v3591, %v3612
    %v3629 = vadd.f32 %v3592, %v3613
    %v3630 = vadd.f32 %v3593, %v3614
    %v3631 = vadd.f32 %v3594, %v3615
    %v3632 = vadd.f32 %v3595, %v3616
    %v3633 = vadd.f32 %v3596, %v3617
    %v3634 = vadd.f32 %v3597, %v3618
    %v3635 = vadd.f32 %v3598, %v3619
    %3637 = vset.pattern.permute.xlu0 0
    %3638 = vperm.xlu0 %3637, %v85
    %v3639 = vpop.permute.xlu0 %3638
    %v3641 = vmul.f32 %v2586, %v3639
    %v3642 = vmul.f32 %v2590, %v3639
    %v3643 = vmul.f32 %v2594, %v3639
    %v3644 = vmul.f32 %v2598, %v3639
    %v3645 = vmul.f32 %v2602, %v3639
    %v3646 = vmul.f32 %v2606, %v3639
    %v3647 = vmul.f32 %v2610, %v3639
    %v3648 = vmul.f32 %v2614, %v3639
    %v3649 = vmul.f32 %v2618, %v3639
    %v3650 = vmul.f32 %v2622, %v3639
    %v3651 = vmul.f32 %v2626, %v3639
    %v3652 = vmul.f32 %v2630, %v3639
    %v3653 = vmul.f32 %v2634, %v3639
    %v3654 = vmul.f32 %v2638, %v3639
    %v3655 = vmul.f32 %v2642, %v3639
    %v3656 = vmul.f32 %v2646, %v3639
    %v3657 = vadd.f32 %v3620, %v3641
    %v3658 = vadd.f32 %v3621, %v3642
    %v3659 = vadd.f32 %v3622, %v3643
    %v3660 = vadd.f32 %v3623, %v3644
    %v3661 = vadd.f32 %v3624, %v3645
    %v3662 = vadd.f32 %v3625, %v3646
    %v3663 = vadd.f32 %v3626, %v3647
    %v3664 = vadd.f32 %v3627, %v3648
    %v3665 = vadd.f32 %v3628, %v3649
    %v3666 = vadd.f32 %v3629, %v3650
    %v3667 = vadd.f32 %v3630, %v3651
    %v3668 = vadd.f32 %v3631, %v3652
    %v3669 = vadd.f32 %v3632, %v3653
    %v3670 = vadd.f32 %v3633, %v3654
    %v3671 = vadd.f32 %v3634, %v3655
    %v3672 = vadd.f32 %v3635, %v3656
    %3674 = vset.pattern.permute.xlu0 0
    %3675 = vperm.xlu0 %3674, %v86
    %v3676 = vpop.permute.xlu0 %3675
    %v3678 = vmul.f32 %v2687, %v3676
    %v3679 = vmul.f32 %v2691, %v3676
    %v3680 = vmul.f32 %v2695, %v3676
    %v3681 = vmul.f32 %v2699, %v3676
    %v3682 = vmul.f32 %v2703, %v3676
    %v3683 = vmul.f32 %v2707, %v3676
    %v3684 = vmul.f32 %v2711, %v3676
    %v3685 = vmul.f32 %v2715, %v3676
    %v3686 = vmul.f32 %v2719, %v3676
    %v3687 = vmul.f32 %v2723, %v3676
    %v3688 = vmul.f32 %v2727, %v3676
    %v3689 = vmul.f32 %v2731, %v3676
    %v3690 = vmul.f32 %v2735, %v3676
    %v3691 = vmul.f32 %v2739, %v3676
    %v3692 = vmul.f32 %v2743, %v3676
    %v3693 = vmul.f32 %v2747, %v3676
    %v3694 = vadd.f32 %v3657, %v3678
    %v3695 = vadd.f32 %v3658, %v3679
    %v3696 = vadd.f32 %v3659, %v3680
    %v3697 = vadd.f32 %v3660, %v3681
    %v3698 = vadd.f32 %v3661, %v3682
    %v3699 = vadd.f32 %v3662, %v3683
    %v3700 = vadd.f32 %v3663, %v3684
    %v3701 = vadd.f32 %v3664, %v3685
    %v3702 = vadd.f32 %v3665, %v3686
    %v3703 = vadd.f32 %v3666, %v3687
    %v3704 = vadd.f32 %v3667, %v3688
    %v3705 = vadd.f32 %v3668, %v3689
    %v3706 = vadd.f32 %v3669, %v3690
    %v3707 = vadd.f32 %v3670, %v3691
    %v3708 = vadd.f32 %v3671, %v3692
    %v3709 = vadd.f32 %v3672, %v3693
    %3711 = vset.pattern.permute.xlu0 0
    %3712 = vperm.xlu0 %3711, %v87
    %v3713 = vpop.permute.xlu0 %3712
    %v3715 = vadd.f32 %v3694, %v3713
    %v3716 = vadd.f32 %v3695, %v3713
    %v3717 = vadd.f32 %v3696, %v3713
    %v3718 = vadd.f32 %v3697, %v3713
    %v3719 = vadd.f32 %v3698, %v3713
    %v3720 = vadd.f32 %v3699, %v3713
    %v3721 = vadd.f32 %v3700, %v3713
    %v3722 = vadd.f32 %v3701, %v3713
    %v3723 = vadd.f32 %v3702, %v3713
    %v3724 = vadd.f32 %v3703, %v3713
    %v3725 = vadd.f32 %v3704, %v3713
    %v3726 = vadd.f32 %v3705, %v3713
    %v3727 = vadd.f32 %v3706, %v3713
    %v3728 = vadd.f32 %v3707, %v3713
    %v3729 = vadd.f32 %v3708, %v3713
    %v3730 = vadd.f32 %v3709, %v3713
    %v3731 = vadd.f32 %v3414, %v3719
    %v3732 = vadd.f32 %v3415, %v3720
    %v3733 = vadd.f32 %v3416, %v3721
    %v3734 = vadd.f32 %v3417, %v3722
    %v3735 = vadd.f32 %v3418, %v3723
    %v3736 = vadd.f32 %v3419, %v3724
    %v3737 = vadd.f32 %v3420, %v3725
    %v3738 = vadd.f32 %v3421, %v3726
    %v3739 = vadd.f32 %v3422, %v3727
    %v3740 = vadd.f32 %v3423, %v3728
    %v3741 = vadd.f32 %v3424, %v3729
    %v3742 = vadd.f32 %v3425, %v3730
    %v3743 = vadd.f32 %v3426, %v3715
    %v3744 = vadd.f32 %v3427, %v3716
    %v3745 = vadd.f32 %v3428, %v3717
    %v3746 = vadd.f32 %v3429, %v3718
    %v3747 = vmax.f32 %v3731, 0.0
    %v3748 = vmax.f32 %v3732, 0.0
    %v3749 = vmax.f32 %v3733, 0.0
    %v3750 = vmax.f32 %v3734, 0.0
    %v3751 = vmax.f32 %v3735, 0.0
    %v3752 = vmax.f32 %v3736, 0.0
    %v3753 = vmax.f32 %v3737, 0.0
    %v3754 = vmax.f32 %v3738, 0.0
    %v3755 = vmax.f32 %v3739, 0.0
    %v3756 = vmax.f32 %v3740, 0.0
    %v3757 = vmax.f32 %v3741, 0.0
    %v3758 = vmax.f32 %v3742, 0.0
    %v3759 = vmax.f32 %v3743, 0.0
    %v3760 = vmax.f32 %v3744, 0.0
    %v3761 = vmax.f32 %v3745, 0.0
    %v3762 = vmax.f32 %v3746, 0.0
    %3763 = vst [vmem:[#allocation4] sm:$0xff] %v3747
    %3764 = vst [vmem:[#allocation4 + $0x8] sm:$0xff] %v3748
    %3765 = vst [vmem:[#allocation4 + $0x10] sm:$0xff] %v3749
    %3766 = vst [vmem:[#allocation4 + $0x18] sm:$0xff] %v3750
    %3767 = vst [vmem:[#allocation4 + $0x20] sm:$0xff] %v3751
    %3768 = vst [vmem:[#allocation4 + $0x28] sm:$0xff] %v3752
    %3769 = vst [vmem:[#allocation4 + $0x30] sm:$0xff] %v3753
    %3770 = vst [vmem:[#allocation4 + $0x38] sm:$0xff] %v3754
    %3771 = vst [vmem:[#allocation4 + $0x40] sm:$0xff] %v3755
    %3772 = vst [vmem:[#allocation4 + $0x48] sm:$0xff] %v3756
    %3773 = vst [vmem:[#allocation4 + $0x50] sm:$0xff] %v3757
    %3774 = vst [vmem:[#allocation4 + $0x58] sm:$0xff] %v3758
    %3775 = vst [vmem:[#allocation4 + $0x60] sm:$0xff] %v3759
    %3776 = vst [vmem:[#allocation4 + $0x68] sm:$0xff] %v3760
    %3777 = vst [vmem:[#allocation4 + $0x70] sm:$0xff] %v3761
    %3778 = vst [vmem:[#allocation4 + $0x78] sm:$0xff] %v3762
    %v3779 = vlaneseq
    %v3780 = vshrl.u32 %v3779, 7
    %v3781 = vsub.s32 0, %v3780
    %v3782 = vrot.slane %v3747, %v3781
    %v3783 = vlaneseq
    %v3784 = vshrl.u32 %v3783, 7
    %v3785 = vsub.s32 0, %v3784
    %v3786 = vrot.slane %v3748, %v3785
    %v3787 = vlaneseq
    %v3788 = vshrl.u32 %v3787, 7
    %v3789 = vsub.s32 0, %v3788
    %v3790 = vrot.slane %v3749, %v3789
    %v3791 = vlaneseq
    %v3792 = vshrl.u32 %v3791, 7
    %v3793 = vsub.s32 0, %v3792
    %v3794 = vrot.slane %v3750, %v3793
    %v3795 = vlaneseq
    %v3796 = vshrl.u32 %v3795, 7
    %v3797 = vsub.s32 0, %v3796
    %v3798 = vrot.slane %v3751, %v3797
    %v3799 = vlaneseq
    %v3800 = vshrl.u32 %v3799, 7
    %v3801 = vsub.s32 0, %v3800
    %v3802 = vrot.slane %v3752, %v3801
    %v3803 = vlaneseq
    %v3804 = vshrl.u32 %v3803, 7
    %v3805 = vsub.s32 0, %v3804
    %v3806 = vrot.slane %v3753, %v3805
    %v3807 = vlaneseq
    %v3808 = vshrl.u32 %v3807, 7
    %v3809 = vsub.s32 0, %v3808
    %v3810 = vrot.slane %v3754, %v3809
    %v3811 = vlaneseq
    %v3812 = vshrl.u32 %v3811, 7
    %v3813 = vsub.s32 0, %v3812
    %v3814 = vrot.slane %v3755, %v3813
    %v3815 = vlaneseq
    %v3816 = vshrl.u32 %v3815, 7
    %v3817 = vsub.s32 0, %v3816
    %v3818 = vrot.slane %v3756, %v3817
    %v3819 = vlaneseq
    %v3820 = vshrl.u32 %v3819, 7
    %v3821 = vsub.s32 0, %v3820
    %v3822 = vrot.slane %v3757, %v3821
    %v3823 = vlaneseq
    %v3824 = vshrl.u32 %v3823, 7
    %v3825 = vsub.s32 0, %v3824
    %v3826 = vrot.slane %v3758, %v3825
    %v3827 = vlaneseq
    %v3828 = vshrl.u32 %v3827, 7
    %v3829 = vsub.s32 0, %v3828
    %v3830 = vrot.slane %v3759, %v3829
    %v3831 = vlaneseq
    %v3832 = vshrl.u32 %v3831, 7
    %v3833 = vsub.s32 0, %v3832
    %v3834 = vrot.slane %v3760, %v3833
    %v3835 = vlaneseq
    %v3836 = vshrl.u32 %v3835, 7
    %v3837 = vsub.s32 0, %v3836
    %v3838 = vrot.slane %v3761, %v3837
    %v3839 = vlaneseq
    %v3840 = vshrl.u32 %v3839, 7
    %v3841 = vsub.s32 0, %v3840
    %v3842 = vrot.slane %v3762, %v3841
    %3844 = vset.pattern.permute.xlu0 0
    %3845 = vperm.xlu0 %3844, %v122
    %v3846 = vpop.permute.xlu0 %3845
    %v3848 = vmul.f32 %v3782, %v3846
    %v3849 = vmul.f32 %v3786, %v3846
    %v3850 = vmul.f32 %v3790, %v3846
    %v3851 = vmul.f32 %v3794, %v3846
    %v3852 = vmul.f32 %v3798, %v3846
    %v3853 = vmul.f32 %v3802, %v3846
    %v3854 = vmul.f32 %v3806, %v3846
    %v3855 = vmul.f32 %v3810, %v3846
    %v3856 = vmul.f32 %v3814, %v3846
    %v3857 = vmul.f32 %v3818, %v3846
    %v3858 = vmul.f32 %v3822, %v3846
    %v3859 = vmul.f32 %v3826, %v3846
    %v3860 = vmul.f32 %v3830, %v3846
    %v3861 = vmul.f32 %v3834, %v3846
    %v3862 = vmul.f32 %v3838, %v3846
    %v3863 = vmul.f32 %v3842, %v3846
    %v3864 = vlaneseq
    %v3865 = vshrl.u32 %v3864, 7
    %v3866 = vsub.s32 1, %v3865
    %v3867 = vrot.slane %v3747, %v3866
    %v3868 = vlaneseq
    %v3869 = vshrl.u32 %v3868, 7
    %v3870 = vsub.s32 1, %v3869
    %v3871 = vrot.slane %v3748, %v3870
    %v3872 = vlaneseq
    %v3873 = vshrl.u32 %v3872, 7
    %v3874 = vsub.s32 1, %v3873
    %v3875 = vrot.slane %v3749, %v3874
    %v3876 = vlaneseq
    %v3877 = vshrl.u32 %v3876, 7
    %v3878 = vsub.s32 1, %v3877
    %v3879 = vrot.slane %v3750, %v3878
    %v3880 = vlaneseq
    %v3881 = vshrl.u32 %v3880, 7
    %v3882 = vsub.s32 1, %v3881
    %v3883 = vrot.slane %v3751, %v3882
    %v3884 = vlaneseq
    %v3885 = vshrl.u32 %v3884, 7
    %v3886 = vsub.s32 1, %v3885
    %v3887 = vrot.slane %v3752, %v3886
    %v3888 = vlaneseq
    %v3889 = vshrl.u32 %v3888, 7
    %v3890 = vsub.s32 1, %v3889
    %v3891 = vrot.slane %v3753, %v3890
    %v3892 = vlaneseq
    %v3893 = vshrl.u32 %v3892, 7
    %v3894 = vsub.s32 1, %v3893
    %v3895 = vrot.slane %v3754, %v3894
    %v3896 = vlaneseq
    %v3897 = vshrl.u32 %v3896, 7
    %v3898 = vsub.s32 1, %v3897
    %v3899 = vrot.slane %v3755, %v3898
    %v3900 = vlaneseq
    %v3901 = vshrl.u32 %v3900, 7
    %v3902 = vsub.s32 1, %v3901
    %v3903 = vrot.slane %v3756, %v3902
    %v3904 = vlaneseq
    %v3905 = vshrl.u32 %v3904, 7
    %v3906 = vsub.s32 1, %v3905
    %v3907 = vrot.slane %v3757, %v3906
    %v3908 = vlaneseq
    %v3909 = vshrl.u32 %v3908, 7
    %v3910 = vsub.s32 1, %v3909
    %v3911 = vrot.slane %v3758, %v3910
    %v3912 = vlaneseq
    %v3913 = vshrl.u32 %v3912, 7
    %v3914 = vsub.s32 1, %v3913
    %v3915 = vrot.slane %v3759, %v3914
    %v3916 = vlaneseq
    %v3917 = vshrl.u32 %v3916, 7
    %v3918 = vsub.s32 1, %v3917
    %v3919 = vrot.slane %v3760, %v3918
    %v3920 = vlaneseq
    %v3921 = vshrl.u32 %v3920, 7
    %v3922 = vsub.s32 1, %v3921
    %v3923 = vrot.slane %v3761, %v3922
    %v3924 = vlaneseq
    %v3925 = vshrl.u32 %v3924, 7
    %v3926 = vsub.s32 1, %v3925
    %v3927 = vrot.slane %v3762, %v3926
    %3929 = vset.pattern.permute.xlu0 0
    %3930 = vperm.xlu0 %3929, %v123
    %v3931 = vpop.permute.xlu0 %3930
    %v3933 = vmul.f32 %v3867, %v3931
    %v3934 = vmul.f32 %v3871, %v3931
    %v3935 = vmul.f32 %v3875, %v3931
    %v3936 = vmul.f32 %v3879, %v3931
    %v3937 = vmul.f32 %v3883, %v3931
    %v3938 = vmul.f32 %v3887, %v3931
    %v3939 = vmul.f32 %v3891, %v3931
    %v3940 = vmul.f32 %v3895, %v3931
    %v3941 = vmul.f32 %v3899, %v3931
    %v3942 = vmul.f32 %v3903, %v3931
    %v3943 = vmul.f32 %v3907, %v3931
    %v3944 = vmul.f32 %v3911, %v3931
    %v3945 = vmul.f32 %v3915, %v3931
    %v3946 = vmul.f32 %v3919, %v3931
    %v3947 = vmul.f32 %v3923, %v3931
    %v3948 = vmul.f32 %v3927, %v3931
    %v3949 = vadd.f32 %v3848, %v3933
    %v3950 = vadd.f32 %v3849, %v3934
    %v3951 = vadd.f32 %v3850, %v3935
    %v3952 = vadd.f32 %v3851, %v3936
    %v3953 = vadd.f32 %v3852, %v3937
    %v3954 = vadd.f32 %v3853, %v3938
    %v3955 = vadd.f32 %v3854, %v3939
    %v3956 = vadd.f32 %v3855, %v3940
    %v3957 = vadd.f32 %v3856, %v3941
    %v3958 = vadd.f32 %v3857, %v3942
    %v3959 = vadd.f32 %v3858, %v3943
    %v3960 = vadd.f32 %v3859, %v3944
    %v3961 = vadd.f32 %v3860, %v3945
    %v3962 = vadd.f32 %v3861, %v3946
    %v3963 = vadd.f32 %v3862, %v3947
    %v3964 = vadd.f32 %v3863, %v3948
    %v3965 = vlaneseq
    %v3966 = vshrl.u32 %v3965, 7
    %v3967 = vsub.s32 2, %v3966
    %v3968 = vrot.slane %v3747, %v3967
    %v3969 = vlaneseq
    %v3970 = vshrl.u32 %v3969, 7
    %v3971 = vsub.s32 2, %v3970
    %v3972 = vrot.slane %v3748, %v3971
    %v3973 = vlaneseq
    %v3974 = vshrl.u32 %v3973, 7
    %v3975 = vsub.s32 2, %v3974
    %v3976 = vrot.slane %v3749, %v3975
    %v3977 = vlaneseq
    %v3978 = vshrl.u32 %v3977, 7
    %v3979 = vsub.s32 2, %v3978
    %v3980 = vrot.slane %v3750, %v3979
    %v3981 = vlaneseq
    %v3982 = vshrl.u32 %v3981, 7
    %v3983 = vsub.s32 2, %v3982
    %v3984 = vrot.slane %v3751, %v3983
    %v3985 = vlaneseq
    %v3986 = vshrl.u32 %v3985, 7
    %v3987 = vsub.s32 2, %v3986
    %v3988 = vrot.slane %v3752, %v3987
    %v3989 = vlaneseq
    %v3990 = vshrl.u32 %v3989, 7
    %v3991 = vsub.s32 2, %v3990
    %v3992 = vrot.slane %v3753, %v3991
    %v3993 = vlaneseq
    %v3994 = vshrl.u32 %v3993, 7
    %v3995 = vsub.s32 2, %v3994
    %v3996 = vrot.slane %v3754, %v3995
    %v3997 = vlaneseq
    %v3998 = vshrl.u32 %v3997, 7
    %v3999 = vsub.s32 2, %v3998
    %v4000 = vrot.slane %v3755, %v3999
    %v4001 = vlaneseq
    %v4002 = vshrl.u32 %v4001, 7
    %v4003 = vsub.s32 2, %v4002
    %v4004 = vrot.slane %v3756, %v4003
    %v4005 = vlaneseq
    %v4006 = vshrl.u32 %v4005, 7
    %v4007 = vsub.s32 2, %v4006
    %v4008 = vrot.slane %v3757, %v4007
    %v4009 = vlaneseq
    %v4010 = vshrl.u32 %v4009, 7
    %v4011 = vsub.s32 2, %v4010
    %v4012 = vrot.slane %v3758, %v4011
    %v4013 = vlaneseq
    %v4014 = vshrl.u32 %v4013, 7
    %v4015 = vsub.s32 2, %v4014
    %v4016 = vrot.slane %v3759, %v4015
    %v4017 = vlaneseq
    %v4018 = vshrl.u32 %v4017, 7
    %v4019 = vsub.s32 2, %v4018
    %v4020 = vrot.slane %v3760, %v4019
    %v4021 = vlaneseq
    %v4022 = vshrl.u32 %v4021, 7
    %v4023 = vsub.s32 2, %v4022
    %v4024 = vrot.slane %v3761, %v4023
    %v4025 = vlaneseq
    %v4026 = vshrl.u32 %v4025, 7
    %v4027 = vsub.s32 2, %v4026
    %v4028 = vrot.slane %v3762, %v4027
    %4030 = vset.pattern.permute.xlu0 0
    %4031 = vperm.xlu0 %4030, %v124
    %v4032 = vpop.permute.xlu0 %4031
    %v4034 = vmul.f32 %v3968, %v4032
    %v4035 = vmul.f32 %v3972, %v4032
    %v4036 = vmul.f32 %v3976, %v4032
    %v4037 = vmul.f32 %v3980, %v4032
    %v4038 = vmul.f32 %v3984, %v4032
    %v4039 = vmul.f32 %v3988, %v4032
    %v4040 = vmul.f32 %v3992, %v4032
    %v4041 = vmul.f32 %v3996, %v4032
    %v4042 = vmul.f32 %v4000, %v4032
    %v4043 = vmul.f32 %v4004, %v4032
    %v4044 = vmul.f32 %v4008, %v4032
    %v4045 = vmul.f32 %v4012, %v4032
    %v4046 = vmul.f32 %v4016, %v4032
    %v4047 = vmul.f32 %v4020, %v4032
    %v4048 = vmul.f32 %v4024, %v4032
    %v4049 = vmul.f32 %v4028, %v4032
    %v4050 = vadd.f32 %v3949, %v4034
    %v4051 = vadd.f32 %v3950, %v4035
    %v4052 = vadd.f32 %v3951, %v4036
    %v4053 = vadd.f32 %v3952, %v4037
    %v4054 = vadd.f32 %v3953, %v4038
    %v4055 = vadd.f32 %v3954, %v4039
    %v4056 = vadd.f32 %v3955, %v4040
    %v4057 = vadd.f32 %v3956, %v4041
    %v4058 = vadd.f32 %v3957, %v4042
    %v4059 = vadd.f32 %v3958, %v4043
    %v4060 = vadd.f32 %v3959, %v4044
    %v4061 = vadd.f32 %v3960, %v4045
    %v4062 = vadd.f32 %v3961, %v4046
    %v4063 = vadd.f32 %v3962, %v4047
    %v4064 = vadd.f32 %v3963, %v4048
    %v4065 = vadd.f32 %v3964, %v4049
    %v4066 = vlaneseq
    %v4067 = vshrl.u32 %v4066, 7
    %v4068 = vsub.s32 3, %v4067
    %v4069 = vrot.slane %v3747, %v4068
    %v4070 = vlaneseq
    %v4071 = vshrl.u32 %v4070, 7
    %v4072 = vsub.s32 3, %v4071
    %v4073 = vrot.slane %v3748, %v4072
    %v4074 = vlaneseq
    %v4075 = vshrl.u32 %v4074, 7
    %v4076 = vsub.s32 3, %v4075
    %v4077 = vrot.slane %v3749, %v4076
    %v4078 = vlaneseq
    %v4079 = vshrl.u32 %v4078, 7
    %v4080 = vsub.s32 3, %v4079
    %v4081 = vrot.slane %v3750, %v4080
    %v4082 = vlaneseq
    %v4083 = vshrl.u32 %v4082, 7
    %v4084 = vsub.s32 3, %v4083
    %v4085 = vrot.slane %v3751, %v4084
    %v4086 = vlaneseq
    %v4087 = vshrl.u32 %v4086, 7
    %v4088 = vsub.s32 3, %v4087
    %v4089 = vrot.slane %v3752, %v4088
    %v4090 = vlaneseq
    %v4091 = vshrl.u32 %v4090, 7
    %v4092 = vsub.s32 3, %v4091
    %v4093 = vrot.slane %v3753, %v4092
    %v4094 = vlaneseq
    %v4095 = vshrl.u32 %v4094, 7
    %v4096 = vsub.s32 3, %v4095
    %v4097 = vrot.slane %v3754, %v4096
    %v4098 = vlaneseq
    %v4099 = vshrl.u32 %v4098, 7
    %v4100 = vsub.s32 3, %v4099
    %v4101 = vrot.slane %v3755, %v4100
    %v4102 = vlaneseq
    %v4103 = vshrl.u32 %v4102, 7
    %v4104 = vsub.s32 3, %v4103
    %v4105 = vrot.slane %v3756, %v4104
    %v4106 = vlaneseq
    %v4107 = vshrl.u32 %v4106, 7
    %v4108 = vsub.s32 3, %v4107
    %v4109 = vrot.slane %v3757, %v4108
    %v4110 = vlaneseq
    %v4111 = vshrl.u32 %v4110, 7
    %v4112 = vsub.s32 3, %v4111
    %v4113 = vrot.slane %v3758, %v4112
    %v4114 = vlaneseq
    %v4115 = vshrl.u32 %v4114, 7
    %v4116 = vsub.s32 3, %v4115
    %v4117 = vrot.slane %v3759, %v4116
    %v4118 = vlaneseq
    %v4119 = vshrl.u32 %v4118, 7
    %v4120 = vsub.s32 3, %v4119
    %v4121 = vrot.slane %v3760, %v4120
    %v4122 = vlaneseq
    %v4123 = vshrl.u32 %v4122, 7
    %v4124 = vsub.s32 3, %v4123
    %v4125 = vrot.slane %v3761, %v4124
    %v4126 = vlaneseq
    %v4127 = vshrl.u32 %v4126, 7
    %v4128 = vsub.s32 3, %v4127
    %v4129 = vrot.slane %v3762, %v4128
    %4131 = vset.pattern.permute.xlu0 0
    %4132 = vperm.xlu0 %4131, %v125
    %v4133 = vpop.permute.xlu0 %4132
    %v4135 = vmul.f32 %v4069, %v4133
    %v4136 = vmul.f32 %v4073, %v4133
    %v4137 = vmul.f32 %v4077, %v4133
    %v4138 = vmul.f32 %v4081, %v4133
    %v4139 = vmul.f32 %v4085, %v4133
    %v4140 = vmul.f32 %v4089, %v4133
    %v4141 = vmul.f32 %v4093, %v4133
    %v4142 = vmul.f32 %v4097, %v4133
    %v4143 = vmul.f32 %v4101, %v4133
    %v4144 = vmul.f32 %v4105, %v4133
    %v4145 = vmul.f32 %v4109, %v4133
    %v4146 = vmul.f32 %v4113, %v4133
    %v4147 = vmul.f32 %v4117, %v4133
    %v4148 = vmul.f32 %v4121, %v4133
    %v4149 = vmul.f32 %v4125, %v4133
    %v4150 = vmul.f32 %v4129, %v4133
    %v4151 = vadd.f32 %v4050, %v4135
    %v4152 = vadd.f32 %v4051, %v4136
    %v4153 = vadd.f32 %v4052, %v4137
    %v4154 = vadd.f32 %v4053, %v4138
    %v4155 = vadd.f32 %v4054, %v4139
    %v4156 = vadd.f32 %v4055, %v4140
    %v4157 = vadd.f32 %v4056, %v4141
    %v4158 = vadd.f32 %v4057, %v4142
    %v4159 = vadd.f32 %v4058, %v4143
    %v4160 = vadd.f32 %v4059, %v4144
    %v4161 = vadd.f32 %v4060, %v4145
    %v4162 = vadd.f32 %v4061, %v4146
    %v4163 = vadd.f32 %v4062, %v4147
    %v4164 = vadd.f32 %v4063, %v4148
    %v4165 = vadd.f32 %v4064, %v4149
    %v4166 = vadd.f32 %v4065, %v4150
    %v4167 = vlaneseq
    %v4168 = vshrl.u32 %v4167, 7
    %v4169 = vsub.s32 4, %v4168
    %v4170 = vrot.slane %v3747, %v4169
    %v4171 = vlaneseq
    %v4172 = vshrl.u32 %v4171, 7
    %v4173 = vsub.s32 4, %v4172
    %v4174 = vrot.slane %v3748, %v4173
    %v4175 = vlaneseq
    %v4176 = vshrl.u32 %v4175, 7
    %v4177 = vsub.s32 4, %v4176
    %v4178 = vrot.slane %v3749, %v4177
    %v4179 = vlaneseq
    %v4180 = vshrl.u32 %v4179, 7
    %v4181 = vsub.s32 4, %v4180
    %v4182 = vrot.slane %v3750, %v4181
    %v4183 = vlaneseq
    %v4184 = vshrl.u32 %v4183, 7
    %v4185 = vsub.s32 4, %v4184
    %v4186 = vrot.slane %v3751, %v4185
    %v4187 = vlaneseq
    %v4188 = vshrl.u32 %v4187, 7
    %v4189 = vsub.s32 4, %v4188
    %v4190 = vrot.slane %v3752, %v4189
    %v4191 = vlaneseq
    %v4192 = vshrl.u32 %v4191, 7
    %v4193 = vsub.s32 4, %v4192
    %v4194 = vrot.slane %v3753, %v4193
    %v4195 = vlaneseq
    %v4196 = vshrl.u32 %v4195, 7
    %v4197 = vsub.s32 4, %v4196
    %v4198 = vrot.slane %v3754, %v4197
    %v4199 = vlaneseq
    %v4200 = vshrl.u32 %v4199, 7
    %v4201 = vsub.s32 4, %v4200
    %v4202 = vrot.slane %v3755, %v4201
    %v4203 = vlaneseq
    %v4204 = vshrl.u32 %v4203, 7
    %v4205 = vsub.s32 4, %v4204
    %v4206 = vrot.slane %v3756, %v4205
    %v4207 = vlaneseq
    %v4208 = vshrl.u32 %v4207, 7
    %v4209 = vsub.s32 4, %v4208
    %v4210 = vrot.slane %v3757, %v4209
    %v4211 = vlaneseq
    %v4212 = vshrl.u32 %v4211, 7
    %v4213 = vsub.s32 4, %v4212
    %v4214 = vrot.slane %v3758, %v4213
    %v4215 = vlaneseq
    %v4216 = vshrl.u32 %v4215, 7
    %v4217 = vsub.s32 4, %v4216
    %v4218 = vrot.slane %v3759, %v4217
    %v4219 = vlaneseq
    %v4220 = vshrl.u32 %v4219, 7
    %v4221 = vsub.s32 4, %v4220
    %v4222 = vrot.slane %v3760, %v4221
    %v4223 = vlaneseq
    %v4224 = vshrl.u32 %v4223, 7
    %v4225 = vsub.s32 4, %v4224
    %v4226 = vrot.slane %v3761, %v4225
    %v4227 = vlaneseq
    %v4228 = vshrl.u32 %v4227, 7
    %v4229 = vsub.s32 4, %v4228
    %v4230 = vrot.slane %v3762, %v4229
    %4232 = vset.pattern.permute.xlu0 0
    %4233 = vperm.xlu0 %4232, %v126
    %v4234 = vpop.permute.xlu0 %4233
    %v4236 = vmul.f32 %v4170, %v4234
    %v4237 = vmul.f32 %v4174, %v4234
    %v4238 = vmul.f32 %v4178, %v4234
    %v4239 = vmul.f32 %v4182, %v4234
    %v4240 = vmul.f32 %v4186, %v4234
    %v4241 = vmul.f32 %v4190, %v4234
    %v4242 = vmul.f32 %v4194, %v4234
    %v4243 = vmul.f32 %v4198, %v4234
    %v4244 = vmul.f32 %v4202, %v4234
    %v4245 = vmul.f32 %v4206, %v4234
    %v4246 = vmul.f32 %v4210, %v4234
    %v4247 = vmul.f32 %v4214, %v4234
    %v4248 = vmul.f32 %v4218, %v4234
    %v4249 = vmul.f32 %v4222, %v4234
    %v4250 = vmul.f32 %v4226, %v4234
    %v4251 = vmul.f32 %v4230, %v4234
    %v4252 = vadd.f32 %v4151, %v4236
    %v4253 = vadd.f32 %v4152, %v4237
    %v4254 = vadd.f32 %v4153, %v4238
    %v4255 = vadd.f32 %v4154, %v4239
    %v4256 = vadd.f32 %v4155, %v4240
    %v4257 = vadd.f32 %v4156, %v4241
    %v4258 = vadd.f32 %v4157, %v4242
    %v4259 = vadd.f32 %v4158, %v4243
    %v4260 = vadd.f32 %v4159, %v4244
    %v4261 = vadd.f32 %v4160, %v4245
    %v4262 = vadd.f32 %v4161, %v4246
    %v4263 = vadd.f32 %v4162, %v4247
    %v4264 = vadd.f32 %v4163, %v4248
    %v4265 = vadd.f32 %v4164, %v4249
    %v4266 = vadd.f32 %v4165, %v4250
    %v4267 = vadd.f32 %v4166, %v4251
    %v4268 = vlaneseq
    %v4269 = vshrl.u32 %v4268, 7
    %v4270 = vsub.s32 5, %v4269
    %v4271 = vrot.slane %v3747, %v4270
    %v4272 = vlaneseq
    %v4273 = vshrl.u32 %v4272, 7
    %v4274 = vsub.s32 5, %v4273
    %v4275 = vrot.slane %v3748, %v4274
    %v4276 = vlaneseq
    %v4277 = vshrl.u32 %v4276, 7
    %v4278 = vsub.s32 5, %v4277
    %v4279 = vrot.slane %v3749, %v4278
    %v4280 = vlaneseq
    %v4281 = vshrl.u32 %v4280, 7
    %v4282 = vsub.s32 5, %v4281
    %v4283 = vrot.slane %v3750, %v4282
    %v4284 = vlaneseq
    %v4285 = vshrl.u32 %v4284, 7
    %v4286 = vsub.s32 5, %v4285
    %v4287 = vrot.slane %v3751, %v4286
    %v4288 = vlaneseq
    %v4289 = vshrl.u32 %v4288, 7
    %v4290 = vsub.s32 5, %v4289
    %v4291 = vrot.slane %v3752, %v4290
    %v4292 = vlaneseq
    %v4293 = vshrl.u32 %v4292, 7
    %v4294 = vsub.s32 5, %v4293
    %v4295 = vrot.slane %v3753, %v4294
    %v4296 = vlaneseq
    %v4297 = vshrl.u32 %v4296, 7
    %v4298 = vsub.s32 5, %v4297
    %v4299 = vrot.slane %v3754, %v4298
    %v4300 = vlaneseq
    %v4301 = vshrl.u32 %v4300, 7
    %v4302 = vsub.s32 5, %v4301
    %v4303 = vrot.slane %v3755, %v4302
    %v4304 = vlaneseq
    %v4305 = vshrl.u32 %v4304, 7
    %v4306 = vsub.s32 5, %v4305
    %v4307 = vrot.slane %v3756, %v4306
    %v4308 = vlaneseq
    %v4309 = vshrl.u32 %v4308, 7
    %v4310 = vsub.s32 5, %v4309
    %v4311 = vrot.slane %v3757, %v4310
    %v4312 = vlaneseq
    %v4313 = vshrl.u32 %v4312, 7
    %v4314 = vsub.s32 5, %v4313
    %v4315 = vrot.slane %v3758, %v4314
    %v4316 = vlaneseq
    %v4317 = vshrl.u32 %v4316, 7
    %v4318 = vsub.s32 5, %v4317
    %v4319 = vrot.slane %v3759, %v4318
    %v4320 = vlaneseq
    %v4321 = vshrl.u32 %v4320, 7
    %v4322 = vsub.s32 5, %v4321
    %v4323 = vrot.slane %v3760, %v4322
    %v4324 = vlaneseq
    %v4325 = vshrl.u32 %v4324, 7
    %v4326 = vsub.s32 5, %v4325
    %v4327 = vrot.slane %v3761, %v4326
    %v4328 = vlaneseq
    %v4329 = vshrl.u32 %v4328, 7
    %v4330 = vsub.s32 5, %v4329
    %v4331 = vrot.slane %v3762, %v4330
    %4333 = vset.pattern.permute.xlu0 0
    %4334 = vperm.xlu0 %4333, %v127
    %v4335 = vpop.permute.xlu0 %4334
    %v4337 = vmul.f32 %v4271, %v4335
    %v4338 = vmul.f32 %v4275, %v4335
    %v4339 = vmul.f32 %v4279, %v4335
    %v4340 = vmul.f32 %v4283, %v4335
    %v4341 = vmul.f32 %v4287, %v4335
    %v4342 = vmul.f32 %v4291, %v4335
    %v4343 = vmul.f32 %v4295, %v4335
    %v4344 = vmul.f32 %v4299, %v4335
    %v4345 = vmul.f32 %v4303, %v4335
    %v4346 = vmul.f32 %v4307, %v4335
    %v4347 = vmul.f32 %v4311, %v4335
    %v4348 = vmul.f32 %v4315, %v4335
    %v4349 = vmul.f32 %v4319, %v4335
    %v4350 = vmul.f32 %v4323, %v4335
    %v4351 = vmul.f32 %v4327, %v4335
    %v4352 = vmul.f32 %v4331, %v4335
    %v4353 = vadd.f32 %v4252, %v4337
    %v4354 = vadd.f32 %v4253, %v4338
    %v4355 = vadd.f32 %v4254, %v4339
    %v4356 = vadd.f32 %v4255, %v4340
    %v4357 = vadd.f32 %v4256, %v4341
    %v4358 = vadd.f32 %v4257, %v4342
    %v4359 = vadd.f32 %v4258, %v4343
    %v4360 = vadd.f32 %v4259, %v4344
    %v4361 = vadd.f32 %v4260, %v4345
    %v4362 = vadd.f32 %v4261, %v4346
    %v4363 = vadd.f32 %v4262, %v4347
    %v4364 = vadd.f32 %v4263, %v4348
    %v4365 = vadd.f32 %v4264, %v4349
    %v4366 = vadd.f32 %v4265, %v4350
    %v4367 = vadd.f32 %v4266, %v4351
    %v4368 = vadd.f32 %v4267, %v4352
    %v4369 = vlaneseq
    %v4370 = vshrl.u32 %v4369, 7
    %v4371 = vsub.s32 6, %v4370
    %v4372 = vrot.slane %v3747, %v4371
    %v4373 = vlaneseq
    %v4374 = vshrl.u32 %v4373, 7
    %v4375 = vsub.s32 6, %v4374
    %v4376 = vrot.slane %v3748, %v4375
    %v4377 = vlaneseq
    %v4378 = vshrl.u32 %v4377, 7
    %v4379 = vsub.s32 6, %v4378
    %v4380 = vrot.slane %v3749, %v4379
    %v4381 = vlaneseq
    %v4382 = vshrl.u32 %v4381, 7
    %v4383 = vsub.s32 6, %v4382
    %v4384 = vrot.slane %v3750, %v4383
    %v4385 = vlaneseq
    %v4386 = vshrl.u32 %v4385, 7
    %v4387 = vsub.s32 6, %v4386
    %v4388 = vrot.slane %v3751, %v4387
    %v4389 = vlaneseq
    %v4390 = vshrl.u32 %v4389, 7
    %v4391 = vsub.s32 6, %v4390
    %v4392 = vrot.slane %v3752, %v4391
    %v4393 = vlaneseq
    %v4394 = vshrl.u32 %v4393, 7
    %v4395 = vsub.s32 6, %v4394
    %v4396 = vrot.slane %v3753, %v4395
    %v4397 = vlaneseq
    %v4398 = vshrl.u32 %v4397, 7
    %v4399 = vsub.s32 6, %v4398
    %v4400 = vrot.slane %v3754, %v4399
    %v4401 = vlaneseq
    %v4402 = vshrl.u32 %v4401, 7
    %v4403 = vsub.s32 6, %v4402
    %v4404 = vrot.slane %v3755, %v4403
    %v4405 = vlaneseq
    %v4406 = vshrl.u32 %v4405, 7
    %v4407 = vsub.s32 6, %v4406
    %v4408 = vrot.slane %v3756, %v4407
    %v4409 = vlaneseq
    %v4410 = vshrl.u32 %v4409, 7
    %v4411 = vsub.s32 6, %v4410
    %v4412 = vrot.slane %v3757, %v4411
    %v4413 = vlaneseq
    %v4414 = vshrl.u32 %v4413, 7
    %v4415 = vsub.s32 6, %v4414
    %v4416 = vrot.slane %v3758, %v4415
    %v4417 = vlaneseq
    %v4418 = vshrl.u32 %v4417, 7
    %v4419 = vsub.s32 6, %v4418
    %v4420 = vrot.slane %v3759, %v4419
    %v4421 = vlaneseq
    %v4422 = vshrl.u32 %v4421, 7
    %v4423 = vsub.s32 6, %v4422
    %v4424 = vrot.slane %v3760, %v4423
    %v4425 = vlaneseq
    %v4426 = vshrl.u32 %v4425, 7
    %v4427 = vsub.s32 6, %v4426
    %v4428 = vrot.slane %v3761, %v4427
    %v4429 = vlaneseq
    %v4430 = vshrl.u32 %v4429, 7
    %v4431 = vsub.s32 6, %v4430
    %v4432 = vrot.slane %v3762, %v4431
    %4434 = vset.pattern.permute.xlu0 0
    %4435 = vperm.xlu0 %4434, %v128
    %v4436 = vpop.permute.xlu0 %4435
    %v4438 = vmul.f32 %v4372, %v4436
    %v4439 = vmul.f32 %v4376, %v4436
    %v4440 = vmul.f32 %v4380, %v4436
    %v4441 = vmul.f32 %v4384, %v4436
    %v4442 = vmul.f32 %v4388, %v4436
    %v4443 = vmul.f32 %v4392, %v4436
    %v4444 = vmul.f32 %v4396, %v4436
    %v4445 = vmul.f32 %v4400, %v4436
    %v4446 = vmul.f32 %v4404, %v4436
    %v4447 = vmul.f32 %v4408, %v4436
    %v4448 = vmul.f32 %v4412, %v4436
    %v4449 = vmul.f32 %v4416, %v4436
    %v4450 = vmul.f32 %v4420, %v4436
    %v4451 = vmul.f32 %v4424, %v4436
    %v4452 = vmul.f32 %v4428, %v4436
    %v4453 = vmul.f32 %v4432, %v4436
    %v4454 = vadd.f32 %v4353, %v4438
    %v4455 = vadd.f32 %v4354, %v4439
    %v4456 = vadd.f32 %v4355, %v4440
    %v4457 = vadd.f32 %v4356, %v4441
    %v4458 = vadd.f32 %v4357, %v4442
    %v4459 = vadd.f32 %v4358, %v4443
    %v4460 = vadd.f32 %v4359, %v4444
    %v4461 = vadd.f32 %v4360, %v4445
    %v4462 = vadd.f32 %v4361, %v4446
    %v4463 = vadd.f32 %v4362, %v4447
    %v4464 = vadd.f32 %v4363, %v4448
    %v4465 = vadd.f32 %v4364, %v4449
    %v4466 = vadd.f32 %v4365, %v4450
    %v4467 = vadd.f32 %v4366, %v4451
    %v4468 = vadd.f32 %v4367, %v4452
    %v4469 = vadd.f32 %v4368, %v4453
    %v4470 = vlaneseq
    %v4471 = vshrl.u32 %v4470, 7
    %v4472 = vsub.s32 7, %v4471
    %v4473 = vrot.slane %v3747, %v4472
    %v4474 = vlaneseq
    %v4475 = vshrl.u32 %v4474, 7
    %v4476 = vsub.s32 7, %v4475
    %v4477 = vrot.slane %v3748, %v4476
    %v4478 = vlaneseq
    %v4479 = vshrl.u32 %v4478, 7
    %v4480 = vsub.s32 7, %v4479
    %v4481 = vrot.slane %v3749, %v4480
    %v4482 = vlaneseq
    %v4483 = vshrl.u32 %v4482, 7
    %v4484 = vsub.s32 7, %v4483
    %v4485 = vrot.slane %v3750, %v4484
    %v4486 = vlaneseq
    %v4487 = vshrl.u32 %v4486, 7
    %v4488 = vsub.s32 7, %v4487
    %v4489 = vrot.slane %v3751, %v4488
    %v4490 = vlaneseq
    %v4491 = vshrl.u32 %v4490, 7
    %v4492 = vsub.s32 7, %v4491
    %v4493 = vrot.slane %v3752, %v4492
    %v4494 = vlaneseq
    %v4495 = vshrl.u32 %v4494, 7
    %v4496 = vsub.s32 7, %v4495
    %v4497 = vrot.slane %v3753, %v4496
    %v4498 = vlaneseq
    %v4499 = vshrl.u32 %v4498, 7
    %v4500 = vsub.s32 7, %v4499
    %v4501 = vrot.slane %v3754, %v4500
    %v4502 = vlaneseq
    %v4503 = vshrl.u32 %v4502, 7
    %v4504 = vsub.s32 7, %v4503
    %v4505 = vrot.slane %v3755, %v4504
    %v4506 = vlaneseq
    %v4507 = vshrl.u32 %v4506, 7
    %v4508 = vsub.s32 7, %v4507
    %v4509 = vrot.slane %v3756, %v4508
    %v4510 = vlaneseq
    %v4511 = vshrl.u32 %v4510, 7
    %v4512 = vsub.s32 7, %v4511
    %v4513 = vrot.slane %v3757, %v4512
    %v4514 = vlaneseq
    %v4515 = vshrl.u32 %v4514, 7
    %v4516 = vsub.s32 7, %v4515
    %v4517 = vrot.slane %v3758, %v4516
    %v4518 = vlaneseq
    %v4519 = vshrl.u32 %v4518, 7
    %v4520 = vsub.s32 7, %v4519
    %v4521 = vrot.slane %v3759, %v4520
    %v4522 = vlaneseq
    %v4523 = vshrl.u32 %v4522, 7
    %v4524 = vsub.s32 7, %v4523
    %v4525 = vrot.slane %v3760, %v4524
    %v4526 = vlaneseq
    %v4527 = vshrl.u32 %v4526, 7
    %v4528 = vsub.s32 7, %v4527
    %v4529 = vrot.slane %v3761, %v4528
    %v4530 = vlaneseq
    %v4531 = vshrl.u32 %v4530, 7
    %v4532 = vsub.s32 7, %v4531
    %v4533 = vrot.slane %v3762, %v4532
    %4535 = vset.pattern.permute.xlu0 0
    %4536 = vperm.xlu0 %4535, %v129
    %v4537 = vpop.permute.xlu0 %4536
    %v4539 = vmul.f32 %v4473, %v4537
    %v4540 = vmul.f32 %v4477, %v4537
    %v4541 = vmul.f32 %v4481, %v4537
    %v4542 = vmul.f32 %v4485, %v4537
    %v4543 = vmul.f32 %v4489, %v4537
    %v4544 = vmul.f32 %v4493, %v4537
    %v4545 = vmul.f32 %v4497, %v4537
    %v4546 = vmul.f32 %v4501, %v4537
    %v4547 = vmul.f32 %v4505, %v4537
    %v4548 = vmul.f32 %v4509, %v4537
    %v4549 = vmul.f32 %v4513, %v4537
    %v4550 = vmul.f32 %v4517, %v4537
    %v4551 = vmul.f32 %v4521, %v4537
    %v4552 = vmul.f32 %v4525, %v4537
    %v4553 = vmul.f32 %v4529, %v4537
    %v4554 = vmul.f32 %v4533, %v4537
    %v4555 = vadd.f32 %v4454, %v4539
    %v4556 = vadd.f32 %v4455, %v4540
    %v4557 = vadd.f32 %v4456, %v4541
    %v4558 = vadd.f32 %v4457, %v4542
    %v4559 = vadd.f32 %v4458, %v4543
    %v4560 = vadd.f32 %v4459, %v4544
    %v4561 = vadd.f32 %v4460, %v4545
    %v4562 = vadd.f32 %v4461, %v4546
    %v4563 = vadd.f32 %v4462, %v4547
    %v4564 = vadd.f32 %v4463, %v4548
    %v4565 = vadd.f32 %v4464, %v4549
    %v4566 = vadd.f32 %v4465, %v4550
    %v4567 = vadd.f32 %v4466, %v4551
    %v4568 = vadd.f32 %v4467, %v4552
    %v4569 = vadd.f32 %v4468, %v4553
    %v4570 = vadd.f32 %v4469, %v4554
    %4572 = vset.pattern.permute.xlu0 0
    %4573 = vperm.xlu0 %4572, %v130
    %v4574 = vpop.permute.xlu0 %4573
    %v4576 = vmul.f32 %v3790, %v4574
    %v4577 = vmul.f32 %v3794, %v4574
    %v4578 = vmul.f32 %v3798, %v4574
    %v4579 = vmul.f32 %v3802, %v4574
    %v4580 = vmul.f32 %v3806, %v4574
    %v4581 = vmul.f32 %v3810, %v4574
    %v4582 = vmul.f32 %v3814, %v4574
    %v4583 = vmul.f32 %v3818, %v4574
    %v4584 = vmul.f32 %v3822, %v4574
    %v4585 = vmul.f32 %v3826, %v4574
    %v4586 = vmul.f32 %v3830, %v4574
    %v4587 = vmul.f32 %v3834, %v4574
    %v4588 = vmul.f32 %v3838, %v4574
    %v4589 = vmul.f32 %v3842, %v4574
    %v4590 = vmul.f32 %v3782, %v4574
    %v4591 = vmul.f32 %v3786, %v4574
    %v4592 = vadd.f32 %v4555, %v4576
    %v4593 = vadd.f32 %v4556, %v4577
    %v4594 = vadd.f32 %v4557, %v4578
    %v4595 = vadd.f32 %v4558, %v4579
    %v4596 = vadd.f32 %v4559, %v4580
    %v4597 = vadd.f32 %v4560, %v4581
    %v4598 = vadd.f32 %v4561, %v4582
    %v4599 = vadd.f32 %v4562, %v4583
    %v4600 = vadd.f32 %v4563, %v4584
    %v4601 = vadd.f32 %v4564, %v4585
    %v4602 = vadd.f32 %v4565, %v4586
    %v4603 = vadd.f32 %v4566, %v4587
    %v4604 = vadd.f32 %v4567, %v4588
    %v4605 = vadd.f32 %v4568, %v4589
    %v4606 = vadd.f32 %v4569, %v4590
    %v4607 = vadd.f32 %v4570, %v4591
    %4609 = vset.pattern.permute.xlu0 0
    %4610 = vperm.xlu0 %4609, %v131
    %v4611 = vpop.permute.xlu0 %4610
    %v4613 = vmul.f32 %v3875, %v4611
    %v4614 = vmul.f32 %v3879, %v4611
    %v4615 = vmul.f32 %v3883, %v4611
    %v4616 = vmul.f32 %v3887, %v4611
    %v4617 = vmul.f32 %v3891, %v4611
    %v4618 = vmul.f32 %v3895, %v4611
    %v4619 = vmul.f32 %v3899, %v4611
    %v4620 = vmul.f32 %v3903, %v4611
    %v4621 = vmul.f32 %v3907, %v4611
    %v4622 = vmul.f32 %v3911, %v4611
    %v4623 = vmul.f32 %v3915, %v4611
    %v4624 = vmul.f32 %v3919, %v4611
    %v4625 = vmul.f32 %v3923, %v4611
    %v4626 = vmul.f32 %v3927, %v4611
    %v4627 = vmul.f32 %v3867, %v4611
    %v4628 = vmul.f32 %v3871, %v4611
    %v4629 = vadd.f32 %v4592, %v4613
    %v4630 = vadd.f32 %v4593, %v4614
    %v4631 = vadd.f32 %v4594, %v4615
    %v4632 = vadd.f32 %v4595, %v4616
    %v4633 = vadd.f32 %v4596, %v4617
    %v4634 = vadd.f32 %v4597, %v4618
    %v4635 = vadd.f32 %v4598, %v4619
    %v4636 = vadd.f32 %v4599, %v4620
    %v4637 = vadd.f32 %v4600, %v4621
    %v4638 = vadd.f32 %v4601, %v4622
    %v4639 = vadd.f32 %v4602, %v4623
    %v4640 = vadd.f32 %v4603, %v4624
    %v4641 = vadd.f32 %v4604, %v4625
    %v4642 = vadd.f32 %v4605, %v4626
    %v4643 = vadd.f32 %v4606, %v4627
    %v4644 = vadd.f32 %v4607, %v4628
    %4646 = vset.pattern.permute.xlu0 0
    %4647 = vperm.xlu0 %4646, %v132
    %v4648 = vpop.permute.xlu0 %4647
    %v4650 = vmul.f32 %v3976, %v4648
    %v4651 = vmul.f32 %v3980, %v4648
    %v4652 = vmul.f32 %v3984, %v4648
    %v4653 = vmul.f32 %v3988, %v4648
    %v4654 = vmul.f32 %v3992, %v4648
    %v4655 = vmul.f32 %v3996, %v4648
    %v4656 = vmul.f32 %v4000, %v4648
    %v4657 = vmul.f32 %v4004, %v4648
    %v4658 = vmul.f32 %v4008, %v4648
    %v4659 = vmul.f32 %v4012, %v4648
    %v4660 = vmul.f32 %v4016, %v4648
    %v4661 = vmul.f32 %v4020, %v4648
    %v4662 = vmul.f32 %v4024, %v4648
    %v4663 = vmul.f32 %v4028, %v4648
    %v4664 = vmul.f32 %v3968, %v4648
    %v4665 = vmul.f32 %v3972, %v4648
    %v4666 = vadd.f32 %v4629, %v4650
    %v4667 = vadd.f32 %v4630, %v4651
    %v4668 = vadd.f32 %v4631, %v4652
    %v4669 = vadd.f32 %v4632, %v4653
    %v4670 = vadd.f32 %v4633, %v4654
    %v4671 = vadd.f32 %v4634, %v4655
    %v4672 = vadd.f32 %v4635, %v4656
    %v4673 = vadd.f32 %v4636, %v4657
    %v4674 = vadd.f32 %v4637, %v4658
    %v4675 = vadd.f32 %v4638, %v4659
    %v4676 = vadd.f32 %v4639, %v4660
    %v4677 = vadd.f32 %v4640, %v4661
    %v4678 = vadd.f32 %v4641, %v4662
    %v4679 = vadd.f32 %v4642, %v4663
    %v4680 = vadd.f32 %v4643, %v4664
    %v4681 = vadd.f32 %v4644, %v4665
    %4683 = vset.pattern.permute.xlu0 0
    %4684 = vperm.xlu0 %4683, %v133
    %v4685 = vpop.permute.xlu0 %4684
    %v4687 = vmul.f32 %v4077, %v4685
    %v4688 = vmul.f32 %v4081, %v4685
    %v4689 = vmul.f32 %v4085, %v4685
    %v4690 = vmul.f32 %v4089, %v4685
    %v4691 = vmul.f32 %v4093, %v4685
    %v4692 = vmul.f32 %v4097, %v4685
    %v4693 = vmul.f32 %v4101, %v4685
    %v4694 = vmul.f32 %v4105, %v4685
    %v4695 = vmul.f32 %v4109, %v4685
    %v4696 = vmul.f32 %v4113, %v4685
    %v4697 = vmul.f32 %v4117, %v4685
    %v4698 = vmul.f32 %v4121, %v4685
    %v4699 = vmul.f32 %v4125, %v4685
    %v4700 = vmul.f32 %v4129, %v4685
    %v4701 = vmul.f32 %v4069, %v4685
    %v4702 = vmul.f32 %v4073, %v4685
    %v4703 = vadd.f32 %v4666, %v4687
    %v4704 = vadd.f32 %v4667, %v4688
    %v4705 = vadd.f32 %v4668, %v4689
    %v4706 = vadd.f32 %v4669, %v4690
    %v4707 = vadd.f32 %v4670, %v4691
    %v4708 = vadd.f32 %v4671, %v4692
    %v4709 = vadd.f32 %v4672, %v4693
    %v4710 = vadd.f32 %v4673, %v4694
    %v4711 = vadd.f32 %v4674, %v4695
    %v4712 = vadd.f32 %v4675, %v4696
    %v4713 = vadd.f32 %v4676, %v4697
    %v4714 = vadd.f32 %v4677, %v4698
    %v4715 = vadd.f32 %v4678, %v4699
    %v4716 = vadd.f32 %v4679, %v4700
    %v4717 = vadd.f32 %v4680, %v4701
    %v4718 = vadd.f32 %v4681, %v4702
    %4720 = vset.pattern.permute.xlu0 0
    %4721 = vperm.xlu0 %4720, %v134
    %v4722 = vpop.permute.xlu0 %4721
    %v4724 = vmul.f32 %v4178, %v4722
    %v4725 = vmul.f32 %v4182, %v4722
    %v4726 = vmul.f32 %v4186, %v4722
    %v4727 = vmul.f32 %v4190, %v4722
    %v4728 = vmul.f32 %v4194, %v4722
    %v4729 = vmul.f32 %v4198, %v4722
    %v4730 = vmul.f32 %v4202, %v4722
    %v4731 = vmul.f32 %v4206, %v4722
    %v4732 = vmul.f32 %v4210, %v4722
    %v4733 = vmul.f32 %v4214, %v4722
    %v4734 = vmul.f32 %v4218, %v4722
    %v4735 = vmul.f32 %v4222, %v4722
    %v4736 = vmul.f32 %v4226, %v4722
    %v4737 = vmul.f32 %v4230, %v4722
    %v4738 = vmul.f32 %v4170, %v4722
    %v4739 = vmul.f32 %v4174, %v4722
    %v4740 = vadd.f32 %v4703, %v4724
    %v4741 = vadd.f32 %v4704, %v4725
    %v4742 = vadd.f32 %v4705, %v4726
    %v4743 = vadd.f32 %v4706, %v4727
    %v4744 = vadd.f32 %v4707, %v4728
    %v4745 = vadd.f32 %v4708, %v4729
    %v4746 = vadd.f32 %v4709, %v4730
    %v4747 = vadd.f32 %v4710, %v4731
    %v4748 = vadd.f32 %v4711, %v4732
    %v4749 = vadd.f32 %v4712, %v4733
    %v4750 = vadd.f32 %v4713, %v4734
    %v4751 = vadd.f32 %v4714, %v4735
    %v4752 = vadd.f32 %v4715, %v4736
    %v4753 = vadd.f32 %v4716, %v4737
    %v4754 = vadd.f32 %v4717, %v4738
    %v4755 = vadd.f32 %v4718, %v4739
    %4757 = vset.pattern.permute.xlu0 0
    %4758 = vperm.xlu0 %4757, %v135
    %v4759 = vpop.permute.xlu0 %4758
    %v4761 = vmul.f32 %v4279, %v4759
    %v4762 = vmul.f32 %v4283, %v4759
    %v4763 = vmul.f32 %v4287, %v4759
    %v4764 = vmul.f32 %v4291, %v4759
    %v4765 = vmul.f32 %v4295, %v4759
    %v4766 = vmul.f32 %v4299, %v4759
    %v4767 = vmul.f32 %v4303, %v4759
    %v4768 = vmul.f32 %v4307, %v4759
    %v4769 = vmul.f32 %v4311, %v4759
    %v4770 = vmul.f32 %v4315, %v4759
    %v4771 = vmul.f32 %v4319, %v4759
    %v4772 = vmul.f32 %v4323, %v4759
    %v4773 = vmul.f32 %v4327, %v4759
    %v4774 = vmul.f32 %v4331, %v4759
    %v4775 = vmul.f32 %v4271, %v4759
    %v4776 = vmul.f32 %v4275, %v4759
    %v4777 = vadd.f32 %v4740, %v4761
    %v4778 = vadd.f32 %v4741, %v4762
    %v4779 = vadd.f32 %v4742, %v4763
    %v4780 = vadd.f32 %v4743, %v4764
    %v4781 = vadd.f32 %v4744, %v4765
    %v4782 = vadd.f32 %v4745, %v4766
    %v4783 = vadd.f32 %v4746, %v4767
    %v4784 = vadd.f32 %v4747, %v4768
    %v4785 = vadd.f32 %v4748, %v4769
    %v4786 = vadd.f32 %v4749, %v4770
    %v4787 = vadd.f32 %v4750, %v4771
    %v4788 = vadd.f32 %v4751, %v4772
    %v4789 = vadd.f32 %v4752, %v4773
    %v4790 = vadd.f32 %v4753, %v4774
    %v4791 = vadd.f32 %v4754, %v4775
    %v4792 = vadd.f32 %v4755, %v4776
    %4794 = vset.pattern.permute.xlu0 0
    %4795 = vperm.xlu0 %4794, %v136
    %v4796 = vpop.permute.xlu0 %4795
    %v4798 = vmul.f32 %v4380, %v4796
    %v4799 = vmul.f32 %v4384, %v4796
    %v4800 = vmul.f32 %v4388, %v4796
    %v4801 = vmul.f32 %v4392, %v4796
    %v4802 = vmul.f32 %v4396, %v4796
    %v4803 = vmul.f32 %v4400, %v4796
    %v4804 = vmul.f32 %v4404, %v4796
    %v4805 = vmul.f32 %v4408, %v4796
    %v4806 = vmul.f32 %v4412, %v4796
    %v4807 = vmul.f32 %v4416, %v4796
    %v4808 = vmul.f32 %v4420, %v4796
    %v4809 = vmul.f32 %v4424, %v4796
    %v4810 = vmul.f32 %v4428, %v4796
    %v4811 = vmul.f32 %v4432, %v4796
    %v4812 = vmul.f32 %v4372, %v4796
    %v4813 = vmul.f32 %v4376, %v4796
    %v4814 = vadd.f32 %v4777, %v4798
    %v4815 = vadd.f32 %v4778, %v4799
    %v4816 = vadd.f32 %v4779, %v4800
    %v4817 = vadd.f32 %v4780, %v4801
    %v4818 = vadd.f32 %v4781, %v4802
    %v4819 = vadd.f32 %v4782, %v4803
    %v4820 = vadd.f32 %v4783, %v4804
    %v4821 = vadd.f32 %v4784, %v4805
    %v4822 = vadd.f32 %v4785, %v4806
    %v4823 = vadd.f32 %v4786, %v4807
    %v4824 = vadd.f32 %v4787, %v4808
    %v4825 = vadd.f32 %v4788, %v4809
    %v4826 = vadd.f32 %v4789, %v4810
    %v4827 = vadd.f32 %v4790, %v4811
    %v4828 = vadd.f32 %v4791, %v4812
    %v4829 = vadd.f32 %v4792, %v4813
    %4831 = vset.pattern.permute.xlu0 0
    %4832 = vperm.xlu0 %4831, %v137
    %v4833 = vpop.permute.xlu0 %4832
    %v4835 = vmul.f32 %v4481, %v4833
    %v4836 = vmul.f32 %v4485, %v4833
    %v4837 = vmul.f32 %v4489, %v4833
    %v4838 = vmul.f32 %v4493, %v4833
    %v4839 = vmul.f32 %v4497, %v4833
    %v4840 = vmul.f32 %v4501, %v4833
    %v4841 = vmul.f32 %v4505, %v4833
    %v4842 = vmul.f32 %v4509, %v4833
    %v4843 = vmul.f32 %v4513, %v4833
    %v4844 = vmul.f32 %v4517, %v4833
    %v4845 = vmul.f32 %v4521, %v4833
    %v4846 = vmul.f32 %v4525, %v4833
    %v4847 = vmul.f32 %v4529, %v4833
    %v4848 = vmul.f32 %v4533, %v4833
    %v4849 = vmul.f32 %v4473, %v4833
    %v4850 = vmul.f32 %v4477, %v4833
    %v4851 = vadd.f32 %v4814, %v4835
    %v4852 = vadd.f32 %v4815, %v4836
    %v4853 = vadd.f32 %v4816, %v4837
    %v4854 = vadd.f32 %v4817, %v4838
    %v4855 = vadd.f32 %v4818, %v4839
    %v4856 = vadd.f32 %v4819, %v4840
    %v4857 = vadd.f32 %v4820, %v4841
    %v4858 = vadd.f32 %v4821, %v4842
    %v4859 = vadd.f32 %v4822, %v4843
    %v4860 = vadd.f32 %v4823, %v4844
    %v4861 = vadd.f32 %v4824, %v4845
    %v4862 = vadd.f32 %v4825, %v4846
    %v4863 = vadd.f32 %v4826, %v4847
    %v4864 = vadd.f32 %v4827, %v4848
    %v4865 = vadd.f32 %v4828, %v4849
    %v4866 = vadd.f32 %v4829, %v4850
    %4868 = vset.pattern.permute.xlu0 0
    %4869 = vperm.xlu0 %4868, %v138
    %v4870 = vpop.permute.xlu0 %4869
    %v4872 = vmul.f32 %v3798, %v4870
    %v4873 = vmul.f32 %v3802, %v4870
    %v4874 = vmul.f32 %v3806, %v4870
    %v4875 = vmul.f32 %v3810, %v4870
    %v4876 = vmul.f32 %v3814, %v4870
    %v4877 = vmul.f32 %v3818, %v4870
    %v4878 = vmul.f32 %v3822, %v4870
    %v4879 = vmul.f32 %v3826, %v4870
    %v4880 = vmul.f32 %v3830, %v4870
    %v4881 = vmul.f32 %v3834, %v4870
    %v4882 = vmul.f32 %v3838, %v4870
    %v4883 = vmul.f32 %v3842, %v4870
    %v4884 = vmul.f32 %v3782, %v4870
    %v4885 = vmul.f32 %v3786, %v4870
    %v4886 = vmul.f32 %v3790, %v4870
    %v4887 = vmul.f32 %v3794, %v4870
    %v4888 = vadd.f32 %v4851, %v4872
    %v4889 = vadd.f32 %v4852, %v4873
    %v4890 = vadd.f32 %v4853, %v4874
    %v4891 = vadd.f32 %v4854, %v4875
    %v4892 = vadd.f32 %v4855, %v4876
    %v4893 = vadd.f32 %v4856, %v4877
    %v4894 = vadd.f32 %v4857, %v4878
    %v4895 = vadd.f32 %v4858, %v4879
    %v4896 = vadd.f32 %v4859, %v4880
    %v4897 = vadd.f32 %v4860, %v4881
    %v4898 = vadd.f32 %v4861, %v4882
    %v4899 = vadd.f32 %v4862, %v4883
    %v4900 = vadd.f32 %v4863, %v4884
    %v4901 = vadd.f32 %v4864, %v4885
    %v4902 = vadd.f32 %v4865, %v4886
    %v4903 = vadd.f32 %v4866, %v4887
    %4905 = vset.pattern.permute.xlu0 0
    %4906 = vperm.xlu0 %4905, %v139
    %v4907 = vpop.permute.xlu0 %4906
    %v4909 = vmul.f32 %v3883, %v4907
    %v4910 = vmul.f32 %v3887, %v4907
    %v4911 = vmul.f32 %v3891, %v4907
    %v4912 = vmul.f32 %v3895, %v4907
    %v4913 = vmul.f32 %v3899, %v4907
    %v4914 = vmul.f32 %v3903, %v4907
    %v4915 = vmul.f32 %v3907, %v4907
    %v4916 = vmul.f32 %v3911, %v4907
    %v4917 = vmul.f32 %v3915, %v4907
    %v4918 = vmul.f32 %v3919, %v4907
    %v4919 = vmul.f32 %v3923, %v4907
    %v4920 = vmul.f32 %v3927, %v4907
    %v4921 = vmul.f32 %v3867, %v4907
    %v4922 = vmul.f32 %v3871, %v4907
    %v4923 = vmul.f32 %v3875, %v4907
    %v4924 = vmul.f32 %v3879, %v4907
    %v4925 = vadd.f32 %v4888, %v4909
    %v4926 = vadd.f32 %v4889, %v4910
    %v4927 = vadd.f32 %v4890, %v4911
    %v4928 = vadd.f32 %v4891, %v4912
    %v4929 = vadd.f32 %v4892, %v4913
    %v4930 = vadd.f32 %v4893, %v4914
    %v4931 = vadd.f32 %v4894, %v4915
    %v4932 = vadd.f32 %v4895, %v4916
    %v4933 = vadd.f32 %v4896, %v4917
    %v4934 = vadd.f32 %v4897, %v4918
    %v4935 = vadd.f32 %v4898, %v4919
    %v4936 = vadd.f32 %v4899, %v4920
    %v4937 = vadd.f32 %v4900, %v4921
    %v4938 = vadd.f32 %v4901, %v4922
    %v4939 = vadd.f32 %v4902, %v4923
    %v4940 = vadd.f32 %v4903, %v4924
    %4942 = vset.pattern.permute.xlu0 0
    %4943 = vperm.xlu0 %4942, %v140
    %v4944 = vpop.permute.xlu0 %4943
    %v4946 = vmul.f32 %v3984, %v4944
    %v4947 = vmul.f32 %v3988, %v4944
    %v4948 = vmul.f32 %v3992, %v4944
    %v4949 = vmul.f32 %v3996, %v4944
    %v4950 = vmul.f32 %v4000, %v4944
    %v4951 = vmul.f32 %v4004, %v4944
    %v4952 = vmul.f32 %v4008, %v4944
    %v4953 = vmul.f32 %v4012, %v4944
    %v4954 = vmul.f32 %v4016, %v4944
    %v4955 = vmul.f32 %v4020, %v4944
    %v4956 = vmul.f32 %v4024, %v4944
    %v4957 = vmul.f32 %v4028, %v4944
    %v4958 = vmul.f32 %v3968, %v4944
    %v4959 = vmul.f32 %v3972, %v4944
    %v4960 = vmul.f32 %v3976, %v4944
    %v4961 = vmul.f32 %v3980, %v4944
    %v4962 = vadd.f32 %v4925, %v4946
    %v4963 = vadd.f32 %v4926, %v4947
    %v4964 = vadd.f32 %v4927, %v4948
    %v4965 = vadd.f32 %v4928, %v4949
    %v4966 = vadd.f32 %v4929, %v4950
    %v4967 = vadd.f32 %v4930, %v4951
    %v4968 = vadd.f32 %v4931, %v4952
    %v4969 = vadd.f32 %v4932, %v4953
    %v4970 = vadd.f32 %v4933, %v4954
    %v4971 = vadd.f32 %v4934, %v4955
    %v4972 = vadd.f32 %v4935, %v4956
    %v4973 = vadd.f32 %v4936, %v4957
    %v4974 = vadd.f32 %v4937, %v4958
    %v4975 = vadd.f32 %v4938, %v4959
    %v4976 = vadd.f32 %v4939, %v4960
    %v4977 = vadd.f32 %v4940, %v4961
    %4979 = vset.pattern.permute.xlu0 0
    %4980 = vperm.xlu0 %4979, %v141
    %v4981 = vpop.permute.xlu0 %4980
    %v4983 = vmul.f32 %v4085, %v4981
    %v4984 = vmul.f32 %v4089, %v4981
    %v4985 = vmul.f32 %v4093, %v4981
    %v4986 = vmul.f32 %v4097, %v4981
    %v4987 = vmul.f32 %v4101, %v4981
    %v4988 = vmul.f32 %v4105, %v4981
    %v4989 = vmul.f32 %v4109, %v4981
    %v4990 = vmul.f32 %v4113, %v4981
    %v4991 = vmul.f32 %v4117, %v4981
    %v4992 = vmul.f32 %v4121, %v4981
    %v4993 = vmul.f32 %v4125, %v4981
    %v4994 = vmul.f32 %v4129, %v4981
    %v4995 = vmul.f32 %v4069, %v4981
    %v4996 = vmul.f32 %v4073, %v4981
    %v4997 = vmul.f32 %v4077, %v4981
    %v4998 = vmul.f32 %v4081, %v4981
    %v4999 = vadd.f32 %v4962, %v4983
    %v5000 = vadd.f32 %v4963, %v4984
    %v5001 = vadd.f32 %v4964, %v4985
    %v5002 = vadd.f32 %v4965, %v4986
    %v5003 = vadd.f32 %v4966, %v4987
    %v5004 = vadd.f32 %v4967, %v4988
    %v5005 = vadd.f32 %v4968, %v4989
    %v5006 = vadd.f32 %v4969, %v4990
    %v5007 = vadd.f32 %v4970, %v4991
    %v5008 = vadd.f32 %v4971, %v4992
    %v5009 = vadd.f32 %v4972, %v4993
    %v5010 = vadd.f32 %v4973, %v4994
    %v5011 = vadd.f32 %v4974, %v4995
    %v5012 = vadd.f32 %v4975, %v4996
    %v5013 = vadd.f32 %v4976, %v4997
    %v5014 = vadd.f32 %v4977, %v4998
    %5016 = vset.pattern.permute.xlu0 0
    %5017 = vperm.xlu0 %5016, %v142
    %v5018 = vpop.permute.xlu0 %5017
    %v5020 = vmul.f32 %v4186, %v5018
    %v5021 = vmul.f32 %v4190, %v5018
    %v5022 = vmul.f32 %v4194, %v5018
    %v5023 = vmul.f32 %v4198, %v5018
    %v5024 = vmul.f32 %v4202, %v5018
    %v5025 = vmul.f32 %v4206, %v5018
    %v5026 = vmul.f32 %v4210, %v5018
    %v5027 = vmul.f32 %v4214, %v5018
    %v5028 = vmul.f32 %v4218, %v5018
    %v5029 = vmul.f32 %v4222, %v5018
    %v5030 = vmul.f32 %v4226, %v5018
    %v5031 = vmul.f32 %v4230, %v5018
    %v5032 = vmul.f32 %v4170, %v5018
    %v5033 = vmul.f32 %v4174, %v5018
    %v5034 = vmul.f32 %v4178, %v5018
    %v5035 = vmul.f32 %v4182, %v5018
    %v5036 = vadd.f32 %v4999, %v5020
    %v5037 = vadd.f32 %v5000, %v5021
    %v5038 = vadd.f32 %v5001, %v5022
    %v5039 = vadd.f32 %v5002, %v5023
    %v5040 = vadd.f32 %v5003, %v5024
    %v5041 = vadd.f32 %v5004, %v5025
    %v5042 = vadd.f32 %v5005, %v5026
    %v5043 = vadd.f32 %v5006, %v5027
    %v5044 = vadd.f32 %v5007, %v5028
    %v5045 = vadd.f32 %v5008, %v5029
    %v5046 = vadd.f32 %v5009, %v5030
    %v5047 = vadd.f32 %v5010, %v5031
    %v5048 = vadd.f32 %v5011, %v5032
    %v5049 = vadd.f32 %v5012, %v5033
    %v5050 = vadd.f32 %v5013, %v5034
    %v5051 = vadd.f32 %v5014, %v5035
    %5053 = vset.pattern.permute.xlu0 0
    %5054 = vperm.xlu0 %5053, %v143
    %v5055 = vpop.permute.xlu0 %5054
    %v5057 = vmul.f32 %v4287, %v5055
    %v5058 = vmul.f32 %v4291, %v5055
    %v5059 = vmul.f32 %v4295, %v5055
    %v5060 = vmul.f32 %v4299, %v5055
    %v5061 = vmul.f32 %v4303, %v5055
    %v5062 = vmul.f32 %v4307, %v5055
    %v5063 = vmul.f32 %v4311, %v5055
    %v5064 = vmul.f32 %v4315, %v5055
    %v5065 = vmul.f32 %v4319, %v5055
    %v5066 = vmul.f32 %v4323, %v5055
    %v5067 = vmul.f32 %v4327, %v5055
    %v5068 = vmul.f32 %v4331, %v5055
    %v5069 = vmul.f32 %v4271, %v5055
    %v5070 = vmul.f32 %v4275, %v5055
    %v5071 = vmul.f32 %v4279, %v5055
    %v5072 = vmul.f32 %v4283, %v5055
    %v5073 = vadd.f32 %v5036, %v5057
    %v5074 = vadd.f32 %v5037, %v5058
    %v5075 = vadd.f32 %v5038, %v5059
    %v5076 = vadd.f32 %v5039, %v5060
    %v5077 = vadd.f32 %v5040, %v5061
    %v5078 = vadd.f32 %v5041, %v5062
    %v5079 = vadd.f32 %v5042, %v5063
    %v5080 = vadd.f32 %v5043, %v5064
    %v5081 = vadd.f32 %v5044, %v5065
    %v5082 = vadd.f32 %v5045, %v5066
    %v5083 = vadd.f32 %v5046, %v5067
    %v5084 = vadd.f32 %v5047, %v5068
    %v5085 = vadd.f32 %v5048, %v5069
    %v5086 = vadd.f32 %v5049, %v5070
    %v5087 = vadd.f32 %v5050, %v5071
    %v5088 = vadd.f32 %v5051, %v5072
    %5090 = vset.pattern.permute.xlu0 0
    %5091 = vperm.xlu0 %5090, %v144
    %v5092 = vpop.permute.xlu0 %5091
    %v5094 = vmul.f32 %v4388, %v5092
    %v5095 = vmul.f32 %v4392, %v5092
    %v5096 = vmul.f32 %v4396, %v5092
    %v5097 = vmul.f32 %v4400, %v5092
    %v5098 = vmul.f32 %v4404, %v5092
    %v5099 = vmul.f32 %v4408, %v5092
    %v5100 = vmul.f32 %v4412, %v5092
    %v5101 = vmul.f32 %v4416, %v5092
    %v5102 = vmul.f32 %v4420, %v5092
    %v5103 = vmul.f32 %v4424, %v5092
    %v5104 = vmul.f32 %v4428, %v5092
    %v5105 = vmul.f32 %v4432, %v5092
    %v5106 = vmul.f32 %v4372, %v5092
    %v5107 = vmul.f32 %v4376, %v5092
    %v5108 = vmul.f32 %v4380, %v5092
    %v5109 = vmul.f32 %v4384, %v5092
    %v5110 = vadd.f32 %v5073, %v5094
    %v5111 = vadd.f32 %v5074, %v5095
    %v5112 = vadd.f32 %v5075, %v5096
    %v5113 = vadd.f32 %v5076, %v5097
    %v5114 = vadd.f32 %v5077, %v5098
    %v5115 = vadd.f32 %v5078, %v5099
    %v5116 = vadd.f32 %v5079, %v5100
    %v5117 = vadd.f32 %v5080, %v5101
    %v5118 = vadd.f32 %v5081, %v5102
    %v5119 = vadd.f32 %v5082, %v5103
    %v5120 = vadd.f32 %v5083, %v5104
    %v5121 = vadd.f32 %v5084, %v5105
    %v5122 = vadd.f32 %v5085, %v5106
    %v5123 = vadd.f32 %v5086, %v5107
    %v5124 = vadd.f32 %v5087, %v5108
    %v5125 = vadd.f32 %v5088, %v5109
    %5127 = vset.pattern.permute.xlu0 0
    %5128 = vperm.xlu0 %5127, %v145
    %v5129 = vpop.permute.xlu0 %5128
    %v5131 = vmul.f32 %v4489, %v5129
    %v5132 = vmul.f32 %v4493, %v5129
    %v5133 = vmul.f32 %v4497, %v5129
    %v5134 = vmul.f32 %v4501, %v5129
    %v5135 = vmul.f32 %v4505, %v5129
    %v5136 = vmul.f32 %v4509, %v5129
    %v5137 = vmul.f32 %v4513, %v5129
    %v5138 = vmul.f32 %v4517, %v5129
    %v5139 = vmul.f32 %v4521, %v5129
    %v5140 = vmul.f32 %v4525, %v5129
    %v5141 = vmul.f32 %v4529, %v5129
    %v5142 = vmul.f32 %v4533, %v5129
    %v5143 = vmul.f32 %v4473, %v5129
    %v5144 = vmul.f32 %v4477, %v5129
    %v5145 = vmul.f32 %v4481, %v5129
    %v5146 = vmul.f32 %v4485, %v5129
    %v5147 = vadd.f32 %v5110, %v5131
    %v5148 = vadd.f32 %v5111, %v5132
    %v5149 = vadd.f32 %v5112, %v5133
    %v5150 = vadd.f32 %v5113, %v5134
    %v5151 = vadd.f32 %v5114, %v5135
    %v5152 = vadd.f32 %v5115, %v5136
    %v5153 = vadd.f32 %v5116, %v5137
    %v5154 = vadd.f32 %v5117, %v5138
    %v5155 = vadd.f32 %v5118, %v5139
    %v5156 = vadd.f32 %v5119, %v5140
    %v5157 = vadd.f32 %v5120, %v5141
    %v5158 = vadd.f32 %v5121, %v5142
    %v5159 = vadd.f32 %v5122, %v5143
    %v5160 = vadd.f32 %v5123, %v5144
    %v5161 = vadd.f32 %v5124, %v5145
    %v5162 = vadd.f32 %v5125, %v5146
    %5164 = vset.pattern.permute.xlu0 0
    %5165 = vperm.xlu0 %5164, %v146
    %v5166 = vpop.permute.xlu0 %5165
    %v5168 = vadd.f32 %v5147, %v5166
    %v5169 = vadd.f32 %v5148, %v5166
    %v5170 = vadd.f32 %v5149, %v5166
    %v5171 = vadd.f32 %v5150, %v5166
    %v5172 = vadd.f32 %v5151, %v5166
    %v5173 = vadd.f32 %v5152, %v5166
    %v5174 = vadd.f32 %v5153, %v5166
    %v5175 = vadd.f32 %v5154, %v5166
    %v5176 = vadd.f32 %v5155, %v5166
    %v5177 = vadd.f32 %v5156, %v5166
    %v5178 = vadd.f32 %v5157, %v5166
    %v5179 = vadd.f32 %v5158, %v5166
    %v5180 = vadd.f32 %v5159, %v5166
    %v5181 = vadd.f32 %v5160, %v5166
    %v5182 = vadd.f32 %v5161, %v5166
    %v5183 = vadd.f32 %v5162, %v5166
    %v5184 = vmax.f32 %v5168, %v5170
    %v5185 = vmax.f32 %v5169, %v5171
    %v5186 = vmax.f32 %v5170, %v5172
    %v5187 = vmax.f32 %v5171, %v5173
    %v5188 = vmax.f32 %v5172, %v5174
    %v5189 = vmax.f32 %v5173, %v5175
    %v5190 = vmax.f32 %v5174, %v5176
    %v5191 = vmax.f32 %v5175, %v5177
    %v5192 = vmax.f32 %v5176, %v5178
    %v5193 = vmax.f32 %v5177, %v5179
    %v5194 = vmax.f32 %v5178, %v5180
    %v5195 = vmax.f32 %v5179, %v5181
    %v5196 = vmax.f32 %v5180, %v5182
    %v5197 = vmax.f32 %v5181, %v5183
    %v5198 = vmax.f32 %v5182, %v5168
    %v5199 = vmax.f32 %v5183, %v5169
    %v5200 = vmax.f32 %v5184, %v5172
    %v5201 = vmax.f32 %v5185, %v5173
    %v5202 = vmax.f32 %v5186, %v5174
    %v5203 = vmax.f32 %v5187, %v5175
    %v5204 = vmax.f32 %v5188, %v5176
    %v5205 = vmax.f32 %v5189, %v5177
    %v5206 = vmax.f32 %v5190, %v5178
    %v5207 = vmax.f32 %v5191, %v5179
    %v5208 = vmax.f32 %v5192, %v5180
    %v5209 = vmax.f32 %v5193, %v5181
    %v5210 = vmax.f32 %v5194, %v5182
    %v5211 = vmax.f32 %v5195, %v5183
    %v5212 = vmax.f32 %v5196, %v5168
    %v5213 = vmax.f32 %v5197, %v5169
    %v5214 = vmax.f32 %v5198, %v5170
    %v5215 = vmax.f32 %v5199, %v5171
    %5217 = vset.pattern.permute.xlu0 0
    %5218 = vperm.xlu0 %5217, %v113
    %v5219 = vpop.permute.xlu0 %5218
    %v5221 = vmul.f32 %v3782, %v5219
    %v5222 = vmul.f32 %v3786, %v5219
    %v5223 = vmul.f32 %v3790, %v5219
    %v5224 = vmul.f32 %v3794, %v5219
    %v5225 = vmul.f32 %v3798, %v5219
    %v5226 = vmul.f32 %v3802, %v5219
    %v5227 = vmul.f32 %v3806, %v5219
    %v5228 = vmul.f32 %v3810, %v5219
    %v5229 = vmul.f32 %v3814, %v5219
    %v5230 = vmul.f32 %v3818, %v5219
    %v5231 = vmul.f32 %v3822, %v5219
    %v5232 = vmul.f32 %v3826, %v5219
    %v5233 = vmul.f32 %v3830, %v5219
    %v5234 = vmul.f32 %v3834, %v5219
    %v5235 = vmul.f32 %v3838, %v5219
    %v5236 = vmul.f32 %v3842, %v5219
    %5238 = vset.pattern.permute.xlu0 0
    %5239 = vperm.xlu0 %5238, %v114
    %v5240 = vpop.permute.xlu0 %5239
    %v5242 = vmul.f32 %v3867, %v5240
    %v5243 = vmul.f32 %v3871, %v5240
    %v5244 = vmul.f32 %v3875, %v5240
    %v5245 = vmul.f32 %v3879, %v5240
    %v5246 = vmul.f32 %v3883, %v5240
    %v5247 = vmul.f32 %v3887, %v5240
    %v5248 = vmul.f32 %v3891, %v5240
    %v5249 = vmul.f32 %v3895, %v5240
    %v5250 = vmul.f32 %v3899, %v5240
    %v5251 = vmul.f32 %v3903, %v5240
    %v5252 = vmul.f32 %v3907, %v5240
    %v5253 = vmul.f32 %v3911, %v5240
    %v5254 = vmul.f32 %v3915, %v5240
    %v5255 = vmul.f32 %v3919, %v5240
    %v5256 = vmul.f32 %v3923, %v5240
    %v5257 = vmul.f32 %v3927, %v5240
    %v5258 = vadd.f32 %v5221, %v5242
    %v5259 = vadd.f32 %v5222, %v5243
    %v5260 = vadd.f32 %v5223, %v5244
    %v5261 = vadd.f32 %v5224, %v5245
    %v5262 = vadd.f32 %v5225, %v5246
    %v5263 = vadd.f32 %v5226, %v5247
    %v5264 = vadd.f32 %v5227, %v5248
    %v5265 = vadd.f32 %v5228, %v5249
    %v5266 = vadd.f32 %v5229, %v5250
    %v5267 = vadd.f32 %v5230, %v5251
    %v5268 = vadd.f32 %v5231, %v5252
    %v5269 = vadd.f32 %v5232, %v5253
    %v5270 = vadd.f32 %v5233, %v5254
    %v5271 = vadd.f32 %v5234, %v5255
    %v5272 = vadd.f32 %v5235, %v5256
    %v5273 = vadd.f32 %v5236, %v5257
    %5275 = vset.pattern.permute.xlu0 0
    %5276 = vperm.xlu0 %5275, %v115
    %v5277 = vpop.permute.xlu0 %5276
    %v5279 = vmul.f32 %v3968, %v5277
    %v5280 = vmul.f32 %v3972, %v5277
    %v5281 = vmul.f32 %v3976, %v5277
    %v5282 = vmul.f32 %v3980, %v5277
    %v5283 = vmul.f32 %v3984, %v5277
    %v5284 = vmul.f32 %v3988, %v5277
    %v5285 = vmul.f32 %v3992, %v5277
    %v5286 = vmul.f32 %v3996, %v5277
    %v5287 = vmul.f32 %v4000, %v5277
    %v5288 = vmul.f32 %v4004, %v5277
    %v5289 = vmul.f32 %v4008, %v5277
    %v5290 = vmul.f32 %v4012, %v5277
    %v5291 = vmul.f32 %v4016, %v5277
    %v5292 = vmul.f32 %v4020, %v5277
    %v5293 = vmul.f32 %v4024, %v5277
    %v5294 = vmul.f32 %v4028, %v5277
    %v5295 = vadd.f32 %v5258, %v5279
    %v5296 = vadd.f32 %v5259, %v5280
    %v5297 = vadd.f32 %v5260, %v5281
    %v5298 = vadd.f32 %v5261, %v5282
    %v5299 = vadd.f32 %v5262, %v5283
    %v5300 = vadd.f32 %v5263, %v5284
    %v5301 = vadd.f32 %v5264, %v5285
    %v5302 = vadd.f32 %v5265, %v5286
    %v5303 = vadd.f32 %v5266, %v5287
    %v5304 = vadd.f32 %v5267, %v5288
    %v5305 = vadd.f32 %v5268, %v5289
    %v5306 = vadd.f32 %v5269, %v5290
    %v5307 = vadd.f32 %v5270, %v5291
    %v5308 = vadd.f32 %v5271, %v5292
    %v5309 = vadd.f32 %v5272, %v5293
    %v5310 = vadd.f32 %v5273, %v5294
    %5312 = vset.pattern.permute.xlu0 0
    %5313 = vperm.xlu0 %5312, %v116
    %v5314 = vpop.permute.xlu0 %5313
    %v5316 = vmul.f32 %v4069, %v5314
    %v5317 = vmul.f32 %v4073, %v5314
    %v5318 = vmul.f32 %v4077, %v5314
    %v5319 = vmul.f32 %v4081, %v5314
    %v5320 = vmul.f32 %v4085, %v5314
    %v5321 = vmul.f32 %v4089, %v5314
    %v5322 = vmul.f32 %v4093, %v5314
    %v5323 = vmul.f32 %v4097, %v5314
    %v5324 = vmul.f32 %v4101, %v5314
    %v5325 = vmul.f32 %v4105, %v5314
    %v5326 = vmul.f32 %v4109, %v5314
    %v5327 = vmul.f32 %v4113, %v5314
    %v5328 = vmul.f32 %v4117, %v5314
    %v5329 = vmul.f32 %v4121, %v5314
    %v5330 = vmul.f32 %v4125, %v5314
    %v5331 = vmul.f32 %v4129, %v5314
    %v5332 = vadd.f32 %v5295, %v5316
    %v5333 = vadd.f32 %v5296, %v5317
    %v5334 = vadd.f32 %v5297, %v5318
    %v5335 = vadd.f32 %v5298, %v5319
    %v5336 = vadd.f32 %v5299, %v5320
    %v5337 = vadd.f32 %v5300, %v5321
    %v5338 = vadd.f32 %v5301, %v5322
    %v5339 = vadd.f32 %v5302, %v5323
    %v5340 = vadd.f32 %v5303, %v5324
    %v5341 = vadd.f32 %v5304, %v5325
    %v5342 = vadd.f32 %v5305, %v5326
    %v5343 = vadd.f32 %v5306, %v5327
    %v5344 = vadd.f32 %v5307, %v5328
    %v5345 = vadd.f32 %v5308, %v5329
    %v5346 = vadd.f32 %v5309, %v5330
    %v5347 = vadd.f32 %v5310, %v5331
    %5349 = vset.pattern.permute.xlu0 0
    %5350 = vperm.xlu0 %5349, %v117
    %v5351 = vpop.permute.xlu0 %5350
    %v5353 = vmul.f32 %v4170, %v5351
    %v5354 = vmul.f32 %v4174, %v5351
    %v5355 = vmul.f32 %v4178, %v5351
    %v5356 = vmul.f32 %v4182, %v5351
    %v5357 = vmul.f32 %v4186, %v5351
    %v5358 = vmul.f32 %v4190, %v5351
    %v5359 = vmul.f32 %v4194, %v5351
    %v5360 = vmul.f32 %v4198, %v5351
    %v5361 = vmul.f32 %v4202, %v5351
    %v5362 = vmul.f32 %v4206, %v5351
    %v5363 = vmul.f32 %v4210, %v5351
    %v5364 = vmul.f32 %v4214, %v5351
    %v5365 = vmul.f32 %v4218, %v5351
    %v5366 = vmul.f32 %v4222, %v5351
    %v5367 = vmul.f32 %v4226, %v5351
    %v5368 = vmul.f32 %v4230, %v5351
    %v5369 = vadd.f32 %v5332, %v5353
    %v5370 = vadd.f32 %v5333, %v5354
    %v5371 = vadd.f32 %v5334, %v5355
    %v5372 = vadd.f32 %v5335, %v5356
    %v5373 = vadd.f32 %v5336, %v5357
    %v5374 = vadd.f32 %v5337, %v5358
    %v5375 = vadd.f32 %v5338, %v5359
    %v5376 = vadd.f32 %v5339, %v5360
    %v5377 = vadd.f32 %v5340, %v5361
    %v5378 = vadd.f32 %v5341, %v5362
    %v5379 = vadd.f32 %v5342, %v5363
    %v5380 = vadd.f32 %v5343, %v5364
    %v5381 = vadd.f32 %v5344, %v5365
    %v5382 = vadd.f32 %v5345, %v5366
    %v5383 = vadd.f32 %v5346, %v5367
    %v5384 = vadd.f32 %v5347, %v5368
    %5386 = vset.pattern.permute.xlu0 0
    %5387 = vperm.xlu0 %5386, %v118
    %v5388 = vpop.permute.xlu0 %5387
    %v5390 = vmul.f32 %v4271, %v5388
    %v5391 = vmul.f32 %v4275, %v5388
    %v5392 = vmul.f32 %v4279, %v5388
    %v5393 = vmul.f32 %v4283, %v5388
    %v5394 = vmul.f32 %v4287, %v5388
    %v5395 = vmul.f32 %v4291, %v5388
    %v5396 = vmul.f32 %v4295, %v5388
    %v5397 = vmul.f32 %v4299, %v5388
    %v5398 = vmul.f32 %v4303, %v5388
    %v5399 = vmul.f32 %v4307, %v5388
    %v5400 = vmul.f32 %v4311, %v5388
    %v5401 = vmul.f32 %v4315, %v5388
    %v5402 = vmul.f32 %v4319, %v5388
    %v5403 = vmul.f32 %v4323, %v5388
    %v5404 = vmul.f32 %v4327, %v5388
    %v5405 = vmul.f32 %v4331, %v5388
    %v5406 = vadd.f32 %v5369, %v5390
    %v5407 = vadd.f32 %v5370, %v5391
    %v5408 = vadd.f32 %v5371, %v5392
    %v5409 = vadd.f32 %v5372, %v5393
    %v5410 = vadd.f32 %v5373, %v5394
    %v5411 = vadd.f32 %v5374, %v5395
    %v5412 = vadd.f32 %v5375, %v5396
    %v5413 = vadd.f32 %v5376, %v5397
    %v5414 = vadd.f32 %v5377, %v5398
    %v5415 = vadd.f32 %v5378, %v5399
    %v5416 = vadd.f32 %v5379, %v5400
    %v5417 = vadd.f32 %v5380, %v5401
    %v5418 = vadd.f32 %v5381, %v5402
    %v5419 = vadd.f32 %v5382, %v5403
    %v5420 = vadd.f32 %v5383, %v5404
    %v5421 = vadd.f32 %v5384, %v5405
    %5423 = vset.pattern.permute.xlu0 0
    %5424 = vperm.xlu0 %5423, %v119
    %v5425 = vpop.permute.xlu0 %5424
    %v5427 = vmul.f32 %v4372, %v5425
    %v5428 = vmul.f32 %v4376, %v5425
    %v5429 = vmul.f32 %v4380, %v5425
    %v5430 = vmul.f32 %v4384, %v5425
    %v5431 = vmul.f32 %v4388, %v5425
    %v5432 = vmul.f32 %v4392, %v5425
    %v5433 = vmul.f32 %v4396, %v5425
    %v5434 = vmul.f32 %v4400, %v5425
    %v5435 = vmul.f32 %v4404, %v5425
    %v5436 = vmul.f32 %v4408, %v5425
    %v5437 = vmul.f32 %v4412, %v5425
    %v5438 = vmul.f32 %v4416, %v5425
    %v5439 = vmul.f32 %v4420, %v5425
    %v5440 = vmul.f32 %v4424, %v5425
    %v5441 = vmul.f32 %v4428, %v5425
    %v5442 = vmul.f32 %v4432, %v5425
    %v5443 = vadd.f32 %v5406, %v5427
    %v5444 = vadd.f32 %v5407, %v5428
    %v5445 = vadd.f32 %v5408, %v5429
    %v5446 = vadd.f32 %v5409, %v5430
    %v5447 = vadd.f32 %v5410, %v5431
    %v5448 = vadd.f32 %v5411, %v5432
    %v5449 = vadd.f32 %v5412, %v5433
    %v5450 = vadd.f32 %v5413, %v5434
    %v5451 = vadd.f32 %v5414, %v5435
    %v5452 = vadd.f32 %v5415, %v5436
    %v5453 = vadd.f32 %v5416, %v5437
    %v5454 = vadd.f32 %v5417, %v5438
    %v5455 = vadd.f32 %v5418, %v5439
    %v5456 = vadd.f32 %v5419, %v5440
    %v5457 = vadd.f32 %v5420, %v5441
    %v5458 = vadd.f32 %v5421, %v5442
    %5460 = vset.pattern.permute.xlu0 0
    %5461 = vperm.xlu0 %5460, %v120
    %v5462 = vpop.permute.xlu0 %5461
    %v5464 = vmul.f32 %v4473, %v5462
    %v5465 = vmul.f32 %v4477, %v5462
    %v5466 = vmul.f32 %v4481, %v5462
    %v5467 = vmul.f32 %v4485, %v5462
    %v5468 = vmul.f32 %v4489, %v5462
    %v5469 = vmul.f32 %v4493, %v5462
    %v5470 = vmul.f32 %v4497, %v5462
    %v5471 = vmul.f32 %v4501, %v5462
    %v5472 = vmul.f32 %v4505, %v5462
    %v5473 = vmul.f32 %v4509, %v5462
    %v5474 = vmul.f32 %v4513, %v5462
    %v5475 = vmul.f32 %v4517, %v5462
    %v5476 = vmul.f32 %v4521, %v5462
    %v5477 = vmul.f32 %v4525, %v5462
    %v5478 = vmul.f32 %v4529, %v5462
    %v5479 = vmul.f32 %v4533, %v5462
    %v5480 = vadd.f32 %v5443, %v5464
    %v5481 = vadd.f32 %v5444, %v5465
    %v5482 = vadd.f32 %v5445, %v5466
    %v5483 = vadd.f32 %v5446, %v5467
    %v5484 = vadd.f32 %v5447, %v5468
    %v5485 = vadd.f32 %v5448, %v5469
    %v5486 = vadd.f32 %v5449, %v5470
    %v5487 = vadd.f32 %v5450, %v5471
    %v5488 = vadd.f32 %v5451, %v5472
    %v5489 = vadd.f32 %v5452, %v5473
    %v5490 = vadd.f32 %v5453, %v5474
    %v5491 = vadd.f32 %v5454, %v5475
    %v5492 = vadd.f32 %v5455, %v5476
    %v5493 = vadd.f32 %v5456, %v5477
    %v5494 = vadd.f32 %v5457, %v5478
    %v5495 = vadd.f32 %v5458, %v5479
    %5497 = vset.pattern.permute.xlu0 0
    %5498 = vperm.xlu0 %5497, %v121
    %v5499 = vpop.permute.xlu0 %5498
    %v5501 = vadd.f32 %v5480, %v5499
    %v5502 = vadd.f32 %v5481, %v5499
    %v5503 = vadd.f32 %v5482, %v5499
    %v5504 = vadd.f32 %v5483, %v5499
    %v5505 = vadd.f32 %v5484, %v5499
    %v5506 = vadd.f32 %v5485, %v5499
    %v5507 = vadd.f32 %v5486, %v5499
    %v5508 = vadd.f32 %v5487, %v5499
    %v5509 = vadd.f32 %v5488, %v5499
    %v5510 = vadd.f32 %v5489, %v5499
    %v5511 = vadd.f32 %v5490, %v5499
    %v5512 = vadd.f32 %v5491, %v5499
    %v5513 = vadd.f32 %v5492, %v5499
    %v5514 = vadd.f32 %v5493, %v5499
    %v5515 = vadd.f32 %v5494, %v5499
    %v5516 = vadd.f32 %v5495, %v5499
    %v5517 = vadd.f32 %v5200, %v5509
    %v5518 = vadd.f32 %v5201, %v5510
    %v5519 = vadd.f32 %v5202, %v5511
    %v5520 = vadd.f32 %v5203, %v5512
    %v5521 = vadd.f32 %v5204, %v5513
    %v5522 = vadd.f32 %v5205, %v5514
    %v5523 = vadd.f32 %v5206, %v5515
    %v5524 = vadd.f32 %v5207, %v5516
    %v5525 = vadd.f32 %v5208, %v5501
    %v5526 = vadd.f32 %v5209, %v5502
    %v5527 = vadd.f32 %v5210, %v5503
    %v5528 = vadd.f32 %v5211, %v5504
    %v5529 = vadd.f32 %v5212, %v5505
    %v5530 = vadd.f32 %v5213, %v5506
    %v5531 = vadd.f32 %v5214, %v5507
    %v5532 = vadd.f32 %v5215, %v5508
    %v5533 = vmax.f32 %v5517, 0.0
    %v5534 = vmax.f32 %v5518, 0.0
    %v5535 = vmax.f32 %v5519, 0.0
    %v5536 = vmax.f32 %v5520, 0.0
    %v5537 = vmax.f32 %v5521, 0.0
    %v5538 = vmax.f32 %v5522, 0.0
    %v5539 = vmax.f32 %v5523, 0.0
    %v5540 = vmax.f32 %v5524, 0.0
    %v5541 = vmax.f32 %v5525, 0.0
    %v5542 = vmax.f32 %v5526, 0.0
    %v5543 = vmax.f32 %v5527, 0.0
    %v5544 = vmax.f32 %v5528, 0.0
    %v5545 = vmax.f32 %v5529, 0.0
    %v5546 = vmax.f32 %v5530, 0.0
    %v5547 = vmax.f32 %v5531, 0.0
    %v5548 = vmax.f32 %v5532, 0.0
    %5549 = vst [vmem:[#allocation6] sm:$0xff] %v5533
    %5550 = vst [vmem:[#allocation6 + $0x8] sm:$0xff] %v5534
    %5551 = vst [vmem:[#allocation6 + $0x10] sm:$0xff] %v5535
    %5552 = vst [vmem:[#allocation6 + $0x18] sm:$0xff] %v5536
    %5553 = vst [vmem:[#allocation6 + $0x20] sm:$0xff] %v5537
    %5554 = vst [vmem:[#allocation6 + $0x28] sm:$0xff] %v5538
    %5555 = vst [vmem:[#allocation6 + $0x30] sm:$0xff] %v5539
    %5556 = vst [vmem:[#allocation6 + $0x38] sm:$0xff] %v5540
    %5557 = vst [vmem:[#allocation6 + $0x40] sm:$0xff] %v5541
    %5558 = vst [vmem:[#allocation6 + $0x48] sm:$0xff] %v5542
    %5559 = vst [vmem:[#allocation6 + $0x50] sm:$0xff] %v5543
    %5560 = vst [vmem:[#allocation6 + $0x58] sm:$0xff] %v5544
    %5561 = vst [vmem:[#allocation6 + $0x60] sm:$0xff] %v5545
    %5562 = vst [vmem:[#allocation6 + $0x68] sm:$0xff] %v5546
    %5563 = vst [vmem:[#allocation6 + $0x70] sm:$0xff] %v5547
    %5564 = vst [vmem:[#allocation6 + $0x78] sm:$0xff] %v5548
    // Predicated region
    $region54: #{tpu_custom_call.1} parent=1 // pred_check
      _
    $region55: #{tpu_custom_call.1} parent=1 // pred_check_branch
      %5566 = sbr.rel (0) target = $region57
    $region56: #{tpu_custom_call.1} parent=1 // pred_region
      %s5568 = ssub.s32 2048, 2048
      %5569 = vsyncadd [#allocation3], %s5568
      %s5570 = sshll.u32 [#allocation2], 4
      %s5571 = int_to_ptr.vmem [resolvable:$true] %s5570
      %5576 = dma.vmem_to_hbm [thread:$0]  %s5571, 2048, %s13, [#allocation3], 128, 128, 8
    $region57: #{tpu_custom_call.1} parent=1 // pred_fallthru
      _
    // Predicated region
    $region58: #{tpu_custom_call.1} parent=1 // pred_check
      _
    $region59: #{tpu_custom_call.1} parent=1 // pred_check_branch
      %5578 = sbr.rel (0) target = $region61
    $region60: #{tpu_custom_call.1} parent=1 // pred_region
      %s5580 = ssub.s32 2048, 2048
      %5581 = vsyncadd [#allocation5], %s5580
      %s5582 = sshll.u32 [#allocation4], 4
      %s5583 = int_to_ptr.vmem [resolvable:$true] %s5582
      %5588 = dma.vmem_to_hbm [thread:$0]  %s5583, 2048, %s14, [#allocation5], 128, 128, 8
    $region61: #{tpu_custom_call.1} parent=1 // pred_fallthru
      _
    // Predicated region
    $region62: #{tpu_custom_call.1} parent=1 // pred_check
      _
    $region63: #{tpu_custom_call.1} parent=1 // pred_check_branch
      %5590 = sbr.rel (0) target = $region65
    $region64: #{tpu_custom_call.1} parent=1 // pred_region
      %s5592 = ssub.s32 2048, 2048
      %5593 = vsyncadd [#allocation5], %s5592
      %s5594 = sshll.u32 [#allocation6], 4
      %s5595 = int_to_ptr.vmem [resolvable:$true] %s5594
      %5600 = dma.vmem_to_hbm [thread:$0]  %s5595, 2048, %s15, [#allocation5], 128, 128, 8
    $region65: #{tpu_custom_call.1} parent=1 // pred_fallthru
      _
    // Predicated region
    $region66: #{tpu_custom_call.1} parent=1 // pred_check
      _
    $region67: #{tpu_custom_call.1} parent=1 // pred_check_branch
      %5602 = sbr.rel (0) target = $region69
    $region68: #{tpu_custom_call.1} parent=1 // pred_region
      %5603 = dma.done [#allocation3], 2048
    $region69: #{tpu_custom_call.1} parent=1 // pred_fallthru
      _
    // Predicated region
    $region70: #{tpu_custom_call.1} parent=1 // pred_check
      _
    $region71: #{tpu_custom_call.1} parent=1 // pred_check_branch
      %5605 = sbr.rel (0) target = $region73
    $region72: #{tpu_custom_call.1} parent=1 // pred_region
      %5606 = dma.done [#allocation5], 2048
    $region73: #{tpu_custom_call.1} parent=1 // pred_fallthru
      _
    // Predicated region
    $region74: #{tpu_custom_call.1} parent=1 // pred_check
      _
    $region75: #{tpu_custom_call.1} parent=1 // pred_check_branch
      %5608 = sbr.rel (0) target = $region77
    $region76: #{tpu_custom_call.1} parent=1 // pred_region
      %5609 = dma.done [#allocation5], 2048
    $region77: #{tpu_custom_call.1} parent=1 // pred_fallthru
      _
    %5610 = vsyncpa [#allocation3], 1
    %5611 = vsyncpa [#allocation5], 1

</llo_original>
